<compile_context>
chip_gen: v7x
topology: tpu7x:2x2x1
jax: 0.10.0
libtpu: 0.0.40
codegen_flags: <defaults>
</compile_context>

<pallas_src>
import jax
import jax.numpy as jnp
from jax.experimental import pallas as pl
from jax.experimental.pallas import tpu as pltpu

Z_DIM = 100
Z_PAD = 128            # lane-aligned K for the first matmul
H1, H2, H3 = 256, 512, 1024
OUT_DIM = 3 * 32 * 32  # 3072 = 24 * 128 -> lane-dense output stores


def _leaky_relu(x, slope=0.2):
    return jnp.where(x > 0, x, slope * x)


def _round_up(x, m):
    return (x + m - 1) // m * m


def fc_generator_kernel(z_ref,
                        w1_ref, b1_ref,
                        w2_ref, b2_ref,
                        w3_ref, b3_ref,
                        w4_ref, b4_ref,
                        out_ref):
    # One batch tile per grid step: 4 MXU matmuls + f32 elementwise.
    x = z_ref[...].astype(jnp.bfloat16)
    h = jnp.dot(x, w1_ref[...], preferred_element_type=jnp.float32)
    h = _leaky_relu(h + b1_ref[...])
    h = jnp.dot(h.astype(jnp.bfloat16), w2_ref[...],
                preferred_element_type=jnp.float32)
    h = _leaky_relu(h + b2_ref[...])
    h = jnp.dot(h.astype(jnp.bfloat16), w3_ref[...],
                preferred_element_type=jnp.float32)
    h = _leaky_relu(h + b3_ref[...])
    h = jnp.dot(h.astype(jnp.bfloat16), w4_ref[...],
                preferred_element_type=jnp.float32)
    out_ref[...] = h + b4_ref[...]


def fc_generator(z, params, *, batch_tile=None):
    """z: (B, 100) f32  ->  (B, 3, 32, 32) f32 (NCHW, like torch .view)."""
    B = z.shape[0]
    (w1, b1), (w2, b2), (w3, b3), (w4, b4) = params

    # Batch tile: large enough to feed the MXU at big B, minimal at small B.
    if batch_tile is None:
        batch_tile = min(256, _round_up(max(B, 8), 8))
    tb = _round_up(batch_tile, 8)
    b_pad = _round_up(B, tb)

    # Lane-align the noise dim: zero-pad z and W1's K dim from 100 -> 128.
    z_p = jnp.zeros((b_pad, Z_PAD), jnp.float32).at[:B, :Z_DIM].set(z)
    w1_p = jnp.zeros((Z_PAD, H1), jnp.float32).at[:Z_DIM, :].set(w1)

    # bf16 weights (half the HBM bytes); biases stay f32.
    w1b = w1_p.astype(jnp.bfloat16)
    w2b = w2.astype(jnp.bfloat16)
    w3b = w3.astype(jnp.bfloat16)
    w4b = w4.astype(jnp.bfloat16)

    const = lambda i: (0, 0)   # weights/biases: fetched once, VMEM-resident
    flat = pl.pallas_call(
        fc_generator_kernel,
        out_shape=jax.ShapeDtypeStruct((b_pad, OUT_DIM), jnp.float32),
        grid=(b_pad // tb,),
        in_specs=[
            pl.BlockSpec((tb, Z_PAD), lambda i: (i, 0)),
            pl.BlockSpec((Z_PAD, H1), const), pl.BlockSpec((1, H1), const),
            pl.BlockSpec((H1, H2), const),    pl.BlockSpec((1, H2), const),
            pl.BlockSpec((H2, H3), const),    pl.BlockSpec((1, H3), const),
            pl.BlockSpec((H3, OUT_DIM), const),
            pl.BlockSpec((1, OUT_DIM), const),
        ],
        out_specs=pl.BlockSpec((tb, OUT_DIM), lambda i: (i, 0)),
        compiler_params=pltpu.CompilerParams(
            dimension_semantics=("parallel",),
            vmem_limit_bytes=48 << 20,
        ),
    )(z_p, w1b, b1, w2b, b2, w3b, b3, w4b, b4)
    return flat[:B].reshape(B, 3, 32, 32)


def init_params(key):
    """Deterministic init mimicking torch.nn.Linear default (U[-1/sqrt(fan_in), +])."""
    dims = [(Z_DIM, H1), (H1, H2), (H2, H3), (H3, OUT_DIM)]
    params = []
    for (fan_in, fan_out) in dims:
        key, kw, kb = jax.random.split(key, 3)
        bound = 1.0 / jnp.sqrt(fan_in)
        w = jax.random.uniform(kw, (fan_in, fan_out), jnp.float32, -bound, bound)
        b = jax.random.uniform(kb, (1, fan_out), jnp.float32, -bound, bound)
        params.append((w, b))
    return params


def _reference(z, params):
    """Mirrors the kernel math: bf16 weights & matmul inputs, f32 accumulate."""
    h = z
    for i, (w, b) in enumerate(params):
        h = jnp.dot(h.astype(jnp.bfloat16), w.astype(jnp.bfloat16),
                    preferred_element_type=jnp.float32) + b
        if i < len(params) - 1:
            h = jnp.where(h > 0, h, 0.2 * h)
    return h.reshape(-1, 3, 32, 32)


if __name__ == "__main__":
    key = jax.random.PRNGKey(0)
    key_p, key_z = jax.random.split(key)
    params = init_params(key_p)

    B = 8
    z = jax.random.normal(key_z, (B, Z_DIM), jnp.float32)

    img = fc_generator(z, params)
    jax.block_until_ready(img)

    assert img.shape == (B, 3, 32, 32), img.shape
    ref = _reference(z, params)
    assert jnp.allclose(img, ref, atol=1e-2, rtol=1e-2), "mismatch vs reference"

    print("KERNEL_OK")
</pallas_src>

<mosaic_0001>
module attributes {stable_mosaic.version = 11 : i64} {
  func.func @fc_generator_kernel(%arg0: i32, %arg1: memref<8x128xf32, #tpu.memory_space<vmem>>, %arg2: memref<128x256xbf16, #tpu.memory_space<vmem>>, %arg3: memref<1x256xf32, #tpu.memory_space<vmem>>, %arg4: memref<256x512xbf16, #tpu.memory_space<vmem>>, %arg5: memref<1x512xf32, #tpu.memory_space<vmem>>, %arg6: memref<512x1024xbf16, #tpu.memory_space<vmem>>, %arg7: memref<1x1024xf32, #tpu.memory_space<vmem>>, %arg8: memref<1024x3072xbf16, #tpu.memory_space<vmem>>, %arg9: memref<1x3072xf32, #tpu.memory_space<vmem>>, %arg10: memref<8x3072xf32, #tpu.memory_space<vmem>>) attributes {dimension_semantics = [#tpu.dimension_semantics<parallel>], iteration_bounds = array<i64: 1>, scalar_prefetch = 0 : i64, scratch_operands = 0 : i64, tpu.core_type = #tpu.core_type<tc>, window_params = [{transform_indices = @transform_0, window_bounds = array<i64: 8, 128>}, {pipeline_mode = #tpu.pipeline_mode<synchronous>, transform_indices = @transform_1, window_bounds = array<i64: 128, 256>}, {pipeline_mode = #tpu.pipeline_mode<synchronous>, transform_indices = @transform_2, window_bounds = array<i64: 1, 256>}, {pipeline_mode = #tpu.pipeline_mode<synchronous>, transform_indices = @transform_3, window_bounds = array<i64: 256, 512>}, {pipeline_mode = #tpu.pipeline_mode<synchronous>, transform_indices = @transform_4, window_bounds = array<i64: 1, 512>}, {pipeline_mode = #tpu.pipeline_mode<synchronous>, transform_indices = @transform_5, window_bounds = array<i64: 512, 1024>}, {pipeline_mode = #tpu.pipeline_mode<synchronous>, transform_indices = @transform_6, window_bounds = array<i64: 1, 1024>}, {pipeline_mode = #tpu.pipeline_mode<synchronous>, transform_indices = @transform_7, window_bounds = array<i64: 1024, 3072>}, {pipeline_mode = #tpu.pipeline_mode<synchronous>, transform_indices = @transform_8, window_bounds = array<i64: 1, 3072>}, {transform_indices = @transform_9, window_bounds = array<i64: 8, 3072>}]} {
    %c0 = arith.constant 0 : index
    %c0_0 = arith.constant 0 : index
    %0 = vector.load %arg1[%c0, %c0_0] : memref<8x128xf32, #tpu.memory_space<vmem>>, vector<8x128xf32>
    %1 = arith.truncf %0 : vector<8x128xf32> to vector<8x128xbf16>
    %c0_1 = arith.constant 0 : index
    %c0_2 = arith.constant 0 : index
    %2 = vector.load %arg2[%c0_1, %c0_2] : memref<128x256xbf16, #tpu.memory_space<vmem>>, vector<128x256xbf16>
    %cst = arith.constant dense<0.000000e+00> : vector<8x256xf32>
    %3 = tpu.matmul %1, %2, %cst {dimension_numbers = #tpu.dot_dimension_numbers<[1], [0], [0], [1], [0, 0, 1, 1], [], []>} : vector<8x128xbf16>, vector<128x256xbf16>, vector<8x256xf32> -> vector<8x256xf32>
    %c0_3 = arith.constant 0 : index
    %c0_4 = arith.constant 0 : index
    %4 = vector.load %arg3[%c0_3, %c0_4] : memref<1x256xf32, #tpu.memory_space<vmem>>, vector<1x256xf32>
    %5 = vector.broadcast %4 : vector<1x256xf32> to vector<8x256xf32>
    %6 = arith.addf %3, %5 : vector<8x256xf32>
    %cst_5 = arith.constant 0.000000e+00 : f32
    %7 = vector.broadcast %cst_5 : f32 to vector<8x256xf32>
    %8 = arith.cmpf ogt, %6, %7 : vector<8x256xf32>
    %cst_6 = arith.constant 2.000000e-01 : f32
    %9 = vector.broadcast %cst_6 : f32 to vector<8x256xf32>
    %10 = arith.mulf %9, %6 : vector<8x256xf32>
    %11 = arith.select %8, %6, %10 : vector<8x256xi1>, vector<8x256xf32>
    %12 = arith.truncf %11 : vector<8x256xf32> to vector<8x256xbf16>
    %c0_7 = arith.constant 0 : index
    %c0_8 = arith.constant 0 : index
    %13 = vector.load %arg4[%c0_7, %c0_8] : memref<256x512xbf16, #tpu.memory_space<vmem>>, vector<256x512xbf16>
    %cst_9 = arith.constant dense<0.000000e+00> : vector<8x512xf32>
    %14 = tpu.matmul %12, %13, %cst_9 {dimension_numbers = #tpu.dot_dimension_numbers<[1], [0], [0], [1], [0, 0, 1, 1], [], []>} : vector<8x256xbf16>, vector<256x512xbf16>, vector<8x512xf32> -> vector<8x512xf32>
    %c0_10 = arith.constant 0 : index
    %c0_11 = arith.constant 0 : index
    %15 = vector.load %arg5[%c0_10, %c0_11] : memref<1x512xf32, #tpu.memory_space<vmem>>, vector<1x512xf32>
    %16 = vector.broadcast %15 : vector<1x512xf32> to vector<8x512xf32>
    %17 = arith.addf %14, %16 : vector<8x512xf32>
    %cst_12 = arith.constant 0.000000e+00 : f32
    %18 = vector.broadcast %cst_12 : f32 to vector<8x512xf32>
    %19 = arith.cmpf ogt, %17, %18 : vector<8x512xf32>
    %cst_13 = arith.constant 2.000000e-01 : f32
    %20 = vector.broadcast %cst_13 : f32 to vector<8x512xf32>
    %21 = arith.mulf %20, %17 : vector<8x512xf32>
    %22 = arith.select %19, %17, %21 : vector<8x512xi1>, vector<8x512xf32>
    %23 = arith.truncf %22 : vector<8x512xf32> to vector<8x512xbf16>
    %c0_14 = arith.constant 0 : index
    %c0_15 = arith.constant 0 : index
    %24 = vector.load %arg6[%c0_14, %c0_15] : memref<512x1024xbf16, #tpu.memory_space<vmem>>, vector<512x1024xbf16>
    %cst_16 = arith.constant dense<0.000000e+00> : vector<8x1024xf32>
    %25 = tpu.matmul %23, %24, %cst_16 {dimension_numbers = #tpu.dot_dimension_numbers<[1], [0], [0], [1], [0, 0, 1, 1], [], []>} : vector<8x512xbf16>, vector<512x1024xbf16>, vector<8x1024xf32> -> vector<8x1024xf32>
    %c0_17 = arith.constant 0 : index
    %c0_18 = arith.constant 0 : index
    %26 = vector.load %arg7[%c0_17, %c0_18] : memref<1x1024xf32, #tpu.memory_space<vmem>>, vector<1x1024xf32>
    %27 = vector.broadcast %26 : vector<1x1024xf32> to vector<8x1024xf32>
    %28 = arith.addf %25, %27 : vector<8x1024xf32>
    %cst_19 = arith.constant 0.000000e+00 : f32
    %29 = vector.broadcast %cst_19 : f32 to vector<8x1024xf32>
    %30 = arith.cmpf ogt, %28, %29 : vector<8x1024xf32>
    %cst_20 = arith.constant 2.000000e-01 : f32
    %31 = vector.broadcast %cst_20 : f32 to vector<8x1024xf32>
    %32 = arith.mulf %31, %28 : vector<8x1024xf32>
    %33 = arith.select %30, %28, %32 : vector<8x1024xi1>, vector<8x1024xf32>
    %34 = arith.truncf %33 : vector<8x1024xf32> to vector<8x1024xbf16>
    %c0_21 = arith.constant 0 : index
    %c0_22 = arith.constant 0 : index
    %35 = vector.load %arg8[%c0_21, %c0_22] : memref<1024x3072xbf16, #tpu.memory_space<vmem>>, vector<1024x3072xbf16>
    %cst_23 = arith.constant dense<0.000000e+00> : vector<8x3072xf32>
    %36 = tpu.matmul %34, %35, %cst_23 {dimension_numbers = #tpu.dot_dimension_numbers<[1], [0], [0], [1], [0, 0, 1, 1], [], []>} : vector<8x1024xbf16>, vector<1024x3072xbf16>, vector<8x3072xf32> -> vector<8x3072xf32>
    %c0_24 = arith.constant 0 : index
    %c0_25 = arith.constant 0 : index
    %37 = vector.load %arg9[%c0_24, %c0_25] : memref<1x3072xf32, #tpu.memory_space<vmem>>, vector<1x3072xf32>
    %38 = vector.broadcast %37 : vector<1x3072xf32> to vector<8x3072xf32>
    %39 = arith.addf %36, %38 : vector<8x3072xf32>
    %c0_26 = arith.constant 0 : index
    %c0_27 = arith.constant 0 : index
    %40 = vector.load %arg10[%c0_26, %c0_27] : memref<8x3072xf32, #tpu.memory_space<vmem>>, vector<8x3072xf32>
    tpu.vector_store %arg10[%c0_26, %c0_27], %39 {strides = array<i32>} : memref<8x3072xf32, #tpu.memory_space<vmem>>, vector<8x3072xf32>,
    return
  }
  func.func @transform_0(%arg0: i32) -> (i32, i32) {
    %c0_i32 = arith.constant 0 : i32
    %c0_i32_0 = arith.constant 0 : i32
    return %arg0, %c0_i32 : i32, i32
  }
  func.func @transform_1(%arg0: i32) -> (i32, i32) {
    %c0_i32 = arith.constant 0 : i32
    %c0_i32_0 = arith.constant 0 : i32
    %c0_i32_1 = arith.constant 0 : i32
    return %c0_i32, %c0_i32_0 : i32, i32
  }
  func.func @transform_2(%arg0: i32) -> (i32, i32) {
    %c0_i32 = arith.constant 0 : i32
    %c0_i32_0 = arith.constant 0 : i32
    %c0_i32_1 = arith.constant 0 : i32
    return %c0_i32, %c0_i32_0 : i32, i32
  }
  func.func @transform_3(%arg0: i32) -> (i32, i32) {
    %c0_i32 = arith.constant 0 : i32
    %c0_i32_0 = arith.constant 0 : i32
    %c0_i32_1 = arith.constant 0 : i32
    return %c0_i32, %c0_i32_0 : i32, i32
  }
  func.func @transform_4(%arg0: i32) -> (i32, i32) {
    %c0_i32 = arith.constant 0 : i32
    %c0_i32_0 = arith.constant 0 : i32
    %c0_i32_1 = arith.constant 0 : i32
    return %c0_i32, %c0_i32_0 : i32, i32
  }
  func.func @transform_5(%arg0: i32) -> (i32, i32) {
    %c0_i32 = arith.constant 0 : i32
    %c0_i32_0 = arith.constant 0 : i32
    %c0_i32_1 = arith.constant 0 : i32
    return %c0_i32, %c0_i32_0 : i32, i32
  }
  func.func @transform_6(%arg0: i32) -> (i32, i32) {
    %c0_i32 = arith.constant 0 : i32
    %c0_i32_0 = arith.constant 0 : i32
    %c0_i32_1 = arith.constant 0 : i32
    return %c0_i32, %c0_i32_0 : i32, i32
  }
  func.func @transform_7(%arg0: i32) -> (i32, i32) {
    %c0_i32 = arith.constant 0 : i32
    %c0_i32_0 = arith.constant 0 : i32
    %c0_i32_1 = arith.constant 0 : i32
    return %c0_i32, %c0_i32_0 : i32, i32
  }
  func.func @transform_8(%arg0: i32) -> (i32, i32) {
    %c0_i32 = arith.constant 0 : i32
    %c0_i32_0 = arith.constant 0 : i32
    %c0_i32_1 = arith.constant 0 : i32
    return %c0_i32, %c0_i32_0 : i32, i32
  }
  func.func @transform_9(%arg0: i32) -> (i32, i32) {
    %c0_i32 = arith.constant 0 : i32
    %c0_i32_0 = arith.constant 0 : i32
    return %arg0, %c0_i32 : i32, i32
  }
}

</mosaic_0001>

<llo_original>
// kernel: tpu_custom_call.1
$region0: #{tpu_custom_call.1}
  #allocation0 [shape = 'u32[]', space=smem, size = 0x4, offset = 0x4, fixed_abs, tag = 'smem constant byte address 0x4 - core index']
  #allocation1 [shape = 'u32[144,128]{1,0:T(1,128)}', space=vmem, size = 0x12000, scoped, tag = 'internal scratch']
  %s0 = inlined_call_operand.hbm [shape: f32[8,128], index: 0, kind: input, shape index: {}]
  %s1 = inlined_call_operand.hbm [shape: bf16[128,256], index: 1, kind: input, shape index: {}]
  %s2 = inlined_call_operand.hbm [shape: f32[1,256], index: 2, kind: input, shape index: {}]
  %s3 = inlined_call_operand.hbm [shape: bf16[256,512], index: 3, kind: input, shape index: {}]
  %s4 = inlined_call_operand.hbm [shape: f32[1,512], index: 4, kind: input, shape index: {}]
  %s5 = inlined_call_operand.hbm [shape: bf16[512,1024], index: 5, kind: input, shape index: {}]
  %s6 = inlined_call_operand.hbm [shape: f32[1,1024], index: 6, kind: input, shape index: {}]
  %s7 = inlined_call_operand.hbm [shape: bf16[1024,3072], index: 7, kind: input, shape index: {}]
  %s8 = inlined_call_operand.hbm [shape: f32[1,3072], index: 8, kind: input, shape index: {}]
  %s9 = inlined_call_operand.hbm [shape: f32[8,3072], index: 9, kind: output, shape index: {}]
  %s10 = sld [smem:[#allocation0]]
  $region82: #{tpu_custom_call.1} parent=0
    _
  %s12 = ssub.s32 1, %s10
  %s13 = scalar_select 0, %s12, %s10
  $region1: #{tpu_custom_call.1} parent=0
    #allocation2 [shape = 'u8[4096]{0}', space=vmem, size = 0x1000, scoped, tag = 'input window, operand 0, single buffered']
    #allocation3 [shape = 's32[1]{0}', space=sflag, size = 0x4, scoped, tag = 'scoped memory for tpu_custom_call.1']
    #allocation4 [shape = 's32[1]{0}', space=sflag, size = 0x4, scoped, tag = 'scoped memory for tpu_custom_call.1']
    #allocation5 [shape = 'u8[65536]{0}', space=vmem, size = 0x10000, scoped, tag = 'input window, operand 1, single buffered']
    #allocation6 [shape = 's32[1]{0}', space=sflag, size = 0x4, scoped, tag = 'scoped memory for tpu_custom_call.1']
    #allocation7 [shape = 'u8[1024]{0}', space=vmem, size = 0x400, scoped, tag = 'input window, operand 2, single buffered']
    #allocation8 [shape = 'u8[262144]{0}', space=vmem, size = 0x40000, scoped, tag = 'input window, operand 3, single buffered']
    #allocation9 [shape = 's32[1]{0}', space=sflag, size = 0x4, scoped, tag = 'scoped memory for tpu_custom_call.1']
    #allocation10 [shape = 'u8[2048]{0}', space=vmem, size = 0x800, scoped, tag = 'input window, operand 4, single buffered']
    #allocation11 [shape = 'u8[1048576]{0}', space=vmem, size = 0x100000, scoped, tag = 'input window, operand 5, single buffered']
    #allocation12 [shape = 's32[1]{0}', space=sflag, size = 0x4, scoped, tag = 'scoped memory for tpu_custom_call.1']
    #allocation13 [shape = 'u8[4096]{0}', space=vmem, size = 0x1000, scoped, tag = 'input window, operand 6, single buffered']
    #allocation14 [shape = 'u8[6291456]{0}', space=vmem, size = 0x600000, scoped, tag = 'input window, operand 7, single buffered']
    #allocation15 [shape = 's32[1]{0}', space=sflag, size = 0x4, scoped, tag = 'scoped memory for tpu_custom_call.1']
    #allocation16 [shape = 'u8[12288]{0}', space=vmem, size = 0x3000, scoped, tag = 'input window, operand 8, single buffered']
    #allocation17 [shape = 'u8[98304]{0}', space=vmem, size = 0x18000, scoped, tag = 'output window, operand 0, single buffered']
    %14 = vsyncpa [#allocation3], 0
    %15 = vsyncpa [#allocation6], 0
    %16 = vsyncpa [#allocation9], 0
    %17 = vsyncpa [#allocation12], 0
    %18 = vsyncpa [#allocation15], 0
    %19 = vsyncpa [#allocation4], 0
    // Predicated region
    $region2: #{tpu_custom_call.1} parent=1 // pred_check
      _
    $region3: #{tpu_custom_call.1} parent=1 // pred_check_branch
      %21 = sbr.rel (0) target = $region5
    $region4: #{tpu_custom_call.1} parent=1 // pred_region
      %s23 = ssub.s32 128, 128
      %24 = vsyncadd [#allocation3], %s23
      %s26 = sshll.u32 [#allocation2], 4
      %s27 = int_to_ptr.vmem [resolvable:$true] %s26
      %29 = dma.hbm_to_vmem [thread:$0]  %s0, 128, %s27, [#allocation3]
    $region5: #{tpu_custom_call.1} parent=1 // pred_fallthru
      _
    // Predicated region
    $region6: #{tpu_custom_call.1} parent=1 // pred_check
      _
    $region7: #{tpu_custom_call.1} parent=1 // pred_check_branch
      %31 = sbr.rel (0) target = $region9
    $region8: #{tpu_custom_call.1} parent=1 // pred_region
      %s33 = ssub.s32 2048, 2048
      %34 = vsyncadd [#allocation6], %s33
      %s35 = sshll.u32 [#allocation5], 4
      %s36 = int_to_ptr.vmem [resolvable:$true] %s35
      %41 = dma.hbm_to_vmem [thread:$0]  %s1, 2048, %s36, [#allocation6], 128, 128, 8
    $region9: #{tpu_custom_call.1} parent=1 // pred_fallthru
      _
    // Predicated region
    $region10: #{tpu_custom_call.1} parent=1 // pred_check
      _
    $region11: #{tpu_custom_call.1} parent=1 // pred_check_branch
      %43 = sbr.rel (0) target = $region13
    $region12: #{tpu_custom_call.1} parent=1 // pred_region
      %s45 = ssub.s32 32, 32
      %46 = vsyncadd [#allocation6], %s45
      %s48 = sshll.u32 [#allocation7], 4
      %s49 = int_to_ptr.vmem [resolvable:$true] %s48
      %51 = dma.hbm_to_vmem [thread:$0]  %s2, 32, %s49, [#allocation6]
    $region13: #{tpu_custom_call.1} parent=1 // pred_fallthru
      _
    // Predicated region
    $region14: #{tpu_custom_call.1} parent=1 // pred_check
      _
    $region15: #{tpu_custom_call.1} parent=1 // pred_check_branch
      %53 = sbr.rel (0) target = $region17
    $region16: #{tpu_custom_call.1} parent=1 // pred_region
      %s55 = ssub.s32 8192, 8192
      %56 = vsyncadd [#allocation9], %s55
      %s57 = sshll.u32 [#allocation8], 4
      %s58 = int_to_ptr.vmem [resolvable:$true] %s57
      %63 = dma.hbm_to_vmem [thread:$0]  %s3, 8192, %s58, [#allocation9], 256, 256, 16
    $region17: #{tpu_custom_call.1} parent=1 // pred_fallthru
      _
    // Predicated region
    $region18: #{tpu_custom_call.1} parent=1 // pred_check
      _
    $region19: #{tpu_custom_call.1} parent=1 // pred_check_branch
      %65 = sbr.rel (0) target = $region21
    $region20: #{tpu_custom_call.1} parent=1 // pred_region
      %s67 = ssub.s32 64, 64
      %68 = vsyncadd [#allocation9], %s67
      %s70 = sshll.u32 [#allocation10], 4
      %s71 = int_to_ptr.vmem [resolvable:$true] %s70
      %73 = dma.hbm_to_vmem [thread:$0]  %s4, 64, %s71, [#allocation9]
    $region21: #{tpu_custom_call.1} parent=1 // pred_fallthru
      _
    // Predicated region
    $region22: #{tpu_custom_call.1} parent=1 // pred_check
      _
    $region23: #{tpu_custom_call.1} parent=1 // pred_check_branch
      %75 = sbr.rel (0) target = $region25
    $region24: #{tpu_custom_call.1} parent=1 // pred_region
      %s77 = ssub.s32 32768, 32768
      %78 = vsyncadd [#allocation12], %s77
      %s79 = sshll.u32 [#allocation11], 4
      %s80 = int_to_ptr.vmem [resolvable:$true] %s79
      %85 = dma.hbm_to_vmem [thread:$0]  %s5, 32768, %s80, [#allocation12], 512, 512, 32
    $region25: #{tpu_custom_call.1} parent=1 // pred_fallthru
      _
    // Predicated region
    $region26: #{tpu_custom_call.1} parent=1 // pred_check
      _
    $region27: #{tpu_custom_call.1} parent=1 // pred_check_branch
      %87 = sbr.rel (0) target = $region29
    $region28: #{tpu_custom_call.1} parent=1 // pred_region
      %s89 = ssub.s32 128, 128
      %90 = vsyncadd [#allocation12], %s89
      %s92 = sshll.u32 [#allocation13], 4
      %s93 = int_to_ptr.vmem [resolvable:$true] %s92
      %95 = dma.hbm_to_vmem [thread:$0]  %s6, 128, %s93, [#allocation12]
    $region29: #{tpu_custom_call.1} parent=1 // pred_fallthru
      _
    // Predicated region
    $region30: #{tpu_custom_call.1} parent=1 // pred_check
      _
    $region31: #{tpu_custom_call.1} parent=1 // pred_check_branch
      %97 = sbr.rel (0) target = $region33
    $region32: #{tpu_custom_call.1} parent=1 // pred_region
      %s99 = ssub.s32 196608, 196608
      %100 = vsyncadd [#allocation15], %s99
      %s101 = sshll.u32 [#allocation14], 4
      %s102 = int_to_ptr.vmem [resolvable:$true] %s101
      %107 = dma.hbm_to_vmem [thread:$0]  %s7, 196608, %s102, [#allocation15], 1536, 1536, 96
    $region33: #{tpu_custom_call.1} parent=1 // pred_fallthru
      _
    // Predicated region
    $region34: #{tpu_custom_call.1} parent=1 // pred_check
      _
    $region35: #{tpu_custom_call.1} parent=1 // pred_check_branch
      %109 = sbr.rel (0) target = $region37
    $region36: #{tpu_custom_call.1} parent=1 // pred_region
      %s111 = ssub.s32 384, 384
      %112 = vsyncadd [#allocation15], %s111
      %s114 = sshll.u32 [#allocation16], 4
      %s115 = int_to_ptr.vmem [resolvable:$true] %s114
      %117 = dma.hbm_to_vmem [thread:$0]  %s8, 384, %s115, [#allocation15]
    $region37: #{tpu_custom_call.1} parent=1 // pred_fallthru
      _
    // Predicated region
    $region38: #{tpu_custom_call.1} parent=1 // pred_check
      _
    $region39: #{tpu_custom_call.1} parent=1 // pred_check_branch
      %119 = sbr.rel (0) target = $region41
    $region40: #{tpu_custom_call.1} parent=1 // pred_region
      %120 = dma.done [#allocation3], 128
    $region41: #{tpu_custom_call.1} parent=1 // pred_fallthru
      _
    // Predicated region
    $region42: #{tpu_custom_call.1} parent=1 // pred_check
      _
    $region43: #{tpu_custom_call.1} parent=1 // pred_check_branch
      %122 = sbr.rel (0) target = $region45
    $region44: #{tpu_custom_call.1} parent=1 // pred_region
      %123 = dma.done [#allocation6], 2048
    $region45: #{tpu_custom_call.1} parent=1 // pred_fallthru
      _
    // Predicated region
    $region46: #{tpu_custom_call.1} parent=1 // pred_check
      _
    $region47: #{tpu_custom_call.1} parent=1 // pred_check_branch
      %125 = sbr.rel (0) target = $region49
    $region48: #{tpu_custom_call.1} parent=1 // pred_region
      %126 = dma.done [#allocation6], 32
    $region49: #{tpu_custom_call.1} parent=1 // pred_fallthru
      _
    // Predicated region
    $region50: #{tpu_custom_call.1} parent=1 // pred_check
      _
    $region51: #{tpu_custom_call.1} parent=1 // pred_check_branch
      %128 = sbr.rel (0) target = $region53
    $region52: #{tpu_custom_call.1} parent=1 // pred_region
      %129 = dma.done [#allocation9], 8192
    $region53: #{tpu_custom_call.1} parent=1 // pred_fallthru
      _
    // Predicated region
    $region54: #{tpu_custom_call.1} parent=1 // pred_check
      _
    $region55: #{tpu_custom_call.1} parent=1 // pred_check_branch
      %131 = sbr.rel (0) target = $region57
    $region56: #{tpu_custom_call.1} parent=1 // pred_region
      %132 = dma.done [#allocation9], 64
    $region57: #{tpu_custom_call.1} parent=1 // pred_fallthru
      _
    // Predicated region
    $region58: #{tpu_custom_call.1} parent=1 // pred_check
      _
    $region59: #{tpu_custom_call.1} parent=1 // pred_check_branch
      %134 = sbr.rel (0) target = $region61
    $region60: #{tpu_custom_call.1} parent=1 // pred_region
      %135 = dma.done [#allocation12], 32768
    $region61: #{tpu_custom_call.1} parent=1 // pred_fallthru
      _
    // Predicated region
    $region62: #{tpu_custom_call.1} parent=1 // pred_check
      _
    $region63: #{tpu_custom_call.1} parent=1 // pred_check_branch
      %137 = sbr.rel (0) target = $region65
    $region64: #{tpu_custom_call.1} parent=1 // pred_region
      %138 = dma.done [#allocation12], 128
    $region65: #{tpu_custom_call.1} parent=1 // pred_fallthru
      _
    // Predicated region
    $region66: #{tpu_custom_call.1} parent=1 // pred_check
      _
    $region67: #{tpu_custom_call.1} parent=1 // pred_check_branch
      %140 = sbr.rel (0) target = $region69
    $region68: #{tpu_custom_call.1} parent=1 // pred_region
      %141 = dma.done [#allocation15], 196608
    $region69: #{tpu_custom_call.1} parent=1 // pred_fallthru
      _
    // Predicated region
    $region70: #{tpu_custom_call.1} parent=1 // pred_check
      _
    $region71: #{tpu_custom_call.1} parent=1 // pred_check_branch
      %143 = sbr.rel (0) target = $region73
    $region72: #{tpu_custom_call.1} parent=1 // pred_region
      %144 = dma.done [#allocation15], 384
    $region73: #{tpu_custom_call.1} parent=1 // pred_fallthru
      _
    %v146 = vld [vmem:[#allocation2] sm:$0xff]
    %v147 = vpack.c.bf16 %v146, %v146
    %v148 = vld [vmem:[#allocation5] sm:$0xff]
    %v149 = vld [vmem:[#allocation5 + $0x8] sm:$0xff]
    %v150 = vld [vmem:[#allocation5 + $0x10] sm:$0xff]
    %v151 = vld [vmem:[#allocation5 + $0x18] sm:$0xff]
    %v152 = vld [vmem:[#allocation5 + $0x20] sm:$0xff]
    %v153 = vld [vmem:[#allocation5 + $0x28] sm:$0xff]
    %v154 = vld [vmem:[#allocation5 + $0x30] sm:$0xff]
    %v155 = vld [vmem:[#allocation5 + $0x38] sm:$0xff]
    %v156 = vld [vmem:[#allocation5 + $0x40] sm:$0xff]
    %v157 = vld [vmem:[#allocation5 + $0x48] sm:$0xff]
    %v158 = vld [vmem:[#allocation5 + $0x50] sm:$0xff]
    %v159 = vld [vmem:[#allocation5 + $0x58] sm:$0xff]
    %v160 = vld [vmem:[#allocation5 + $0x60] sm:$0xff]
    %v161 = vld [vmem:[#allocation5 + $0x68] sm:$0xff]
    %v162 = vld [vmem:[#allocation5 + $0x70] sm:$0xff]
    %v163 = vld [vmem:[#allocation5 + $0x78] sm:$0xff]
    %v164 = vld [vmem:[#allocation7] sm:$0x3]
    %v166 = vlaneseq
    %v167 = vshrl.u32 %v166, 7
    %v168 = vsub.s32 0, %v167
    %v169 = vrot.slane %v164, %v168
    %v170 = vlaneseq
    %v171 = vshrl.u32 %v170, 7
    %v172 = vsub.s32 1, %v171
    %v173 = vrot.slane %v164, %v172
    %v192 = vunpack.c.l.b16 %v148
    %v193 = vunpack.c.h.b16 %v148
    %v194 = vunpack.c.l.b16 %v149
    %v195 = vunpack.c.h.b16 %v149
    %v196 = vunpack.c.l.b16 %v150
    %v197 = vunpack.c.h.b16 %v150
    %v198 = vunpack.c.l.b16 %v151
    %v199 = vunpack.c.h.b16 %v151
    %v200 = vunpack.c.l.b16 %v152
    %v201 = vunpack.c.h.b16 %v152
    %v202 = vunpack.c.l.b16 %v153
    %v203 = vunpack.c.h.b16 %v153
    %v204 = vunpack.c.l.b16 %v154
    %v205 = vunpack.c.h.b16 %v154
    %v206 = vunpack.c.l.b16 %v155
    %v207 = vunpack.c.h.b16 %v155
    %v208 = vunpack.c.l.b16 %v156
    %v209 = vunpack.c.h.b16 %v156
    %v210 = vunpack.c.l.b16 %v157
    %v211 = vunpack.c.h.b16 %v157
    %v212 = vunpack.c.l.b16 %v158
    %v213 = vunpack.c.h.b16 %v158
    %v214 = vunpack.c.l.b16 %v159
    %v215 = vunpack.c.h.b16 %v159
    %v216 = vunpack.c.l.b16 %v160
    %v217 = vunpack.c.h.b16 %v160
    %v218 = vunpack.c.l.b16 %v161
    %v219 = vunpack.c.h.b16 %v161
    %v220 = vunpack.c.l.b16 %v162
    %v221 = vunpack.c.h.b16 %v162
    %v222 = vunpack.c.l.b16 %v163
    %v223 = vunpack.c.h.b16 %v163
    %v224 = vpack.c.b16 %v194, %v192
    %v225 = vpack.c.b16 %v195, %v193
    %v226 = vpack.c.b16 %v198, %v196
    %v227 = vpack.c.b16 %v199, %v197
    %v228 = vpack.c.b16 %v202, %v200
    %v229 = vpack.c.b16 %v203, %v201
    %v230 = vpack.c.b16 %v206, %v204
    %v231 = vpack.c.b16 %v207, %v205
    %v232 = vpack.c.b16 %v210, %v208
    %v233 = vpack.c.b16 %v211, %v209
    %v234 = vpack.c.b16 %v214, %v212
    %v235 = vpack.c.b16 %v215, %v213
    %v236 = vpack.c.b16 %v218, %v216
    %v237 = vpack.c.b16 %v219, %v217
    %v238 = vpack.c.b16 %v222, %v220
    %v239 = vpack.c.b16 %v223, %v221
    %256 = vmatprep.subr.bf16.mxu0 %v225
    %257 = vmatpush1.bf16.msra.mxu0 %v224
    %258 = vmatprep.subr.bf16.mxu0 %v227
    %259 = vmatpush1.bf16.msra.mxu0 %v226
    %260 = vmatprep.subr.bf16.mxu0 %v229
    %261 = vmatpush1.bf16.msra.mxu0 %v228
    %262 = vmatprep.subr.bf16.mxu0 %v231
    %263 = vmatpush1.bf16.msra.mxu0 %v230
    %264 = vmatprep.subr.bf16.mxu0 %v233
    %265 = vmatpush1.bf16.msra.mxu0 %v232
    %266 = vmatprep.subr.bf16.mxu0 %v235
    %267 = vmatpush1.bf16.msra.mxu0 %v234
    %268 = vmatprep.subr.bf16.mxu0 %v237
    %269 = vmatpush1.bf16.msra.mxu0 %v236
    %270 = vmatprep.subr.bf16.mxu0 %v239
    %271 = vmatpush1.bf16.msra.mxu0 %v238
    %272 = vmatprep.subr.bf16.mxu0 0
    %273 = vmatpush1.bf16.msra.mxu0 0
    %274 = vmatprep.subr.bf16.mxu0 0
    %275 = vmatpush1.bf16.msra.mxu0 0
    %276 = vmatprep.subr.bf16.mxu0 0
    %277 = vmatpush1.bf16.msra.mxu0 0
    %278 = vmatprep.subr.bf16.mxu0 0
    %279 = vmatpush1.bf16.msra.mxu0 0
    %280 = vmatprep.subr.bf16.mxu0 0
    %281 = vmatpush1.bf16.msra.mxu0 0
    %282 = vmatprep.subr.bf16.mxu0 0
    %283 = vmatpush1.bf16.msra.mxu0 0
    %284 = vmatprep.subr.bf16.mxu0 0
    %285 = vmatpush1.bf16.msra.mxu0 0
    %286 = vmatprep.subr.bf16.mxu0 0
    %287 = vmatpush1.bf16.msra.mxu0 0
    %288 = vmatprep.mubr.bf16.mxu0 0
    %289 = vmatmul.mubr.bf16.gmra.mrb[0].mxu0 %v147
    %v290 = vpop.f32.mrb[0].mxu0
    %v291 = vadd.f32 %v169, %v290
    %v292 = vpop.f32.mrb[0].mxu0
    %v293 = vadd.f32 %v173, %v292
    %v294 = vpop.f32.mrb[0].mxu0
    %v295 = vpop.f32.mrb[0].mxu0
    %296 = vdwg.mxu0
    %vm297 = vcmp.gt.f32.partialorder %v291, 0.0
    %vm298 = vcmp.gt.f32.partialorder %v293, 0.0
    %v299 = vmul.f32 %v291, 0.2
    %v300 = vmul.f32 %v293, 0.2
    %v301 = vsel %vm297, %v291, %v299
    %v302 = vsel %vm298, %v293, %v300
    %v303 = vpack.c.bf16 %v301, %v301
    %v304 = vpack.c.bf16 %v302, %v302
    %v305 = vld [vmem:[#allocation8] sm:$0xff]
    %v306 = vld [vmem:[#allocation8 + $0x8] sm:$0xff]
    %v307 = vld [vmem:[#allocation8 + $0x10] sm:$0xff]
    %v308 = vld [vmem:[#allocation8 + $0x18] sm:$0xff]
    %v309 = vld [vmem:[#allocation8 + $0x20] sm:$0xff]
    %v310 = vld [vmem:[#allocation8 + $0x28] sm:$0xff]
    %v311 = vld [vmem:[#allocation8 + $0x30] sm:$0xff]
    %v312 = vld [vmem:[#allocation8 + $0x38] sm:$0xff]
    %v313 = vld [vmem:[#allocation8 + $0x40] sm:$0xff]
    %v314 = vld [vmem:[#allocation8 + $0x48] sm:$0xff]
    %v315 = vld [vmem:[#allocation8 + $0x50] sm:$0xff]
    %v316 = vld [vmem:[#allocation8 + $0x58] sm:$0xff]
    %v317 = vld [vmem:[#allocation8 + $0x60] sm:$0xff]
    %v318 = vld [vmem:[#allocation8 + $0x68] sm:$0xff]
    %v319 = vld [vmem:[#allocation8 + $0x70] sm:$0xff]
    %v320 = vld [vmem:[#allocation8 + $0x78] sm:$0xff]
    %v321 = vld [vmem:[#allocation8 + $0x80] sm:$0xff]
    %v322 = vld [vmem:[#allocation8 + $0x88] sm:$0xff]
    %v323 = vld [vmem:[#allocation8 + $0x90] sm:$0xff]
    %v324 = vld [vmem:[#allocation8 + $0x98] sm:$0xff]
    %v325 = vld [vmem:[#allocation8 + $0xa0] sm:$0xff]
    %v326 = vld [vmem:[#allocation8 + $0xa8] sm:$0xff]
    %v327 = vld [vmem:[#allocation8 + $0xb0] sm:$0xff]
    %v328 = vld [vmem:[#allocation8 + $0xb8] sm:$0xff]
    %v329 = vld [vmem:[#allocation8 + $0xc0] sm:$0xff]
    %v330 = vld [vmem:[#allocation8 + $0xc8] sm:$0xff]
    %v331 = vld [vmem:[#allocation8 + $0xd0] sm:$0xff]
    %v332 = vld [vmem:[#allocation8 + $0xd8] sm:$0xff]
    %v333 = vld [vmem:[#allocation8 + $0xe0] sm:$0xff]
    %v334 = vld [vmem:[#allocation8 + $0xe8] sm:$0xff]
    %v335 = vld [vmem:[#allocation8 + $0xf0] sm:$0xff]
    %v336 = vld [vmem:[#allocation8 + $0xf8] sm:$0xff]
    %v337 = vld [vmem:[#allocation8 + $0x100] sm:$0xff]
    %v338 = vld [vmem:[#allocation8 + $0x108] sm:$0xff]
    %v339 = vld [vmem:[#allocation8 + $0x110] sm:$0xff]
    %v340 = vld [vmem:[#allocation8 + $0x118] sm:$0xff]
    %v341 = vld [vmem:[#allocation8 + $0x120] sm:$0xff]
    %v342 = vld [vmem:[#allocation8 + $0x128] sm:$0xff]
    %v343 = vld [vmem:[#allocation8 + $0x130] sm:$0xff]
    %v344 = vld [vmem:[#allocation8 + $0x138] sm:$0xff]
    %v345 = vld [vmem:[#allocation8 + $0x140] sm:$0xff]
    %v346 = vld [vmem:[#allocation8 + $0x148] sm:$0xff]
    %v347 = vld [vmem:[#allocation8 + $0x150] sm:$0xff]
    %v348 = vld [vmem:[#allocation8 + $0x158] sm:$0xff]
    %v349 = vld [vmem:[#allocation8 + $0x160] sm:$0xff]
    %v350 = vld [vmem:[#allocation8 + $0x168] sm:$0xff]
    %v351 = vld [vmem:[#allocation8 + $0x170] sm:$0xff]
    %v352 = vld [vmem:[#allocation8 + $0x178] sm:$0xff]
    %v353 = vld [vmem:[#allocation8 + $0x180] sm:$0xff]
    %v354 = vld [vmem:[#allocation8 + $0x188] sm:$0xff]
    %v355 = vld [vmem:[#allocation8 + $0x190] sm:$0xff]
    %v356 = vld [vmem:[#allocation8 + $0x198] sm:$0xff]
    %v357 = vld [vmem:[#allocation8 + $0x1a0] sm:$0xff]
    %v358 = vld [vmem:[#allocation8 + $0x1a8] sm:$0xff]
    %v359 = vld [vmem:[#allocation8 + $0x1b0] sm:$0xff]
    %v360 = vld [vmem:[#allocation8 + $0x1b8] sm:$0xff]
    %v361 = vld [vmem:[#allocation8 + $0x1c0] sm:$0xff]
    %v362 = vld [vmem:[#allocation8 + $0x1c8] sm:$0xff]
    %v363 = vld [vmem:[#allocation8 + $0x1d0] sm:$0xff]
    %v364 = vld [vmem:[#allocation8 + $0x1d8] sm:$0xff]
    %v365 = vld [vmem:[#allocation8 + $0x1e0] sm:$0xff]
    %v366 = vld [vmem:[#allocation8 + $0x1e8] sm:$0xff]
    %v367 = vld [vmem:[#allocation8 + $0x1f0] sm:$0xff]
    %v368 = vld [vmem:[#allocation8 + $0x1f8] sm:$0xff]
    %v369 = vld [vmem:[#allocation10] sm:$0xf]
    %v371 = vlaneseq
    %v372 = vshrl.u32 %v371, 7
    %v373 = vsub.s32 0, %v372
    %v374 = vrot.slane %v369, %v373
    %v375 = vlaneseq
    %v376 = vshrl.u32 %v375, 7
    %v377 = vsub.s32 1, %v376
    %v378 = vrot.slane %v369, %v377
    %v379 = vlaneseq
    %v380 = vshrl.u32 %v379, 7
    %v381 = vsub.s32 2, %v380
    %v382 = vrot.slane %v369, %v381
    %v383 = vlaneseq
    %v384 = vshrl.u32 %v383, 7
    %v385 = vsub.s32 3, %v384
    %v386 = vrot.slane %v369, %v385
    %v455 = vunpack.c.l.b16 %v305
    %v456 = vunpack.c.h.b16 %v305
    %v457 = vunpack.c.l.b16 %v306
    %v458 = vunpack.c.h.b16 %v306
    %v459 = vunpack.c.l.b16 %v307
    %v460 = vunpack.c.h.b16 %v307
    %v461 = vunpack.c.l.b16 %v308
    %v462 = vunpack.c.h.b16 %v308
    %v463 = vunpack.c.l.b16 %v309
    %v464 = vunpack.c.h.b16 %v309
    %v465 = vunpack.c.l.b16 %v310
    %v466 = vunpack.c.h.b16 %v310
    %v467 = vunpack.c.l.b16 %v311
    %v468 = vunpack.c.h.b16 %v311
    %v469 = vunpack.c.l.b16 %v312
    %v470 = vunpack.c.h.b16 %v312
    %v471 = vunpack.c.l.b16 %v313
    %v472 = vunpack.c.h.b16 %v313
    %v473 = vunpack.c.l.b16 %v314
    %v474 = vunpack.c.h.b16 %v314
    %v475 = vunpack.c.l.b16 %v315
    %v476 = vunpack.c.h.b16 %v315
    %v477 = vunpack.c.l.b16 %v316
    %v478 = vunpack.c.h.b16 %v316
    %v479 = vunpack.c.l.b16 %v317
    %v480 = vunpack.c.h.b16 %v317
    %v481 = vunpack.c.l.b16 %v318
    %v482 = vunpack.c.h.b16 %v318
    %v483 = vunpack.c.l.b16 %v319
    %v484 = vunpack.c.h.b16 %v319
    %v485 = vunpack.c.l.b16 %v320
    %v486 = vunpack.c.h.b16 %v320
    %v487 = vunpack.c.l.b16 %v321
    %v488 = vunpack.c.h.b16 %v321
    %v489 = vunpack.c.l.b16 %v322
    %v490 = vunpack.c.h.b16 %v322
    %v491 = vunpack.c.l.b16 %v323
    %v492 = vunpack.c.h.b16 %v323
    %v493 = vunpack.c.l.b16 %v324
    %v494 = vunpack.c.h.b16 %v324
    %v495 = vunpack.c.l.b16 %v325
    %v496 = vunpack.c.h.b16 %v325
    %v497 = vunpack.c.l.b16 %v326
    %v498 = vunpack.c.h.b16 %v326
    %v499 = vunpack.c.l.b16 %v327
    %v500 = vunpack.c.h.b16 %v327
    %v501 = vunpack.c.l.b16 %v328
    %v502 = vunpack.c.h.b16 %v328
    %v503 = vunpack.c.l.b16 %v329
    %v504 = vunpack.c.h.b16 %v329
    %v505 = vunpack.c.l.b16 %v330
    %v506 = vunpack.c.h.b16 %v330
    %v507 = vunpack.c.l.b16 %v331
    %v508 = vunpack.c.h.b16 %v331
    %v509 = vunpack.c.l.b16 %v332
    %v510 = vunpack.c.h.b16 %v332
    %v511 = vunpack.c.l.b16 %v333
    %v512 = vunpack.c.h.b16 %v333
    %v513 = vunpack.c.l.b16 %v334
    %v514 = vunpack.c.h.b16 %v334
    %v515 = vunpack.c.l.b16 %v335
    %v516 = vunpack.c.h.b16 %v335
    %v517 = vunpack.c.l.b16 %v336
    %v518 = vunpack.c.h.b16 %v336
    %v519 = vunpack.c.l.b16 %v337
    %v520 = vunpack.c.h.b16 %v337
    %v521 = vunpack.c.l.b16 %v338
    %v522 = vunpack.c.h.b16 %v338
    %v523 = vunpack.c.l.b16 %v339
    %v524 = vunpack.c.h.b16 %v339
    %v525 = vunpack.c.l.b16 %v340
    %v526 = vunpack.c.h.b16 %v340
    %v527 = vunpack.c.l.b16 %v341
    %v528 = vunpack.c.h.b16 %v341
    %v529 = vunpack.c.l.b16 %v342
    %v530 = vunpack.c.h.b16 %v342
    %v531 = vunpack.c.l.b16 %v343
    %v532 = vunpack.c.h.b16 %v343
    %v533 = vunpack.c.l.b16 %v344
    %v534 = vunpack.c.h.b16 %v344
    %v535 = vunpack.c.l.b16 %v345
    %v536 = vunpack.c.h.b16 %v345
    %v537 = vunpack.c.l.b16 %v346
    %v538 = vunpack.c.h.b16 %v346
    %v539 = vunpack.c.l.b16 %v347
    %v540 = vunpack.c.h.b16 %v347
    %v541 = vunpack.c.l.b16 %v348
    %v542 = vunpack.c.h.b16 %v348
    %v543 = vunpack.c.l.b16 %v349
    %v544 = vunpack.c.h.b16 %v349
    %v545 = vunpack.c.l.b16 %v350
    %v546 = vunpack.c.h.b16 %v350
    %v547 = vunpack.c.l.b16 %v351
    %v548 = vunpack.c.h.b16 %v351
    %v549 = vunpack.c.l.b16 %v352
    %v550 = vunpack.c.h.b16 %v352
    %v551 = vunpack.c.l.b16 %v353
    %v552 = vunpack.c.h.b16 %v353
    %v553 = vunpack.c.l.b16 %v354
    %v554 = vunpack.c.h.b16 %v354
    %v555 = vunpack.c.l.b16 %v355
    %v556 = vunpack.c.h.b16 %v355
    %v557 = vunpack.c.l.b16 %v356
    %v558 = vunpack.c.h.b16 %v356
    %v559 = vunpack.c.l.b16 %v357
    %v560 = vunpack.c.h.b16 %v357
    %v561 = vunpack.c.l.b16 %v358
    %v562 = vunpack.c.h.b16 %v358
    %v563 = vunpack.c.l.b16 %v359
    %v564 = vunpack.c.h.b16 %v359
    %v565 = vunpack.c.l.b16 %v360
    %v566 = vunpack.c.h.b16 %v360
    %v567 = vunpack.c.l.b16 %v361
    %v568 = vunpack.c.h.b16 %v361
    %v569 = vunpack.c.l.b16 %v362
    %v570 = vunpack.c.h.b16 %v362
    %v571 = vunpack.c.l.b16 %v363
    %v572 = vunpack.c.h.b16 %v363
    %v573 = vunpack.c.l.b16 %v364
    %v574 = vunpack.c.h.b16 %v364
    %v575 = vunpack.c.l.b16 %v365
    %v576 = vunpack.c.h.b16 %v365
    %v577 = vunpack.c.l.b16 %v366
    %v578 = vunpack.c.h.b16 %v366
    %v579 = vunpack.c.l.b16 %v367
    %v580 = vunpack.c.h.b16 %v367
    %v581 = vunpack.c.l.b16 %v368
    %v582 = vunpack.c.h.b16 %v368
    %v583 = vpack.c.b16 %v459, %v455
    %v584 = vpack.c.b16 %v460, %v456
    %v585 = vpack.c.b16 %v461, %v457
    %v586 = vpack.c.b16 %v462, %v458
    %v587 = vpack.c.b16 %v467, %v463
    %v588 = vpack.c.b16 %v468, %v464
    %v589 = vpack.c.b16 %v469, %v465
    %v590 = vpack.c.b16 %v470, %v466
    %v591 = vpack.c.b16 %v475, %v471
    %v592 = vpack.c.b16 %v476, %v472
    %v593 = vpack.c.b16 %v477, %v473
    %v594 = vpack.c.b16 %v478, %v474
    %v595 = vpack.c.b16 %v483, %v479
    %v596 = vpack.c.b16 %v484, %v480
    %v597 = vpack.c.b16 %v485, %v481
    %v598 = vpack.c.b16 %v486, %v482
    %v599 = vpack.c.b16 %v491, %v487
    %v600 = vpack.c.b16 %v492, %v488
    %v601 = vpack.c.b16 %v493, %v489
    %v602 = vpack.c.b16 %v494, %v490
    %v603 = vpack.c.b16 %v499, %v495
    %v604 = vpack.c.b16 %v500, %v496
    %v605 = vpack.c.b16 %v501, %v497
    %v606 = vpack.c.b16 %v502, %v498
    %v607 = vpack.c.b16 %v507, %v503
    %v608 = vpack.c.b16 %v508, %v504
    %v609 = vpack.c.b16 %v509, %v505
    %v610 = vpack.c.b16 %v510, %v506
    %v611 = vpack.c.b16 %v515, %v511
    %v612 = vpack.c.b16 %v516, %v512
    %v613 = vpack.c.b16 %v517, %v513
    %v614 = vpack.c.b16 %v518, %v514
    %v615 = vpack.c.b16 %v523, %v519
    %v616 = vpack.c.b16 %v524, %v520
    %v617 = vpack.c.b16 %v525, %v521
    %v618 = vpack.c.b16 %v526, %v522
    %v619 = vpack.c.b16 %v531, %v527
    %v620 = vpack.c.b16 %v532, %v528
    %v621 = vpack.c.b16 %v533, %v529
    %v622 = vpack.c.b16 %v534, %v530
    %v623 = vpack.c.b16 %v539, %v535
    %v624 = vpack.c.b16 %v540, %v536
    %v625 = vpack.c.b16 %v541, %v537
    %v626 = vpack.c.b16 %v542, %v538
    %v627 = vpack.c.b16 %v547, %v543
    %v628 = vpack.c.b16 %v548, %v544
    %v629 = vpack.c.b16 %v549, %v545
    %v630 = vpack.c.b16 %v550, %v546
    %v631 = vpack.c.b16 %v555, %v551
    %v632 = vpack.c.b16 %v556, %v552
    %v633 = vpack.c.b16 %v557, %v553
    %v634 = vpack.c.b16 %v558, %v554
    %v635 = vpack.c.b16 %v563, %v559
    %v636 = vpack.c.b16 %v564, %v560
    %v637 = vpack.c.b16 %v565, %v561
    %v638 = vpack.c.b16 %v566, %v562
    %v639 = vpack.c.b16 %v571, %v567
    %v640 = vpack.c.b16 %v572, %v568
    %v641 = vpack.c.b16 %v573, %v569
    %v642 = vpack.c.b16 %v574, %v570
    %v643 = vpack.c.b16 %v579, %v575
    %v644 = vpack.c.b16 %v580, %v576
    %v645 = vpack.c.b16 %v581, %v577
    %v646 = vpack.c.b16 %v582, %v578
    %711 = vmatprep.subr.bf16.mxu0 %v584
    %712 = vmatpush1.bf16.msra.mxu0 %v583
    %713 = vmatprep.subr.bf16.mxu0 %v588
    %714 = vmatpush1.bf16.msra.mxu0 %v587
    %715 = vmatprep.subr.bf16.mxu0 %v592
    %716 = vmatpush1.bf16.msra.mxu0 %v591
    %717 = vmatprep.subr.bf16.mxu0 %v596
    %718 = vmatpush1.bf16.msra.mxu0 %v595
    %719 = vmatprep.subr.bf16.mxu0 %v600
    %720 = vmatpush1.bf16.msra.mxu0 %v599
    %721 = vmatprep.subr.bf16.mxu0 %v604
    %722 = vmatpush1.bf16.msra.mxu0 %v603
    %723 = vmatprep.subr.bf16.mxu0 %v608
    %724 = vmatpush1.bf16.msra.mxu0 %v607
    %725 = vmatprep.subr.bf16.mxu0 %v612
    %726 = vmatpush1.bf16.msra.mxu0 %v611
    %727 = vmatprep.subr.bf16.mxu0 %v616
    %728 = vmatpush1.bf16.msra.mxu0 %v615
    %729 = vmatprep.subr.bf16.mxu0 %v620
    %730 = vmatpush1.bf16.msra.mxu0 %v619
    %731 = vmatprep.subr.bf16.mxu0 %v624
    %732 = vmatpush1.bf16.msra.mxu0 %v623
    %733 = vmatprep.subr.bf16.mxu0 %v628
    %734 = vmatpush1.bf16.msra.mxu0 %v627
    %735 = vmatprep.subr.bf16.mxu0 %v632
    %736 = vmatpush1.bf16.msra.mxu0 %v631
    %737 = vmatprep.subr.bf16.mxu0 %v636
    %738 = vmatpush1.bf16.msra.mxu0 %v635
    %739 = vmatprep.subr.bf16.mxu0 %v640
    %740 = vmatpush1.bf16.msra.mxu0 %v639
    %741 = vmatprep.subr.bf16.mxu0 %v644
    %742 = vmatpush1.bf16.msra.mxu0 %v643
    %743 = vmatprep.mubr.bf16.mxu0 %v304
    %744 = vmatmul.mubr.bf16.gmra.mrb[0].mxu0 %v303
    %v745 = vpop.f32.mrb[0].mxu0
    %v746 = vadd.f32 %v374, %v745
    %v747 = vpop.f32.mrb[0].mxu0
    %v748 = vadd.f32 %v378, %v747
    %v749 = vpop.f32.mrb[0].mxu0
    %v750 = vpop.f32.mrb[0].mxu0
    %751 = vdwg.mxu0
    %752 = vmatprep.subr.bf16.mxu0 %v586
    %753 = vmatpush1.bf16.msra.mxu0 %v585
    %754 = vmatprep.subr.bf16.mxu0 %v590
    %755 = vmatpush1.bf16.msra.mxu0 %v589
    %756 = vmatprep.subr.bf16.mxu0 %v594
    %757 = vmatpush1.bf16.msra.mxu0 %v593
    %758 = vmatprep.subr.bf16.mxu0 %v598
    %759 = vmatpush1.bf16.msra.mxu0 %v597
    %760 = vmatprep.subr.bf16.mxu0 %v602
    %761 = vmatpush1.bf16.msra.mxu0 %v601
    %762 = vmatprep.subr.bf16.mxu0 %v606
    %763 = vmatpush1.bf16.msra.mxu0 %v605
    %764 = vmatprep.subr.bf16.mxu0 %v610
    %765 = vmatpush1.bf16.msra.mxu0 %v609
    %766 = vmatprep.subr.bf16.mxu0 %v614
    %767 = vmatpush1.bf16.msra.mxu0 %v613
    %768 = vmatprep.subr.bf16.mxu0 %v618
    %769 = vmatpush1.bf16.msra.mxu0 %v617
    %770 = vmatprep.subr.bf16.mxu0 %v622
    %771 = vmatpush1.bf16.msra.mxu0 %v621
    %772 = vmatprep.subr.bf16.mxu0 %v626
    %773 = vmatpush1.bf16.msra.mxu0 %v625
    %774 = vmatprep.subr.bf16.mxu0 %v630
    %775 = vmatpush1.bf16.msra.mxu0 %v629
    %776 = vmatprep.subr.bf16.mxu0 %v634
    %777 = vmatpush1.bf16.msra.mxu0 %v633
    %778 = vmatprep.subr.bf16.mxu0 %v638
    %779 = vmatpush1.bf16.msra.mxu0 %v637
    %780 = vmatprep.subr.bf16.mxu0 %v642
    %781 = vmatpush1.bf16.msra.mxu0 %v641
    %782 = vmatprep.subr.bf16.mxu0 %v646
    %783 = vmatpush1.bf16.msra.mxu0 %v645
    %784 = vmatprep.mubr.bf16.mxu0 %v304
    %785 = vmatmul.mubr.bf16.gmra.mrb[0].mxu0 %v303
    %v786 = vpop.f32.mrb[0].mxu0
    %v787 = vadd.f32 %v382, %v786
    %v788 = vpop.f32.mrb[0].mxu0
    %v789 = vadd.f32 %v386, %v788
    %v790 = vpop.f32.mrb[0].mxu0
    %v791 = vpop.f32.mrb[0].mxu0
    %792 = vdwg.mxu0
    %vm793 = vcmp.gt.f32.partialorder %v746, 0.0
    %vm794 = vcmp.gt.f32.partialorder %v748, 0.0
    %vm795 = vcmp.gt.f32.partialorder %v787, 0.0
    %vm796 = vcmp.gt.f32.partialorder %v789, 0.0
    %v797 = vmul.f32 %v746, 0.2
    %v798 = vmul.f32 %v748, 0.2
    %v799 = vmul.f32 %v787, 0.2
    %v800 = vmul.f32 %v789, 0.2
    %v801 = vsel %vm793, %v746, %v797
    %v802 = vsel %vm794, %v748, %v798
    %v803 = vsel %vm795, %v787, %v799
    %v804 = vsel %vm796, %v789, %v800
    %v805 = vpack.c.bf16 %v801, %v801
    %v806 = vpack.c.bf16 %v802, %v802
    %v807 = vpack.c.bf16 %v803, %v803
    %v808 = vpack.c.bf16 %v804, %v804
    %v809 = vld [vmem:[#allocation11] sm:$0xff]
    %v810 = vld [vmem:[#allocation11 + $0x8] sm:$0xff]
    %v811 = vld [vmem:[#allocation11 + $0x10] sm:$0xff]
    %v812 = vld [vmem:[#allocation11 + $0x18] sm:$0xff]
    %v813 = vld [vmem:[#allocation11 + $0x20] sm:$0xff]
    %v814 = vld [vmem:[#allocation11 + $0x28] sm:$0xff]
    %v815 = vld [vmem:[#allocation11 + $0x30] sm:$0xff]
    %v816 = vld [vmem:[#allocation11 + $0x38] sm:$0xff]
    %v817 = vld [vmem:[#allocation11 + $0x40] sm:$0xff]
    %v818 = vld [vmem:[#allocation11 + $0x48] sm:$0xff]
    %v819 = vld [vmem:[#allocation11 + $0x50] sm:$0xff]
    %v820 = vld [vmem:[#allocation11 + $0x58] sm:$0xff]
    %v821 = vld [vmem:[#allocation11 + $0x60] sm:$0xff]
    %v822 = vld [vmem:[#allocation11 + $0x68] sm:$0xff]
    %v823 = vld [vmem:[#allocation11 + $0x70] sm:$0xff]
    %v824 = vld [vmem:[#allocation11 + $0x78] sm:$0xff]
    %v825 = vld [vmem:[#allocation11 + $0x80] sm:$0xff]
    %v826 = vld [vmem:[#allocation11 + $0x88] sm:$0xff]
    %v827 = vld [vmem:[#allocation11 + $0x90] sm:$0xff]
    %v828 = vld [vmem:[#allocation11 + $0x98] sm:$0xff]
    %v829 = vld [vmem:[#allocation11 + $0xa0] sm:$0xff]
    %v830 = vld [vmem:[#allocation11 + $0xa8] sm:$0xff]
    %v831 = vld [vmem:[#allocation11 + $0xb0] sm:$0xff]
    %v832 = vld [vmem:[#allocation11 + $0xb8] sm:$0xff]
    %v833 = vld [vmem:[#allocation11 + $0xc0] sm:$0xff]
    %v834 = vld [vmem:[#allocation11 + $0xc8] sm:$0xff]
    %v835 = vld [vmem:[#allocation11 + $0xd0] sm:$0xff]
    %v836 = vld [vmem:[#allocation11 + $0xd8] sm:$0xff]
    %v837 = vld [vmem:[#allocation11 + $0xe0] sm:$0xff]
    %v838 = vld [vmem:[#allocation11 + $0xe8] sm:$0xff]
    %v839 = vld [vmem:[#allocation11 + $0xf0] sm:$0xff]
    %v840 = vld [vmem:[#allocation11 + $0xf8] sm:$0xff]
    %v841 = vld [vmem:[#allocation11 + $0x100] sm:$0xff]
    %v842 = vld [vmem:[#allocation11 + $0x108] sm:$0xff]
    %v843 = vld [vmem:[#allocation11 + $0x110] sm:$0xff]
    %v844 = vld [vmem:[#allocation11 + $0x118] sm:$0xff]
    %v845 = vld [vmem:[#allocation11 + $0x120] sm:$0xff]
    %v846 = vld [vmem:[#allocation11 + $0x128] sm:$0xff]
    %v847 = vld [vmem:[#allocation11 + $0x130] sm:$0xff]
    %v848 = vld [vmem:[#allocation11 + $0x138] sm:$0xff]
    %v849 = vld [vmem:[#allocation11 + $0x140] sm:$0xff]
    %v850 = vld [vmem:[#allocation11 + $0x148] sm:$0xff]
    %v851 = vld [vmem:[#allocation11 + $0x150] sm:$0xff]
    %v852 = vld [vmem:[#allocation11 + $0x158] sm:$0xff]
    %v853 = vld [vmem:[#allocation11 + $0x160] sm:$0xff]
    %v854 = vld [vmem:[#allocation11 + $0x168] sm:$0xff]
    %v855 = vld [vmem:[#allocation11 + $0x170] sm:$0xff]
    %v856 = vld [vmem:[#allocation11 + $0x178] sm:$0xff]
    %v857 = vld [vmem:[#allocation11 + $0x180] sm:$0xff]
    %v858 = vld [vmem:[#allocation11 + $0x188] sm:$0xff]
    %v859 = vld [vmem:[#allocation11 + $0x190] sm:$0xff]
    %v860 = vld [vmem:[#allocation11 + $0x198] sm:$0xff]
    %v861 = vld [vmem:[#allocation11 + $0x1a0] sm:$0xff]
    %v862 = vld [vmem:[#allocation11 + $0x1a8] sm:$0xff]
    %v863 = vld [vmem:[#allocation11 + $0x1b0] sm:$0xff]
    %v864 = vld [vmem:[#allocation11 + $0x1b8] sm:$0xff]
    %v865 = vld [vmem:[#allocation11 + $0x1c0] sm:$0xff]
    %v866 = vld [vmem:[#allocation11 + $0x1c8] sm:$0xff]
    %v867 = vld [vmem:[#allocation11 + $0x1d0] sm:$0xff]
    %v868 = vld [vmem:[#allocation11 + $0x1d8] sm:$0xff]
    %v869 = vld [vmem:[#allocation11 + $0x1e0] sm:$0xff]
    %v870 = vld [vmem:[#allocation11 + $0x1e8] sm:$0xff]
    %v871 = vld [vmem:[#allocation11 + $0x1f0] sm:$0xff]
    %v872 = vld [vmem:[#allocation11 + $0x1f8] sm:$0xff]
    %v873 = vld [vmem:[#allocation11 + $0x200] sm:$0xff]
    %v874 = vld [vmem:[#allocation11 + $0x208] sm:$0xff]
    %v875 = vld [vmem:[#allocation11 + $0x210] sm:$0xff]
    %v876 = vld [vmem:[#allocation11 + $0x218] sm:$0xff]
    %v877 = vld [vmem:[#allocation11 + $0x220] sm:$0xff]
    %v878 = vld [vmem:[#allocation11 + $0x228] sm:$0xff]
    %v879 = vld [vmem:[#allocation11 + $0x230] sm:$0xff]
    %v880 = vld [vmem:[#allocation11 + $0x238] sm:$0xff]
    %v881 = vld [vmem:[#allocation11 + $0x240] sm:$0xff]
    %v882 = vld [vmem:[#allocation11 + $0x248] sm:$0xff]
    %v883 = vld [vmem:[#allocation11 + $0x250] sm:$0xff]
    %v884 = vld [vmem:[#allocation11 + $0x258] sm:$0xff]
    %v885 = vld [vmem:[#allocation11 + $0x260] sm:$0xff]
    %v886 = vld [vmem:[#allocation11 + $0x268] sm:$0xff]
    %v887 = vld [vmem:[#allocation11 + $0x270] sm:$0xff]
    %v888 = vld [vmem:[#allocation11 + $0x278] sm:$0xff]
    %v889 = vld [vmem:[#allocation11 + $0x280] sm:$0xff]
    %v890 = vld [vmem:[#allocation11 + $0x288] sm:$0xff]
    %v891 = vld [vmem:[#allocation11 + $0x290] sm:$0xff]
    %v892 = vld [vmem:[#allocation11 + $0x298] sm:$0xff]
    %v893 = vld [vmem:[#allocation11 + $0x2a0] sm:$0xff]
    %v894 = vld [vmem:[#allocation11 + $0x2a8] sm:$0xff]
    %v895 = vld [vmem:[#allocation11 + $0x2b0] sm:$0xff]
    %v896 = vld [vmem:[#allocation11 + $0x2b8] sm:$0xff]
    %v897 = vld [vmem:[#allocation11 + $0x2c0] sm:$0xff]
    %v898 = vld [vmem:[#allocation11 + $0x2c8] sm:$0xff]
    %v899 = vld [vmem:[#allocation11 + $0x2d0] sm:$0xff]
    %v900 = vld [vmem:[#allocation11 + $0x2d8] sm:$0xff]
    %v901 = vld [vmem:[#allocation11 + $0x2e0] sm:$0xff]
    %v902 = vld [vmem:[#allocation11 + $0x2e8] sm:$0xff]
    %v903 = vld [vmem:[#allocation11 + $0x2f0] sm:$0xff]
    %v904 = vld [vmem:[#allocation11 + $0x2f8] sm:$0xff]
    %v905 = vld [vmem:[#allocation11 + $0x300] sm:$0xff]
    %v906 = vld [vmem:[#allocation11 + $0x308] sm:$0xff]
    %v907 = vld [vmem:[#allocation11 + $0x310] sm:$0xff]
    %v908 = vld [vmem:[#allocation11 + $0x318] sm:$0xff]
    %v909 = vld [vmem:[#allocation11 + $0x320] sm:$0xff]
    %v910 = vld [vmem:[#allocation11 + $0x328] sm:$0xff]
    %v911 = vld [vmem:[#allocation11 + $0x330] sm:$0xff]
    %v912 = vld [vmem:[#allocation11 + $0x338] sm:$0xff]
    %v913 = vld [vmem:[#allocation11 + $0x340] sm:$0xff]
    %v914 = vld [vmem:[#allocation11 + $0x348] sm:$0xff]
    %v915 = vld [vmem:[#allocation11 + $0x350] sm:$0xff]
    %v916 = vld [vmem:[#allocation11 + $0x358] sm:$0xff]
    %v917 = vld [vmem:[#allocation11 + $0x360] sm:$0xff]
    %v918 = vld [vmem:[#allocation11 + $0x368] sm:$0xff]
    %v919 = vld [vmem:[#allocation11 + $0x370] sm:$0xff]
    %v920 = vld [vmem:[#allocation11 + $0x378] sm:$0xff]
    %v921 = vld [vmem:[#allocation11 + $0x380] sm:$0xff]
    %v922 = vld [vmem:[#allocation11 + $0x388] sm:$0xff]
    %v923 = vld [vmem:[#allocation11 + $0x390] sm:$0xff]
    %v924 = vld [vmem:[#allocation11 + $0x398] sm:$0xff]
    %v925 = vld [vmem:[#allocation11 + $0x3a0] sm:$0xff]
    %v926 = vld [vmem:[#allocation11 + $0x3a8] sm:$0xff]
    %v927 = vld [vmem:[#allocation11 + $0x3b0] sm:$0xff]
    %v928 = vld [vmem:[#allocation11 + $0x3b8] sm:$0xff]
    %v929 = vld [vmem:[#allocation11 + $0x3c0] sm:$0xff]
    %v930 = vld [vmem:[#allocation11 + $0x3c8] sm:$0xff]
    %v931 = vld [vmem:[#allocation11 + $0x3d0] sm:$0xff]
    %v932 = vld [vmem:[#allocation11 + $0x3d8] sm:$0xff]
    %v933 = vld [vmem:[#allocation11 + $0x3e0] sm:$0xff]
    %v934 = vld [vmem:[#allocation11 + $0x3e8] sm:$0xff]
    %v935 = vld [vmem:[#allocation11 + $0x3f0] sm:$0xff]
    %v936 = vld [vmem:[#allocation11 + $0x3f8] sm:$0xff]
    %v937 = vld [vmem:[#allocation11 + $0x400] sm:$0xff]
    %v938 = vld [vmem:[#allocation11 + $0x408] sm:$0xff]
    %v939 = vld [vmem:[#allocation11 + $0x410] sm:$0xff]
    %v940 = vld [vmem:[#allocation11 + $0x418] sm:$0xff]
    %v941 = vld [vmem:[#allocation11 + $0x420] sm:$0xff]
    %v942 = vld [vmem:[#allocation11 + $0x428] sm:$0xff]
    %v943 = vld [vmem:[#allocation11 + $0x430] sm:$0xff]
    %v944 = vld [vmem:[#allocation11 + $0x438] sm:$0xff]
    %v945 = vld [vmem:[#allocation11 + $0x440] sm:$0xff]
    %v946 = vld [vmem:[#allocation11 + $0x448] sm:$0xff]
    %v947 = vld [vmem:[#allocation11 + $0x450] sm:$0xff]
    %v948 = vld [vmem:[#allocation11 + $0x458] sm:$0xff]
    %v949 = vld [vmem:[#allocation11 + $0x460] sm:$0xff]
    %v950 = vld [vmem:[#allocation11 + $0x468] sm:$0xff]
    %v951 = vld [vmem:[#allocation11 + $0x470] sm:$0xff]
    %v952 = vld [vmem:[#allocation11 + $0x478] sm:$0xff]
    %v953 = vld [vmem:[#allocation11 + $0x480] sm:$0xff]
    %v954 = vld [vmem:[#allocation11 + $0x488] sm:$0xff]
    %v955 = vld [vmem:[#allocation11 + $0x490] sm:$0xff]
    %v956 = vld [vmem:[#allocation11 + $0x498] sm:$0xff]
    %v957 = vld [vmem:[#allocation11 + $0x4a0] sm:$0xff]
    %v958 = vld [vmem:[#allocation11 + $0x4a8] sm:$0xff]
    %v959 = vld [vmem:[#allocation11 + $0x4b0] sm:$0xff]
    %v960 = vld [vmem:[#allocation11 + $0x4b8] sm:$0xff]
    %v961 = vld [vmem:[#allocation11 + $0x4c0] sm:$0xff]
    %v962 = vld [vmem:[#allocation11 + $0x4c8] sm:$0xff]
    %v963 = vld [vmem:[#allocation11 + $0x4d0] sm:$0xff]
    %v964 = vld [vmem:[#allocation11 + $0x4d8] sm:$0xff]
    %v965 = vld [vmem:[#allocation11 + $0x4e0] sm:$0xff]
    %v966 = vld [vmem:[#allocation11 + $0x4e8] sm:$0xff]
    %v967 = vld [vmem:[#allocation11 + $0x4f0] sm:$0xff]
    %v968 = vld [vmem:[#allocation11 + $0x4f8] sm:$0xff]
    %v969 = vld [vmem:[#allocation11 + $0x500] sm:$0xff]
    %v970 = vld [vmem:[#allocation11 + $0x508] sm:$0xff]
    %v971 = vld [vmem:[#allocation11 + $0x510] sm:$0xff]
    %v972 = vld [vmem:[#allocation11 + $0x518] sm:$0xff]
    %v973 = vld [vmem:[#allocation11 + $0x520] sm:$0xff]
    %v974 = vld [vmem:[#allocation11 + $0x528] sm:$0xff]
    %v975 = vld [vmem:[#allocation11 + $0x530] sm:$0xff]
    %v976 = vld [vmem:[#allocation11 + $0x538] sm:$0xff]
    %v977 = vld [vmem:[#allocation11 + $0x540] sm:$0xff]
    %v978 = vld [vmem:[#allocation11 + $0x548] sm:$0xff]
    %v979 = vld [vmem:[#allocation11 + $0x550] sm:$0xff]
    %v980 = vld [vmem:[#allocation11 + $0x558] sm:$0xff]
    %v981 = vld [vmem:[#allocation11 + $0x560] sm:$0xff]
    %v982 = vld [vmem:[#allocation11 + $0x568] sm:$0xff]
    %v983 = vld [vmem:[#allocation11 + $0x570] sm:$0xff]
    %v984 = vld [vmem:[#allocation11 + $0x578] sm:$0xff]
    %v985 = vld [vmem:[#allocation11 + $0x580] sm:$0xff]
    %v986 = vld [vmem:[#allocation11 + $0x588] sm:$0xff]
    %v987 = vld [vmem:[#allocation11 + $0x590] sm:$0xff]
    %v988 = vld [vmem:[#allocation11 + $0x598] sm:$0xff]
    %v989 = vld [vmem:[#allocation11 + $0x5a0] sm:$0xff]
    %v990 = vld [vmem:[#allocation11 + $0x5a8] sm:$0xff]
    %v991 = vld [vmem:[#allocation11 + $0x5b0] sm:$0xff]
    %v992 = vld [vmem:[#allocation11 + $0x5b8] sm:$0xff]
    %v993 = vld [vmem:[#allocation11 + $0x5c0] sm:$0xff]
    %v994 = vld [vmem:[#allocation11 + $0x5c8] sm:$0xff]
    %v995 = vld [vmem:[#allocation11 + $0x5d0] sm:$0xff]
    %v996 = vld [vmem:[#allocation11 + $0x5d8] sm:$0xff]
    %v997 = vld [vmem:[#allocation11 + $0x5e0] sm:$0xff]
    %v998 = vld [vmem:[#allocation11 + $0x5e8] sm:$0xff]
    %v999 = vld [vmem:[#allocation11 + $0x5f0] sm:$0xff]
    %v1000 = vld [vmem:[#allocation11 + $0x5f8] sm:$0xff]
    %v1001 = vld [vmem:[#allocation11 + $0x600] sm:$0xff]
    %v1002 = vld [vmem:[#allocation11 + $0x608] sm:$0xff]
    %v1003 = vld [vmem:[#allocation11 + $0x610] sm:$0xff]
    %v1004 = vld [vmem:[#allocation11 + $0x618] sm:$0xff]
    %v1005 = vld [vmem:[#allocation11 + $0x620] sm:$0xff]
    %v1006 = vld [vmem:[#allocation11 + $0x628] sm:$0xff]
    %v1007 = vld [vmem:[#allocation11 + $0x630] sm:$0xff]
    %v1008 = vld [vmem:[#allocation11 + $0x638] sm:$0xff]
    %v1009 = vld [vmem:[#allocation11 + $0x640] sm:$0xff]
    %v1010 = vld [vmem:[#allocation11 + $0x648] sm:$0xff]
    %v1011 = vld [vmem:[#allocation11 + $0x650] sm:$0xff]
    %v1012 = vld [vmem:[#allocation11 + $0x658] sm:$0xff]
    %v1013 = vld [vmem:[#allocation11 + $0x660] sm:$0xff]
    %v1014 = vld [vmem:[#allocation11 + $0x668] sm:$0xff]
    %v1015 = vld [vmem:[#allocation11 + $0x670] sm:$0xff]
    %v1016 = vld [vmem:[#allocation11 + $0x678] sm:$0xff]
    %v1017 = vld [vmem:[#allocation11 + $0x680] sm:$0xff]
    %v1018 = vld [vmem:[#allocation11 + $0x688] sm:$0xff]
    %v1019 = vld [vmem:[#allocation11 + $0x690] sm:$0xff]
    %v1020 = vld [vmem:[#allocation11 + $0x698] sm:$0xff]
    %v1021 = vld [vmem:[#allocation11 + $0x6a0] sm:$0xff]
    %v1022 = vld [vmem:[#allocation11 + $0x6a8] sm:$0xff]
    %v1023 = vld [vmem:[#allocation11 + $0x6b0] sm:$0xff]
    %v1024 = vld [vmem:[#allocation11 + $0x6b8] sm:$0xff]
    %v1025 = vld [vmem:[#allocation11 + $0x6c0] sm:$0xff]
    %v1026 = vld [vmem:[#allocation11 + $0x6c8] sm:$0xff]
    %v1027 = vld [vmem:[#allocation11 + $0x6d0] sm:$0xff]
    %v1028 = vld [vmem:[#allocation11 + $0x6d8] sm:$0xff]
    %v1029 = vld [vmem:[#allocation11 + $0x6e0] sm:$0xff]
    %v1030 = vld [vmem:[#allocation11 + $0x6e8] sm:$0xff]
    %v1031 = vld [vmem:[#allocation11 + $0x6f0] sm:$0xff]
    %v1032 = vld [vmem:[#allocation11 + $0x6f8] sm:$0xff]
    %v1033 = vld [vmem:[#allocation11 + $0x700] sm:$0xff]
    %v1034 = vld [vmem:[#allocation11 + $0x708] sm:$0xff]
    %v1035 = vld [vmem:[#allocation11 + $0x710] sm:$0xff]
    %v1036 = vld [vmem:[#allocation11 + $0x718] sm:$0xff]
    %v1037 = vld [vmem:[#allocation11 + $0x720] sm:$0xff]
    %v1038 = vld [vmem:[#allocation11 + $0x728] sm:$0xff]
    %v1039 = vld [vmem:[#allocation11 + $0x730] sm:$0xff]
    %v1040 = vld [vmem:[#allocation11 + $0x738] sm:$0xff]
    %v1041 = vld [vmem:[#allocation11 + $0x740] sm:$0xff]
    %v1042 = vld [vmem:[#allocation11 + $0x748] sm:$0xff]
    %v1043 = vld [vmem:[#allocation11 + $0x750] sm:$0xff]
    %v1044 = vld [vmem:[#allocation11 + $0x758] sm:$0xff]
    %v1045 = vld [vmem:[#allocation11 + $0x760] sm:$0xff]
    %v1046 = vld [vmem:[#allocation11 + $0x768] sm:$0xff]
    %v1047 = vld [vmem:[#allocation11 + $0x770] sm:$0xff]
    %v1048 = vld [vmem:[#allocation11 + $0x778] sm:$0xff]
    %v1049 = vld [vmem:[#allocation11 + $0x780] sm:$0xff]
    %v1050 = vld [vmem:[#allocation11 + $0x788] sm:$0xff]
    %v1051 = vld [vmem:[#allocation11 + $0x790] sm:$0xff]
    %v1052 = vld [vmem:[#allocation11 + $0x798] sm:$0xff]
    %v1053 = vld [vmem:[#allocation11 + $0x7a0] sm:$0xff]
    %v1054 = vld [vmem:[#allocation11 + $0x7a8] sm:$0xff]
    %v1055 = vld [vmem:[#allocation11 + $0x7b0] sm:$0xff]
    %v1056 = vld [vmem:[#allocation11 + $0x7b8] sm:$0xff]
    %v1057 = vld [vmem:[#allocation11 + $0x7c0] sm:$0xff]
    %v1058 = vld [vmem:[#allocation11 + $0x7c8] sm:$0xff]
    %v1059 = vld [vmem:[#allocation11 + $0x7d0] sm:$0xff]
    %v1060 = vld [vmem:[#allocation11 + $0x7d8] sm:$0xff]
    %v1061 = vld [vmem:[#allocation11 + $0x7e0] sm:$0xff]
    %v1062 = vld [vmem:[#allocation11 + $0x7e8] sm:$0xff]
    %v1063 = vld [vmem:[#allocation11 + $0x7f0] sm:$0xff]
    %v1064 = vld [vmem:[#allocation11 + $0x7f8] sm:$0xff]
    %v1065 = vld [vmem:[#allocation13] sm:$0xff]
    %v1067 = vlaneseq
    %v1068 = vshrl.u32 %v1067, 7
    %v1069 = vsub.s32 0, %v1068
    %v1070 = vrot.slane %v1065, %v1069
    %v1071 = vlaneseq
    %v1072 = vshrl.u32 %v1071, 7
    %v1073 = vsub.s32 1, %v1072
    %v1074 = vrot.slane %v1065, %v1073
    %v1075 = vlaneseq
    %v1076 = vshrl.u32 %v1075, 7
    %v1077 = vsub.s32 2, %v1076
    %v1078 = vrot.slane %v1065, %v1077
    %v1079 = vlaneseq
    %v1080 = vshrl.u32 %v1079, 7
    %v1081 = vsub.s32 3, %v1080
    %v1082 = vrot.slane %v1065, %v1081
    %v1083 = vlaneseq
    %v1084 = vshrl.u32 %v1083, 7
    %v1085 = vsub.s32 4, %v1084
    %v1086 = vrot.slane %v1065, %v1085
    %v1087 = vlaneseq
    %v1088 = vshrl.u32 %v1087, 7
    %v1089 = vsub.s32 5, %v1088
    %v1090 = vrot.slane %v1065, %v1089
    %v1091 = vlaneseq
    %v1092 = vshrl.u32 %v1091, 7
    %v1093 = vsub.s32 6, %v1092
    %v1094 = vrot.slane %v1065, %v1093
    %v1095 = vlaneseq
    %v1096 = vshrl.u32 %v1095, 7
    %v1097 = vsub.s32 7, %v1096
    %v1098 = vrot.slane %v1065, %v1097
    %v1363 = vunpack.c.l.b16 %v809
    %v1364 = vunpack.c.h.b16 %v809
    %v1365 = vunpack.c.l.b16 %v810
    %v1366 = vunpack.c.h.b16 %v810
    %v1367 = vunpack.c.l.b16 %v811
    %v1368 = vunpack.c.h.b16 %v811
    %v1369 = vunpack.c.l.b16 %v812
    %v1370 = vunpack.c.h.b16 %v812
    %v1371 = vunpack.c.l.b16 %v813
    %v1372 = vunpack.c.h.b16 %v813
    %v1373 = vunpack.c.l.b16 %v814
    %v1374 = vunpack.c.h.b16 %v814
    %v1375 = vunpack.c.l.b16 %v815
    %v1376 = vunpack.c.h.b16 %v815
    %v1377 = vunpack.c.l.b16 %v816
    %v1378 = vunpack.c.h.b16 %v816
    %v1379 = vunpack.c.l.b16 %v817
    %v1380 = vunpack.c.h.b16 %v817
    %v1381 = vunpack.c.l.b16 %v818
    %v1382 = vunpack.c.h.b16 %v818
    %v1383 = vunpack.c.l.b16 %v819
    %v1384 = vunpack.c.h.b16 %v819
    %v1385 = vunpack.c.l.b16 %v820
    %v1386 = vunpack.c.h.b16 %v820
    %v1387 = vunpack.c.l.b16 %v821
    %v1388 = vunpack.c.h.b16 %v821
    %v1389 = vunpack.c.l.b16 %v822
    %v1390 = vunpack.c.h.b16 %v822
    %v1391 = vunpack.c.l.b16 %v823
    %v1392 = vunpack.c.h.b16 %v823
    %v1393 = vunpack.c.l.b16 %v824
    %v1394 = vunpack.c.h.b16 %v824
    %v1395 = vunpack.c.l.b16 %v825
    %v1396 = vunpack.c.h.b16 %v825
    %v1397 = vunpack.c.l.b16 %v826
    %v1398 = vunpack.c.h.b16 %v826
    %v1399 = vunpack.c.l.b16 %v827
    %v1400 = vunpack.c.h.b16 %v827
    %v1401 = vunpack.c.l.b16 %v828
    %v1402 = vunpack.c.h.b16 %v828
    %v1403 = vunpack.c.l.b16 %v829
    %v1404 = vunpack.c.h.b16 %v829
    %v1405 = vunpack.c.l.b16 %v830
    %v1406 = vunpack.c.h.b16 %v830
    %v1407 = vunpack.c.l.b16 %v831
    %v1408 = vunpack.c.h.b16 %v831
    %v1409 = vunpack.c.l.b16 %v832
    %v1410 = vunpack.c.h.b16 %v832
    %v1411 = vunpack.c.l.b16 %v833
    %v1412 = vunpack.c.h.b16 %v833
    %v1413 = vunpack.c.l.b16 %v834
    %v1414 = vunpack.c.h.b16 %v834
    %v1415 = vunpack.c.l.b16 %v835
    %v1416 = vunpack.c.h.b16 %v835
    %v1417 = vunpack.c.l.b16 %v836
    %v1418 = vunpack.c.h.b16 %v836
    %v1419 = vunpack.c.l.b16 %v837
    %v1420 = vunpack.c.h.b16 %v837
    %v1421 = vunpack.c.l.b16 %v838
    %v1422 = vunpack.c.h.b16 %v838
    %v1423 = vunpack.c.l.b16 %v839
    %v1424 = vunpack.c.h.b16 %v839
    %v1425 = vunpack.c.l.b16 %v840
    %v1426 = vunpack.c.h.b16 %v840
    %v1427 = vunpack.c.l.b16 %v841
    %v1428 = vunpack.c.h.b16 %v841
    %v1429 = vunpack.c.l.b16 %v842
    %v1430 = vunpack.c.h.b16 %v842
    %v1431 = vunpack.c.l.b16 %v843
    %v1432 = vunpack.c.h.b16 %v843
    %v1433 = vunpack.c.l.b16 %v844
    %v1434 = vunpack.c.h.b16 %v844
    %v1435 = vunpack.c.l.b16 %v845
    %v1436 = vunpack.c.h.b16 %v845
    %v1437 = vunpack.c.l.b16 %v846
    %v1438 = vunpack.c.h.b16 %v846
    %v1439 = vunpack.c.l.b16 %v847
    %v1440 = vunpack.c.h.b16 %v847
    %v1441 = vunpack.c.l.b16 %v848
    %v1442 = vunpack.c.h.b16 %v848
    %v1443 = vunpack.c.l.b16 %v849
    %v1444 = vunpack.c.h.b16 %v849
    %v1445 = vunpack.c.l.b16 %v850
    %v1446 = vunpack.c.h.b16 %v850
    %v1447 = vunpack.c.l.b16 %v851
    %v1448 = vunpack.c.h.b16 %v851
    %v1449 = vunpack.c.l.b16 %v852
    %v1450 = vunpack.c.h.b16 %v852
    %v1451 = vunpack.c.l.b16 %v853
    %v1452 = vunpack.c.h.b16 %v853
    %v1453 = vunpack.c.l.b16 %v854
    %v1454 = vunpack.c.h.b16 %v854
    %v1455 = vunpack.c.l.b16 %v855
    %v1456 = vunpack.c.h.b16 %v855
    %v1457 = vunpack.c.l.b16 %v856
    %v1458 = vunpack.c.h.b16 %v856
    %v1459 = vunpack.c.l.b16 %v857
    %v1460 = vunpack.c.h.b16 %v857
    %v1461 = vunpack.c.l.b16 %v858
    %v1462 = vunpack.c.h.b16 %v858
    %v1463 = vunpack.c.l.b16 %v859
    %v1464 = vunpack.c.h.b16 %v859
    %v1465 = vunpack.c.l.b16 %v860
    %v1466 = vunpack.c.h.b16 %v860
    %v1467 = vunpack.c.l.b16 %v861
    %v1468 = vunpack.c.h.b16 %v861
    %v1469 = vunpack.c.l.b16 %v862
    %v1470 = vunpack.c.h.b16 %v862
    %v1471 = vunpack.c.l.b16 %v863
    %v1472 = vunpack.c.h.b16 %v863
    %v1473 = vunpack.c.l.b16 %v864
    %v1474 = vunpack.c.h.b16 %v864
    %v1475 = vunpack.c.l.b16 %v865
    %v1476 = vunpack.c.h.b16 %v865
    %v1477 = vunpack.c.l.b16 %v866
    %v1478 = vunpack.c.h.b16 %v866
    %v1479 = vunpack.c.l.b16 %v867
    %v1480 = vunpack.c.h.b16 %v867
    %v1481 = vunpack.c.l.b16 %v868
    %v1482 = vunpack.c.h.b16 %v868
    %v1483 = vunpack.c.l.b16 %v869
    %v1484 = vunpack.c.h.b16 %v869
    %v1485 = vunpack.c.l.b16 %v870
    %v1486 = vunpack.c.h.b16 %v870
    %v1487 = vunpack.c.l.b16 %v871
    %v1488 = vunpack.c.h.b16 %v871
    %v1489 = vunpack.c.l.b16 %v872
    %v1490 = vunpack.c.h.b16 %v872
    %v1491 = vunpack.c.l.b16 %v873
    %v1492 = vunpack.c.h.b16 %v873
    %v1493 = vunpack.c.l.b16 %v874
    %v1494 = vunpack.c.h.b16 %v874
    %v1495 = vunpack.c.l.b16 %v875
    %v1496 = vunpack.c.h.b16 %v875
    %v1497 = vunpack.c.l.b16 %v876
    %v1498 = vunpack.c.h.b16 %v876
    %v1499 = vunpack.c.l.b16 %v877
    %v1500 = vunpack.c.h.b16 %v877
    %v1501 = vunpack.c.l.b16 %v878
    %v1502 = vunpack.c.h.b16 %v878
    %v1503 = vunpack.c.l.b16 %v879
    %v1504 = vunpack.c.h.b16 %v879
    %v1505 = vunpack.c.l.b16 %v880
    %v1506 = vunpack.c.h.b16 %v880
    %v1507 = vunpack.c.l.b16 %v881
    %v1508 = vunpack.c.h.b16 %v881
    %v1509 = vunpack.c.l.b16 %v882
    %v1510 = vunpack.c.h.b16 %v882
    %v1511 = vunpack.c.l.b16 %v883
    %v1512 = vunpack.c.h.b16 %v883
    %v1513 = vunpack.c.l.b16 %v884
    %v1514 = vunpack.c.h.b16 %v884
    %v1515 = vunpack.c.l.b16 %v885
    %v1516 = vunpack.c.h.b16 %v885
    %v1517 = vunpack.c.l.b16 %v886
    %v1518 = vunpack.c.h.b16 %v886
    %v1519 = vunpack.c.l.b16 %v887
    %v1520 = vunpack.c.h.b16 %v887
    %v1521 = vunpack.c.l.b16 %v888
    %v1522 = vunpack.c.h.b16 %v888
    %v1523 = vunpack.c.l.b16 %v889
    %v1524 = vunpack.c.h.b16 %v889
    %v1525 = vunpack.c.l.b16 %v890
    %v1526 = vunpack.c.h.b16 %v890
    %v1527 = vunpack.c.l.b16 %v891
    %v1528 = vunpack.c.h.b16 %v891
    %v1529 = vunpack.c.l.b16 %v892
    %v1530 = vunpack.c.h.b16 %v892
    %v1531 = vunpack.c.l.b16 %v893
    %v1532 = vunpack.c.h.b16 %v893
    %v1533 = vunpack.c.l.b16 %v894
    %v1534 = vunpack.c.h.b16 %v894
    %v1535 = vunpack.c.l.b16 %v895
    %v1536 = vunpack.c.h.b16 %v895
    %v1537 = vunpack.c.l.b16 %v896
    %v1538 = vunpack.c.h.b16 %v896
    %v1539 = vunpack.c.l.b16 %v897
    %v1540 = vunpack.c.h.b16 %v897
    %v1541 = vunpack.c.l.b16 %v898
    %v1542 = vunpack.c.h.b16 %v898
    %v1543 = vunpack.c.l.b16 %v899
    %v1544 = vunpack.c.h.b16 %v899
    %v1545 = vunpack.c.l.b16 %v900
    %v1546 = vunpack.c.h.b16 %v900
    %v1547 = vunpack.c.l.b16 %v901
    %v1548 = vunpack.c.h.b16 %v901
    %v1549 = vunpack.c.l.b16 %v902
    %v1550 = vunpack.c.h.b16 %v902
    %v1551 = vunpack.c.l.b16 %v903
    %v1552 = vunpack.c.h.b16 %v903
    %v1553 = vunpack.c.l.b16 %v904
    %v1554 = vunpack.c.h.b16 %v904
    %v1555 = vunpack.c.l.b16 %v905
    %v1556 = vunpack.c.h.b16 %v905
    %v1557 = vunpack.c.l.b16 %v906
    %v1558 = vunpack.c.h.b16 %v906
    %v1559 = vunpack.c.l.b16 %v907
    %v1560 = vunpack.c.h.b16 %v907
    %v1561 = vunpack.c.l.b16 %v908
    %v1562 = vunpack.c.h.b16 %v908
    %v1563 = vunpack.c.l.b16 %v909
    %v1564 = vunpack.c.h.b16 %v909
    %v1565 = vunpack.c.l.b16 %v910
    %v1566 = vunpack.c.h.b16 %v910
    %v1567 = vunpack.c.l.b16 %v911
    %v1568 = vunpack.c.h.b16 %v911
    %v1569 = vunpack.c.l.b16 %v912
    %v1570 = vunpack.c.h.b16 %v912
    %v1571 = vunpack.c.l.b16 %v913
    %v1572 = vunpack.c.h.b16 %v913
    %v1573 = vunpack.c.l.b16 %v914
    %v1574 = vunpack.c.h.b16 %v914
    %v1575 = vunpack.c.l.b16 %v915
    %v1576 = vunpack.c.h.b16 %v915
    %v1577 = vunpack.c.l.b16 %v916
    %v1578 = vunpack.c.h.b16 %v916
    %v1579 = vunpack.c.l.b16 %v917
    %v1580 = vunpack.c.h.b16 %v917
    %v1581 = vunpack.c.l.b16 %v918
    %v1582 = vunpack.c.h.b16 %v918
    %v1583 = vunpack.c.l.b16 %v919
    %v1584 = vunpack.c.h.b16 %v919
    %v1585 = vunpack.c.l.b16 %v920
    %v1586 = vunpack.c.h.b16 %v920
    %v1587 = vunpack.c.l.b16 %v921
    %v1588 = vunpack.c.h.b16 %v921
    %v1589 = vunpack.c.l.b16 %v922
    %v1590 = vunpack.c.h.b16 %v922
    %v1591 = vunpack.c.l.b16 %v923
    %v1592 = vunpack.c.h.b16 %v923
    %v1593 = vunpack.c.l.b16 %v924
    %v1594 = vunpack.c.h.b16 %v924
    %v1595 = vunpack.c.l.b16 %v925
    %v1596 = vunpack.c.h.b16 %v925
    %v1597 = vunpack.c.l.b16 %v926
    %v1598 = vunpack.c.h.b16 %v926
    %v1599 = vunpack.c.l.b16 %v927
    %v1600 = vunpack.c.h.b16 %v927
    %v1601 = vunpack.c.l.b16 %v928
    %v1602 = vunpack.c.h.b16 %v928
    %v1603 = vunpack.c.l.b16 %v929
    %v1604 = vunpack.c.h.b16 %v929
    %v1605 = vunpack.c.l.b16 %v930
    %v1606 = vunpack.c.h.b16 %v930
    %v1607 = vunpack.c.l.b16 %v931
    %v1608 = vunpack.c.h.b16 %v931
    %v1609 = vunpack.c.l.b16 %v932
    %v1610 = vunpack.c.h.b16 %v932
    %v1611 = vunpack.c.l.b16 %v933
    %v1612 = vunpack.c.h.b16 %v933
    %v1613 = vunpack.c.l.b16 %v934
    %v1614 = vunpack.c.h.b16 %v934
    %v1615 = vunpack.c.l.b16 %v935
    %v1616 = vunpack.c.h.b16 %v935
    %v1617 = vunpack.c.l.b16 %v936
    %v1618 = vunpack.c.h.b16 %v936
    %v1619 = vunpack.c.l.b16 %v937
    %v1620 = vunpack.c.h.b16 %v937
    %v1621 = vunpack.c.l.b16 %v938
    %v1622 = vunpack.c.h.b16 %v938
    %v1623 = vunpack.c.l.b16 %v939
    %v1624 = vunpack.c.h.b16 %v939
    %v1625 = vunpack.c.l.b16 %v940
    %v1626 = vunpack.c.h.b16 %v940
    %v1627 = vunpack.c.l.b16 %v941
    %v1628 = vunpack.c.h.b16 %v941
    %v1629 = vunpack.c.l.b16 %v942
    %v1630 = vunpack.c.h.b16 %v942
    %v1631 = vunpack.c.l.b16 %v943
    %v1632 = vunpack.c.h.b16 %v943
    %v1633 = vunpack.c.l.b16 %v944
    %v1634 = vunpack.c.h.b16 %v944
    %v1635 = vunpack.c.l.b16 %v945
    %v1636 = vunpack.c.h.b16 %v945
    %v1637 = vunpack.c.l.b16 %v946
    %v1638 = vunpack.c.h.b16 %v946
    %v1639 = vunpack.c.l.b16 %v947
    %v1640 = vunpack.c.h.b16 %v947
    %v1641 = vunpack.c.l.b16 %v948
    %v1642 = vunpack.c.h.b16 %v948
    %v1643 = vunpack.c.l.b16 %v949
    %v1644 = vunpack.c.h.b16 %v949
    %v1645 = vunpack.c.l.b16 %v950
    %v1646 = vunpack.c.h.b16 %v950
    %v1647 = vunpack.c.l.b16 %v951
    %v1648 = vunpack.c.h.b16 %v951
    %v1649 = vunpack.c.l.b16 %v952
    %v1650 = vunpack.c.h.b16 %v952
    %v1651 = vunpack.c.l.b16 %v953
    %v1652 = vunpack.c.h.b16 %v953
    %v1653 = vunpack.c.l.b16 %v954
    %v1654 = vunpack.c.h.b16 %v954
    %v1655 = vunpack.c.l.b16 %v955
    %v1656 = vunpack.c.h.b16 %v955
    %v1657 = vunpack.c.l.b16 %v956
    %v1658 = vunpack.c.h.b16 %v956
    %v1659 = vunpack.c.l.b16 %v957
    %v1660 = vunpack.c.h.b16 %v957
    %v1661 = vunpack.c.l.b16 %v958
    %v1662 = vunpack.c.h.b16 %v958
    %v1663 = vunpack.c.l.b16 %v959
    %v1664 = vunpack.c.h.b16 %v959
    %v1665 = vunpack.c.l.b16 %v960
    %v1666 = vunpack.c.h.b16 %v960
    %v1667 = vunpack.c.l.b16 %v961
    %v1668 = vunpack.c.h.b16 %v961
    %v1669 = vunpack.c.l.b16 %v962
    %v1670 = vunpack.c.h.b16 %v962
    %v1671 = vunpack.c.l.b16 %v963
    %v1672 = vunpack.c.h.b16 %v963
    %v1673 = vunpack.c.l.b16 %v964
    %v1674 = vunpack.c.h.b16 %v964
    %v1675 = vunpack.c.l.b16 %v965
    %v1676 = vunpack.c.h.b16 %v965
    %v1677 = vunpack.c.l.b16 %v966
    %v1678 = vunpack.c.h.b16 %v966
    %v1679 = vunpack.c.l.b16 %v967
    %v1680 = vunpack.c.h.b16 %v967
    %v1681 = vunpack.c.l.b16 %v968
    %v1682 = vunpack.c.h.b16 %v968
    %v1683 = vunpack.c.l.b16 %v969
    %v1684 = vunpack.c.h.b16 %v969
    %v1685 = vunpack.c.l.b16 %v970
    %v1686 = vunpack.c.h.b16 %v970
    %v1687 = vunpack.c.l.b16 %v971
    %v1688 = vunpack.c.h.b16 %v971
    %v1689 = vunpack.c.l.b16 %v972
    %v1690 = vunpack.c.h.b16 %v972
    %v1691 = vunpack.c.l.b16 %v973
    %v1692 = vunpack.c.h.b16 %v973
    %v1693 = vunpack.c.l.b16 %v974
    %v1694 = vunpack.c.h.b16 %v974
    %v1695 = vunpack.c.l.b16 %v975
    %v1696 = vunpack.c.h.b16 %v975
    %v1697 = vunpack.c.l.b16 %v976
    %v1698 = vunpack.c.h.b16 %v976
    %v1699 = vunpack.c.l.b16 %v977
    %v1700 = vunpack.c.h.b16 %v977
    %v1701 = vunpack.c.l.b16 %v978
    %v1702 = vunpack.c.h.b16 %v978
    %v1703 = vunpack.c.l.b16 %v979
    %v1704 = vunpack.c.h.b16 %v979
    %v1705 = vunpack.c.l.b16 %v980
    %v1706 = vunpack.c.h.b16 %v980
    %v1707 = vunpack.c.l.b16 %v981
    %v1708 = vunpack.c.h.b16 %v981
    %v1709 = vunpack.c.l.b16 %v982
    %v1710 = vunpack.c.h.b16 %v982
    %v1711 = vunpack.c.l.b16 %v983
    %v1712 = vunpack.c.h.b16 %v983
    %v1713 = vunpack.c.l.b16 %v984
    %v1714 = vunpack.c.h.b16 %v984
    %v1715 = vunpack.c.l.b16 %v985
    %v1716 = vunpack.c.h.b16 %v985
    %v1717 = vunpack.c.l.b16 %v986
    %v1718 = vunpack.c.h.b16 %v986
    %v1719 = vunpack.c.l.b16 %v987
    %v1720 = vunpack.c.h.b16 %v987
    %v1721 = vunpack.c.l.b16 %v988
    %v1722 = vunpack.c.h.b16 %v988
    %v1723 = vunpack.c.l.b16 %v989
    %v1724 = vunpack.c.h.b16 %v989
    %v1725 = vunpack.c.l.b16 %v990
    %v1726 = vunpack.c.h.b16 %v990
    %v1727 = vunpack.c.l.b16 %v991
    %v1728 = vunpack.c.h.b16 %v991
    %v1729 = vunpack.c.l.b16 %v992
    %v1730 = vunpack.c.h.b16 %v992
    %v1731 = vunpack.c.l.b16 %v993
    %v1732 = vunpack.c.h.b16 %v993
    %v1733 = vunpack.c.l.b16 %v994
    %v1734 = vunpack.c.h.b16 %v994
    %v1735 = vunpack.c.l.b16 %v995
    %v1736 = vunpack.c.h.b16 %v995
    %v1737 = vunpack.c.l.b16 %v996
    %v1738 = vunpack.c.h.b16 %v996
    %v1739 = vunpack.c.l.b16 %v997
    %v1740 = vunpack.c.h.b16 %v997
    %v1741 = vunpack.c.l.b16 %v998
    %v1742 = vunpack.c.h.b16 %v998
    %v1743 = vunpack.c.l.b16 %v999
    %v1744 = vunpack.c.h.b16 %v999
    %v1745 = vunpack.c.l.b16 %v1000
    %v1746 = vunpack.c.h.b16 %v1000
    %v1747 = vunpack.c.l.b16 %v1001
    %v1748 = vunpack.c.h.b16 %v1001
    %v1749 = vunpack.c.l.b16 %v1002
    %v1750 = vunpack.c.h.b16 %v1002
    %v1751 = vunpack.c.l.b16 %v1003
    %v1752 = vunpack.c.h.b16 %v1003
    %v1753 = vunpack.c.l.b16 %v1004
    %v1754 = vunpack.c.h.b16 %v1004
    %v1755 = vunpack.c.l.b16 %v1005
    %v1756 = vunpack.c.h.b16 %v1005
    %v1757 = vunpack.c.l.b16 %v1006
    %v1758 = vunpack.c.h.b16 %v1006
    %v1759 = vunpack.c.l.b16 %v1007
    %v1760 = vunpack.c.h.b16 %v1007
    %v1761 = vunpack.c.l.b16 %v1008
    %v1762 = vunpack.c.h.b16 %v1008
    %v1763 = vunpack.c.l.b16 %v1009
    %v1764 = vunpack.c.h.b16 %v1009
    %v1765 = vunpack.c.l.b16 %v1010
    %v1766 = vunpack.c.h.b16 %v1010
    %v1767 = vunpack.c.l.b16 %v1011
    %v1768 = vunpack.c.h.b16 %v1011
    %v1769 = vunpack.c.l.b16 %v1012
    %v1770 = vunpack.c.h.b16 %v1012
    %v1771 = vunpack.c.l.b16 %v1013
    %v1772 = vunpack.c.h.b16 %v1013
    %v1773 = vunpack.c.l.b16 %v1014
    %v1774 = vunpack.c.h.b16 %v1014
    %v1775 = vunpack.c.l.b16 %v1015
    %v1776 = vunpack.c.h.b16 %v1015
    %v1777 = vunpack.c.l.b16 %v1016
    %v1778 = vunpack.c.h.b16 %v1016
    %v1779 = vunpack.c.l.b16 %v1017
    %v1780 = vunpack.c.h.b16 %v1017
    %v1781 = vunpack.c.l.b16 %v1018
    %v1782 = vunpack.c.h.b16 %v1018
    %v1783 = vunpack.c.l.b16 %v1019
    %v1784 = vunpack.c.h.b16 %v1019
    %v1785 = vunpack.c.l.b16 %v1020
    %v1786 = vunpack.c.h.b16 %v1020
    %v1787 = vunpack.c.l.b16 %v1021
    %v1788 = vunpack.c.h.b16 %v1021
    %v1789 = vunpack.c.l.b16 %v1022
    %v1790 = vunpack.c.h.b16 %v1022
    %v1791 = vunpack.c.l.b16 %v1023
    %v1792 = vunpack.c.h.b16 %v1023
    %v1793 = vunpack.c.l.b16 %v1024
    %v1794 = vunpack.c.h.b16 %v1024
    %v1795 = vunpack.c.l.b16 %v1025
    %v1796 = vunpack.c.h.b16 %v1025
    %v1797 = vunpack.c.l.b16 %v1026
    %v1798 = vunpack.c.h.b16 %v1026
    %v1799 = vunpack.c.l.b16 %v1027
    %v1800 = vunpack.c.h.b16 %v1027
    %v1801 = vunpack.c.l.b16 %v1028
    %v1802 = vunpack.c.h.b16 %v1028
    %v1803 = vunpack.c.l.b16 %v1029
    %v1804 = vunpack.c.h.b16 %v1029
    %v1805 = vunpack.c.l.b16 %v1030
    %v1806 = vunpack.c.h.b16 %v1030
    %v1807 = vunpack.c.l.b16 %v1031
    %v1808 = vunpack.c.h.b16 %v1031
    %v1809 = vunpack.c.l.b16 %v1032
    %v1810 = vunpack.c.h.b16 %v1032
    %v1811 = vunpack.c.l.b16 %v1033
    %v1812 = vunpack.c.h.b16 %v1033
    %v1813 = vunpack.c.l.b16 %v1034
    %v1814 = vunpack.c.h.b16 %v1034
    %v1815 = vunpack.c.l.b16 %v1035
    %v1816 = vunpack.c.h.b16 %v1035
    %v1817 = vunpack.c.l.b16 %v1036
    %v1818 = vunpack.c.h.b16 %v1036
    %v1819 = vunpack.c.l.b16 %v1037
    %v1820 = vunpack.c.h.b16 %v1037
    %v1821 = vunpack.c.l.b16 %v1038
    %v1822 = vunpack.c.h.b16 %v1038
    %v1823 = vunpack.c.l.b16 %v1039
    %v1824 = vunpack.c.h.b16 %v1039
    %v1825 = vunpack.c.l.b16 %v1040
    %v1826 = vunpack.c.h.b16 %v1040
    %v1827 = vunpack.c.l.b16 %v1041
    %v1828 = vunpack.c.h.b16 %v1041
    %v1829 = vunpack.c.l.b16 %v1042
    %v1830 = vunpack.c.h.b16 %v1042
    %v1831 = vunpack.c.l.b16 %v1043
    %v1832 = vunpack.c.h.b16 %v1043
    %v1833 = vunpack.c.l.b16 %v1044
    %v1834 = vunpack.c.h.b16 %v1044
    %v1835 = vunpack.c.l.b16 %v1045
    %v1836 = vunpack.c.h.b16 %v1045
    %v1837 = vunpack.c.l.b16 %v1046
    %v1838 = vunpack.c.h.b16 %v1046
    %v1839 = vunpack.c.l.b16 %v1047
    %v1840 = vunpack.c.h.b16 %v1047
    %v1841 = vunpack.c.l.b16 %v1048
    %v1842 = vunpack.c.h.b16 %v1048
    %v1843 = vunpack.c.l.b16 %v1049
    %v1844 = vunpack.c.h.b16 %v1049
    %v1845 = vunpack.c.l.b16 %v1050
    %v1846 = vunpack.c.h.b16 %v1050
    %v1847 = vunpack.c.l.b16 %v1051
    %v1848 = vunpack.c.h.b16 %v1051
    %v1849 = vunpack.c.l.b16 %v1052
    %v1850 = vunpack.c.h.b16 %v1052
    %v1851 = vunpack.c.l.b16 %v1053
    %v1852 = vunpack.c.h.b16 %v1053
    %v1853 = vunpack.c.l.b16 %v1054
    %v1854 = vunpack.c.h.b16 %v1054
    %v1855 = vunpack.c.l.b16 %v1055
    %v1856 = vunpack.c.h.b16 %v1055
    %v1857 = vunpack.c.l.b16 %v1056
    %v1858 = vunpack.c.h.b16 %v1056
    %v1859 = vunpack.c.l.b16 %v1057
    %v1860 = vunpack.c.h.b16 %v1057
    %v1861 = vunpack.c.l.b16 %v1058
    %v1862 = vunpack.c.h.b16 %v1058
    %v1863 = vunpack.c.l.b16 %v1059
    %v1864 = vunpack.c.h.b16 %v1059
    %v1865 = vunpack.c.l.b16 %v1060
    %v1866 = vunpack.c.h.b16 %v1060
    %v1867 = vunpack.c.l.b16 %v1061
    %v1868 = vunpack.c.h.b16 %v1061
    %v1869 = vunpack.c.l.b16 %v1062
    %v1870 = vunpack.c.h.b16 %v1062
    %v1871 = vunpack.c.l.b16 %v1063
    %v1872 = vunpack.c.h.b16 %v1063
    %v1873 = vunpack.c.l.b16 %v1064
    %v1874 = vunpack.c.h.b16 %v1064
    %v1875 = vpack.c.b16 %v1371, %v1363
    %v1876 = vpack.c.b16 %v1372, %v1364
    %v1877 = vpack.c.b16 %v1373, %v1365
    %v1878 = vpack.c.b16 %v1374, %v1366
    %v1879 = vpack.c.b16 %v1375, %v1367
    %v1880 = vpack.c.b16 %v1376, %v1368
    %v1881 = vpack.c.b16 %v1377, %v1369
    %v1882 = vpack.c.b16 %v1378, %v1370
    %v1883 = vpack.c.b16 %v1387, %v1379
    %v1884 = vpack.c.b16 %v1388, %v1380
    %v1885 = vpack.c.b16 %v1389, %v1381
    %v1886 = vpack.c.b16 %v1390, %v1382
    %v1887 = vpack.c.b16 %v1391, %v1383
    %v1888 = vpack.c.b16 %v1392, %v1384
    %v1889 = vpack.c.b16 %v1393, %v1385
    %v1890 = vpack.c.b16 %v1394, %v1386
    %v1891 = vpack.c.b16 %v1403, %v1395
    %v1892 = vpack.c.b16 %v1404, %v1396
    %v1893 = vpack.c.b16 %v1405, %v1397
    %v1894 = vpack.c.b16 %v1406, %v1398
    %v1895 = vpack.c.b16 %v1407, %v1399
    %v1896 = vpack.c.b16 %v1408, %v1400
    %v1897 = vpack.c.b16 %v1409, %v1401
    %v1898 = vpack.c.b16 %v1410, %v1402
    %v1899 = vpack.c.b16 %v1419, %v1411
    %v1900 = vpack.c.b16 %v1420, %v1412
    %v1901 = vpack.c.b16 %v1421, %v1413
    %v1902 = vpack.c.b16 %v1422, %v1414
    %v1903 = vpack.c.b16 %v1423, %v1415
    %v1904 = vpack.c.b16 %v1424, %v1416
    %v1905 = vpack.c.b16 %v1425, %v1417
    %v1906 = vpack.c.b16 %v1426, %v1418
    %v1907 = vpack.c.b16 %v1435, %v1427
    %v1908 = vpack.c.b16 %v1436, %v1428
    %v1909 = vpack.c.b16 %v1437, %v1429
    %v1910 = vpack.c.b16 %v1438, %v1430
    %v1911 = vpack.c.b16 %v1439, %v1431
    %v1912 = vpack.c.b16 %v1440, %v1432
    %v1913 = vpack.c.b16 %v1441, %v1433
    %v1914 = vpack.c.b16 %v1442, %v1434
    %v1915 = vpack.c.b16 %v1451, %v1443
    %v1916 = vpack.c.b16 %v1452, %v1444
    %v1917 = vpack.c.b16 %v1453, %v1445
    %v1918 = vpack.c.b16 %v1454, %v1446
    %v1919 = vpack.c.b16 %v1455, %v1447
    %v1920 = vpack.c.b16 %v1456, %v1448
    %v1921 = vpack.c.b16 %v1457, %v1449
    %v1922 = vpack.c.b16 %v1458, %v1450
    %v1923 = vpack.c.b16 %v1467, %v1459
    %v1924 = vpack.c.b16 %v1468, %v1460
    %v1925 = vpack.c.b16 %v1469, %v1461
    %v1926 = vpack.c.b16 %v1470, %v1462
    %v1927 = vpack.c.b16 %v1471, %v1463
    %v1928 = vpack.c.b16 %v1472, %v1464
    %v1929 = vpack.c.b16 %v1473, %v1465
    %v1930 = vpack.c.b16 %v1474, %v1466
    %v1931 = vpack.c.b16 %v1483, %v1475
    %v1932 = vpack.c.b16 %v1484, %v1476
    %v1933 = vpack.c.b16 %v1485, %v1477
    %v1934 = vpack.c.b16 %v1486, %v1478
    %v1935 = vpack.c.b16 %v1487, %v1479
    %v1936 = vpack.c.b16 %v1488, %v1480
    %v1937 = vpack.c.b16 %v1489, %v1481
    %v1938 = vpack.c.b16 %v1490, %v1482
    %v1939 = vpack.c.b16 %v1499, %v1491
    %v1940 = vpack.c.b16 %v1500, %v1492
    %v1941 = vpack.c.b16 %v1501, %v1493
    %v1942 = vpack.c.b16 %v1502, %v1494
    %v1943 = vpack.c.b16 %v1503, %v1495
    %v1944 = vpack.c.b16 %v1504, %v1496
    %v1945 = vpack.c.b16 %v1505, %v1497
    %v1946 = vpack.c.b16 %v1506, %v1498
    %v1947 = vpack.c.b16 %v1515, %v1507
    %v1948 = vpack.c.b16 %v1516, %v1508
    %v1949 = vpack.c.b16 %v1517, %v1509
    %v1950 = vpack.c.b16 %v1518, %v1510
    %v1951 = vpack.c.b16 %v1519, %v1511
    %v1952 = vpack.c.b16 %v1520, %v1512
    %v1953 = vpack.c.b16 %v1521, %v1513
    %v1954 = vpack.c.b16 %v1522, %v1514
    %v1955 = vpack.c.b16 %v1531, %v1523
    %v1956 = vpack.c.b16 %v1532, %v1524
    %v1957 = vpack.c.b16 %v1533, %v1525
    %v1958 = vpack.c.b16 %v1534, %v1526
    %v1959 = vpack.c.b16 %v1535, %v1527
    %v1960 = vpack.c.b16 %v1536, %v1528
    %v1961 = vpack.c.b16 %v1537, %v1529
    %v1962 = vpack.c.b16 %v1538, %v1530
    %v1963 = vpack.c.b16 %v1547, %v1539
    %v1964 = vpack.c.b16 %v1548, %v1540
    %v1965 = vpack.c.b16 %v1549, %v1541
    %v1966 = vpack.c.b16 %v1550, %v1542
    %v1967 = vpack.c.b16 %v1551, %v1543
    %v1968 = vpack.c.b16 %v1552, %v1544
    %v1969 = vpack.c.b16 %v1553, %v1545
    %v1970 = vpack.c.b16 %v1554, %v1546
    %v1971 = vpack.c.b16 %v1563, %v1555
    %v1972 = vpack.c.b16 %v1564, %v1556
    %v1973 = vpack.c.b16 %v1565, %v1557
    %v1974 = vpack.c.b16 %v1566, %v1558
    %v1975 = vpack.c.b16 %v1567, %v1559
    %v1976 = vpack.c.b16 %v1568, %v1560
    %v1977 = vpack.c.b16 %v1569, %v1561
    %v1978 = vpack.c.b16 %v1570, %v1562
    %v1979 = vpack.c.b16 %v1579, %v1571
    %v1980 = vpack.c.b16 %v1580, %v1572
    %v1981 = vpack.c.b16 %v1581, %v1573
    %v1982 = vpack.c.b16 %v1582, %v1574
    %v1983 = vpack.c.b16 %v1583, %v1575
    %v1984 = vpack.c.b16 %v1584, %v1576
    %v1985 = vpack.c.b16 %v1585, %v1577
    %v1986 = vpack.c.b16 %v1586, %v1578
    %v1987 = vpack.c.b16 %v1595, %v1587
    %v1988 = vpack.c.b16 %v1596, %v1588
    %v1989 = vpack.c.b16 %v1597, %v1589
    %v1990 = vpack.c.b16 %v1598, %v1590
    %v1991 = vpack.c.b16 %v1599, %v1591
    %v1992 = vpack.c.b16 %v1600, %v1592
    %v1993 = vpack.c.b16 %v1601, %v1593
    %v1994 = vpack.c.b16 %v1602, %v1594
    %v1995 = vpack.c.b16 %v1611, %v1603
    %v1996 = vpack.c.b16 %v1612, %v1604
    %v1997 = vpack.c.b16 %v1613, %v1605
    %v1998 = vpack.c.b16 %v1614, %v1606
    %v1999 = vpack.c.b16 %v1615, %v1607
    %v2000 = vpack.c.b16 %v1616, %v1608
    %v2001 = vpack.c.b16 %v1617, %v1609
    %v2002 = vpack.c.b16 %v1618, %v1610
    %v2003 = vpack.c.b16 %v1627, %v1619
    %v2004 = vpack.c.b16 %v1628, %v1620
    %v2005 = vpack.c.b16 %v1629, %v1621
    %v2006 = vpack.c.b16 %v1630, %v1622
    %v2007 = vpack.c.b16 %v1631, %v1623
    %v2008 = vpack.c.b16 %v1632, %v1624
    %v2009 = vpack.c.b16 %v1633, %v1625
    %v2010 = vpack.c.b16 %v1634, %v1626
    %v2011 = vpack.c.b16 %v1643, %v1635
    %v2012 = vpack.c.b16 %v1644, %v1636
    %v2013 = vpack.c.b16 %v1645, %v1637
    %v2014 = vpack.c.b16 %v1646, %v1638
    %v2015 = vpack.c.b16 %v1647, %v1639
    %v2016 = vpack.c.b16 %v1648, %v1640
    %v2017 = vpack.c.b16 %v1649, %v1641
    %v2018 = vpack.c.b16 %v1650, %v1642
    %v2019 = vpack.c.b16 %v1659, %v1651
    %v2020 = vpack.c.b16 %v1660, %v1652
    %v2021 = vpack.c.b16 %v1661, %v1653
    %v2022 = vpack.c.b16 %v1662, %v1654
    %v2023 = vpack.c.b16 %v1663, %v1655
    %v2024 = vpack.c.b16 %v1664, %v1656
    %v2025 = vpack.c.b16 %v1665, %v1657
    %v2026 = vpack.c.b16 %v1666, %v1658
    %v2027 = vpack.c.b16 %v1675, %v1667
    %v2028 = vpack.c.b16 %v1676, %v1668
    %v2029 = vpack.c.b16 %v1677, %v1669
    %v2030 = vpack.c.b16 %v1678, %v1670
    %v2031 = vpack.c.b16 %v1679, %v1671
    %v2032 = vpack.c.b16 %v1680, %v1672
    %v2033 = vpack.c.b16 %v1681, %v1673
    %v2034 = vpack.c.b16 %v1682, %v1674
    %v2035 = vpack.c.b16 %v1691, %v1683
    %v2036 = vpack.c.b16 %v1692, %v1684
    %v2037 = vpack.c.b16 %v1693, %v1685
    %v2038 = vpack.c.b16 %v1694, %v1686
    %v2039 = vpack.c.b16 %v1695, %v1687
    %v2040 = vpack.c.b16 %v1696, %v1688
    %v2041 = vpack.c.b16 %v1697, %v1689
    %v2042 = vpack.c.b16 %v1698, %v1690
    %v2043 = vpack.c.b16 %v1707, %v1699
    %v2044 = vpack.c.b16 %v1708, %v1700
    %v2045 = vpack.c.b16 %v1709, %v1701
    %v2046 = vpack.c.b16 %v1710, %v1702
    %v2047 = vpack.c.b16 %v1711, %v1703
    %v2048 = vpack.c.b16 %v1712, %v1704
    %v2049 = vpack.c.b16 %v1713, %v1705
    %v2050 = vpack.c.b16 %v1714, %v1706
    %v2051 = vpack.c.b16 %v1723, %v1715
    %v2052 = vpack.c.b16 %v1724, %v1716
    %v2053 = vpack.c.b16 %v1725, %v1717
    %v2054 = vpack.c.b16 %v1726, %v1718
    %v2055 = vpack.c.b16 %v1727, %v1719
    %v2056 = vpack.c.b16 %v1728, %v1720
    %v2057 = vpack.c.b16 %v1729, %v1721
    %v2058 = vpack.c.b16 %v1730, %v1722
    %v2059 = vpack.c.b16 %v1739, %v1731
    %v2060 = vpack.c.b16 %v1740, %v1732
    %v2061 = vpack.c.b16 %v1741, %v1733
    %v2062 = vpack.c.b16 %v1742, %v1734
    %v2063 = vpack.c.b16 %v1743, %v1735
    %v2064 = vpack.c.b16 %v1744, %v1736
    %v2065 = vpack.c.b16 %v1745, %v1737
    %v2066 = vpack.c.b16 %v1746, %v1738
    %v2067 = vpack.c.b16 %v1755, %v1747
    %v2068 = vpack.c.b16 %v1756, %v1748
    %v2069 = vpack.c.b16 %v1757, %v1749
    %v2070 = vpack.c.b16 %v1758, %v1750
    %v2071 = vpack.c.b16 %v1759, %v1751
    %v2072 = vpack.c.b16 %v1760, %v1752
    %v2073 = vpack.c.b16 %v1761, %v1753
    %v2074 = vpack.c.b16 %v1762, %v1754
    %v2075 = vpack.c.b16 %v1771, %v1763
    %v2076 = vpack.c.b16 %v1772, %v1764
    %v2077 = vpack.c.b16 %v1773, %v1765
    %v2078 = vpack.c.b16 %v1774, %v1766
    %v2079 = vpack.c.b16 %v1775, %v1767
    %v2080 = vpack.c.b16 %v1776, %v1768
    %v2081 = vpack.c.b16 %v1777, %v1769
    %v2082 = vpack.c.b16 %v1778, %v1770
    %v2083 = vpack.c.b16 %v1787, %v1779
    %v2084 = vpack.c.b16 %v1788, %v1780
    %v2085 = vpack.c.b16 %v1789, %v1781
    %v2086 = vpack.c.b16 %v1790, %v1782
    %v2087 = vpack.c.b16 %v1791, %v1783
    %v2088 = vpack.c.b16 %v1792, %v1784
    %v2089 = vpack.c.b16 %v1793, %v1785
    %v2090 = vpack.c.b16 %v1794, %v1786
    %v2091 = vpack.c.b16 %v1803, %v1795
    %v2092 = vpack.c.b16 %v1804, %v1796
    %v2093 = vpack.c.b16 %v1805, %v1797
    %v2094 = vpack.c.b16 %v1806, %v1798
    %v2095 = vpack.c.b16 %v1807, %v1799
    %v2096 = vpack.c.b16 %v1808, %v1800
    %v2097 = vpack.c.b16 %v1809, %v1801
    %v2098 = vpack.c.b16 %v1810, %v1802
    %v2099 = vpack.c.b16 %v1819, %v1811
    %v2100 = vpack.c.b16 %v1820, %v1812
    %v2101 = vpack.c.b16 %v1821, %v1813
    %v2102 = vpack.c.b16 %v1822, %v1814
    %v2103 = vpack.c.b16 %v1823, %v1815
    %v2104 = vpack.c.b16 %v1824, %v1816
    %v2105 = vpack.c.b16 %v1825, %v1817
    %v2106 = vpack.c.b16 %v1826, %v1818
    %v2107 = vpack.c.b16 %v1835, %v1827
    %v2108 = vpack.c.b16 %v1836, %v1828
    %v2109 = vpack.c.b16 %v1837, %v1829
    %v2110 = vpack.c.b16 %v1838, %v1830
    %v2111 = vpack.c.b16 %v1839, %v1831
    %v2112 = vpack.c.b16 %v1840, %v1832
    %v2113 = vpack.c.b16 %v1841, %v1833
    %v2114 = vpack.c.b16 %v1842, %v1834
    %v2115 = vpack.c.b16 %v1851, %v1843
    %v2116 = vpack.c.b16 %v1852, %v1844
    %v2117 = vpack.c.b16 %v1853, %v1845
    %v2118 = vpack.c.b16 %v1854, %v1846
    %v2119 = vpack.c.b16 %v1855, %v1847
    %v2120 = vpack.c.b16 %v1856, %v1848
    %v2121 = vpack.c.b16 %v1857, %v1849
    %v2122 = vpack.c.b16 %v1858, %v1850
    %v2123 = vpack.c.b16 %v1867, %v1859
    %v2124 = vpack.c.b16 %v1868, %v1860
    %v2125 = vpack.c.b16 %v1869, %v1861
    %v2126 = vpack.c.b16 %v1870, %v1862
    %v2127 = vpack.c.b16 %v1871, %v1863
    %v2128 = vpack.c.b16 %v1872, %v1864
    %v2129 = vpack.c.b16 %v1873, %v1865
    %v2130 = vpack.c.b16 %v1874, %v1866
    %2387 = vmatprep.subr.bf16.mxu0 %v1876
    %2388 = vmatpush1.bf16.msra.mxu0 %v1875
    %2389 = vmatprep.subr.bf16.mxu0 %v1884
    %2390 = vmatpush1.bf16.msra.mxu0 %v1883
    %2391 = vmatprep.subr.bf16.mxu0 %v1892
    %2392 = vmatpush1.bf16.msra.mxu0 %v1891
    %2393 = vmatprep.subr.bf16.mxu0 %v1900
    %2394 = vmatpush1.bf16.msra.mxu0 %v1899
    %2395 = vmatprep.subr.bf16.mxu0 %v1908
    %2396 = vmatpush1.bf16.msra.mxu0 %v1907
    %2397 = vmatprep.subr.bf16.mxu0 %v1916
    %2398 = vmatpush1.bf16.msra.mxu0 %v1915
    %2399 = vmatprep.subr.bf16.mxu0 %v1924
    %2400 = vmatpush1.bf16.msra.mxu0 %v1923
    %2401 = vmatprep.subr.bf16.mxu0 %v1932
    %2402 = vmatpush1.bf16.msra.mxu0 %v1931
    %2403 = vmatprep.subr.bf16.mxu0 %v1940
    %2404 = vmatpush1.bf16.msra.mxu0 %v1939
    %2405 = vmatprep.subr.bf16.mxu0 %v1948
    %2406 = vmatpush1.bf16.msra.mxu0 %v1947
    %2407 = vmatprep.subr.bf16.mxu0 %v1956
    %2408 = vmatpush1.bf16.msra.mxu0 %v1955
    %2409 = vmatprep.subr.bf16.mxu0 %v1964
    %2410 = vmatpush1.bf16.msra.mxu0 %v1963
    %2411 = vmatprep.subr.bf16.mxu0 %v1972
    %2412 = vmatpush1.bf16.msra.mxu0 %v1971
    %2413 = vmatprep.subr.bf16.mxu0 %v1980
    %2414 = vmatpush1.bf16.msra.mxu0 %v1979
    %2415 = vmatprep.subr.bf16.mxu0 %v1988
    %2416 = vmatpush1.bf16.msra.mxu0 %v1987
    %2417 = vmatprep.subr.bf16.mxu0 %v1996
    %2418 = vmatpush1.bf16.msra.mxu0 %v1995
    %2419 = vmatprep.mubr.bf16.mxu0 %v806
    %2420 = vmatmul.mubr.bf16.gmra.mrb[0].mxu0 %v805
    %v2421 = vpop.f32.mrb[0].mxu0
    %v2422 = vadd.f32 %v1070, %v2421
    %v2423 = vpop.f32.mrb[0].mxu0
    %v2424 = vadd.f32 %v1074, %v2423
    %v2425 = vpop.f32.mrb[0].mxu0
    %v2426 = vpop.f32.mrb[0].mxu0
    %2427 = vdwg.mxu0
    %2428 = vmatprep.subr.bf16.mxu0 %v2004
    %2429 = vmatpush1.bf16.msra.mxu0 %v2003
    %2430 = vmatprep.subr.bf16.mxu0 %v2012
    %2431 = vmatpush1.bf16.msra.mxu0 %v2011
    %2432 = vmatprep.subr.bf16.mxu0 %v2020
    %2433 = vmatpush1.bf16.msra.mxu0 %v2019
    %2434 = vmatprep.subr.bf16.mxu0 %v2028
    %2435 = vmatpush1.bf16.msra.mxu0 %v2027
    %2436 = vmatprep.subr.bf16.mxu0 %v2036
    %2437 = vmatpush1.bf16.msra.mxu0 %v2035
    %2438 = vmatprep.subr.bf16.mxu0 %v2044
    %2439 = vmatpush1.bf16.msra.mxu0 %v2043
    %2440 = vmatprep.subr.bf16.mxu0 %v2052
    %2441 = vmatpush1.bf16.msra.mxu0 %v2051
    %2442 = vmatprep.subr.bf16.mxu0 %v2060
    %2443 = vmatpush1.bf16.msra.mxu0 %v2059
    %2444 = vmatprep.subr.bf16.mxu0 %v2068
    %2445 = vmatpush1.bf16.msra.mxu0 %v2067
    %2446 = vmatprep.subr.bf16.mxu0 %v2076
    %2447 = vmatpush1.bf16.msra.mxu0 %v2075
    %2448 = vmatprep.subr.bf16.mxu0 %v2084
    %2449 = vmatpush1.bf16.msra.mxu0 %v2083
    %2450 = vmatprep.subr.bf16.mxu0 %v2092
    %2451 = vmatpush1.bf16.msra.mxu0 %v2091
    %2452 = vmatprep.subr.bf16.mxu0 %v2100
    %2453 = vmatpush1.bf16.msra.mxu0 %v2099
    %2454 = vmatprep.subr.bf16.mxu0 %v2108
    %2455 = vmatpush1.bf16.msra.mxu0 %v2107
    %2456 = vmatprep.subr.bf16.mxu0 %v2116
    %2457 = vmatpush1.bf16.msra.mxu0 %v2115
    %2458 = vmatprep.subr.bf16.mxu0 %v2124
    %2459 = vmatpush1.bf16.msra.mxu0 %v2123
    %2460 = vmatprep.mubr.bf16.mxu0 %v808
    %2461 = vmatmul.mubr.bf16.gmra.mrb[0].mxu0 %v807
    %v2462 = vpop.f32.mrb[0].mxu0
    %v2463 = vadd.f32 %v2422, %v2462
    %v2464 = vpop.f32.mrb[0].mxu0
    %v2465 = vadd.f32 %v2424, %v2464
    %v2466 = vpop.f32.mrb[0].mxu0
    %v2467 = vpop.f32.mrb[0].mxu0
    %2468 = vdwg.mxu0
    %2469 = vmatprep.subr.bf16.mxu0 %v1878
    %2470 = vmatpush1.bf16.msra.mxu0 %v1877
    %2471 = vmatprep.subr.bf16.mxu0 %v1886
    %2472 = vmatpush1.bf16.msra.mxu0 %v1885
    %2473 = vmatprep.subr.bf16.mxu0 %v1894
    %2474 = vmatpush1.bf16.msra.mxu0 %v1893
    %2475 = vmatprep.subr.bf16.mxu0 %v1902
    %2476 = vmatpush1.bf16.msra.mxu0 %v1901
    %2477 = vmatprep.subr.bf16.mxu0 %v1910
    %2478 = vmatpush1.bf16.msra.mxu0 %v1909
    %2479 = vmatprep.subr.bf16.mxu0 %v1918
    %2480 = vmatpush1.bf16.msra.mxu0 %v1917
    %2481 = vmatprep.subr.bf16.mxu0 %v1926
    %2482 = vmatpush1.bf16.msra.mxu0 %v1925
    %2483 = vmatprep.subr.bf16.mxu0 %v1934
    %2484 = vmatpush1.bf16.msra.mxu0 %v1933
    %2485 = vmatprep.subr.bf16.mxu0 %v1942
    %2486 = vmatpush1.bf16.msra.mxu0 %v1941
    %2487 = vmatprep.subr.bf16.mxu0 %v1950
    %2488 = vmatpush1.bf16.msra.mxu0 %v1949
    %2489 = vmatprep.subr.bf16.mxu0 %v1958
    %2490 = vmatpush1.bf16.msra.mxu0 %v1957
    %2491 = vmatprep.subr.bf16.mxu0 %v1966
    %2492 = vmatpush1.bf16.msra.mxu0 %v1965
    %2493 = vmatprep.subr.bf16.mxu0 %v1974
    %2494 = vmatpush1.bf16.msra.mxu0 %v1973
    %2495 = vmatprep.subr.bf16.mxu0 %v1982
    %2496 = vmatpush1.bf16.msra.mxu0 %v1981
    %2497 = vmatprep.subr.bf16.mxu0 %v1990
    %2498 = vmatpush1.bf16.msra.mxu0 %v1989
    %2499 = vmatprep.subr.bf16.mxu0 %v1998
    %2500 = vmatpush1.bf16.msra.mxu0 %v1997
    %2501 = vmatprep.mubr.bf16.mxu0 %v806
    %2502 = vmatmul.mubr.bf16.gmra.mrb[0].mxu0 %v805
    %v2503 = vpop.f32.mrb[0].mxu0
    %v2504 = vadd.f32 %v1078, %v2503
    %v2505 = vpop.f32.mrb[0].mxu0
    %v2506 = vadd.f32 %v1082, %v2505
    %v2507 = vpop.f32.mrb[0].mxu0
    %v2508 = vpop.f32.mrb[0].mxu0
    %2509 = vdwg.mxu0
    %2510 = vmatprep.subr.bf16.mxu0 %v2006
    %2511 = vmatpush1.bf16.msra.mxu0 %v2005
    %2512 = vmatprep.subr.bf16.mxu0 %v2014
    %2513 = vmatpush1.bf16.msra.mxu0 %v2013
    %2514 = vmatprep.subr.bf16.mxu0 %v2022
    %2515 = vmatpush1.bf16.msra.mxu0 %v2021
    %2516 = vmatprep.subr.bf16.mxu0 %v2030
    %2517 = vmatpush1.bf16.msra.mxu0 %v2029
    %2518 = vmatprep.subr.bf16.mxu0 %v2038
    %2519 = vmatpush1.bf16.msra.mxu0 %v2037
    %2520 = vmatprep.subr.bf16.mxu0 %v2046
    %2521 = vmatpush1.bf16.msra.mxu0 %v2045
    %2522 = vmatprep.subr.bf16.mxu0 %v2054
    %2523 = vmatpush1.bf16.msra.mxu0 %v2053
    %2524 = vmatprep.subr.bf16.mxu0 %v2062
    %2525 = vmatpush1.bf16.msra.mxu0 %v2061
    %2526 = vmatprep.subr.bf16.mxu0 %v2070
    %2527 = vmatpush1.bf16.msra.mxu0 %v2069
    %2528 = vmatprep.subr.bf16.mxu0 %v2078
    %2529 = vmatpush1.bf16.msra.mxu0 %v2077
    %2530 = vmatprep.subr.bf16.mxu0 %v2086
    %2531 = vmatpush1.bf16.msra.mxu0 %v2085
    %2532 = vmatprep.subr.bf16.mxu0 %v2094
    %2533 = vmatpush1.bf16.msra.mxu0 %v2093
    %2534 = vmatprep.subr.bf16.mxu0 %v2102
    %2535 = vmatpush1.bf16.msra.mxu0 %v2101
    %2536 = vmatprep.subr.bf16.mxu0 %v2110
    %2537 = vmatpush1.bf16.msra.mxu0 %v2109
    %2538 = vmatprep.subr.bf16.mxu0 %v2118
    %2539 = vmatpush1.bf16.msra.mxu0 %v2117
    %2540 = vmatprep.subr.bf16.mxu0 %v2126
    %2541 = vmatpush1.bf16.msra.mxu0 %v2125
    %2542 = vmatprep.mubr.bf16.mxu0 %v808
    %2543 = vmatmul.mubr.bf16.gmra.mrb[0].mxu0 %v807
    %v2544 = vpop.f32.mrb[0].mxu0
    %v2545 = vadd.f32 %v2504, %v2544
    %v2546 = vpop.f32.mrb[0].mxu0
    %v2547 = vadd.f32 %v2506, %v2546
    %v2548 = vpop.f32.mrb[0].mxu0
    %v2549 = vpop.f32.mrb[0].mxu0
    %2550 = vdwg.mxu0
    %2551 = vmatprep.subr.bf16.mxu0 %v1880
    %2552 = vmatpush1.bf16.msra.mxu0 %v1879
    %2553 = vmatprep.subr.bf16.mxu0 %v1888
    %2554 = vmatpush1.bf16.msra.mxu0 %v1887
    %2555 = vmatprep.subr.bf16.mxu0 %v1896
    %2556 = vmatpush1.bf16.msra.mxu0 %v1895
    %2557 = vmatprep.subr.bf16.mxu0 %v1904
    %2558 = vmatpush1.bf16.msra.mxu0 %v1903
    %2559 = vmatprep.subr.bf16.mxu0 %v1912
    %2560 = vmatpush1.bf16.msra.mxu0 %v1911
    %2561 = vmatprep.subr.bf16.mxu0 %v1920
    %2562 = vmatpush1.bf16.msra.mxu0 %v1919
    %2563 = vmatprep.subr.bf16.mxu0 %v1928
    %2564 = vmatpush1.bf16.msra.mxu0 %v1927
    %2565 = vmatprep.subr.bf16.mxu0 %v1936
    %2566 = vmatpush1.bf16.msra.mxu0 %v1935
    %2567 = vmatprep.subr.bf16.mxu0 %v1944
    %2568 = vmatpush1.bf16.msra.mxu0 %v1943
    %2569 = vmatprep.subr.bf16.mxu0 %v1952
    %2570 = vmatpush1.bf16.msra.mxu0 %v1951
    %2571 = vmatprep.subr.bf16.mxu0 %v1960
    %2572 = vmatpush1.bf16.msra.mxu0 %v1959
    %2573 = vmatprep.subr.bf16.mxu0 %v1968
    %2574 = vmatpush1.bf16.msra.mxu0 %v1967
    %2575 = vmatprep.subr.bf16.mxu0 %v1976
    %2576 = vmatpush1.bf16.msra.mxu0 %v1975
    %2577 = vmatprep.subr.bf16.mxu0 %v1984
    %2578 = vmatpush1.bf16.msra.mxu0 %v1983
    %2579 = vmatprep.subr.bf16.mxu0 %v1992
    %2580 = vmatpush1.bf16.msra.mxu0 %v1991
    %2581 = vmatprep.subr.bf16.mxu0 %v2000
    %2582 = vmatpush1.bf16.msra.mxu0 %v1999
    %2583 = vmatprep.mubr.bf16.mxu0 %v806
    %2584 = vmatmul.mubr.bf16.gmra.mrb[0].mxu0 %v805
    %v2585 = vpop.f32.mrb[0].mxu0
    %v2586 = vadd.f32 %v1086, %v2585
    %v2587 = vpop.f32.mrb[0].mxu0
    %v2588 = vadd.f32 %v1090, %v2587
    %v2589 = vpop.f32.mrb[0].mxu0
    %v2590 = vpop.f32.mrb[0].mxu0
    %2591 = vdwg.mxu0
    %2592 = vmatprep.subr.bf16.mxu0 %v2008
    %2593 = vmatpush1.bf16.msra.mxu0 %v2007
    %2594 = vmatprep.subr.bf16.mxu0 %v2016
    %2595 = vmatpush1.bf16.msra.mxu0 %v2015
    %2596 = vmatprep.subr.bf16.mxu0 %v2024
    %2597 = vmatpush1.bf16.msra.mxu0 %v2023
    %2598 = vmatprep.subr.bf16.mxu0 %v2032
    %2599 = vmatpush1.bf16.msra.mxu0 %v2031
    %2600 = vmatprep.subr.bf16.mxu0 %v2040
    %2601 = vmatpush1.bf16.msra.mxu0 %v2039
    %2602 = vmatprep.subr.bf16.mxu0 %v2048
    %2603 = vmatpush1.bf16.msra.mxu0 %v2047
    %2604 = vmatprep.subr.bf16.mxu0 %v2056
    %2605 = vmatpush1.bf16.msra.mxu0 %v2055
    %2606 = vmatprep.subr.bf16.mxu0 %v2064
    %2607 = vmatpush1.bf16.msra.mxu0 %v2063
    %2608 = vmatprep.subr.bf16.mxu0 %v2072
    %2609 = vmatpush1.bf16.msra.mxu0 %v2071
    %2610 = vmatprep.subr.bf16.mxu0 %v2080
    %2611 = vmatpush1.bf16.msra.mxu0 %v2079
    %2612 = vmatprep.subr.bf16.mxu0 %v2088
    %2613 = vmatpush1.bf16.msra.mxu0 %v2087
    %2614 = vmatprep.subr.bf16.mxu0 %v2096
    %2615 = vmatpush1.bf16.msra.mxu0 %v2095
    %2616 = vmatprep.subr.bf16.mxu0 %v2104
    %2617 = vmatpush1.bf16.msra.mxu0 %v2103
    %2618 = vmatprep.subr.bf16.mxu0 %v2112
    %2619 = vmatpush1.bf16.msra.mxu0 %v2111
    %2620 = vmatprep.subr.bf16.mxu0 %v2120
    %2621 = vmatpush1.bf16.msra.mxu0 %v2119
    %2622 = vmatprep.subr.bf16.mxu0 %v2128
    %2623 = vmatpush1.bf16.msra.mxu0 %v2127
    %2624 = vmatprep.mubr.bf16.mxu0 %v808
    %2625 = vmatmul.mubr.bf16.gmra.mrb[0].mxu0 %v807
    %v2626 = vpop.f32.mrb[0].mxu0
    %v2627 = vadd.f32 %v2586, %v2626
    %v2628 = vpop.f32.mrb[0].mxu0
    %v2629 = vadd.f32 %v2588, %v2628
    %v2630 = vpop.f32.mrb[0].mxu0
    %v2631 = vpop.f32.mrb[0].mxu0
    %2632 = vdwg.mxu0
    %2633 = vmatprep.subr.bf16.mxu0 %v1882
    %2634 = vmatpush1.bf16.msra.mxu0 %v1881
    %2635 = vmatprep.subr.bf16.mxu0 %v1890
    %2636 = vmatpush1.bf16.msra.mxu0 %v1889
    %2637 = vmatprep.subr.bf16.mxu0 %v1898
    %2638 = vmatpush1.bf16.msra.mxu0 %v1897
    %2639 = vmatprep.subr.bf16.mxu0 %v1906
    %2640 = vmatpush1.bf16.msra.mxu0 %v1905
    %2641 = vmatprep.subr.bf16.mxu0 %v1914
    %2642 = vmatpush1.bf16.msra.mxu0 %v1913
    %2643 = vmatprep.subr.bf16.mxu0 %v1922
    %2644 = vmatpush1.bf16.msra.mxu0 %v1921
    %2645 = vmatprep.subr.bf16.mxu0 %v1930
    %2646 = vmatpush1.bf16.msra.mxu0 %v1929
    %2647 = vmatprep.subr.bf16.mxu0 %v1938
    %2648 = vmatpush1.bf16.msra.mxu0 %v1937
    %2649 = vmatprep.subr.bf16.mxu0 %v1946
    %2650 = vmatpush1.bf16.msra.mxu0 %v1945
    %2651 = vmatprep.subr.bf16.mxu0 %v1954
    %2652 = vmatpush1.bf16.msra.mxu0 %v1953
    %2653 = vmatprep.subr.bf16.mxu0 %v1962
    %2654 = vmatpush1.bf16.msra.mxu0 %v1961
    %2655 = vmatprep.subr.bf16.mxu0 %v1970
    %2656 = vmatpush1.bf16.msra.mxu0 %v1969
    %2657 = vmatprep.subr.bf16.mxu0 %v1978
    %2658 = vmatpush1.bf16.msra.mxu0 %v1977
    %2659 = vmatprep.subr.bf16.mxu0 %v1986
    %2660 = vmatpush1.bf16.msra.mxu0 %v1985
    %2661 = vmatprep.subr.bf16.mxu0 %v1994
    %2662 = vmatpush1.bf16.msra.mxu0 %v1993
    %2663 = vmatprep.subr.bf16.mxu0 %v2002
    %2664 = vmatpush1.bf16.msra.mxu0 %v2001
    %2665 = vmatprep.mubr.bf16.mxu0 %v806
    %2666 = vmatmul.mubr.bf16.gmra.mrb[0].mxu0 %v805
    %v2667 = vpop.f32.mrb[0].mxu0
    %v2668 = vadd.f32 %v1094, %v2667
    %v2669 = vpop.f32.mrb[0].mxu0
    %v2670 = vadd.f32 %v1098, %v2669
    %v2671 = vpop.f32.mrb[0].mxu0
    %v2672 = vpop.f32.mrb[0].mxu0
    %2673 = vdwg.mxu0
    %2674 = vmatprep.subr.bf16.mxu0 %v2010
    %2675 = vmatpush1.bf16.msra.mxu0 %v2009
    %2676 = vmatprep.subr.bf16.mxu0 %v2018
    %2677 = vmatpush1.bf16.msra.mxu0 %v2017
    %2678 = vmatprep.subr.bf16.mxu0 %v2026
    %2679 = vmatpush1.bf16.msra.mxu0 %v2025
    %2680 = vmatprep.subr.bf16.mxu0 %v2034
    %2681 = vmatpush1.bf16.msra.mxu0 %v2033
    %2682 = vmatprep.subr.bf16.mxu0 %v2042
    %2683 = vmatpush1.bf16.msra.mxu0 %v2041
    %2684 = vmatprep.subr.bf16.mxu0 %v2050
    %2685 = vmatpush1.bf16.msra.mxu0 %v2049
    %2686 = vmatprep.subr.bf16.mxu0 %v2058
    %2687 = vmatpush1.bf16.msra.mxu0 %v2057
    %2688 = vmatprep.subr.bf16.mxu0 %v2066
    %2689 = vmatpush1.bf16.msra.mxu0 %v2065
    %2690 = vmatprep.subr.bf16.mxu0 %v2074
    %2691 = vmatpush1.bf16.msra.mxu0 %v2073
    %2692 = vmatprep.subr.bf16.mxu0 %v2082
    %2693 = vmatpush1.bf16.msra.mxu0 %v2081
    %2694 = vmatprep.subr.bf16.mxu0 %v2090
    %2695 = vmatpush1.bf16.msra.mxu0 %v2089
    %2696 = vmatprep.subr.bf16.mxu0 %v2098
    %2697 = vmatpush1.bf16.msra.mxu0 %v2097
    %2698 = vmatprep.subr.bf16.mxu0 %v2106
    %2699 = vmatpush1.bf16.msra.mxu0 %v2105
    %2700 = vmatprep.subr.bf16.mxu0 %v2114
    %2701 = vmatpush1.bf16.msra.mxu0 %v2113
    %2702 = vmatprep.subr.bf16.mxu0 %v2122
    %2703 = vmatpush1.bf16.msra.mxu0 %v2121
    %2704 = vmatprep.subr.bf16.mxu0 %v2130
    %2705 = vmatpush1.bf16.msra.mxu0 %v2129
    %2706 = vmatprep.mubr.bf16.mxu0 %v808
    %2707 = vmatmul.mubr.bf16.gmra.mrb[0].mxu0 %v807
    %v2708 = vpop.f32.mrb[0].mxu0
    %v2709 = vadd.f32 %v2668, %v2708
    %v2710 = vpop.f32.mrb[0].mxu0
    %v2711 = vadd.f32 %v2670, %v2710
    %v2712 = vpop.f32.mrb[0].mxu0
    %v2713 = vpop.f32.mrb[0].mxu0
    %2714 = vdwg.mxu0
    %vm2715 = vcmp.gt.f32.partialorder %v2463, 0.0
    %vm2716 = vcmp.gt.f32.partialorder %v2465, 0.0
    %vm2717 = vcmp.gt.f32.partialorder %v2545, 0.0
    %vm2718 = vcmp.gt.f32.partialorder %v2547, 0.0
    %vm2719 = vcmp.gt.f32.partialorder %v2627, 0.0
    %vm2720 = vcmp.gt.f32.partialorder %v2629, 0.0
    %vm2721 = vcmp.gt.f32.partialorder %v2709, 0.0
    %vm2722 = vcmp.gt.f32.partialorder %v2711, 0.0
    %v2723 = vmul.f32 %v2463, 0.2
    %v2724 = vmul.f32 %v2465, 0.2
    %v2725 = vmul.f32 %v2545, 0.2
    %v2726 = vmul.f32 %v2547, 0.2
    %v2727 = vmul.f32 %v2627, 0.2
    %v2728 = vmul.f32 %v2629, 0.2
    %v2729 = vmul.f32 %v2709, 0.2
    %v2730 = vmul.f32 %v2711, 0.2
    %v2731 = vsel %vm2715, %v2463, %v2723
    %v2732 = vsel %vm2716, %v2465, %v2724
    %v2733 = vsel %vm2717, %v2545, %v2725
    %v2734 = vsel %vm2718, %v2547, %v2726
    %v2735 = vsel %vm2719, %v2627, %v2727
    %v2736 = vsel %vm2720, %v2629, %v2728
    %v2737 = vsel %vm2721, %v2709, %v2729
    %v2738 = vsel %vm2722, %v2711, %v2730
    %v2739 = vpack.c.bf16 %v2731, %v2731
    %v2740 = vpack.c.bf16 %v2732, %v2732
    %v2741 = vpack.c.bf16 %v2733, %v2733
    %v2742 = vpack.c.bf16 %v2734, %v2734
    %v2743 = vpack.c.bf16 %v2735, %v2735
    %v2744 = vpack.c.bf16 %v2736, %v2736
    %v2745 = vpack.c.bf16 %v2737, %v2737
    %v2746 = vpack.c.bf16 %v2738, %v2738
    %v2747 = vld [vmem:[#allocation14] sm:$0xff]
    %v2748 = vld [vmem:[#allocation14 + $0x8] sm:$0xff]
    %v2749 = vld [vmem:[#allocation14 + $0x10] sm:$0xff]
    %v2750 = vld [vmem:[#allocation14 + $0x18] sm:$0xff]
    %v2751 = vld [vmem:[#allocation14 + $0x20] sm:$0xff]
    %v2752 = vld [vmem:[#allocation14 + $0x28] sm:$0xff]
    %v2753 = vld [vmem:[#allocation14 + $0x30] sm:$0xff]
    %v2754 = vld [vmem:[#allocation14 + $0x38] sm:$0xff]
    %v2755 = vld [vmem:[#allocation14 + $0x40] sm:$0xff]
    %v2756 = vld [vmem:[#allocation14 + $0x48] sm:$0xff]
    %v2757 = vld [vmem:[#allocation14 + $0x50] sm:$0xff]
    %v2758 = vld [vmem:[#allocation14 + $0x58] sm:$0xff]
    %v2759 = vld [vmem:[#allocation14 + $0x60] sm:$0xff]
    %v2760 = vld [vmem:[#allocation14 + $0x68] sm:$0xff]
    %v2761 = vld [vmem:[#allocation14 + $0x70] sm:$0xff]
    %v2762 = vld [vmem:[#allocation14 + $0x78] sm:$0xff]
    %v2763 = vld [vmem:[#allocation14 + $0x80] sm:$0xff]
    %v2764 = vld [vmem:[#allocation14 + $0x88] sm:$0xff]
    %v2765 = vld [vmem:[#allocation14 + $0x90] sm:$0xff]
    %v2766 = vld [vmem:[#allocation14 + $0x98] sm:$0xff]
    %v2767 = vld [vmem:[#allocation14 + $0xa0] sm:$0xff]
    %v2768 = vld [vmem:[#allocation14 + $0xa8] sm:$0xff]
    %v2769 = vld [vmem:[#allocation14 + $0xb0] sm:$0xff]
    %v2770 = vld [vmem:[#allocation14 + $0xb8] sm:$0xff]
    %v2771 = vld [vmem:[#allocation14 + $0xc0] sm:$0xff]
    %v2772 = vld [vmem:[#allocation14 + $0xc8] sm:$0xff]
    %v2773 = vld [vmem:[#allocation14 + $0xd0] sm:$0xff]
    %v2774 = vld [vmem:[#allocation14 + $0xd8] sm:$0xff]
    %v2775 = vld [vmem:[#allocation14 + $0xe0] sm:$0xff]
    %v2776 = vld [vmem:[#allocation14 + $0xe8] sm:$0xff]
    %v2777 = vld [vmem:[#allocation14 + $0xf0] sm:$0xff]
    %v2778 = vld [vmem:[#allocation14 + $0xf8] sm:$0xff]
    %v2779 = vld [vmem:[#allocation14 + $0x100] sm:$0xff]
    %v2780 = vld [vmem:[#allocation14 + $0x108] sm:$0xff]
    %v2781 = vld [vmem:[#allocation14 + $0x110] sm:$0xff]
    %v2782 = vld [vmem:[#allocation14 + $0x118] sm:$0xff]
    %v2783 = vld [vmem:[#allocation14 + $0x120] sm:$0xff]
    %v2784 = vld [vmem:[#allocation14 + $0x128] sm:$0xff]
    %v2785 = vld [vmem:[#allocation14 + $0x130] sm:$0xff]
    %v2786 = vld [vmem:[#allocation14 + $0x138] sm:$0xff]
    %v2787 = vld [vmem:[#allocation14 + $0x140] sm:$0xff]
    %v2788 = vld [vmem:[#allocation14 + $0x148] sm:$0xff]
    %v2789 = vld [vmem:[#allocation14 + $0x150] sm:$0xff]
    %v2790 = vld [vmem:[#allocation14 + $0x158] sm:$0xff]
    %v2791 = vld [vmem:[#allocation14 + $0x160] sm:$0xff]
    %v2792 = vld [vmem:[#allocation14 + $0x168] sm:$0xff]
    %v2793 = vld [vmem:[#allocation14 + $0x170] sm:$0xff]
    %v2794 = vld [vmem:[#allocation14 + $0x178] sm:$0xff]
    %v2795 = vld [vmem:[#allocation14 + $0x180] sm:$0xff]
    %v2796 = vld [vmem:[#allocation14 + $0x188] sm:$0xff]
    %v2797 = vld [vmem:[#allocation14 + $0x190] sm:$0xff]
    %v2798 = vld [vmem:[#allocation14 + $0x198] sm:$0xff]
    %v2799 = vld [vmem:[#allocation14 + $0x1a0] sm:$0xff]
    %v2800 = vld [vmem:[#allocation14 + $0x1a8] sm:$0xff]
    %v2801 = vld [vmem:[#allocation14 + $0x1b0] sm:$0xff]
    %v2802 = vld [vmem:[#allocation14 + $0x1b8] sm:$0xff]
    %v2803 = vld [vmem:[#allocation14 + $0x1c0] sm:$0xff]
    %v2804 = vld [vmem:[#allocation14 + $0x1c8] sm:$0xff]
    %v2805 = vld [vmem:[#allocation14 + $0x1d0] sm:$0xff]
    %v2806 = vld [vmem:[#allocation14 + $0x1d8] sm:$0xff]
    %v2807 = vld [vmem:[#allocation14 + $0x1e0] sm:$0xff]
    %v2808 = vld [vmem:[#allocation14 + $0x1e8] sm:$0xff]
    %v2809 = vld [vmem:[#allocation14 + $0x1f0] sm:$0xff]
    %v2810 = vld [vmem:[#allocation14 + $0x1f8] sm:$0xff]
    %v2811 = vld [vmem:[#allocation14 + $0x200] sm:$0xff]
    %v2812 = vld [vmem:[#allocation14 + $0x208] sm:$0xff]
    %v2813 = vld [vmem:[#allocation14 + $0x210] sm:$0xff]
    %v2814 = vld [vmem:[#allocation14 + $0x218] sm:$0xff]
    %v2815 = vld [vmem:[#allocation14 + $0x220] sm:$0xff]
    %v2816 = vld [vmem:[#allocation14 + $0x228] sm:$0xff]
    %v2817 = vld [vmem:[#allocation14 + $0x230] sm:$0xff]
    %v2818 = vld [vmem:[#allocation14 + $0x238] sm:$0xff]
    %v2819 = vld [vmem:[#allocation14 + $0x240] sm:$0xff]
    %v2820 = vld [vmem:[#allocation14 + $0x248] sm:$0xff]
    %v2821 = vld [vmem:[#allocation14 + $0x250] sm:$0xff]
    %v2822 = vld [vmem:[#allocation14 + $0x258] sm:$0xff]
    %v2823 = vld [vmem:[#allocation14 + $0x260] sm:$0xff]
    %v2824 = vld [vmem:[#allocation14 + $0x268] sm:$0xff]
    %v2825 = vld [vmem:[#allocation14 + $0x270] sm:$0xff]
    %v2826 = vld [vmem:[#allocation14 + $0x278] sm:$0xff]
    %v2827 = vld [vmem:[#allocation14 + $0x280] sm:$0xff]
    %v2828 = vld [vmem:[#allocation14 + $0x288] sm:$0xff]
    %v2829 = vld [vmem:[#allocation14 + $0x290] sm:$0xff]
    %v2830 = vld [vmem:[#allocation14 + $0x298] sm:$0xff]
    %v2831 = vld [vmem:[#allocation14 + $0x2a0] sm:$0xff]
    %v2832 = vld [vmem:[#allocation14 + $0x2a8] sm:$0xff]
    %v2833 = vld [vmem:[#allocation14 + $0x2b0] sm:$0xff]
    %v2834 = vld [vmem:[#allocation14 + $0x2b8] sm:$0xff]
    %v2835 = vld [vmem:[#allocation14 + $0x2c0] sm:$0xff]
    %v2836 = vld [vmem:[#allocation14 + $0x2c8] sm:$0xff]
    %v2837 = vld [vmem:[#allocation14 + $0x2d0] sm:$0xff]
    %v2838 = vld [vmem:[#allocation14 + $0x2d8] sm:$0xff]
    %v2839 = vld [vmem:[#allocation14 + $0x2e0] sm:$0xff]
    %v2840 = vld [vmem:[#allocation14 + $0x2e8] sm:$0xff]
    %v2841 = vld [vmem:[#allocation14 + $0x2f0] sm:$0xff]
    %v2842 = vld [vmem:[#allocation14 + $0x2f8] sm:$0xff]
    %v2843 = vld [vmem:[#allocation14 + $0x300] sm:$0xff]
    %v2844 = vld [vmem:[#allocation14 + $0x308] sm:$0xff]
    %v2845 = vld [vmem:[#allocation14 + $0x310] sm:$0xff]
    %v2846 = vld [vmem:[#allocation14 + $0x318] sm:$0xff]
    %v2847 = vld [vmem:[#allocation14 + $0x320] sm:$0xff]
    %v2848 = vld [vmem:[#allocation14 + $0x328] sm:$0xff]
    %v2849 = vld [vmem:[#allocation14 + $0x330] sm:$0xff]
    %v2850 = vld [vmem:[#allocation14 + $0x338] sm:$0xff]
    %v2851 = vld [vmem:[#allocation14 + $0x340] sm:$0xff]
    %v2852 = vld [vmem:[#allocation14 + $0x348] sm:$0xff]
    %v2853 = vld [vmem:[#allocation14 + $0x350] sm:$0xff]
    %v2854 = vld [vmem:[#allocation14 + $0x358] sm:$0xff]
    %v2855 = vld [vmem:[#allocation14 + $0x360] sm:$0xff]
    %v2856 = vld [vmem:[#allocation14 + $0x368] sm:$0xff]
    %v2857 = vld [vmem:[#allocation14 + $0x370] sm:$0xff]
    %v2858 = vld [vmem:[#allocation14 + $0x378] sm:$0xff]
    %v2859 = vld [vmem:[#allocation14 + $0x380] sm:$0xff]
    %v2860 = vld [vmem:[#allocation14 + $0x388] sm:$0xff]
    %v2861 = vld [vmem:[#allocation14 + $0x390] sm:$0xff]
    %v2862 = vld [vmem:[#allocation14 + $0x398] sm:$0xff]
    %v2863 = vld [vmem:[#allocation14 + $0x3a0] sm:$0xff]
    %v2864 = vld [vmem:[#allocation14 + $0x3a8] sm:$0xff]
    %v2865 = vld [vmem:[#allocation14 + $0x3b0] sm:$0xff]
    %v2866 = vld [vmem:[#allocation14 + $0x3b8] sm:$0xff]
    %v2867 = vld [vmem:[#allocation14 + $0x3c0] sm:$0xff]
    %v2868 = vld [vmem:[#allocation14 + $0x3c8] sm:$0xff]
    %v2869 = vld [vmem:[#allocation14 + $0x3d0] sm:$0xff]
    %v2870 = vld [vmem:[#allocation14 + $0x3d8] sm:$0xff]
    %v2871 = vld [vmem:[#allocation14 + $0x3e0] sm:$0xff]
    %v2872 = vld [vmem:[#allocation14 + $0x3e8] sm:$0xff]
    %v2873 = vld [vmem:[#allocation14 + $0x3f0] sm:$0xff]
    %v2874 = vld [vmem:[#allocation14 + $0x3f8] sm:$0xff]
    %v2875 = vld [vmem:[#allocation14 + $0x400] sm:$0xff]
    %v2876 = vld [vmem:[#allocation14 + $0x408] sm:$0xff]
    %v2877 = vld [vmem:[#allocation14 + $0x410] sm:$0xff]
    %v2878 = vld [vmem:[#allocation14 + $0x418] sm:$0xff]
    %v2879 = vld [vmem:[#allocation14 + $0x420] sm:$0xff]
    %v2880 = vld [vmem:[#allocation14 + $0x428] sm:$0xff]
    %v2881 = vld [vmem:[#allocation14 + $0x430] sm:$0xff]
    %v2882 = vld [vmem:[#allocation14 + $0x438] sm:$0xff]
    %v2883 = vld [vmem:[#allocation14 + $0x440] sm:$0xff]
    %v2884 = vld [vmem:[#allocation14 + $0x448] sm:$0xff]
    %v2885 = vld [vmem:[#allocation14 + $0x450] sm:$0xff]
    %v2886 = vld [vmem:[#allocation14 + $0x458] sm:$0xff]
    %v2887 = vld [vmem:[#allocation14 + $0x460] sm:$0xff]
    %v2888 = vld [vmem:[#allocation14 + $0x468] sm:$0xff]
    %v2889 = vld [vmem:[#allocation14 + $0x470] sm:$0xff]
    %v2890 = vld [vmem:[#allocation14 + $0x478] sm:$0xff]
    %v2891 = vld [vmem:[#allocation14 + $0x480] sm:$0xff]
    %v2892 = vld [vmem:[#allocation14 + $0x488] sm:$0xff]
    %v2893 = vld [vmem:[#allocation14 + $0x490] sm:$0xff]
    %v2894 = vld [vmem:[#allocation14 + $0x498] sm:$0xff]
    %v2895 = vld [vmem:[#allocation14 + $0x4a0] sm:$0xff]
    %v2896 = vld [vmem:[#allocation14 + $0x4a8] sm:$0xff]
    %v2897 = vld [vmem:[#allocation14 + $0x4b0] sm:$0xff]
    %v2898 = vld [vmem:[#allocation14 + $0x4b8] sm:$0xff]
    %v2899 = vld [vmem:[#allocation14 + $0x4c0] sm:$0xff]
    %v2900 = vld [vmem:[#allocation14 + $0x4c8] sm:$0xff]
    %v2901 = vld [vmem:[#allocation14 + $0x4d0] sm:$0xff]
    %v2902 = vld [vmem:[#allocation14 + $0x4d8] sm:$0xff]
    %v2903 = vld [vmem:[#allocation14 + $0x4e0] sm:$0xff]
    %v2904 = vld [vmem:[#allocation14 + $0x4e8] sm:$0xff]
    %v2905 = vld [vmem:[#allocation14 + $0x4f0] sm:$0xff]
    %v2906 = vld [vmem:[#allocation14 + $0x4f8] sm:$0xff]
    %v2907 = vld [vmem:[#allocation14 + $0x500] sm:$0xff]
    %v2908 = vld [vmem:[#allocation14 + $0x508] sm:$0xff]
    %v2909 = vld [vmem:[#allocation14 + $0x510] sm:$0xff]
    %v2910 = vld [vmem:[#allocation14 + $0x518] sm:$0xff]
    %v2911 = vld [vmem:[#allocation14 + $0x520] sm:$0xff]
    %v2912 = vld [vmem:[#allocation14 + $0x528] sm:$0xff]
    %v2913 = vld [vmem:[#allocation14 + $0x530] sm:$0xff]
    %v2914 = vld [vmem:[#allocation14 + $0x538] sm:$0xff]
    %v2915 = vld [vmem:[#allocation14 + $0x540] sm:$0xff]
    %v2916 = vld [vmem:[#allocation14 + $0x548] sm:$0xff]
    %v2917 = vld [vmem:[#allocation14 + $0x550] sm:$0xff]
    %v2918 = vld [vmem:[#allocation14 + $0x558] sm:$0xff]
    %v2919 = vld [vmem:[#allocation14 + $0x560] sm:$0xff]
    %v2920 = vld [vmem:[#allocation14 + $0x568] sm:$0xff]
    %v2921 = vld [vmem:[#allocation14 + $0x570] sm:$0xff]
    %v2922 = vld [vmem:[#allocation14 + $0x578] sm:$0xff]
    %v2923 = vld [vmem:[#allocation14 + $0x580] sm:$0xff]
    %v2924 = vld [vmem:[#allocation14 + $0x588] sm:$0xff]
    %v2925 = vld [vmem:[#allocation14 + $0x590] sm:$0xff]
    %v2926 = vld [vmem:[#allocation14 + $0x598] sm:$0xff]
    %v2927 = vld [vmem:[#allocation14 + $0x5a0] sm:$0xff]
    %v2928 = vld [vmem:[#allocation14 + $0x5a8] sm:$0xff]
    %v2929 = vld [vmem:[#allocation14 + $0x5b0] sm:$0xff]
    %v2930 = vld [vmem:[#allocation14 + $0x5b8] sm:$0xff]
    %v2931 = vld [vmem:[#allocation14 + $0x5c0] sm:$0xff]
    %v2932 = vld [vmem:[#allocation14 + $0x5c8] sm:$0xff]
    %v2933 = vld [vmem:[#allocation14 + $0x5d0] sm:$0xff]
    %v2934 = vld [vmem:[#allocation14 + $0x5d8] sm:$0xff]
    %v2935 = vld [vmem:[#allocation14 + $0x5e0] sm:$0xff]
    %v2936 = vld [vmem:[#allocation14 + $0x5e8] sm:$0xff]
    %v2937 = vld [vmem:[#allocation14 + $0x5f0] sm:$0xff]
    %v2938 = vld [vmem:[#allocation14 + $0x5f8] sm:$0xff]
    %v2939 = vld [vmem:[#allocation14 + $0x600] sm:$0xff]
    %v2940 = vld [vmem:[#allocation14 + $0x608] sm:$0xff]
    %v2941 = vld [vmem:[#allocation14 + $0x610] sm:$0xff]
    %v2942 = vld [vmem:[#allocation14 + $0x618] sm:$0xff]
    %v2943 = vld [vmem:[#allocation14 + $0x620] sm:$0xff]
    %v2944 = vld [vmem:[#allocation14 + $0x628] sm:$0xff]
    %v2945 = vld [vmem:[#allocation14 + $0x630] sm:$0xff]
    %v2946 = vld [vmem:[#allocation14 + $0x638] sm:$0xff]
    %v2947 = vld [vmem:[#allocation14 + $0x640] sm:$0xff]
    %v2948 = vld [vmem:[#allocation14 + $0x648] sm:$0xff]
    %v2949 = vld [vmem:[#allocation14 + $0x650] sm:$0xff]
    %v2950 = vld [vmem:[#allocation14 + $0x658] sm:$0xff]
    %v2951 = vld [vmem:[#allocation14 + $0x660] sm:$0xff]
    %v2952 = vld [vmem:[#allocation14 + $0x668] sm:$0xff]
    %v2953 = vld [vmem:[#allocation14 + $0x670] sm:$0xff]
    %v2954 = vld [vmem:[#allocation14 + $0x678] sm:$0xff]
    %v2955 = vld [vmem:[#allocation14 + $0x680] sm:$0xff]
    %v2956 = vld [vmem:[#allocation14 + $0x688] sm:$0xff]
    %v2957 = vld [vmem:[#allocation14 + $0x690] sm:$0xff]
    %v2958 = vld [vmem:[#allocation14 + $0x698] sm:$0xff]
    %v2959 = vld [vmem:[#allocation14 + $0x6a0] sm:$0xff]
    %v2960 = vld [vmem:[#allocation14 + $0x6a8] sm:$0xff]
    %v2961 = vld [vmem:[#allocation14 + $0x6b0] sm:$0xff]
    %v2962 = vld [vmem:[#allocation14 + $0x6b8] sm:$0xff]
    %v2963 = vld [vmem:[#allocation14 + $0x6c0] sm:$0xff]
    %v2964 = vld [vmem:[#allocation14 + $0x6c8] sm:$0xff]
    %v2965 = vld [vmem:[#allocation14 + $0x6d0] sm:$0xff]
    %v2966 = vld [vmem:[#allocation14 + $0x6d8] sm:$0xff]
    %v2967 = vld [vmem:[#allocation14 + $0x6e0] sm:$0xff]
    %v2968 = vld [vmem:[#allocation14 + $0x6e8] sm:$0xff]
    %v2969 = vld [vmem:[#allocation14 + $0x6f0] sm:$0xff]
    %v2970 = vld [vmem:[#allocation14 + $0x6f8] sm:$0xff]
    %v2971 = vld [vmem:[#allocation14 + $0x700] sm:$0xff]
    %v2972 = vld [vmem:[#allocation14 + $0x708] sm:$0xff]
    %v2973 = vld [vmem:[#allocation14 + $0x710] sm:$0xff]
    %v2974 = vld [vmem:[#allocation14 + $0x718] sm:$0xff]
    %v2975 = vld [vmem:[#allocation14 + $0x720] sm:$0xff]
    %v2976 = vld [vmem:[#allocation14 + $0x728] sm:$0xff]
    %v2977 = vld [vmem:[#allocation14 + $0x730] sm:$0xff]
    %v2978 = vld [vmem:[#allocation14 + $0x738] sm:$0xff]
    %v2979 = vld [vmem:[#allocation14 + $0x740] sm:$0xff]
    %v2980 = vld [vmem:[#allocation14 + $0x748] sm:$0xff]
    %v2981 = vld [vmem:[#allocation14 + $0x750] sm:$0xff]
    %v2982 = vld [vmem:[#allocation14 + $0x758] sm:$0xff]
    %v2983 = vld [vmem:[#allocation14 + $0x760] sm:$0xff]
    %v2984 = vld [vmem:[#allocation14 + $0x768] sm:$0xff]
    %v2985 = vld [vmem:[#allocation14 + $0x770] sm:$0xff]
    %v2986 = vld [vmem:[#allocation14 + $0x778] sm:$0xff]
    %v2987 = vld [vmem:[#allocation14 + $0x780] sm:$0xff]
    %v2988 = vld [vmem:[#allocation14 + $0x788] sm:$0xff]
    %v2989 = vld [vmem:[#allocation14 + $0x790] sm:$0xff]
    %v2990 = vld [vmem:[#allocation14 + $0x798] sm:$0xff]
    %v2991 = vld [vmem:[#allocation14 + $0x7a0] sm:$0xff]
    %v2992 = vld [vmem:[#allocation14 + $0x7a8] sm:$0xff]
    %v2993 = vld [vmem:[#allocation14 + $0x7b0] sm:$0xff]
    %v2994 = vld [vmem:[#allocation14 + $0x7b8] sm:$0xff]
    %v2995 = vld [vmem:[#allocation14 + $0x7c0] sm:$0xff]
    %v2996 = vld [vmem:[#allocation14 + $0x7c8] sm:$0xff]
    %v2997 = vld [vmem:[#allocation14 + $0x7d0] sm:$0xff]
    %v2998 = vld [vmem:[#allocation14 + $0x7d8] sm:$0xff]
    %v2999 = vld [vmem:[#allocation14 + $0x7e0] sm:$0xff]
    %v3000 = vld [vmem:[#allocation14 + $0x7e8] sm:$0xff]
    %v3001 = vld [vmem:[#allocation14 + $0x7f0] sm:$0xff]
    %v3002 = vld [vmem:[#allocation14 + $0x7f8] sm:$0xff]
    %v3003 = vld [vmem:[#allocation14 + $0x800] sm:$0xff]
    %v3004 = vld [vmem:[#allocation14 + $0x808] sm:$0xff]
    %v3005 = vld [vmem:[#allocation14 + $0x810] sm:$0xff]
    %v3006 = vld [vmem:[#allocation14 + $0x818] sm:$0xff]
    %v3007 = vld [vmem:[#allocation14 + $0x820] sm:$0xff]
    %v3008 = vld [vmem:[#allocation14 + $0x828] sm:$0xff]
    %v3009 = vld [vmem:[#allocation14 + $0x830] sm:$0xff]
    %v3010 = vld [vmem:[#allocation14 + $0x838] sm:$0xff]
    %v3011 = vld [vmem:[#allocation14 + $0x840] sm:$0xff]
    %v3012 = vld [vmem:[#allocation14 + $0x848] sm:$0xff]
    %v3013 = vld [vmem:[#allocation14 + $0x850] sm:$0xff]
    %v3014 = vld [vmem:[#allocation14 + $0x858] sm:$0xff]
    %v3015 = vld [vmem:[#allocation14 + $0x860] sm:$0xff]
    %v3016 = vld [vmem:[#allocation14 + $0x868] sm:$0xff]
    %v3017 = vld [vmem:[#allocation14 + $0x870] sm:$0xff]
    %v3018 = vld [vmem:[#allocation14 + $0x878] sm:$0xff]
    %v3019 = vld [vmem:[#allocation14 + $0x880] sm:$0xff]
    %v3020 = vld [vmem:[#allocation14 + $0x888] sm:$0xff]
    %v3021 = vld [vmem:[#allocation14 + $0x890] sm:$0xff]
    %v3022 = vld [vmem:[#allocation14 + $0x898] sm:$0xff]
    %v3023 = vld [vmem:[#allocation14 + $0x8a0] sm:$0xff]
    %v3024 = vld [vmem:[#allocation14 + $0x8a8] sm:$0xff]
    %v3025 = vld [vmem:[#allocation14 + $0x8b0] sm:$0xff]
    %v3026 = vld [vmem:[#allocation14 + $0x8b8] sm:$0xff]
    %v3027 = vld [vmem:[#allocation14 + $0x8c0] sm:$0xff]
    %v3028 = vld [vmem:[#allocation14 + $0x8c8] sm:$0xff]
    %v3029 = vld [vmem:[#allocation14 + $0x8d0] sm:$0xff]
    %v3030 = vld [vmem:[#allocation14 + $0x8d8] sm:$0xff]
    %v3031 = vld [vmem:[#allocation14 + $0x8e0] sm:$0xff]
    %v3032 = vld [vmem:[#allocation14 + $0x8e8] sm:$0xff]
    %v3033 = vld [vmem:[#allocation14 + $0x8f0] sm:$0xff]
    %v3034 = vld [vmem:[#allocation14 + $0x8f8] sm:$0xff]
    %v3035 = vld [vmem:[#allocation14 + $0x900] sm:$0xff]
    %v3036 = vld [vmem:[#allocation14 + $0x908] sm:$0xff]
    %v3037 = vld [vmem:[#allocation14 + $0x910] sm:$0xff]
    %v3038 = vld [vmem:[#allocation14 + $0x918] sm:$0xff]
    %v3039 = vld [vmem:[#allocation14 + $0x920] sm:$0xff]
    %v3040 = vld [vmem:[#allocation14 + $0x928] sm:$0xff]
    %v3041 = vld [vmem:[#allocation14 + $0x930] sm:$0xff]
    %v3042 = vld [vmem:[#allocation14 + $0x938] sm:$0xff]
    %v3043 = vld [vmem:[#allocation14 + $0x940] sm:$0xff]
    %v3044 = vld [vmem:[#allocation14 + $0x948] sm:$0xff]
    %v3045 = vld [vmem:[#allocation14 + $0x950] sm:$0xff]
    %v3046 = vld [vmem:[#allocation14 + $0x958] sm:$0xff]
    %v3047 = vld [vmem:[#allocation14 + $0x960] sm:$0xff]
    %v3048 = vld [vmem:[#allocation14 + $0x968] sm:$0xff]
    %v3049 = vld [vmem:[#allocation14 + $0x970] sm:$0xff]
    %v3050 = vld [vmem:[#allocation14 + $0x978] sm:$0xff]
    %v3051 = vld [vmem:[#allocation14 + $0x980] sm:$0xff]
    %v3052 = vld [vmem:[#allocation14 + $0x988] sm:$0xff]
    %v3053 = vld [vmem:[#allocation14 + $0x990] sm:$0xff]
    %v3054 = vld [vmem:[#allocation14 + $0x998] sm:$0xff]
    %v3055 = vld [vmem:[#allocation14 + $0x9a0] sm:$0xff]
    %v3056 = vld [vmem:[#allocation14 + $0x9a8] sm:$0xff]
    %v3057 = vld [vmem:[#allocation14 + $0x9b0] sm:$0xff]
    %v3058 = vld [vmem:[#allocation14 + $0x9b8] sm:$0xff]
    %v3059 = vld [vmem:[#allocation14 + $0x9c0] sm:$0xff]
    %v3060 = vld [vmem:[#allocation14 + $0x9c8] sm:$0xff]
    %v3061 = vld [vmem:[#allocation14 + $0x9d0] sm:$0xff]
    %v3062 = vld [vmem:[#allocation14 + $0x9d8] sm:$0xff]
    %v3063 = vld [vmem:[#allocation14 + $0x9e0] sm:$0xff]
    %v3064 = vld [vmem:[#allocation14 + $0x9e8] sm:$0xff]
    %v3065 = vld [vmem:[#allocation14 + $0x9f0] sm:$0xff]
    %v3066 = vld [vmem:[#allocation14 + $0x9f8] sm:$0xff]
    %v3067 = vld [vmem:[#allocation14 + $0xa00] sm:$0xff]
    %v3068 = vld [vmem:[#allocation14 + $0xa08] sm:$0xff]
    %v3069 = vld [vmem:[#allocation14 + $0xa10] sm:$0xff]
    %v3070 = vld [vmem:[#allocation14 + $0xa18] sm:$0xff]
    %v3071 = vld [vmem:[#allocation14 + $0xa20] sm:$0xff]
    %v3072 = vld [vmem:[#allocation14 + $0xa28] sm:$0xff]
    %v3073 = vld [vmem:[#allocation14 + $0xa30] sm:$0xff]
    %v3074 = vld [vmem:[#allocation14 + $0xa38] sm:$0xff]
    %v3075 = vld [vmem:[#allocation14 + $0xa40] sm:$0xff]
    %v3076 = vld [vmem:[#allocation14 + $0xa48] sm:$0xff]
    %v3077 = vld [vmem:[#allocation14 + $0xa50] sm:$0xff]
    %v3078 = vld [vmem:[#allocation14 + $0xa58] sm:$0xff]
    %v3079 = vld [vmem:[#allocation14 + $0xa60] sm:$0xff]
    %v3080 = vld [vmem:[#allocation14 + $0xa68] sm:$0xff]
    %v3081 = vld [vmem:[#allocation14 + $0xa70] sm:$0xff]
    %v3082 = vld [vmem:[#allocation14 + $0xa78] sm:$0xff]
    %v3083 = vld [vmem:[#allocation14 + $0xa80] sm:$0xff]
    %v3084 = vld [vmem:[#allocation14 + $0xa88] sm:$0xff]
    %v3085 = vld [vmem:[#allocation14 + $0xa90] sm:$0xff]
    %v3086 = vld [vmem:[#allocation14 + $0xa98] sm:$0xff]
    %v3087 = vld [vmem:[#allocation14 + $0xaa0] sm:$0xff]
    %v3088 = vld [vmem:[#allocation14 + $0xaa8] sm:$0xff]
    %v3089 = vld [vmem:[#allocation14 + $0xab0] sm:$0xff]
    %v3090 = vld [vmem:[#allocation14 + $0xab8] sm:$0xff]
    %v3091 = vld [vmem:[#allocation14 + $0xac0] sm:$0xff]
    %v3092 = vld [vmem:[#allocation14 + $0xac8] sm:$0xff]
    %v3093 = vld [vmem:[#allocation14 + $0xad0] sm:$0xff]
    %v3094 = vld [vmem:[#allocation14 + $0xad8] sm:$0xff]
    %v3095 = vld [vmem:[#allocation14 + $0xae0] sm:$0xff]
    %v3096 = vld [vmem:[#allocation14 + $0xae8] sm:$0xff]
    %v3097 = vld [vmem:[#allocation14 + $0xaf0] sm:$0xff]
    %v3098 = vld [vmem:[#allocation14 + $0xaf8] sm:$0xff]
    %v3099 = vld [vmem:[#allocation14 + $0xb00] sm:$0xff]
    %v3100 = vld [vmem:[#allocation14 + $0xb08] sm:$0xff]
    %v3101 = vld [vmem:[#allocation14 + $0xb10] sm:$0xff]
    %v3102 = vld [vmem:[#allocation14 + $0xb18] sm:$0xff]
    %v3103 = vld [vmem:[#allocation14 + $0xb20] sm:$0xff]
    %v3104 = vld [vmem:[#allocation14 + $0xb28] sm:$0xff]
    %v3105 = vld [vmem:[#allocation14 + $0xb30] sm:$0xff]
    %v3106 = vld [vmem:[#allocation14 + $0xb38] sm:$0xff]
    %v3107 = vld [vmem:[#allocation14 + $0xb40] sm:$0xff]
    %v3108 = vld [vmem:[#allocation14 + $0xb48] sm:$0xff]
    %v3109 = vld [vmem:[#allocation14 + $0xb50] sm:$0xff]
    %v3110 = vld [vmem:[#allocation14 + $0xb58] sm:$0xff]
    %v3111 = vld [vmem:[#allocation14 + $0xb60] sm:$0xff]
    %v3112 = vld [vmem:[#allocation14 + $0xb68] sm:$0xff]
    %v3113 = vld [vmem:[#allocation14 + $0xb70] sm:$0xff]
    %v3114 = vld [vmem:[#allocation14 + $0xb78] sm:$0xff]
    %v3115 = vld [vmem:[#allocation14 + $0xb80] sm:$0xff]
    %v3116 = vld [vmem:[#allocation14 + $0xb88] sm:$0xff]
    %v3117 = vld [vmem:[#allocation14 + $0xb90] sm:$0xff]
    %v3118 = vld [vmem:[#allocation14 + $0xb98] sm:$0xff]
    %v3119 = vld [vmem:[#allocation14 + $0xba0] sm:$0xff]
    %v3120 = vld [vmem:[#allocation14 + $0xba8] sm:$0xff]
    %v3121 = vld [vmem:[#allocation14 + $0xbb0] sm:$0xff]
    %v3122 = vld [vmem:[#allocation14 + $0xbb8] sm:$0xff]
    %v3123 = vld [vmem:[#allocation14 + $0xbc0] sm:$0xff]
    %v3124 = vld [vmem:[#allocation14 + $0xbc8] sm:$0xff]
    %v3125 = vld [vmem:[#allocation14 + $0xbd0] sm:$0xff]
    %v3126 = vld [vmem:[#allocation14 + $0xbd8] sm:$0xff]
    %v3127 = vld [vmem:[#allocation14 + $0xbe0] sm:$0xff]
    %v3128 = vld [vmem:[#allocation14 + $0xbe8] sm:$0xff]
    %v3129 = vld [vmem:[#allocation14 + $0xbf0] sm:$0xff]
    %v3130 = vld [vmem:[#allocation14 + $0xbf8] sm:$0xff]
    %v3131 = vld [vmem:[#allocation14 + $0xc00] sm:$0xff]
    %v3132 = vld [vmem:[#allocation14 + $0xc08] sm:$0xff]
    %v3133 = vld [vmem:[#allocation14 + $0xc10] sm:$0xff]
    %v3134 = vld [vmem:[#allocation14 + $0xc18] sm:$0xff]
    %v3135 = vld [vmem:[#allocation14 + $0xc20] sm:$0xff]
    %v3136 = vld [vmem:[#allocation14 + $0xc28] sm:$0xff]
    %v3137 = vld [vmem:[#allocation14 + $0xc30] sm:$0xff]
    %v3138 = vld [vmem:[#allocation14 + $0xc38] sm:$0xff]
    %v3139 = vld [vmem:[#allocation14 + $0xc40] sm:$0xff]
    %v3140 = vld [vmem:[#allocation14 + $0xc48] sm:$0xff]
    %v3141 = vld [vmem:[#allocation14 + $0xc50] sm:$0xff]
    %v3142 = vld [vmem:[#allocation14 + $0xc58] sm:$0xff]
    %v3143 = vld [vmem:[#allocation14 + $0xc60] sm:$0xff]
    %v3144 = vld [vmem:[#allocation14 + $0xc68] sm:$0xff]
    %v3145 = vld [vmem:[#allocation14 + $0xc70] sm:$0xff]
    %v3146 = vld [vmem:[#allocation14 + $0xc78] sm:$0xff]
    %v3147 = vld [vmem:[#allocation14 + $0xc80] sm:$0xff]
    %v3148 = vld [vmem:[#allocation14 + $0xc88] sm:$0xff]
    %v3149 = vld [vmem:[#allocation14 + $0xc90] sm:$0xff]
    %v3150 = vld [vmem:[#allocation14 + $0xc98] sm:$0xff]
    %v3151 = vld [vmem:[#allocation14 + $0xca0] sm:$0xff]
    %v3152 = vld [vmem:[#allocation14 + $0xca8] sm:$0xff]
    %v3153 = vld [vmem:[#allocation14 + $0xcb0] sm:$0xff]
    %v3154 = vld [vmem:[#allocation14 + $0xcb8] sm:$0xff]
    %v3155 = vld [vmem:[#allocation14 + $0xcc0] sm:$0xff]
    %v3156 = vld [vmem:[#allocation14 + $0xcc8] sm:$0xff]
    %v3157 = vld [vmem:[#allocation14 + $0xcd0] sm:$0xff]
    %v3158 = vld [vmem:[#allocation14 + $0xcd8] sm:$0xff]
    %v3159 = vld [vmem:[#allocation14 + $0xce0] sm:$0xff]
    %v3160 = vld [vmem:[#allocation14 + $0xce8] sm:$0xff]
    %v3161 = vld [vmem:[#allocation14 + $0xcf0] sm:$0xff]
    %v3162 = vld [vmem:[#allocation14 + $0xcf8] sm:$0xff]
    %v3163 = vld [vmem:[#allocation14 + $0xd00] sm:$0xff]
    %v3164 = vld [vmem:[#allocation14 + $0xd08] sm:$0xff]
    %v3165 = vld [vmem:[#allocation14 + $0xd10] sm:$0xff]
    %v3166 = vld [vmem:[#allocation14 + $0xd18] sm:$0xff]
    %v3167 = vld [vmem:[#allocation14 + $0xd20] sm:$0xff]
    %v3168 = vld [vmem:[#allocation14 + $0xd28] sm:$0xff]
    %v3169 = vld [vmem:[#allocation14 + $0xd30] sm:$0xff]
    %v3170 = vld [vmem:[#allocation14 + $0xd38] sm:$0xff]
    %v3171 = vld [vmem:[#allocation14 + $0xd40] sm:$0xff]
    %v3172 = vld [vmem:[#allocation14 + $0xd48] sm:$0xff]
    %v3173 = vld [vmem:[#allocation14 + $0xd50] sm:$0xff]
    %v3174 = vld [vmem:[#allocation14 + $0xd58] sm:$0xff]
    %v3175 = vld [vmem:[#allocation14 + $0xd60] sm:$0xff]
    %v3176 = vld [vmem:[#allocation14 + $0xd68] sm:$0xff]
    %v3177 = vld [vmem:[#allocation14 + $0xd70] sm:$0xff]
    %v3178 = vld [vmem:[#allocation14 + $0xd78] sm:$0xff]
    %v3179 = vld [vmem:[#allocation14 + $0xd80] sm:$0xff]
    %v3180 = vld [vmem:[#allocation14 + $0xd88] sm:$0xff]
    %v3181 = vld [vmem:[#allocation14 + $0xd90] sm:$0xff]
    %v3182 = vld [vmem:[#allocation14 + $0xd98] sm:$0xff]
    %v3183 = vld [vmem:[#allocation14 + $0xda0] sm:$0xff]
    %v3184 = vld [vmem:[#allocation14 + $0xda8] sm:$0xff]
    %v3185 = vld [vmem:[#allocation14 + $0xdb0] sm:$0xff]
    %v3186 = vld [vmem:[#allocation14 + $0xdb8] sm:$0xff]
    %v3187 = vld [vmem:[#allocation14 + $0xdc0] sm:$0xff]
    %v3188 = vld [vmem:[#allocation14 + $0xdc8] sm:$0xff]
    %v3189 = vld [vmem:[#allocation14 + $0xdd0] sm:$0xff]
    %v3190 = vld [vmem:[#allocation14 + $0xdd8] sm:$0xff]
    %v3191 = vld [vmem:[#allocation14 + $0xde0] sm:$0xff]
    %v3192 = vld [vmem:[#allocation14 + $0xde8] sm:$0xff]
    %v3193 = vld [vmem:[#allocation14 + $0xdf0] sm:$0xff]
    %v3194 = vld [vmem:[#allocation14 + $0xdf8] sm:$0xff]
    %v3195 = vld [vmem:[#allocation14 + $0xe00] sm:$0xff]
    %v3196 = vld [vmem:[#allocation14 + $0xe08] sm:$0xff]
    %v3197 = vld [vmem:[#allocation14 + $0xe10] sm:$0xff]
    %v3198 = vld [vmem:[#allocation14 + $0xe18] sm:$0xff]
    %v3199 = vld [vmem:[#allocation14 + $0xe20] sm:$0xff]
    %v3200 = vld [vmem:[#allocation14 + $0xe28] sm:$0xff]
    %v3201 = vld [vmem:[#allocation14 + $0xe30] sm:$0xff]
    %v3202 = vld [vmem:[#allocation14 + $0xe38] sm:$0xff]
    %v3203 = vld [vmem:[#allocation14 + $0xe40] sm:$0xff]
    %v3204 = vld [vmem:[#allocation14 + $0xe48] sm:$0xff]
    %v3205 = vld [vmem:[#allocation14 + $0xe50] sm:$0xff]
    %v3206 = vld [vmem:[#allocation14 + $0xe58] sm:$0xff]
    %v3207 = vld [vmem:[#allocation14 + $0xe60] sm:$0xff]
    %v3208 = vld [vmem:[#allocation14 + $0xe68] sm:$0xff]
    %v3209 = vld [vmem:[#allocation14 + $0xe70] sm:$0xff]
    %v3210 = vld [vmem:[#allocation14 + $0xe78] sm:$0xff]
    %v3211 = vld [vmem:[#allocation14 + $0xe80] sm:$0xff]
    %v3212 = vld [vmem:[#allocation14 + $0xe88] sm:$0xff]
    %v3213 = vld [vmem:[#allocation14 + $0xe90] sm:$0xff]
    %v3214 = vld [vmem:[#allocation14 + $0xe98] sm:$0xff]
    %v3215 = vld [vmem:[#allocation14 + $0xea0] sm:$0xff]
    %v3216 = vld [vmem:[#allocation14 + $0xea8] sm:$0xff]
    %v3217 = vld [vmem:[#allocation14 + $0xeb0] sm:$0xff]
    %v3218 = vld [vmem:[#allocation14 + $0xeb8] sm:$0xff]
    %v3219 = vld [vmem:[#allocation14 + $0xec0] sm:$0xff]
    %v3220 = vld [vmem:[#allocation14 + $0xec8] sm:$0xff]
    %v3221 = vld [vmem:[#allocation14 + $0xed0] sm:$0xff]
    %v3222 = vld [vmem:[#allocation14 + $0xed8] sm:$0xff]
    %v3223 = vld [vmem:[#allocation14 + $0xee0] sm:$0xff]
    %v3224 = vld [vmem:[#allocation14 + $0xee8] sm:$0xff]
    %v3225 = vld [vmem:[#allocation14 + $0xef0] sm:$0xff]
    %v3226 = vld [vmem:[#allocation14 + $0xef8] sm:$0xff]
    %v3227 = vld [vmem:[#allocation14 + $0xf00] sm:$0xff]
    %v3228 = vld [vmem:[#allocation14 + $0xf08] sm:$0xff]
    %v3229 = vld [vmem:[#allocation14 + $0xf10] sm:$0xff]
    %v3230 = vld [vmem:[#allocation14 + $0xf18] sm:$0xff]
    %v3231 = vld [vmem:[#allocation14 + $0xf20] sm:$0xff]
    %v3232 = vld [vmem:[#allocation14 + $0xf28] sm:$0xff]
    %v3233 = vld [vmem:[#allocation14 + $0xf30] sm:$0xff]
    %v3234 = vld [vmem:[#allocation14 + $0xf38] sm:$0xff]
    %v3235 = vld [vmem:[#allocation14 + $0xf40] sm:$0xff]
    %v3236 = vld [vmem:[#allocation14 + $0xf48] sm:$0xff]
    %v3237 = vld [vmem:[#allocation14 + $0xf50] sm:$0xff]
    %v3238 = vld [vmem:[#allocation14 + $0xf58] sm:$0xff]
    %v3239 = vld [vmem:[#allocation14 + $0xf60] sm:$0xff]
    %v3240 = vld [vmem:[#allocation14 + $0xf68] sm:$0xff]
    %v3241 = vld [vmem:[#allocation14 + $0xf70] sm:$0xff]
    %v3242 = vld [vmem:[#allocation14 + $0xf78] sm:$0xff]
    %v3243 = vld [vmem:[#allocation14 + $0xf80] sm:$0xff]
    %v3244 = vld [vmem:[#allocation14 + $0xf88] sm:$0xff]
    %v3245 = vld [vmem:[#allocation14 + $0xf90] sm:$0xff]
    %v3246 = vld [vmem:[#allocation14 + $0xf98] sm:$0xff]
    %v3247 = vld [vmem:[#allocation14 + $0xfa0] sm:$0xff]
    %v3248 = vld [vmem:[#allocation14 + $0xfa8] sm:$0xff]
    %v3249 = vld [vmem:[#allocation14 + $0xfb0] sm:$0xff]
    %v3250 = vld [vmem:[#allocation14 + $0xfb8] sm:$0xff]
    %v3251 = vld [vmem:[#allocation14 + $0xfc0] sm:$0xff]
    %v3252 = vld [vmem:[#allocation14 + $0xfc8] sm:$0xff]
    %v3253 = vld [vmem:[#allocation14 + $0xfd0] sm:$0xff]
    %v3254 = vld [vmem:[#allocation14 + $0xfd8] sm:$0xff]
    %v3255 = vld [vmem:[#allocation14 + $0xfe0] sm:$0xff]
    %v3256 = vld [vmem:[#allocation14 + $0xfe8] sm:$0xff]
    %v3257 = vld [vmem:[#allocation14 + $0xff0] sm:$0xff]
    %v3258 = vld [vmem:[#allocation14 + $0xff8] sm:$0xff]
    %v3259 = vld [vmem:[#allocation14 + $0x1000] sm:$0xff]
    %v3260 = vld [vmem:[#allocation14 + $0x1008] sm:$0xff]
    %v3261 = vld [vmem:[#allocation14 + $0x1010] sm:$0xff]
    %v3262 = vld [vmem:[#allocation14 + $0x1018] sm:$0xff]
    %v3263 = vld [vmem:[#allocation14 + $0x1020] sm:$0xff]
    %v3264 = vld [vmem:[#allocation14 + $0x1028] sm:$0xff]
    %v3265 = vld [vmem:[#allocation14 + $0x1030] sm:$0xff]
    %v3266 = vld [vmem:[#allocation14 + $0x1038] sm:$0xff]
    %v3267 = vld [vmem:[#allocation14 + $0x1040] sm:$0xff]
    %v3268 = vld [vmem:[#allocation14 + $0x1048] sm:$0xff]
    %v3269 = vld [vmem:[#allocation14 + $0x1050] sm:$0xff]
    %v3270 = vld [vmem:[#allocation14 + $0x1058] sm:$0xff]
    %v3271 = vld [vmem:[#allocation14 + $0x1060] sm:$0xff]
    %v3272 = vld [vmem:[#allocation14 + $0x1068] sm:$0xff]
    %v3273 = vld [vmem:[#allocation14 + $0x1070] sm:$0xff]
    %v3274 = vld [vmem:[#allocation14 + $0x1078] sm:$0xff]
    %v3275 = vld [vmem:[#allocation14 + $0x1080] sm:$0xff]
    %v3276 = vld [vmem:[#allocation14 + $0x1088] sm:$0xff]
    %v3277 = vld [vmem:[#allocation14 + $0x1090] sm:$0xff]
    %v3278 = vld [vmem:[#allocation14 + $0x1098] sm:$0xff]
    %v3279 = vld [vmem:[#allocation14 + $0x10a0] sm:$0xff]
    %v3280 = vld [vmem:[#allocation14 + $0x10a8] sm:$0xff]
    %v3281 = vld [vmem:[#allocation14 + $0x10b0] sm:$0xff]
    %v3282 = vld [vmem:[#allocation14 + $0x10b8] sm:$0xff]
    %v3283 = vld [vmem:[#allocation14 + $0x10c0] sm:$0xff]
    %v3284 = vld [vmem:[#allocation14 + $0x10c8] sm:$0xff]
    %v3285 = vld [vmem:[#allocation14 + $0x10d0] sm:$0xff]
    %v3286 = vld [vmem:[#allocation14 + $0x10d8] sm:$0xff]
    %v3287 = vld [vmem:[#allocation14 + $0x10e0] sm:$0xff]
    %v3288 = vld [vmem:[#allocation14 + $0x10e8] sm:$0xff]
    %v3289 = vld [vmem:[#allocation14 + $0x10f0] sm:$0xff]
    %v3290 = vld [vmem:[#allocation14 + $0x10f8] sm:$0xff]
    %v3291 = vld [vmem:[#allocation14 + $0x1100] sm:$0xff]
    %v3292 = vld [vmem:[#allocation14 + $0x1108] sm:$0xff]
    %v3293 = vld [vmem:[#allocation14 + $0x1110] sm:$0xff]
    %v3294 = vld [vmem:[#allocation14 + $0x1118] sm:$0xff]
    %v3295 = vld [vmem:[#allocation14 + $0x1120] sm:$0xff]
    %v3296 = vld [vmem:[#allocation14 + $0x1128] sm:$0xff]
    %v3297 = vld [vmem:[#allocation14 + $0x1130] sm:$0xff]
    %v3298 = vld [vmem:[#allocation14 + $0x1138] sm:$0xff]
    %v3299 = vld [vmem:[#allocation14 + $0x1140] sm:$0xff]
    %v3300 = vld [vmem:[#allocation14 + $0x1148] sm:$0xff]
    %v3301 = vld [vmem:[#allocation14 + $0x1150] sm:$0xff]
    %v3302 = vld [vmem:[#allocation14 + $0x1158] sm:$0xff]
    %v3303 = vld [vmem:[#allocation14 + $0x1160] sm:$0xff]
    %v3304 = vld [vmem:[#allocation14 + $0x1168] sm:$0xff]
    %v3305 = vld [vmem:[#allocation14 + $0x1170] sm:$0xff]
    %v3306 = vld [vmem:[#allocation14 + $0x1178] sm:$0xff]
    %v3307 = vld [vmem:[#allocation14 + $0x1180] sm:$0xff]
    %v3308 = vld [vmem:[#allocation14 + $0x1188] sm:$0xff]
    %v3309 = vld [vmem:[#allocation14 + $0x1190] sm:$0xff]
    %v3310 = vld [vmem:[#allocation14 + $0x1198] sm:$0xff]
    %v3311 = vld [vmem:[#allocation14 + $0x11a0] sm:$0xff]
    %v3312 = vld [vmem:[#allocation14 + $0x11a8] sm:$0xff]
    %v3313 = vld [vmem:[#allocation14 + $0x11b0] sm:$0xff]
    %v3314 = vld [vmem:[#allocation14 + $0x11b8] sm:$0xff]
    %v3315 = vld [vmem:[#allocation14 + $0x11c0] sm:$0xff]
    %v3316 = vld [vmem:[#allocation14 + $0x11c8] sm:$0xff]
    %v3317 = vld [vmem:[#allocation14 + $0x11d0] sm:$0xff]
    %v3318 = vld [vmem:[#allocation14 + $0x11d8] sm:$0xff]
    %v3319 = vld [vmem:[#allocation14 + $0x11e0] sm:$0xff]
    %v3320 = vld [vmem:[#allocation14 + $0x11e8] sm:$0xff]
    %v3321 = vld [vmem:[#allocation14 + $0x11f0] sm:$0xff]
    %v3322 = vld [vmem:[#allocation14 + $0x11f8] sm:$0xff]
    %v3323 = vld [vmem:[#allocation14 + $0x1200] sm:$0xff]
    %v3324 = vld [vmem:[#allocation14 + $0x1208] sm:$0xff]
    %v3325 = vld [vmem:[#allocation14 + $0x1210] sm:$0xff]
    %v3326 = vld [vmem:[#allocation14 + $0x1218] sm:$0xff]
    %v3327 = vld [vmem:[#allocation14 + $0x1220] sm:$0xff]
    %v3328 = vld [vmem:[#allocation14 + $0x1228] sm:$0xff]
    %v3329 = vld [vmem:[#allocation14 + $0x1230] sm:$0xff]
    %v3330 = vld [vmem:[#allocation14 + $0x1238] sm:$0xff]
    %v3331 = vld [vmem:[#allocation14 + $0x1240] sm:$0xff]
    %v3332 = vld [vmem:[#allocation14 + $0x1248] sm:$0xff]
    %v3333 = vld [vmem:[#allocation14 + $0x1250] sm:$0xff]
    %v3334 = vld [vmem:[#allocation14 + $0x1258] sm:$0xff]
    %v3335 = vld [vmem:[#allocation14 + $0x1260] sm:$0xff]
    %v3336 = vld [vmem:[#allocation14 + $0x1268] sm:$0xff]
    %v3337 = vld [vmem:[#allocation14 + $0x1270] sm:$0xff]
    %v3338 = vld [vmem:[#allocation14 + $0x1278] sm:$0xff]
    %v3339 = vld [vmem:[#allocation14 + $0x1280] sm:$0xff]
    %v3340 = vld [vmem:[#allocation14 + $0x1288] sm:$0xff]
    %v3341 = vld [vmem:[#allocation14 + $0x1290] sm:$0xff]
    %v3342 = vld [vmem:[#allocation14 + $0x1298] sm:$0xff]
    %v3343 = vld [vmem:[#allocation14 + $0x12a0] sm:$0xff]
    %v3344 = vld [vmem:[#allocation14 + $0x12a8] sm:$0xff]
    %v3345 = vld [vmem:[#allocation14 + $0x12b0] sm:$0xff]
    %v3346 = vld [vmem:[#allocation14 + $0x12b8] sm:$0xff]
    %v3347 = vld [vmem:[#allocation14 + $0x12c0] sm:$0xff]
    %v3348 = vld [vmem:[#allocation14 + $0x12c8] sm:$0xff]
    %v3349 = vld [vmem:[#allocation14 + $0x12d0] sm:$0xff]
    %v3350 = vld [vmem:[#allocation14 + $0x12d8] sm:$0xff]
    %v3351 = vld [vmem:[#allocation14 + $0x12e0] sm:$0xff]
    %v3352 = vld [vmem:[#allocation14 + $0x12e8] sm:$0xff]
    %v3353 = vld [vmem:[#allocation14 + $0x12f0] sm:$0xff]
    %v3354 = vld [vmem:[#allocation14 + $0x12f8] sm:$0xff]
    %v3355 = vld [vmem:[#allocation14 + $0x1300] sm:$0xff]
    %v3356 = vld [vmem:[#allocation14 + $0x1308] sm:$0xff]
    %v3357 = vld [vmem:[#allocation14 + $0x1310] sm:$0xff]
    %v3358 = vld [vmem:[#allocation14 + $0x1318] sm:$0xff]
    %v3359 = vld [vmem:[#allocation14 + $0x1320] sm:$0xff]
    %v3360 = vld [vmem:[#allocation14 + $0x1328] sm:$0xff]
    %v3361 = vld [vmem:[#allocation14 + $0x1330] sm:$0xff]
    %v3362 = vld [vmem:[#allocation14 + $0x1338] sm:$0xff]
    %v3363 = vld [vmem:[#allocation14 + $0x1340] sm:$0xff]
    %v3364 = vld [vmem:[#allocation14 + $0x1348] sm:$0xff]
    %v3365 = vld [vmem:[#allocation14 + $0x1350] sm:$0xff]
    %v3366 = vld [vmem:[#allocation14 + $0x1358] sm:$0xff]
    %v3367 = vld [vmem:[#allocation14 + $0x1360] sm:$0xff]
    %v3368 = vld [vmem:[#allocation14 + $0x1368] sm:$0xff]
    %v3369 = vld [vmem:[#allocation14 + $0x1370] sm:$0xff]
    %v3370 = vld [vmem:[#allocation14 + $0x1378] sm:$0xff]
    %v3371 = vld [vmem:[#allocation14 + $0x1380] sm:$0xff]
    %v3372 = vld [vmem:[#allocation14 + $0x1388] sm:$0xff]
    %v3373 = vld [vmem:[#allocation14 + $0x1390] sm:$0xff]
    %v3374 = vld [vmem:[#allocation14 + $0x1398] sm:$0xff]
    %v3375 = vld [vmem:[#allocation14 + $0x13a0] sm:$0xff]
    %v3376 = vld [vmem:[#allocation14 + $0x13a8] sm:$0xff]
    %v3377 = vld [vmem:[#allocation14 + $0x13b0] sm:$0xff]
    %v3378 = vld [vmem:[#allocation14 + $0x13b8] sm:$0xff]
    %v3379 = vld [vmem:[#allocation14 + $0x13c0] sm:$0xff]
    %v3380 = vld [vmem:[#allocation14 + $0x13c8] sm:$0xff]
    %v3381 = vld [vmem:[#allocation14 + $0x13d0] sm:$0xff]
    %v3382 = vld [vmem:[#allocation14 + $0x13d8] sm:$0xff]
    %v3383 = vld [vmem:[#allocation14 + $0x13e0] sm:$0xff]
    %v3384 = vld [vmem:[#allocation14 + $0x13e8] sm:$0xff]
    %v3385 = vld [vmem:[#allocation14 + $0x13f0] sm:$0xff]
    %v3386 = vld [vmem:[#allocation14 + $0x13f8] sm:$0xff]
    %v3387 = vld [vmem:[#allocation14 + $0x1400] sm:$0xff]
    %v3388 = vld [vmem:[#allocation14 + $0x1408] sm:$0xff]
    %v3389 = vld [vmem:[#allocation14 + $0x1410] sm:$0xff]
    %v3390 = vld [vmem:[#allocation14 + $0x1418] sm:$0xff]
    %v3391 = vld [vmem:[#allocation14 + $0x1420] sm:$0xff]
    %v3392 = vld [vmem:[#allocation14 + $0x1428] sm:$0xff]
    %v3393 = vld [vmem:[#allocation14 + $0x1430] sm:$0xff]
    %v3394 = vld [vmem:[#allocation14 + $0x1438] sm:$0xff]
    %v3395 = vld [vmem:[#allocation14 + $0x1440] sm:$0xff]
    %v3396 = vld [vmem:[#allocation14 + $0x1448] sm:$0xff]
    %v3397 = vld [vmem:[#allocation14 + $0x1450] sm:$0xff]
    %v3398 = vld [vmem:[#allocation14 + $0x1458] sm:$0xff]
    %v3399 = vld [vmem:[#allocation14 + $0x1460] sm:$0xff]
    %v3400 = vld [vmem:[#allocation14 + $0x1468] sm:$0xff]
    %v3401 = vld [vmem:[#allocation14 + $0x1470] sm:$0xff]
    %v3402 = vld [vmem:[#allocation14 + $0x1478] sm:$0xff]
    %v3403 = vld [vmem:[#allocation14 + $0x1480] sm:$0xff]
    %v3404 = vld [vmem:[#allocation14 + $0x1488] sm:$0xff]
    %v3405 = vld [vmem:[#allocation14 + $0x1490] sm:$0xff]
    %v3406 = vld [vmem:[#allocation14 + $0x1498] sm:$0xff]
    %v3407 = vld [vmem:[#allocation14 + $0x14a0] sm:$0xff]
    %v3408 = vld [vmem:[#allocation14 + $0x14a8] sm:$0xff]
    %v3409 = vld [vmem:[#allocation14 + $0x14b0] sm:$0xff]
    %v3410 = vld [vmem:[#allocation14 + $0x14b8] sm:$0xff]
    %v3411 = vld [vmem:[#allocation14 + $0x14c0] sm:$0xff]
    %v3412 = vld [vmem:[#allocation14 + $0x14c8] sm:$0xff]
    %v3413 = vld [vmem:[#allocation14 + $0x14d0] sm:$0xff]
    %v3414 = vld [vmem:[#allocation14 + $0x14d8] sm:$0xff]
    %v3415 = vld [vmem:[#allocation14 + $0x14e0] sm:$0xff]
    %v3416 = vld [vmem:[#allocation14 + $0x14e8] sm:$0xff]
    %v3417 = vld [vmem:[#allocation14 + $0x14f0] sm:$0xff]
    %v3418 = vld [vmem:[#allocation14 + $0x14f8] sm:$0xff]
    %v3419 = vld [vmem:[#allocation14 + $0x1500] sm:$0xff]
    %v3420 = vld [vmem:[#allocation14 + $0x1508] sm:$0xff]
    %v3421 = vld [vmem:[#allocation14 + $0x1510] sm:$0xff]
    %v3422 = vld [vmem:[#allocation14 + $0x1518] sm:$0xff]
    %v3423 = vld [vmem:[#allocation14 + $0x1520] sm:$0xff]
    %v3424 = vld [vmem:[#allocation14 + $0x1528] sm:$0xff]
    %v3425 = vld [vmem:[#allocation14 + $0x1530] sm:$0xff]
    %v3426 = vld [vmem:[#allocation14 + $0x1538] sm:$0xff]
    %v3427 = vld [vmem:[#allocation14 + $0x1540] sm:$0xff]
    %v3428 = vld [vmem:[#allocation14 + $0x1548] sm:$0xff]
    %v3429 = vld [vmem:[#allocation14 + $0x1550] sm:$0xff]
    %v3430 = vld [vmem:[#allocation14 + $0x1558] sm:$0xff]
    %v3431 = vld [vmem:[#allocation14 + $0x1560] sm:$0xff]
    %v3432 = vld [vmem:[#allocation14 + $0x1568] sm:$0xff]
    %v3433 = vld [vmem:[#allocation14 + $0x1570] sm:$0xff]
    %v3434 = vld [vmem:[#allocation14 + $0x1578] sm:$0xff]
    %v3435 = vld [vmem:[#allocation14 + $0x1580] sm:$0xff]
    %v3436 = vld [vmem:[#allocation14 + $0x1588] sm:$0xff]
    %v3437 = vld [vmem:[#allocation14 + $0x1590] sm:$0xff]
    %v3438 = vld [vmem:[#allocation14 + $0x1598] sm:$0xff]
    %v3439 = vld [vmem:[#allocation14 + $0x15a0] sm:$0xff]
    %v3440 = vld [vmem:[#allocation14 + $0x15a8] sm:$0xff]
    %v3441 = vld [vmem:[#allocation14 + $0x15b0] sm:$0xff]
    %v3442 = vld [vmem:[#allocation14 + $0x15b8] sm:$0xff]
    %v3443 = vld [vmem:[#allocation14 + $0x15c0] sm:$0xff]
    %v3444 = vld [vmem:[#allocation14 + $0x15c8] sm:$0xff]
    %v3445 = vld [vmem:[#allocation14 + $0x15d0] sm:$0xff]
    %v3446 = vld [vmem:[#allocation14 + $0x15d8] sm:$0xff]
    %v3447 = vld [vmem:[#allocation14 + $0x15e0] sm:$0xff]
    %v3448 = vld [vmem:[#allocation14 + $0x15e8] sm:$0xff]
    %v3449 = vld [vmem:[#allocation14 + $0x15f0] sm:$0xff]
    %v3450 = vld [vmem:[#allocation14 + $0x15f8] sm:$0xff]
    %v3451 = vld [vmem:[#allocation14 + $0x1600] sm:$0xff]
    %v3452 = vld [vmem:[#allocation14 + $0x1608] sm:$0xff]
    %v3453 = vld [vmem:[#allocation14 + $0x1610] sm:$0xff]
    %v3454 = vld [vmem:[#allocation14 + $0x1618] sm:$0xff]
    %v3455 = vld [vmem:[#allocation14 + $0x1620] sm:$0xff]
    %v3456 = vld [vmem:[#allocation14 + $0x1628] sm:$0xff]
    %v3457 = vld [vmem:[#allocation14 + $0x1630] sm:$0xff]
    %v3458 = vld [vmem:[#allocation14 + $0x1638] sm:$0xff]
    %v3459 = vld [vmem:[#allocation14 + $0x1640] sm:$0xff]
    %v3460 = vld [vmem:[#allocation14 + $0x1648] sm:$0xff]
    %v3461 = vld [vmem:[#allocation14 + $0x1650] sm:$0xff]
    %v3462 = vld [vmem:[#allocation14 + $0x1658] sm:$0xff]
    %v3463 = vld [vmem:[#allocation14 + $0x1660] sm:$0xff]
    %v3464 = vld [vmem:[#allocation14 + $0x1668] sm:$0xff]
    %v3465 = vld [vmem:[#allocation14 + $0x1670] sm:$0xff]
    %v3466 = vld [vmem:[#allocation14 + $0x1678] sm:$0xff]
    %v3467 = vld [vmem:[#allocation14 + $0x1680] sm:$0xff]
    %v3468 = vld [vmem:[#allocation14 + $0x1688] sm:$0xff]
    %v3469 = vld [vmem:[#allocation14 + $0x1690] sm:$0xff]
    %v3470 = vld [vmem:[#allocation14 + $0x1698] sm:$0xff]
    %v3471 = vld [vmem:[#allocation14 + $0x16a0] sm:$0xff]
    %v3472 = vld [vmem:[#allocation14 + $0x16a8] sm:$0xff]
    %v3473 = vld [vmem:[#allocation14 + $0x16b0] sm:$0xff]
    %v3474 = vld [vmem:[#allocation14 + $0x16b8] sm:$0xff]
    %v3475 = vld [vmem:[#allocation14 + $0x16c0] sm:$0xff]
    %v3476 = vld [vmem:[#allocation14 + $0x16c8] sm:$0xff]
    %v3477 = vld [vmem:[#allocation14 + $0x16d0] sm:$0xff]
    %v3478 = vld [vmem:[#allocation14 + $0x16d8] sm:$0xff]
    %v3479 = vld [vmem:[#allocation14 + $0x16e0] sm:$0xff]
    %v3480 = vld [vmem:[#allocation14 + $0x16e8] sm:$0xff]
    %v3481 = vld [vmem:[#allocation14 + $0x16f0] sm:$0xff]
    %v3482 = vld [vmem:[#allocation14 + $0x16f8] sm:$0xff]
    %v3483 = vld [vmem:[#allocation14 + $0x1700] sm:$0xff]
    %v3484 = vld [vmem:[#allocation14 + $0x1708] sm:$0xff]
    %v3485 = vld [vmem:[#allocation14 + $0x1710] sm:$0xff]
    %v3486 = vld [vmem:[#allocation14 + $0x1718] sm:$0xff]
    %v3487 = vld [vmem:[#allocation14 + $0x1720] sm:$0xff]
    %v3488 = vld [vmem:[#allocation14 + $0x1728] sm:$0xff]
    %v3489 = vld [vmem:[#allocation14 + $0x1730] sm:$0xff]
    %v3490 = vld [vmem:[#allocation14 + $0x1738] sm:$0xff]
    %v3491 = vld [vmem:[#allocation14 + $0x1740] sm:$0xff]
    %v3492 = vld [vmem:[#allocation14 + $0x1748] sm:$0xff]
    %v3493 = vld [vmem:[#allocation14 + $0x1750] sm:$0xff]
    %v3494 = vld [vmem:[#allocation14 + $0x1758] sm:$0xff]
    %v3495 = vld [vmem:[#allocation14 + $0x1760] sm:$0xff]
    %v3496 = vld [vmem:[#allocation14 + $0x1768] sm:$0xff]
    %v3497 = vld [vmem:[#allocation14 + $0x1770] sm:$0xff]
    %v3498 = vld [vmem:[#allocation14 + $0x1778] sm:$0xff]
    %v3499 = vld [vmem:[#allocation14 + $0x1780] sm:$0xff]
    %v3500 = vld [vmem:[#allocation14 + $0x1788] sm:$0xff]
    %v3501 = vld [vmem:[#allocation14 + $0x1790] sm:$0xff]
    %v3502 = vld [vmem:[#allocation14 + $0x1798] sm:$0xff]
    %v3503 = vld [vmem:[#allocation14 + $0x17a0] sm:$0xff]
    %v3504 = vld [vmem:[#allocation14 + $0x17a8] sm:$0xff]
    %v3505 = vld [vmem:[#allocation14 + $0x17b0] sm:$0xff]
    %v3506 = vld [vmem:[#allocation14 + $0x17b8] sm:$0xff]
    %v3507 = vld [vmem:[#allocation14 + $0x17c0] sm:$0xff]
    %v3508 = vld [vmem:[#allocation14 + $0x17c8] sm:$0xff]
    %v3509 = vld [vmem:[#allocation14 + $0x17d0] sm:$0xff]
    %v3510 = vld [vmem:[#allocation14 + $0x17d8] sm:$0xff]
    %v3511 = vld [vmem:[#allocation14 + $0x17e0] sm:$0xff]
    %v3512 = vld [vmem:[#allocation14 + $0x17e8] sm:$0xff]
    %v3513 = vld [vmem:[#allocation14 + $0x17f0] sm:$0xff]
    %v3514 = vld [vmem:[#allocation14 + $0x17f8] sm:$0xff]
    %v3515 = vld [vmem:[#allocation14 + $0x1800] sm:$0xff]
    %v3516 = vld [vmem:[#allocation14 + $0x1808] sm:$0xff]
    %v3517 = vld [vmem:[#allocation14 + $0x1810] sm:$0xff]
    %v3518 = vld [vmem:[#allocation14 + $0x1818] sm:$0xff]
    %v3519 = vld [vmem:[#allocation14 + $0x1820] sm:$0xff]
    %v3520 = vld [vmem:[#allocation14 + $0x1828] sm:$0xff]
    %v3521 = vld [vmem:[#allocation14 + $0x1830] sm:$0xff]
    %v3522 = vld [vmem:[#allocation14 + $0x1838] sm:$0xff]
    %v3523 = vld [vmem:[#allocation14 + $0x1840] sm:$0xff]
    %v3524 = vld [vmem:[#allocation14 + $0x1848] sm:$0xff]
    %v3525 = vld [vmem:[#allocation14 + $0x1850] sm:$0xff]
    %v3526 = vld [vmem:[#allocation14 + $0x1858] sm:$0xff]
    %v3527 = vld [vmem:[#allocation14 + $0x1860] sm:$0xff]
    %v3528 = vld [vmem:[#allocation14 + $0x1868] sm:$0xff]
    %v3529 = vld [vmem:[#allocation14 + $0x1870] sm:$0xff]
    %v3530 = vld [vmem:[#allocation14 + $0x1878] sm:$0xff]
    %v3531 = vld [vmem:[#allocation14 + $0x1880] sm:$0xff]
    %v3532 = vld [vmem:[#allocation14 + $0x1888] sm:$0xff]
    %v3533 = vld [vmem:[#allocation14 + $0x1890] sm:$0xff]
    %v3534 = vld [vmem:[#allocation14 + $0x1898] sm:$0xff]
    %v3535 = vld [vmem:[#allocation14 + $0x18a0] sm:$0xff]
    %v3536 = vld [vmem:[#allocation14 + $0x18a8] sm:$0xff]
    %v3537 = vld [vmem:[#allocation14 + $0x18b0] sm:$0xff]
    %v3538 = vld [vmem:[#allocation14 + $0x18b8] sm:$0xff]
    %v3539 = vld [vmem:[#allocation14 + $0x18c0] sm:$0xff]
    %v3540 = vld [vmem:[#allocation14 + $0x18c8] sm:$0xff]
    %v3541 = vld [vmem:[#allocation14 + $0x18d0] sm:$0xff]
    %v3542 = vld [vmem:[#allocation14 + $0x18d8] sm:$0xff]
    %v3543 = vld [vmem:[#allocation14 + $0x18e0] sm:$0xff]
    %v3544 = vld [vmem:[#allocation14 + $0x18e8] sm:$0xff]
    %v3545 = vld [vmem:[#allocation14 + $0x18f0] sm:$0xff]
    %v3546 = vld [vmem:[#allocation14 + $0x18f8] sm:$0xff]
    %v3547 = vld [vmem:[#allocation14 + $0x1900] sm:$0xff]
    %v3548 = vld [vmem:[#allocation14 + $0x1908] sm:$0xff]
    %v3549 = vld [vmem:[#allocation14 + $0x1910] sm:$0xff]
    %v3550 = vld [vmem:[#allocation14 + $0x1918] sm:$0xff]
    %v3551 = vld [vmem:[#allocation14 + $0x1920] sm:$0xff]
    %v3552 = vld [vmem:[#allocation14 + $0x1928] sm:$0xff]
    %v3553 = vld [vmem:[#allocation14 + $0x1930] sm:$0xff]
    %v3554 = vld [vmem:[#allocation14 + $0x1938] sm:$0xff]
    %v3555 = vld [vmem:[#allocation14 + $0x1940] sm:$0xff]
    %v3556 = vld [vmem:[#allocation14 + $0x1948] sm:$0xff]
    %v3557 = vld [vmem:[#allocation14 + $0x1950] sm:$0xff]
    %v3558 = vld [vmem:[#allocation14 + $0x1958] sm:$0xff]
    %v3559 = vld [vmem:[#allocation14 + $0x1960] sm:$0xff]
    %v3560 = vld [vmem:[#allocation14 + $0x1968] sm:$0xff]
    %v3561 = vld [vmem:[#allocation14 + $0x1970] sm:$0xff]
    %v3562 = vld [vmem:[#allocation14 + $0x1978] sm:$0xff]
    %v3563 = vld [vmem:[#allocation14 + $0x1980] sm:$0xff]
    %v3564 = vld [vmem:[#allocation14 + $0x1988] sm:$0xff]
    %v3565 = vld [vmem:[#allocation14 + $0x1990] sm:$0xff]
    %v3566 = vld [vmem:[#allocation14 + $0x1998] sm:$0xff]
    %v3567 = vld [vmem:[#allocation14 + $0x19a0] sm:$0xff]
    %v3568 = vld [vmem:[#allocation14 + $0x19a8] sm:$0xff]
    %v3569 = vld [vmem:[#allocation14 + $0x19b0] sm:$0xff]
    %v3570 = vld [vmem:[#allocation14 + $0x19b8] sm:$0xff]
    %v3571 = vld [vmem:[#allocation14 + $0x19c0] sm:$0xff]
    %v3572 = vld [vmem:[#allocation14 + $0x19c8] sm:$0xff]
    %v3573 = vld [vmem:[#allocation14 + $0x19d0] sm:$0xff]
    %v3574 = vld [vmem:[#allocation14 + $0x19d8] sm:$0xff]
    %v3575 = vld [vmem:[#allocation14 + $0x19e0] sm:$0xff]
    %v3576 = vld [vmem:[#allocation14 + $0x19e8] sm:$0xff]
    %v3577 = vld [vmem:[#allocation14 + $0x19f0] sm:$0xff]
    %v3578 = vld [vmem:[#allocation14 + $0x19f8] sm:$0xff]
    %v3579 = vld [vmem:[#allocation14 + $0x1a00] sm:$0xff]
    %v3580 = vld [vmem:[#allocation14 + $0x1a08] sm:$0xff]
    %v3581 = vld [vmem:[#allocation14 + $0x1a10] sm:$0xff]
    %v3582 = vld [vmem:[#allocation14 + $0x1a18] sm:$0xff]
    %v3583 = vld [vmem:[#allocation14 + $0x1a20] sm:$0xff]
    %v3584 = vld [vmem:[#allocation14 + $0x1a28] sm:$0xff]
    %v3585 = vld [vmem:[#allocation14 + $0x1a30] sm:$0xff]
    %v3586 = vld [vmem:[#allocation14 + $0x1a38] sm:$0xff]
    %v3587 = vld [vmem:[#allocation14 + $0x1a40] sm:$0xff]
    %v3588 = vld [vmem:[#allocation14 + $0x1a48] sm:$0xff]
    %v3589 = vld [vmem:[#allocation14 + $0x1a50] sm:$0xff]
    %v3590 = vld [vmem:[#allocation14 + $0x1a58] sm:$0xff]
    %v3591 = vld [vmem:[#allocation14 + $0x1a60] sm:$0xff]
    %v3592 = vld [vmem:[#allocation14 + $0x1a68] sm:$0xff]
    %v3593 = vld [vmem:[#allocation14 + $0x1a70] sm:$0xff]
    %v3594 = vld [vmem:[#allocation14 + $0x1a78] sm:$0xff]
    %v3595 = vld [vmem:[#allocation14 + $0x1a80] sm:$0xff]
    %v3596 = vld [vmem:[#allocation14 + $0x1a88] sm:$0xff]
    %v3597 = vld [vmem:[#allocation14 + $0x1a90] sm:$0xff]
    %v3598 = vld [vmem:[#allocation14 + $0x1a98] sm:$0xff]
    %v3599 = vld [vmem:[#allocation14 + $0x1aa0] sm:$0xff]
    %v3600 = vld [vmem:[#allocation14 + $0x1aa8] sm:$0xff]
    %v3601 = vld [vmem:[#allocation14 + $0x1ab0] sm:$0xff]
    %v3602 = vld [vmem:[#allocation14 + $0x1ab8] sm:$0xff]
    %v3603 = vld [vmem:[#allocation14 + $0x1ac0] sm:$0xff]
    %v3604 = vld [vmem:[#allocation14 + $0x1ac8] sm:$0xff]
    %v3605 = vld [vmem:[#allocation14 + $0x1ad0] sm:$0xff]
    %v3606 = vld [vmem:[#allocation14 + $0x1ad8] sm:$0xff]
    %v3607 = vld [vmem:[#allocation14 + $0x1ae0] sm:$0xff]
    %v3608 = vld [vmem:[#allocation14 + $0x1ae8] sm:$0xff]
    %v3609 = vld [vmem:[#allocation14 + $0x1af0] sm:$0xff]
    %v3610 = vld [vmem:[#allocation14 + $0x1af8] sm:$0xff]
    %v3611 = vld [vmem:[#allocation14 + $0x1b00] sm:$0xff]
    %v3612 = vld [vmem:[#allocation14 + $0x1b08] sm:$0xff]
    %v3613 = vld [vmem:[#allocation14 + $0x1b10] sm:$0xff]
    %v3614 = vld [vmem:[#allocation14 + $0x1b18] sm:$0xff]
    %v3615 = vld [vmem:[#allocation14 + $0x1b20] sm:$0xff]
    %v3616 = vld [vmem:[#allocation14 + $0x1b28] sm:$0xff]
    %v3617 = vld [vmem:[#allocation14 + $0x1b30] sm:$0xff]
    %v3618 = vld [vmem:[#allocation14 + $0x1b38] sm:$0xff]
    %v3619 = vld [vmem:[#allocation14 + $0x1b40] sm:$0xff]
    %v3620 = vld [vmem:[#allocation14 + $0x1b48] sm:$0xff]
    %v3621 = vld [vmem:[#allocation14 + $0x1b50] sm:$0xff]
    %v3622 = vld [vmem:[#allocation14 + $0x1b58] sm:$0xff]
    %v3623 = vld [vmem:[#allocation14 + $0x1b60] sm:$0xff]
    %v3624 = vld [vmem:[#allocation14 + $0x1b68] sm:$0xff]
    %v3625 = vld [vmem:[#allocation14 + $0x1b70] sm:$0xff]
    %v3626 = vld [vmem:[#allocation14 + $0x1b78] sm:$0xff]
    %v3627 = vld [vmem:[#allocation14 + $0x1b80] sm:$0xff]
    %v3628 = vld [vmem:[#allocation14 + $0x1b88] sm:$0xff]
    %v3629 = vld [vmem:[#allocation14 + $0x1b90] sm:$0xff]
    %v3630 = vld [vmem:[#allocation14 + $0x1b98] sm:$0xff]
    %v3631 = vld [vmem:[#allocation14 + $0x1ba0] sm:$0xff]
    %v3632 = vld [vmem:[#allocation14 + $0x1ba8] sm:$0xff]
    %v3633 = vld [vmem:[#allocation14 + $0x1bb0] sm:$0xff]
    %v3634 = vld [vmem:[#allocation14 + $0x1bb8] sm:$0xff]
    %v3635 = vld [vmem:[#allocation14 + $0x1bc0] sm:$0xff]
    %v3636 = vld [vmem:[#allocation14 + $0x1bc8] sm:$0xff]
    %v3637 = vld [vmem:[#allocation14 + $0x1bd0] sm:$0xff]
    %v3638 = vld [vmem:[#allocation14 + $0x1bd8] sm:$0xff]
    %v3639 = vld [vmem:[#allocation14 + $0x1be0] sm:$0xff]
    %v3640 = vld [vmem:[#allocation14 + $0x1be8] sm:$0xff]
    %v3641 = vld [vmem:[#allocation14 + $0x1bf0] sm:$0xff]
    %v3642 = vld [vmem:[#allocation14 + $0x1bf8] sm:$0xff]
    %v3643 = vld [vmem:[#allocation14 + $0x1c00] sm:$0xff]
    %v3644 = vld [vmem:[#allocation14 + $0x1c08] sm:$0xff]
    %v3645 = vld [vmem:[#allocation14 + $0x1c10] sm:$0xff]
    %v3646 = vld [vmem:[#allocation14 + $0x1c18] sm:$0xff]
    %v3647 = vld [vmem:[#allocation14 + $0x1c20] sm:$0xff]
    %v3648 = vld [vmem:[#allocation14 + $0x1c28] sm:$0xff]
    %v3649 = vld [vmem:[#allocation14 + $0x1c30] sm:$0xff]
    %v3650 = vld [vmem:[#allocation14 + $0x1c38] sm:$0xff]
    %v3651 = vld [vmem:[#allocation14 + $0x1c40] sm:$0xff]
    %v3652 = vld [vmem:[#allocation14 + $0x1c48] sm:$0xff]
    %v3653 = vld [vmem:[#allocation14 + $0x1c50] sm:$0xff]
    %v3654 = vld [vmem:[#allocation14 + $0x1c58] sm:$0xff]
    %v3655 = vld [vmem:[#allocation14 + $0x1c60] sm:$0xff]
    %v3656 = vld [vmem:[#allocation14 + $0x1c68] sm:$0xff]
    %v3657 = vld [vmem:[#allocation14 + $0x1c70] sm:$0xff]
    %v3658 = vld [vmem:[#allocation14 + $0x1c78] sm:$0xff]
    %v3659 = vld [vmem:[#allocation14 + $0x1c80] sm:$0xff]
    %v3660 = vld [vmem:[#allocation14 + $0x1c88] sm:$0xff]
    %v3661 = vld [vmem:[#allocation14 + $0x1c90] sm:$0xff]
    %v3662 = vld [vmem:[#allocation14 + $0x1c98] sm:$0xff]
    %v3663 = vld [vmem:[#allocation14 + $0x1ca0] sm:$0xff]
    %v3664 = vld [vmem:[#allocation14 + $0x1ca8] sm:$0xff]
    %v3665 = vld [vmem:[#allocation14 + $0x1cb0] sm:$0xff]
    %v3666 = vld [vmem:[#allocation14 + $0x1cb8] sm:$0xff]
    %v3667 = vld [vmem:[#allocation14 + $0x1cc0] sm:$0xff]
    %v3668 = vld [vmem:[#allocation14 + $0x1cc8] sm:$0xff]
    %v3669 = vld [vmem:[#allocation14 + $0x1cd0] sm:$0xff]
    %v3670 = vld [vmem:[#allocation14 + $0x1cd8] sm:$0xff]
    %v3671 = vld [vmem:[#allocation14 + $0x1ce0] sm:$0xff]
    %v3672 = vld [vmem:[#allocation14 + $0x1ce8] sm:$0xff]
    %v3673 = vld [vmem:[#allocation14 + $0x1cf0] sm:$0xff]
    %v3674 = vld [vmem:[#allocation14 + $0x1cf8] sm:$0xff]
    %v3675 = vld [vmem:[#allocation14 + $0x1d00] sm:$0xff]
    %v3676 = vld [vmem:[#allocation14 + $0x1d08] sm:$0xff]
    %v3677 = vld [vmem:[#allocation14 + $0x1d10] sm:$0xff]
    %v3678 = vld [vmem:[#allocation14 + $0x1d18] sm:$0xff]
    %v3679 = vld [vmem:[#allocation14 + $0x1d20] sm:$0xff]
    %v3680 = vld [vmem:[#allocation14 + $0x1d28] sm:$0xff]
    %v3681 = vld [vmem:[#allocation14 + $0x1d30] sm:$0xff]
    %v3682 = vld [vmem:[#allocation14 + $0x1d38] sm:$0xff]
    %v3683 = vld [vmem:[#allocation14 + $0x1d40] sm:$0xff]
    %v3684 = vld [vmem:[#allocation14 + $0x1d48] sm:$0xff]
    %v3685 = vld [vmem:[#allocation14 + $0x1d50] sm:$0xff]
    %v3686 = vld [vmem:[#allocation14 + $0x1d58] sm:$0xff]
    %v3687 = vld [vmem:[#allocation14 + $0x1d60] sm:$0xff]
    %v3688 = vld [vmem:[#allocation14 + $0x1d68] sm:$0xff]
    %v3689 = vld [vmem:[#allocation14 + $0x1d70] sm:$0xff]
    %v3690 = vld [vmem:[#allocation14 + $0x1d78] sm:$0xff]
    %v3691 = vld [vmem:[#allocation14 + $0x1d80] sm:$0xff]
    %v3692 = vld [vmem:[#allocation14 + $0x1d88] sm:$0xff]
    %v3693 = vld [vmem:[#allocation14 + $0x1d90] sm:$0xff]
    %v3694 = vld [vmem:[#allocation14 + $0x1d98] sm:$0xff]
    %v3695 = vld [vmem:[#allocation14 + $0x1da0] sm:$0xff]
    %v3696 = vld [vmem:[#allocation14 + $0x1da8] sm:$0xff]
    %v3697 = vld [vmem:[#allocation14 + $0x1db0] sm:$0xff]
    %v3698 = vld [vmem:[#allocation14 + $0x1db8] sm:$0xff]
    %v3699 = vld [vmem:[#allocation14 + $0x1dc0] sm:$0xff]
    %v3700 = vld [vmem:[#allocation14 + $0x1dc8] sm:$0xff]
    %v3701 = vld [vmem:[#allocation14 + $0x1dd0] sm:$0xff]
    %v3702 = vld [vmem:[#allocation14 + $0x1dd8] sm:$0xff]
    %v3703 = vld [vmem:[#allocation14 + $0x1de0] sm:$0xff]
    %v3704 = vld [vmem:[#allocation14 + $0x1de8] sm:$0xff]
    %v3705 = vld [vmem:[#allocation14 + $0x1df0] sm:$0xff]
    %v3706 = vld [vmem:[#allocation14 + $0x1df8] sm:$0xff]
    %v3707 = vld [vmem:[#allocation14 + $0x1e00] sm:$0xff]
    %v3708 = vld [vmem:[#allocation14 + $0x1e08] sm:$0xff]
    %v3709 = vld [vmem:[#allocation14 + $0x1e10] sm:$0xff]
    %v3710 = vld [vmem:[#allocation14 + $0x1e18] sm:$0xff]
    %v3711 = vld [vmem:[#allocation14 + $0x1e20] sm:$0xff]
    %v3712 = vld [vmem:[#allocation14 + $0x1e28] sm:$0xff]
    %v3713 = vld [vmem:[#allocation14 + $0x1e30] sm:$0xff]
    %v3714 = vld [vmem:[#allocation14 + $0x1e38] sm:$0xff]
    %v3715 = vld [vmem:[#allocation14 + $0x1e40] sm:$0xff]
    %v3716 = vld [vmem:[#allocation14 + $0x1e48] sm:$0xff]
    %v3717 = vld [vmem:[#allocation14 + $0x1e50] sm:$0xff]
    %v3718 = vld [vmem:[#allocation14 + $0x1e58] sm:$0xff]
    %v3719 = vld [vmem:[#allocation14 + $0x1e60] sm:$0xff]
    %v3720 = vld [vmem:[#allocation14 + $0x1e68] sm:$0xff]
    %v3721 = vld [vmem:[#allocation14 + $0x1e70] sm:$0xff]
    %v3722 = vld [vmem:[#allocation14 + $0x1e78] sm:$0xff]
    %v3723 = vld [vmem:[#allocation14 + $0x1e80] sm:$0xff]
    %v3724 = vld [vmem:[#allocation14 + $0x1e88] sm:$0xff]
    %v3725 = vld [vmem:[#allocation14 + $0x1e90] sm:$0xff]
    %v3726 = vld [vmem:[#allocation14 + $0x1e98] sm:$0xff]
    %v3727 = vld [vmem:[#allocation14 + $0x1ea0] sm:$0xff]
    %v3728 = vld [vmem:[#allocation14 + $0x1ea8] sm:$0xff]
    %v3729 = vld [vmem:[#allocation14 + $0x1eb0] sm:$0xff]
    %v3730 = vld [vmem:[#allocation14 + $0x1eb8] sm:$0xff]
    %v3731 = vld [vmem:[#allocation14 + $0x1ec0] sm:$0xff]
    %v3732 = vld [vmem:[#allocation14 + $0x1ec8] sm:$0xff]
    %v3733 = vld [vmem:[#allocation14 + $0x1ed0] sm:$0xff]
    %v3734 = vld [vmem:[#allocation14 + $0x1ed8] sm:$0xff]
    %v3735 = vld [vmem:[#allocation14 + $0x1ee0] sm:$0xff]
    %v3736 = vld [vmem:[#allocation14 + $0x1ee8] sm:$0xff]
    %v3737 = vld [vmem:[#allocation14 + $0x1ef0] sm:$0xff]
    %v3738 = vld [vmem:[#allocation14 + $0x1ef8] sm:$0xff]
    %v3739 = vld [vmem:[#allocation14 + $0x1f00] sm:$0xff]
    %v3740 = vld [vmem:[#allocation14 + $0x1f08] sm:$0xff]
    %v3741 = vld [vmem:[#allocation14 + $0x1f10] sm:$0xff]
    %v3742 = vld [vmem:[#allocation14 + $0x1f18] sm:$0xff]
    %v3743 = vld [vmem:[#allocation14 + $0x1f20] sm:$0xff]
    %v3744 = vld [vmem:[#allocation14 + $0x1f28] sm:$0xff]
    %v3745 = vld [vmem:[#allocation14 + $0x1f30] sm:$0xff]
    %v3746 = vld [vmem:[#allocation14 + $0x1f38] sm:$0xff]
    %v3747 = vld [vmem:[#allocation14 + $0x1f40] sm:$0xff]
    %v3748 = vld [vmem:[#allocation14 + $0x1f48] sm:$0xff]
    %v3749 = vld [vmem:[#allocation14 + $0x1f50] sm:$0xff]
    %v3750 = vld [vmem:[#allocation14 + $0x1f58] sm:$0xff]
    %v3751 = vld [vmem:[#allocation14 + $0x1f60] sm:$0xff]
    %v3752 = vld [vmem:[#allocation14 + $0x1f68] sm:$0xff]
    %v3753 = vld [vmem:[#allocation14 + $0x1f70] sm:$0xff]
    %v3754 = vld [vmem:[#allocation14 + $0x1f78] sm:$0xff]
    %v3755 = vld [vmem:[#allocation14 + $0x1f80] sm:$0xff]
    %v3756 = vld [vmem:[#allocation14 + $0x1f88] sm:$0xff]
    %v3757 = vld [vmem:[#allocation14 + $0x1f90] sm:$0xff]
    %v3758 = vld [vmem:[#allocation14 + $0x1f98] sm:$0xff]
    %v3759 = vld [vmem:[#allocation14 + $0x1fa0] sm:$0xff]
    %v3760 = vld [vmem:[#allocation14 + $0x1fa8] sm:$0xff]
    %v3761 = vld [vmem:[#allocation14 + $0x1fb0] sm:$0xff]
    %v3762 = vld [vmem:[#allocation14 + $0x1fb8] sm:$0xff]
    %v3763 = vld [vmem:[#allocation14 + $0x1fc0] sm:$0xff]
    %v3764 = vld [vmem:[#allocation14 + $0x1fc8] sm:$0xff]
    %v3765 = vld [vmem:[#allocation14 + $0x1fd0] sm:$0xff]
    %v3766 = vld [vmem:[#allocation14 + $0x1fd8] sm:$0xff]
    %v3767 = vld [vmem:[#allocation14 + $0x1fe0] sm:$0xff]
    %v3768 = vld [vmem:[#allocation14 + $0x1fe8] sm:$0xff]
    %v3769 = vld [vmem:[#allocation14 + $0x1ff0] sm:$0xff]
    %v3770 = vld [vmem:[#allocation14 + $0x1ff8] sm:$0xff]
    %v3771 = vld [vmem:[#allocation14 + $0x2000] sm:$0xff]
    %v3772 = vld [vmem:[#allocation14 + $0x2008] sm:$0xff]
    %v3773 = vld [vmem:[#allocation14 + $0x2010] sm:$0xff]
    %v3774 = vld [vmem:[#allocation14 + $0x2018] sm:$0xff]
    %v3775 = vld [vmem:[#allocation14 + $0x2020] sm:$0xff]
    %v3776 = vld [vmem:[#allocation14 + $0x2028] sm:$0xff]
    %v3777 = vld [vmem:[#allocation14 + $0x2030] sm:$0xff]
    %v3778 = vld [vmem:[#allocation14 + $0x2038] sm:$0xff]
    %v3779 = vld [vmem:[#allocation14 + $0x2040] sm:$0xff]
    %v3780 = vld [vmem:[#allocation14 + $0x2048] sm:$0xff]
    %v3781 = vld [vmem:[#allocation14 + $0x2050] sm:$0xff]
    %v3782 = vld [vmem:[#allocation14 + $0x2058] sm:$0xff]
    %v3783 = vld [vmem:[#allocation14 + $0x2060] sm:$0xff]
    %v3784 = vld [vmem:[#allocation14 + $0x2068] sm:$0xff]
    %v3785 = vld [vmem:[#allocation14 + $0x2070] sm:$0xff]
    %v3786 = vld [vmem:[#allocation14 + $0x2078] sm:$0xff]
    %v3787 = vld [vmem:[#allocation14 + $0x2080] sm:$0xff]
    %v3788 = vld [vmem:[#allocation14 + $0x2088] sm:$0xff]
    %v3789 = vld [vmem:[#allocation14 + $0x2090] sm:$0xff]
    %v3790 = vld [vmem:[#allocation14 + $0x2098] sm:$0xff]
    %v3791 = vld [vmem:[#allocation14 + $0x20a0] sm:$0xff]
    %v3792 = vld [vmem:[#allocation14 + $0x20a8] sm:$0xff]
    %v3793 = vld [vmem:[#allocation14 + $0x20b0] sm:$0xff]
    %v3794 = vld [vmem:[#allocation14 + $0x20b8] sm:$0xff]
    %v3795 = vld [vmem:[#allocation14 + $0x20c0] sm:$0xff]
    %v3796 = vld [vmem:[#allocation14 + $0x20c8] sm:$0xff]
    %v3797 = vld [vmem:[#allocation14 + $0x20d0] sm:$0xff]
    %v3798 = vld [vmem:[#allocation14 + $0x20d8] sm:$0xff]
    %v3799 = vld [vmem:[#allocation14 + $0x20e0] sm:$0xff]
    %v3800 = vld [vmem:[#allocation14 + $0x20e8] sm:$0xff]
    %v3801 = vld [vmem:[#allocation14 + $0x20f0] sm:$0xff]
    %v3802 = vld [vmem:[#allocation14 + $0x20f8] sm:$0xff]
    %v3803 = vld [vmem:[#allocation14 + $0x2100] sm:$0xff]
    %v3804 = vld [vmem:[#allocation14 + $0x2108] sm:$0xff]
    %v3805 = vld [vmem:[#allocation14 + $0x2110] sm:$0xff]
    %v3806 = vld [vmem:[#allocation14 + $0x2118] sm:$0xff]
    %v3807 = vld [vmem:[#allocation14 + $0x2120] sm:$0xff]
    %v3808 = vld [vmem:[#allocation14 + $0x2128] sm:$0xff]
    %v3809 = vld [vmem:[#allocation14 + $0x2130] sm:$0xff]
    %v3810 = vld [vmem:[#allocation14 + $0x2138] sm:$0xff]
    %v3811 = vld [vmem:[#allocation14 + $0x2140] sm:$0xff]
    %v3812 = vld [vmem:[#allocation14 + $0x2148] sm:$0xff]
    %v3813 = vld [vmem:[#allocation14 + $0x2150] sm:$0xff]
    %v3814 = vld [vmem:[#allocation14 + $0x2158] sm:$0xff]
    %v3815 = vld [vmem:[#allocation14 + $0x2160] sm:$0xff]
    %v3816 = vld [vmem:[#allocation14 + $0x2168] sm:$0xff]
    %v3817 = vld [vmem:[#allocation14 + $0x2170] sm:$0xff]
    %v3818 = vld [vmem:[#allocation14 + $0x2178] sm:$0xff]
    %v3819 = vld [vmem:[#allocation14 + $0x2180] sm:$0xff]
    %v3820 = vld [vmem:[#allocation14 + $0x2188] sm:$0xff]
    %v3821 = vld [vmem:[#allocation14 + $0x2190] sm:$0xff]
    %v3822 = vld [vmem:[#allocation14 + $0x2198] sm:$0xff]
    %v3823 = vld [vmem:[#allocation14 + $0x21a0] sm:$0xff]
    %v3824 = vld [vmem:[#allocation14 + $0x21a8] sm:$0xff]
    %v3825 = vld [vmem:[#allocation14 + $0x21b0] sm:$0xff]
    %v3826 = vld [vmem:[#allocation14 + $0x21b8] sm:$0xff]
    %v3827 = vld [vmem:[#allocation14 + $0x21c0] sm:$0xff]
    %v3828 = vld [vmem:[#allocation14 + $0x21c8] sm:$0xff]
    %v3829 = vld [vmem:[#allocation14 + $0x21d0] sm:$0xff]
    %v3830 = vld [vmem:[#allocation14 + $0x21d8] sm:$0xff]
    %v3831 = vld [vmem:[#allocation14 + $0x21e0] sm:$0xff]
    %v3832 = vld [vmem:[#allocation14 + $0x21e8] sm:$0xff]
    %v3833 = vld [vmem:[#allocation14 + $0x21f0] sm:$0xff]
    %v3834 = vld [vmem:[#allocation14 + $0x21f8] sm:$0xff]
    %v3835 = vld [vmem:[#allocation14 + $0x2200] sm:$0xff]
    %v3836 = vld [vmem:[#allocation14 + $0x2208] sm:$0xff]
    %v3837 = vld [vmem:[#allocation14 + $0x2210] sm:$0xff]
    %v3838 = vld [vmem:[#allocation14 + $0x2218] sm:$0xff]
    %v3839 = vld [vmem:[#allocation14 + $0x2220] sm:$0xff]
    %v3840 = vld [vmem:[#allocation14 + $0x2228] sm:$0xff]
    %v3841 = vld [vmem:[#allocation14 + $0x2230] sm:$0xff]
    %v3842 = vld [vmem:[#allocation14 + $0x2238] sm:$0xff]
    %v3843 = vld [vmem:[#allocation14 + $0x2240] sm:$0xff]
    %v3844 = vld [vmem:[#allocation14 + $0x2248] sm:$0xff]
    %v3845 = vld [vmem:[#allocation14 + $0x2250] sm:$0xff]
    %v3846 = vld [vmem:[#allocation14 + $0x2258] sm:$0xff]
    %v3847 = vld [vmem:[#allocation14 + $0x2260] sm:$0xff]
    %v3848 = vld [vmem:[#allocation14 + $0x2268] sm:$0xff]
    %v3849 = vld [vmem:[#allocation14 + $0x2270] sm:$0xff]
    %v3850 = vld [vmem:[#allocation14 + $0x2278] sm:$0xff]
    %v3851 = vld [vmem:[#allocation14 + $0x2280] sm:$0xff]
    %v3852 = vld [vmem:[#allocation14 + $0x2288] sm:$0xff]
    %v3853 = vld [vmem:[#allocation14 + $0x2290] sm:$0xff]
    %v3854 = vld [vmem:[#allocation14 + $0x2298] sm:$0xff]
    %v3855 = vld [vmem:[#allocation14 + $0x22a0] sm:$0xff]
    %v3856 = vld [vmem:[#allocation14 + $0x22a8] sm:$0xff]
    %v3857 = vld [vmem:[#allocation14 + $0x22b0] sm:$0xff]
    %v3858 = vld [vmem:[#allocation14 + $0x22b8] sm:$0xff]
    %v3859 = vld [vmem:[#allocation14 + $0x22c0] sm:$0xff]
    %v3860 = vld [vmem:[#allocation14 + $0x22c8] sm:$0xff]
    %v3861 = vld [vmem:[#allocation14 + $0x22d0] sm:$0xff]
    %v3862 = vld [vmem:[#allocation14 + $0x22d8] sm:$0xff]
    %v3863 = vld [vmem:[#allocation14 + $0x22e0] sm:$0xff]
    %v3864 = vld [vmem:[#allocation14 + $0x22e8] sm:$0xff]
    %v3865 = vld [vmem:[#allocation14 + $0x22f0] sm:$0xff]
    %v3866 = vld [vmem:[#allocation14 + $0x22f8] sm:$0xff]
    %v3867 = vld [vmem:[#allocation14 + $0x2300] sm:$0xff]
    %v3868 = vld [vmem:[#allocation14 + $0x2308] sm:$0xff]
    %v3869 = vld [vmem:[#allocation14 + $0x2310] sm:$0xff]
    %v3870 = vld [vmem:[#allocation14 + $0x2318] sm:$0xff]
    %v3871 = vld [vmem:[#allocation14 + $0x2320] sm:$0xff]
    %v3872 = vld [vmem:[#allocation14 + $0x2328] sm:$0xff]
    %v3873 = vld [vmem:[#allocation14 + $0x2330] sm:$0xff]
    %v3874 = vld [vmem:[#allocation14 + $0x2338] sm:$0xff]
    %v3875 = vld [vmem:[#allocation14 + $0x2340] sm:$0xff]
    %v3876 = vld [vmem:[#allocation14 + $0x2348] sm:$0xff]
    %v3877 = vld [vmem:[#allocation14 + $0x2350] sm:$0xff]
    %v3878 = vld [vmem:[#allocation14 + $0x2358] sm:$0xff]
    %v3879 = vld [vmem:[#allocation14 + $0x2360] sm:$0xff]
    %v3880 = vld [vmem:[#allocation14 + $0x2368] sm:$0xff]
    %v3881 = vld [vmem:[#allocation14 + $0x2370] sm:$0xff]
    %v3882 = vld [vmem:[#allocation14 + $0x2378] sm:$0xff]
    %v3883 = vld [vmem:[#allocation14 + $0x2380] sm:$0xff]
    %v3884 = vld [vmem:[#allocation14 + $0x2388] sm:$0xff]
    %v3885 = vld [vmem:[#allocation14 + $0x2390] sm:$0xff]
    %v3886 = vld [vmem:[#allocation14 + $0x2398] sm:$0xff]
    %v3887 = vld [vmem:[#allocation14 + $0x23a0] sm:$0xff]
    %v3888 = vld [vmem:[#allocation14 + $0x23a8] sm:$0xff]
    %v3889 = vld [vmem:[#allocation14 + $0x23b0] sm:$0xff]
    %v3890 = vld [vmem:[#allocation14 + $0x23b8] sm:$0xff]
    %v3891 = vld [vmem:[#allocation14 + $0x23c0] sm:$0xff]
    %v3892 = vld [vmem:[#allocation14 + $0x23c8] sm:$0xff]
    %v3893 = vld [vmem:[#allocation14 + $0x23d0] sm:$0xff]
    %v3894 = vld [vmem:[#allocation14 + $0x23d8] sm:$0xff]
    %v3895 = vld [vmem:[#allocation14 + $0x23e0] sm:$0xff]
    %v3896 = vld [vmem:[#allocation14 + $0x23e8] sm:$0xff]
    %v3897 = vld [vmem:[#allocation14 + $0x23f0] sm:$0xff]
    %v3898 = vld [vmem:[#allocation14 + $0x23f8] sm:$0xff]
    %v3899 = vld [vmem:[#allocation14 + $0x2400] sm:$0xff]
    %v3900 = vld [vmem:[#allocation14 + $0x2408] sm:$0xff]
    %v3901 = vld [vmem:[#allocation14 + $0x2410] sm:$0xff]
    %v3902 = vld [vmem:[#allocation14 + $0x2418] sm:$0xff]
    %v3903 = vld [vmem:[#allocation14 + $0x2420] sm:$0xff]
    %v3904 = vld [vmem:[#allocation14 + $0x2428] sm:$0xff]
    %v3905 = vld [vmem:[#allocation14 + $0x2430] sm:$0xff]
    %v3906 = vld [vmem:[#allocation14 + $0x2438] sm:$0xff]
    %v3907 = vld [vmem:[#allocation14 + $0x2440] sm:$0xff]
    %v3908 = vld [vmem:[#allocation14 + $0x2448] sm:$0xff]
    %v3909 = vld [vmem:[#allocation14 + $0x2450] sm:$0xff]
    %v3910 = vld [vmem:[#allocation14 + $0x2458] sm:$0xff]
    %v3911 = vld [vmem:[#allocation14 + $0x2460] sm:$0xff]
    %v3912 = vld [vmem:[#allocation14 + $0x2468] sm:$0xff]
    %v3913 = vld [vmem:[#allocation14 + $0x2470] sm:$0xff]
    %v3914 = vld [vmem:[#allocation14 + $0x2478] sm:$0xff]
    %v3915 = vld [vmem:[#allocation14 + $0x2480] sm:$0xff]
    %v3916 = vld [vmem:[#allocation14 + $0x2488] sm:$0xff]
    %v3917 = vld [vmem:[#allocation14 + $0x2490] sm:$0xff]
    %v3918 = vld [vmem:[#allocation14 + $0x2498] sm:$0xff]
    %v3919 = vld [vmem:[#allocation14 + $0x24a0] sm:$0xff]
    %v3920 = vld [vmem:[#allocation14 + $0x24a8] sm:$0xff]
    %v3921 = vld [vmem:[#allocation14 + $0x24b0] sm:$0xff]
    %v3922 = vld [vmem:[#allocation14 + $0x24b8] sm:$0xff]
    %v3923 = vld [vmem:[#allocation14 + $0x24c0] sm:$0xff]
    %v3924 = vld [vmem:[#allocation14 + $0x24c8] sm:$0xff]
    %v3925 = vld [vmem:[#allocation14 + $0x24d0] sm:$0xff]
    %v3926 = vld [vmem:[#allocation14 + $0x24d8] sm:$0xff]
    %v3927 = vld [vmem:[#allocation14 + $0x24e0] sm:$0xff]
    %v3928 = vld [vmem:[#allocation14 + $0x24e8] sm:$0xff]
    %v3929 = vld [vmem:[#allocation14 + $0x24f0] sm:$0xff]
    %v3930 = vld [vmem:[#allocation14 + $0x24f8] sm:$0xff]
    %v3931 = vld [vmem:[#allocation14 + $0x2500] sm:$0xff]
    %v3932 = vld [vmem:[#allocation14 + $0x2508] sm:$0xff]
    %v3933 = vld [vmem:[#allocation14 + $0x2510] sm:$0xff]
    %v3934 = vld [vmem:[#allocation14 + $0x2518] sm:$0xff]
    %v3935 = vld [vmem:[#allocation14 + $0x2520] sm:$0xff]
    %v3936 = vld [vmem:[#allocation14 + $0x2528] sm:$0xff]
    %v3937 = vld [vmem:[#allocation14 + $0x2530] sm:$0xff]
    %v3938 = vld [vmem:[#allocation14 + $0x2538] sm:$0xff]
    %v3939 = vld [vmem:[#allocation14 + $0x2540] sm:$0xff]
    %v3940 = vld [vmem:[#allocation14 + $0x2548] sm:$0xff]
    %v3941 = vld [vmem:[#allocation14 + $0x2550] sm:$0xff]
    %v3942 = vld [vmem:[#allocation14 + $0x2558] sm:$0xff]
    %v3943 = vld [vmem:[#allocation14 + $0x2560] sm:$0xff]
    %v3944 = vld [vmem:[#allocation14 + $0x2568] sm:$0xff]
    %v3945 = vld [vmem:[#allocation14 + $0x2570] sm:$0xff]
    %v3946 = vld [vmem:[#allocation14 + $0x2578] sm:$0xff]
    %v3947 = vld [vmem:[#allocation14 + $0x2580] sm:$0xff]
    %v3948 = vld [vmem:[#allocation14 + $0x2588] sm:$0xff]
    %v3949 = vld [vmem:[#allocation14 + $0x2590] sm:$0xff]
    %v3950 = vld [vmem:[#allocation14 + $0x2598] sm:$0xff]
    %v3951 = vld [vmem:[#allocation14 + $0x25a0] sm:$0xff]
    %v3952 = vld [vmem:[#allocation14 + $0x25a8] sm:$0xff]
    %v3953 = vld [vmem:[#allocation14 + $0x25b0] sm:$0xff]
    %v3954 = vld [vmem:[#allocation14 + $0x25b8] sm:$0xff]
    %v3955 = vld [vmem:[#allocation14 + $0x25c0] sm:$0xff]
    %v3956 = vld [vmem:[#allocation14 + $0x25c8] sm:$0xff]
    %v3957 = vld [vmem:[#allocation14 + $0x25d0] sm:$0xff]
    %v3958 = vld [vmem:[#allocation14 + $0x25d8] sm:$0xff]
    %v3959 = vld [vmem:[#allocation14 + $0x25e0] sm:$0xff]
    %v3960 = vld [vmem:[#allocation14 + $0x25e8] sm:$0xff]
    %v3961 = vld [vmem:[#allocation14 + $0x25f0] sm:$0xff]
    %v3962 = vld [vmem:[#allocation14 + $0x25f8] sm:$0xff]
    %v3963 = vld [vmem:[#allocation14 + $0x2600] sm:$0xff]
    %v3964 = vld [vmem:[#allocation14 + $0x2608] sm:$0xff]
    %v3965 = vld [vmem:[#allocation14 + $0x2610] sm:$0xff]
    %v3966 = vld [vmem:[#allocation14 + $0x2618] sm:$0xff]
    %v3967 = vld [vmem:[#allocation14 + $0x2620] sm:$0xff]
    %v3968 = vld [vmem:[#allocation14 + $0x2628] sm:$0xff]
    %v3969 = vld [vmem:[#allocation14 + $0x2630] sm:$0xff]
    %v3970 = vld [vmem:[#allocation14 + $0x2638] sm:$0xff]
    %v3971 = vld [vmem:[#allocation14 + $0x2640] sm:$0xff]
    %v3972 = vld [vmem:[#allocation14 + $0x2648] sm:$0xff]
    %v3973 = vld [vmem:[#allocation14 + $0x2650] sm:$0xff]
    %v3974 = vld [vmem:[#allocation14 + $0x2658] sm:$0xff]
    %v3975 = vld [vmem:[#allocation14 + $0x2660] sm:$0xff]
    %v3976 = vld [vmem:[#allocation14 + $0x2668] sm:$0xff]
    %v3977 = vld [vmem:[#allocation14 + $0x2670] sm:$0xff]
    %v3978 = vld [vmem:[#allocation14 + $0x2678] sm:$0xff]
    %v3979 = vld [vmem:[#allocation14 + $0x2680] sm:$0xff]
    %v3980 = vld [vmem:[#allocation14 + $0x2688] sm:$0xff]
    %v3981 = vld [vmem:[#allocation14 + $0x2690] sm:$0xff]
    %v3982 = vld [vmem:[#allocation14 + $0x2698] sm:$0xff]
    %v3983 = vld [vmem:[#allocation14 + $0x26a0] sm:$0xff]
    %v3984 = vld [vmem:[#allocation14 + $0x26a8] sm:$0xff]
    %v3985 = vld [vmem:[#allocation14 + $0x26b0] sm:$0xff]
    %v3986 = vld [vmem:[#allocation14 + $0x26b8] sm:$0xff]
    %v3987 = vld [vmem:[#allocation14 + $0x26c0] sm:$0xff]
    %v3988 = vld [vmem:[#allocation14 + $0x26c8] sm:$0xff]
    %v3989 = vld [vmem:[#allocation14 + $0x26d0] sm:$0xff]
    %v3990 = vld [vmem:[#allocation14 + $0x26d8] sm:$0xff]
    %v3991 = vld [vmem:[#allocation14 + $0x26e0] sm:$0xff]
    %v3992 = vld [vmem:[#allocation14 + $0x26e8] sm:$0xff]
    %v3993 = vld [vmem:[#allocation14 + $0x26f0] sm:$0xff]
    %v3994 = vld [vmem:[#allocation14 + $0x26f8] sm:$0xff]
    %v3995 = vld [vmem:[#allocation14 + $0x2700] sm:$0xff]
    %v3996 = vld [vmem:[#allocation14 + $0x2708] sm:$0xff]
    %v3997 = vld [vmem:[#allocation14 + $0x2710] sm:$0xff]
    %v3998 = vld [vmem:[#allocation14 + $0x2718] sm:$0xff]
    %v3999 = vld [vmem:[#allocation14 + $0x2720] sm:$0xff]
    %v4000 = vld [vmem:[#allocation14 + $0x2728] sm:$0xff]
    %v4001 = vld [vmem:[#allocation14 + $0x2730] sm:$0xff]
    %v4002 = vld [vmem:[#allocation14 + $0x2738] sm:$0xff]
    %v4003 = vld [vmem:[#allocation14 + $0x2740] sm:$0xff]
    %v4004 = vld [vmem:[#allocation14 + $0x2748] sm:$0xff]
    %v4005 = vld [vmem:[#allocation14 + $0x2750] sm:$0xff]
    %v4006 = vld [vmem:[#allocation14 + $0x2758] sm:$0xff]
    %v4007 = vld [vmem:[#allocation14 + $0x2760] sm:$0xff]
    %v4008 = vld [vmem:[#allocation14 + $0x2768] sm:$0xff]
    %v4009 = vld [vmem:[#allocation14 + $0x2770] sm:$0xff]
    %v4010 = vld [vmem:[#allocation14 + $0x2778] sm:$0xff]
    %v4011 = vld [vmem:[#allocation14 + $0x2780] sm:$0xff]
    %v4012 = vld [vmem:[#allocation14 + $0x2788] sm:$0xff]
    %v4013 = vld [vmem:[#allocation14 + $0x2790] sm:$0xff]
    %v4014 = vld [vmem:[#allocation14 + $0x2798] sm:$0xff]
    %v4015 = vld [vmem:[#allocation14 + $0x27a0] sm:$0xff]
    %v4016 = vld [vmem:[#allocation14 + $0x27a8] sm:$0xff]
    %v4017 = vld [vmem:[#allocation14 + $0x27b0] sm:$0xff]
    %v4018 = vld [vmem:[#allocation14 + $0x27b8] sm:$0xff]
    %v4019 = vld [vmem:[#allocation14 + $0x27c0] sm:$0xff]
    %v4020 = vld [vmem:[#allocation14 + $0x27c8] sm:$0xff]
    %v4021 = vld [vmem:[#allocation14 + $0x27d0] sm:$0xff]
    %v4022 = vld [vmem:[#allocation14 + $0x27d8] sm:$0xff]
    %v4023 = vld [vmem:[#allocation14 + $0x27e0] sm:$0xff]
    %v4024 = vld [vmem:[#allocation14 + $0x27e8] sm:$0xff]
    %v4025 = vld [vmem:[#allocation14 + $0x27f0] sm:$0xff]
    %v4026 = vld [vmem:[#allocation14 + $0x27f8] sm:$0xff]
    %v4027 = vld [vmem:[#allocation14 + $0x2800] sm:$0xff]
    %v4028 = vld [vmem:[#allocation14 + $0x2808] sm:$0xff]
    %v4029 = vld [vmem:[#allocation14 + $0x2810] sm:$0xff]
    %v4030 = vld [vmem:[#allocation14 + $0x2818] sm:$0xff]
    %v4031 = vld [vmem:[#allocation14 + $0x2820] sm:$0xff]
    %v4032 = vld [vmem:[#allocation14 + $0x2828] sm:$0xff]
    %v4033 = vld [vmem:[#allocation14 + $0x2830] sm:$0xff]
    %v4034 = vld [vmem:[#allocation14 + $0x2838] sm:$0xff]
    %v4035 = vld [vmem:[#allocation14 + $0x2840] sm:$0xff]
    %v4036 = vld [vmem:[#allocation14 + $0x2848] sm:$0xff]
    %v4037 = vld [vmem:[#allocation14 + $0x2850] sm:$0xff]
    %v4038 = vld [vmem:[#allocation14 + $0x2858] sm:$0xff]
    %v4039 = vld [vmem:[#allocation14 + $0x2860] sm:$0xff]
    %v4040 = vld [vmem:[#allocation14 + $0x2868] sm:$0xff]
    %v4041 = vld [vmem:[#allocation14 + $0x2870] sm:$0xff]
    %v4042 = vld [vmem:[#allocation14 + $0x2878] sm:$0xff]
    %v4043 = vld [vmem:[#allocation14 + $0x2880] sm:$0xff]
    %v4044 = vld [vmem:[#allocation14 + $0x2888] sm:$0xff]
    %v4045 = vld [vmem:[#allocation14 + $0x2890] sm:$0xff]
    %v4046 = vld [vmem:[#allocation14 + $0x2898] sm:$0xff]
    %v4047 = vld [vmem:[#allocation14 + $0x28a0] sm:$0xff]
    %v4048 = vld [vmem:[#allocation14 + $0x28a8] sm:$0xff]
    %v4049 = vld [vmem:[#allocation14 + $0x28b0] sm:$0xff]
    %v4050 = vld [vmem:[#allocation14 + $0x28b8] sm:$0xff]
    %v4051 = vld [vmem:[#allocation14 + $0x28c0] sm:$0xff]
    %v4052 = vld [vmem:[#allocation14 + $0x28c8] sm:$0xff]
    %v4053 = vld [vmem:[#allocation14 + $0x28d0] sm:$0xff]
    %v4054 = vld [vmem:[#allocation14 + $0x28d8] sm:$0xff]
    %v4055 = vld [vmem:[#allocation14 + $0x28e0] sm:$0xff]
    %v4056 = vld [vmem:[#allocation14 + $0x28e8] sm:$0xff]
    %v4057 = vld [vmem:[#allocation14 + $0x28f0] sm:$0xff]
    %v4058 = vld [vmem:[#allocation14 + $0x28f8] sm:$0xff]
    %v4059 = vld [vmem:[#allocation14 + $0x2900] sm:$0xff]
    %v4060 = vld [vmem:[#allocation14 + $0x2908] sm:$0xff]
    %v4061 = vld [vmem:[#allocation14 + $0x2910] sm:$0xff]
    %v4062 = vld [vmem:[#allocation14 + $0x2918] sm:$0xff]
    %v4063 = vld [vmem:[#allocation14 + $0x2920] sm:$0xff]
    %v4064 = vld [vmem:[#allocation14 + $0x2928] sm:$0xff]
    %v4065 = vld [vmem:[#allocation14 + $0x2930] sm:$0xff]
    %v4066 = vld [vmem:[#allocation14 + $0x2938] sm:$0xff]
    %v4067 = vld [vmem:[#allocation14 + $0x2940] sm:$0xff]
    %v4068 = vld [vmem:[#allocation14 + $0x2948] sm:$0xff]
    %v4069 = vld [vmem:[#allocation14 + $0x2950] sm:$0xff]
    %v4070 = vld [vmem:[#allocation14 + $0x2958] sm:$0xff]
    %v4071 = vld [vmem:[#allocation14 + $0x2960] sm:$0xff]
    %v4072 = vld [vmem:[#allocation14 + $0x2968] sm:$0xff]
    %v4073 = vld [vmem:[#allocation14 + $0x2970] sm:$0xff]
    %v4074 = vld [vmem:[#allocation14 + $0x2978] sm:$0xff]
    %v4075 = vld [vmem:[#allocation14 + $0x2980] sm:$0xff]
    %v4076 = vld [vmem:[#allocation14 + $0x2988] sm:$0xff]
    %v4077 = vld [vmem:[#allocation14 + $0x2990] sm:$0xff]
    %v4078 = vld [vmem:[#allocation14 + $0x2998] sm:$0xff]
    %v4079 = vld [vmem:[#allocation14 + $0x29a0] sm:$0xff]
    %v4080 = vld [vmem:[#allocation14 + $0x29a8] sm:$0xff]
    %v4081 = vld [vmem:[#allocation14 + $0x29b0] sm:$0xff]
    %v4082 = vld [vmem:[#allocation14 + $0x29b8] sm:$0xff]
    %v4083 = vld [vmem:[#allocation14 + $0x29c0] sm:$0xff]
    %v4084 = vld [vmem:[#allocation14 + $0x29c8] sm:$0xff]
    %v4085 = vld [vmem:[#allocation14 + $0x29d0] sm:$0xff]
    %v4086 = vld [vmem:[#allocation14 + $0x29d8] sm:$0xff]
    %v4087 = vld [vmem:[#allocation14 + $0x29e0] sm:$0xff]
    %v4088 = vld [vmem:[#allocation14 + $0x29e8] sm:$0xff]
    %v4089 = vld [vmem:[#allocation14 + $0x29f0] sm:$0xff]
    %v4090 = vld [vmem:[#allocation14 + $0x29f8] sm:$0xff]
    %v4091 = vld [vmem:[#allocation14 + $0x2a00] sm:$0xff]
    %v4092 = vld [vmem:[#allocation14 + $0x2a08] sm:$0xff]
    %v4093 = vld [vmem:[#allocation14 + $0x2a10] sm:$0xff]
    %v4094 = vld [vmem:[#allocation14 + $0x2a18] sm:$0xff]
    %v4095 = vld [vmem:[#allocation14 + $0x2a20] sm:$0xff]
    %v4096 = vld [vmem:[#allocation14 + $0x2a28] sm:$0xff]
    %v4097 = vld [vmem:[#allocation14 + $0x2a30] sm:$0xff]
    %v4098 = vld [vmem:[#allocation14 + $0x2a38] sm:$0xff]
    %v4099 = vld [vmem:[#allocation14 + $0x2a40] sm:$0xff]
    %v4100 = vld [vmem:[#allocation14 + $0x2a48] sm:$0xff]
    %v4101 = vld [vmem:[#allocation14 + $0x2a50] sm:$0xff]
    %v4102 = vld [vmem:[#allocation14 + $0x2a58] sm:$0xff]
    %v4103 = vld [vmem:[#allocation14 + $0x2a60] sm:$0xff]
    %v4104 = vld [vmem:[#allocation14 + $0x2a68] sm:$0xff]
    %v4105 = vld [vmem:[#allocation14 + $0x2a70] sm:$0xff]
    %v4106 = vld [vmem:[#allocation14 + $0x2a78] sm:$0xff]
    %v4107 = vld [vmem:[#allocation14 + $0x2a80] sm:$0xff]
    %v4108 = vld [vmem:[#allocation14 + $0x2a88] sm:$0xff]
    %v4109 = vld [vmem:[#allocation14 + $0x2a90] sm:$0xff]
    %v4110 = vld [vmem:[#allocation14 + $0x2a98] sm:$0xff]
    %v4111 = vld [vmem:[#allocation14 + $0x2aa0] sm:$0xff]
    %v4112 = vld [vmem:[#allocation14 + $0x2aa8] sm:$0xff]
    %v4113 = vld [vmem:[#allocation14 + $0x2ab0] sm:$0xff]
    %v4114 = vld [vmem:[#allocation14 + $0x2ab8] sm:$0xff]
    %v4115 = vld [vmem:[#allocation14 + $0x2ac0] sm:$0xff]
    %v4116 = vld [vmem:[#allocation14 + $0x2ac8] sm:$0xff]
    %v4117 = vld [vmem:[#allocation14 + $0x2ad0] sm:$0xff]
    %v4118 = vld [vmem:[#allocation14 + $0x2ad8] sm:$0xff]
    %v4119 = vld [vmem:[#allocation14 + $0x2ae0] sm:$0xff]
    %v4120 = vld [vmem:[#allocation14 + $0x2ae8] sm:$0xff]
    %v4121 = vld [vmem:[#allocation14 + $0x2af0] sm:$0xff]
    %v4122 = vld [vmem:[#allocation14 + $0x2af8] sm:$0xff]
    %v4123 = vld [vmem:[#allocation14 + $0x2b00] sm:$0xff]
    %v4124 = vld [vmem:[#allocation14 + $0x2b08] sm:$0xff]
    %v4125 = vld [vmem:[#allocation14 + $0x2b10] sm:$0xff]
    %v4126 = vld [vmem:[#allocation14 + $0x2b18] sm:$0xff]
    %v4127 = vld [vmem:[#allocation14 + $0x2b20] sm:$0xff]
    %v4128 = vld [vmem:[#allocation14 + $0x2b28] sm:$0xff]
    %v4129 = vld [vmem:[#allocation14 + $0x2b30] sm:$0xff]
    %v4130 = vld [vmem:[#allocation14 + $0x2b38] sm:$0xff]
    %v4131 = vld [vmem:[#allocation14 + $0x2b40] sm:$0xff]
    %v4132 = vld [vmem:[#allocation14 + $0x2b48] sm:$0xff]
    %v4133 = vld [vmem:[#allocation14 + $0x2b50] sm:$0xff]
    %v4134 = vld [vmem:[#allocation14 + $0x2b58] sm:$0xff]
    %v4135 = vld [vmem:[#allocation14 + $0x2b60] sm:$0xff]
    %v4136 = vld [vmem:[#allocation14 + $0x2b68] sm:$0xff]
    %v4137 = vld [vmem:[#allocation14 + $0x2b70] sm:$0xff]
    %v4138 = vld [vmem:[#allocation14 + $0x2b78] sm:$0xff]
    %v4139 = vld [vmem:[#allocation14 + $0x2b80] sm:$0xff]
    %v4140 = vld [vmem:[#allocation14 + $0x2b88] sm:$0xff]
    %v4141 = vld [vmem:[#allocation14 + $0x2b90] sm:$0xff]
    %v4142 = vld [vmem:[#allocation14 + $0x2b98] sm:$0xff]
    %v4143 = vld [vmem:[#allocation14 + $0x2ba0] sm:$0xff]
    %v4144 = vld [vmem:[#allocation14 + $0x2ba8] sm:$0xff]
    %v4145 = vld [vmem:[#allocation14 + $0x2bb0] sm:$0xff]
    %v4146 = vld [vmem:[#allocation14 + $0x2bb8] sm:$0xff]
    %v4147 = vld [vmem:[#allocation14 + $0x2bc0] sm:$0xff]
    %v4148 = vld [vmem:[#allocation14 + $0x2bc8] sm:$0xff]
    %v4149 = vld [vmem:[#allocation14 + $0x2bd0] sm:$0xff]
    %v4150 = vld [vmem:[#allocation14 + $0x2bd8] sm:$0xff]
    %v4151 = vld [vmem:[#allocation14 + $0x2be0] sm:$0xff]
    %v4152 = vld [vmem:[#allocation14 + $0x2be8] sm:$0xff]
    %v4153 = vld [vmem:[#allocation14 + $0x2bf0] sm:$0xff]
    %v4154 = vld [vmem:[#allocation14 + $0x2bf8] sm:$0xff]
    %v4155 = vld [vmem:[#allocation14 + $0x2c00] sm:$0xff]
    %v4156 = vld [vmem:[#allocation14 + $0x2c08] sm:$0xff]
    %v4157 = vld [vmem:[#allocation14 + $0x2c10] sm:$0xff]
    %v4158 = vld [vmem:[#allocation14 + $0x2c18] sm:$0xff]
    %v4159 = vld [vmem:[#allocation14 + $0x2c20] sm:$0xff]
    %v4160 = vld [vmem:[#allocation14 + $0x2c28] sm:$0xff]
    %v4161 = vld [vmem:[#allocation14 + $0x2c30] sm:$0xff]
    %v4162 = vld [vmem:[#allocation14 + $0x2c38] sm:$0xff]
    %v4163 = vld [vmem:[#allocation14 + $0x2c40] sm:$0xff]
    %v4164 = vld [vmem:[#allocation14 + $0x2c48] sm:$0xff]
    %v4165 = vld [vmem:[#allocation14 + $0x2c50] sm:$0xff]
    %v4166 = vld [vmem:[#allocation14 + $0x2c58] sm:$0xff]
    %v4167 = vld [vmem:[#allocation14 + $0x2c60] sm:$0xff]
    %v4168 = vld [vmem:[#allocation14 + $0x2c68] sm:$0xff]
    %v4169 = vld [vmem:[#allocation14 + $0x2c70] sm:$0xff]
    %v4170 = vld [vmem:[#allocation14 + $0x2c78] sm:$0xff]
    %v4171 = vld [vmem:[#allocation14 + $0x2c80] sm:$0xff]
    %v4172 = vld [vmem:[#allocation14 + $0x2c88] sm:$0xff]
    %v4173 = vld [vmem:[#allocation14 + $0x2c90] sm:$0xff]
    %v4174 = vld [vmem:[#allocation14 + $0x2c98] sm:$0xff]
    %v4175 = vld [vmem:[#allocation14 + $0x2ca0] sm:$0xff]
    %v4176 = vld [vmem:[#allocation14 + $0x2ca8] sm:$0xff]
    %v4177 = vld [vmem:[#allocation14 + $0x2cb0] sm:$0xff]
    %v4178 = vld [vmem:[#allocation14 + $0x2cb8] sm:$0xff]
    %v4179 = vld [vmem:[#allocation14 + $0x2cc0] sm:$0xff]
    %v4180 = vld [vmem:[#allocation14 + $0x2cc8] sm:$0xff]
    %v4181 = vld [vmem:[#allocation14 + $0x2cd0] sm:$0xff]
    %v4182 = vld [vmem:[#allocation14 + $0x2cd8] sm:$0xff]
    %v4183 = vld [vmem:[#allocation14 + $0x2ce0] sm:$0xff]
    %v4184 = vld [vmem:[#allocation14 + $0x2ce8] sm:$0xff]
    %v4185 = vld [vmem:[#allocation14 + $0x2cf0] sm:$0xff]
    %v4186 = vld [vmem:[#allocation14 + $0x2cf8] sm:$0xff]
    %v4187 = vld [vmem:[#allocation14 + $0x2d00] sm:$0xff]
    %v4188 = vld [vmem:[#allocation14 + $0x2d08] sm:$0xff]
    %v4189 = vld [vmem:[#allocation14 + $0x2d10] sm:$0xff]
    %v4190 = vld [vmem:[#allocation14 + $0x2d18] sm:$0xff]
    %v4191 = vld [vmem:[#allocation14 + $0x2d20] sm:$0xff]
    %v4192 = vld [vmem:[#allocation14 + $0x2d28] sm:$0xff]
    %v4193 = vld [vmem:[#allocation14 + $0x2d30] sm:$0xff]
    %v4194 = vld [vmem:[#allocation14 + $0x2d38] sm:$0xff]
    %v4195 = vld [vmem:[#allocation14 + $0x2d40] sm:$0xff]
    %v4196 = vld [vmem:[#allocation14 + $0x2d48] sm:$0xff]
    %v4197 = vld [vmem:[#allocation14 + $0x2d50] sm:$0xff]
    %v4198 = vld [vmem:[#allocation14 + $0x2d58] sm:$0xff]
    %v4199 = vld [vmem:[#allocation14 + $0x2d60] sm:$0xff]
    %v4200 = vld [vmem:[#allocation14 + $0x2d68] sm:$0xff]
    %v4201 = vld [vmem:[#allocation14 + $0x2d70] sm:$0xff]
    %v4202 = vld [vmem:[#allocation14 + $0x2d78] sm:$0xff]
    %v4203 = vld [vmem:[#allocation14 + $0x2d80] sm:$0xff]
    %v4204 = vld [vmem:[#allocation14 + $0x2d88] sm:$0xff]
    %v4205 = vld [vmem:[#allocation14 + $0x2d90] sm:$0xff]
    %v4206 = vld [vmem:[#allocation14 + $0x2d98] sm:$0xff]
    %v4207 = vld [vmem:[#allocation14 + $0x2da0] sm:$0xff]
    %v4208 = vld [vmem:[#allocation14 + $0x2da8] sm:$0xff]
    %v4209 = vld [vmem:[#allocation14 + $0x2db0] sm:$0xff]
    %v4210 = vld [vmem:[#allocation14 + $0x2db8] sm:$0xff]
    %v4211 = vld [vmem:[#allocation14 + $0x2dc0] sm:$0xff]
    %v4212 = vld [vmem:[#allocation14 + $0x2dc8] sm:$0xff]
    %v4213 = vld [vmem:[#allocation14 + $0x2dd0] sm:$0xff]
    %v4214 = vld [vmem:[#allocation14 + $0x2dd8] sm:$0xff]
    %v4215 = vld [vmem:[#allocation14 + $0x2de0] sm:$0xff]
    %v4216 = vld [vmem:[#allocation14 + $0x2de8] sm:$0xff]
    %v4217 = vld [vmem:[#allocation14 + $0x2df0] sm:$0xff]
    %v4218 = vld [vmem:[#allocation14 + $0x2df8] sm:$0xff]
    %v4219 = vld [vmem:[#allocation14 + $0x2e00] sm:$0xff]
    %v4220 = vld [vmem:[#allocation14 + $0x2e08] sm:$0xff]
    %v4221 = vld [vmem:[#allocation14 + $0x2e10] sm:$0xff]
    %v4222 = vld [vmem:[#allocation14 + $0x2e18] sm:$0xff]
    %v4223 = vld [vmem:[#allocation14 + $0x2e20] sm:$0xff]
    %v4224 = vld [vmem:[#allocation14 + $0x2e28] sm:$0xff]
    %v4225 = vld [vmem:[#allocation14 + $0x2e30] sm:$0xff]
    %v4226 = vld [vmem:[#allocation14 + $0x2e38] sm:$0xff]
    %v4227 = vld [vmem:[#allocation14 + $0x2e40] sm:$0xff]
    %v4228 = vld [vmem:[#allocation14 + $0x2e48] sm:$0xff]
    %v4229 = vld [vmem:[#allocation14 + $0x2e50] sm:$0xff]
    %v4230 = vld [vmem:[#allocation14 + $0x2e58] sm:$0xff]
    %v4231 = vld [vmem:[#allocation14 + $0x2e60] sm:$0xff]
    %v4232 = vld [vmem:[#allocation14 + $0x2e68] sm:$0xff]
    %v4233 = vld [vmem:[#allocation14 + $0x2e70] sm:$0xff]
    %v4234 = vld [vmem:[#allocation14 + $0x2e78] sm:$0xff]
    %v4235 = vld [vmem:[#allocation14 + $0x2e80] sm:$0xff]
    %v4236 = vld [vmem:[#allocation14 + $0x2e88] sm:$0xff]
    %v4237 = vld [vmem:[#allocation14 + $0x2e90] sm:$0xff]
    %v4238 = vld [vmem:[#allocation14 + $0x2e98] sm:$0xff]
    %v4239 = vld [vmem:[#allocation14 + $0x2ea0] sm:$0xff]
    %v4240 = vld [vmem:[#allocation14 + $0x2ea8] sm:$0xff]
    %v4241 = vld [vmem:[#allocation14 + $0x2eb0] sm:$0xff]
    %v4242 = vld [vmem:[#allocation14 + $0x2eb8] sm:$0xff]
    %v4243 = vld [vmem:[#allocation14 + $0x2ec0] sm:$0xff]
    %v4244 = vld [vmem:[#allocation14 + $0x2ec8] sm:$0xff]
    %v4245 = vld [vmem:[#allocation14 + $0x2ed0] sm:$0xff]
    %v4246 = vld [vmem:[#allocation14 + $0x2ed8] sm:$0xff]
    %v4247 = vld [vmem:[#allocation14 + $0x2ee0] sm:$0xff]
    %v4248 = vld [vmem:[#allocation14 + $0x2ee8] sm:$0xff]
    %v4249 = vld [vmem:[#allocation14 + $0x2ef0] sm:$0xff]
    %v4250 = vld [vmem:[#allocation14 + $0x2ef8] sm:$0xff]
    %v4251 = vld [vmem:[#allocation14 + $0x2f00] sm:$0xff]
    %v4252 = vld [vmem:[#allocation14 + $0x2f08] sm:$0xff]
    %v4253 = vld [vmem:[#allocation14 + $0x2f10] sm:$0xff]
    %v4254 = vld [vmem:[#allocation14 + $0x2f18] sm:$0xff]
    %v4255 = vld [vmem:[#allocation14 + $0x2f20] sm:$0xff]
    %v4256 = vld [vmem:[#allocation14 + $0x2f28] sm:$0xff]
    %v4257 = vld [vmem:[#allocation14 + $0x2f30] sm:$0xff]
    %v4258 = vld [vmem:[#allocation14 + $0x2f38] sm:$0xff]
    %v4259 = vld [vmem:[#allocation14 + $0x2f40] sm:$0xff]
    %v4260 = vld [vmem:[#allocation14 + $0x2f48] sm:$0xff]
    %v4261 = vld [vmem:[#allocation14 + $0x2f50] sm:$0xff]
    %v4262 = vld [vmem:[#allocation14 + $0x2f58] sm:$0xff]
    %v4263 = vld [vmem:[#allocation14 + $0x2f60] sm:$0xff]
    %v4264 = vld [vmem:[#allocation14 + $0x2f68] sm:$0xff]
    %v4265 = vld [vmem:[#allocation14 + $0x2f70] sm:$0xff]
    %v4266 = vld [vmem:[#allocation14 + $0x2f78] sm:$0xff]
    %v4267 = vld [vmem:[#allocation14 + $0x2f80] sm:$0xff]
    %v4268 = vld [vmem:[#allocation14 + $0x2f88] sm:$0xff]
    %v4269 = vld [vmem:[#allocation14 + $0x2f90] sm:$0xff]
    %v4270 = vld [vmem:[#allocation14 + $0x2f98] sm:$0xff]
    %v4271 = vld [vmem:[#allocation14 + $0x2fa0] sm:$0xff]
    %v4272 = vld [vmem:[#allocation14 + $0x2fa8] sm:$0xff]
    %v4273 = vld [vmem:[#allocation14 + $0x2fb0] sm:$0xff]
    %v4274 = vld [vmem:[#allocation14 + $0x2fb8] sm:$0xff]
    %v4275 = vld [vmem:[#allocation14 + $0x2fc0] sm:$0xff]
    %v4276 = vld [vmem:[#allocation14 + $0x2fc8] sm:$0xff]
    %v4277 = vld [vmem:[#allocation14 + $0x2fd0] sm:$0xff]
    %v4278 = vld [vmem:[#allocation14 + $0x2fd8] sm:$0xff]
    %v4279 = vld [vmem:[#allocation14 + $0x2fe0] sm:$0xff]
    %v4280 = vld [vmem:[#allocation14 + $0x2fe8] sm:$0xff]
    %v4281 = vld [vmem:[#allocation14 + $0x2ff0] sm:$0xff]
    %v4282 = vld [vmem:[#allocation14 + $0x2ff8] sm:$0xff]
    %v4283 = vld [vmem:[#allocation16] sm:$0xff]
    %v4284 = vld [vmem:[#allocation16 + $0x8] sm:$0xff]
    %v4285 = vld [vmem:[#allocation16 + $0x10] sm:$0xff]
    %v4289 = vlaneseq
    %v4290 = vshrl.u32 %v4289, 7
    %v4291 = vsub.s32 0, %v4290
    %v4292 = vrot.slane %v4283, %v4291
    %v4293 = vlaneseq
    %v4294 = vshrl.u32 %v4293, 7
    %v4295 = vsub.s32 1, %v4294
    %v4296 = vrot.slane %v4283, %v4295
    %v4297 = vlaneseq
    %v4298 = vshrl.u32 %v4297, 7
    %v4299 = vsub.s32 2, %v4298
    %v4300 = vrot.slane %v4283, %v4299
    %v4301 = vlaneseq
    %v4302 = vshrl.u32 %v4301, 7
    %v4303 = vsub.s32 3, %v4302
    %v4304 = vrot.slane %v4283, %v4303
    %v4305 = vlaneseq
    %v4306 = vshrl.u32 %v4305, 7
    %v4307 = vsub.s32 4, %v4306
    %v4308 = vrot.slane %v4283, %v4307
    %v4309 = vlaneseq
    %v4310 = vshrl.u32 %v4309, 7
    %v4311 = vsub.s32 5, %v4310
    %v4312 = vrot.slane %v4283, %v4311
    %v4313 = vlaneseq
    %v4314 = vshrl.u32 %v4313, 7
    %v4315 = vsub.s32 6, %v4314
    %v4316 = vrot.slane %v4283, %v4315
    %v4317 = vlaneseq
    %v4318 = vshrl.u32 %v4317, 7
    %v4319 = vsub.s32 7, %v4318
    %v4320 = vrot.slane %v4283, %v4319
    %v4321 = vlaneseq
    %v4322 = vshrl.u32 %v4321, 7
    %v4323 = vsub.s32 0, %v4322
    %v4324 = vrot.slane %v4284, %v4323
    %v4325 = vlaneseq
    %v4326 = vshrl.u32 %v4325, 7
    %v4327 = vsub.s32 1, %v4326
    %v4328 = vrot.slane %v4284, %v4327
    %v4329 = vlaneseq
    %v4330 = vshrl.u32 %v4329, 7
    %v4331 = vsub.s32 2, %v4330
    %v4332 = vrot.slane %v4284, %v4331
    %v4333 = vlaneseq
    %v4334 = vshrl.u32 %v4333, 7
    %v4335 = vsub.s32 3, %v4334
    %v4336 = vrot.slane %v4284, %v4335
    %v4337 = vlaneseq
    %v4338 = vshrl.u32 %v4337, 7
    %v4339 = vsub.s32 4, %v4338
    %v4340 = vrot.slane %v4284, %v4339
    %v4341 = vlaneseq
    %v4342 = vshrl.u32 %v4341, 7
    %v4343 = vsub.s32 5, %v4342
    %v4344 = vrot.slane %v4284, %v4343
    %v4345 = vlaneseq
    %v4346 = vshrl.u32 %v4345, 7
    %v4347 = vsub.s32 6, %v4346
    %v4348 = vrot.slane %v4284, %v4347
    %v4349 = vlaneseq
    %v4350 = vshrl.u32 %v4349, 7
    %v4351 = vsub.s32 7, %v4350
    %v4352 = vrot.slane %v4284, %v4351
    %v4353 = vlaneseq
    %v4354 = vshrl.u32 %v4353, 7
    %v4355 = vsub.s32 0, %v4354
    %v4356 = vrot.slane %v4285, %v4355
    %v4357 = vlaneseq
    %v4358 = vshrl.u32 %v4357, 7
    %v4359 = vsub.s32 1, %v4358
    %v4360 = vrot.slane %v4285, %v4359
    %v4361 = vlaneseq
    %v4362 = vshrl.u32 %v4361, 7
    %v4363 = vsub.s32 2, %v4362
    %v4364 = vrot.slane %v4285, %v4363
    %v4365 = vlaneseq
    %v4366 = vshrl.u32 %v4365, 7
    %v4367 = vsub.s32 3, %v4366
    %v4368 = vrot.slane %v4285, %v4367
    %v4369 = vlaneseq
    %v4370 = vshrl.u32 %v4369, 7
    %v4371 = vsub.s32 4, %v4370
    %v4372 = vrot.slane %v4285, %v4371
    %v4373 = vlaneseq
    %v4374 = vshrl.u32 %v4373, 7
    %v4375 = vsub.s32 5, %v4374
    %v4376 = vrot.slane %v4285, %v4375
    %v4377 = vlaneseq
    %v4378 = vshrl.u32 %v4377, 7
    %v4379 = vsub.s32 6, %v4378
    %v4380 = vrot.slane %v4285, %v4379
    %v4381 = vlaneseq
    %v4382 = vshrl.u32 %v4381, 7
    %v4383 = vsub.s32 7, %v4382
    %v4384 = vrot.slane %v4285, %v4383
    %v5945 = vunpack.c.l.b16 %v2747
    %v5946 = vunpack.c.h.b16 %v2747
    %v5947 = vunpack.c.l.b16 %v2748
    %v5948 = vunpack.c.h.b16 %v2748
    %v5949 = vunpack.c.l.b16 %v2749
    %v5950 = vunpack.c.h.b16 %v2749
    %v5951 = vunpack.c.l.b16 %v2750
    %v5952 = vunpack.c.h.b16 %v2750
    %v5953 = vunpack.c.l.b16 %v2751
    %v5954 = vunpack.c.h.b16 %v2751
    %v5955 = vunpack.c.l.b16 %v2752
    %v5956 = vunpack.c.h.b16 %v2752
    %v5957 = vunpack.c.l.b16 %v2753
    %v5958 = vunpack.c.h.b16 %v2753
    %v5959 = vunpack.c.l.b16 %v2754
    %v5960 = vunpack.c.h.b16 %v2754
    %v5961 = vunpack.c.l.b16 %v2755
    %v5962 = vunpack.c.h.b16 %v2755
    %v5963 = vunpack.c.l.b16 %v2756
    %v5964 = vunpack.c.h.b16 %v2756
    %v5965 = vunpack.c.l.b16 %v2757
    %v5966 = vunpack.c.h.b16 %v2757
    %v5967 = vunpack.c.l.b16 %v2758
    %v5968 = vunpack.c.h.b16 %v2758
    %v5969 = vunpack.c.l.b16 %v2759
    %v5970 = vunpack.c.h.b16 %v2759
    %v5971 = vunpack.c.l.b16 %v2760
    %v5972 = vunpack.c.h.b16 %v2760
    %v5973 = vunpack.c.l.b16 %v2761
    %v5974 = vunpack.c.h.b16 %v2761
    %v5975 = vunpack.c.l.b16 %v2762
    %v5976 = vunpack.c.h.b16 %v2762
    %v5977 = vunpack.c.l.b16 %v2763
    %v5978 = vunpack.c.h.b16 %v2763
    %v5979 = vunpack.c.l.b16 %v2764
    %v5980 = vunpack.c.h.b16 %v2764
    %v5981 = vunpack.c.l.b16 %v2765
    %v5982 = vunpack.c.h.b16 %v2765
    %v5983 = vunpack.c.l.b16 %v2766
    %v5984 = vunpack.c.h.b16 %v2766
    %v5985 = vunpack.c.l.b16 %v2767
    %v5986 = vunpack.c.h.b16 %v2767
    %v5987 = vunpack.c.l.b16 %v2768
    %v5988 = vunpack.c.h.b16 %v2768
    %v5989 = vunpack.c.l.b16 %v2769
    %v5990 = vunpack.c.h.b16 %v2769
    %v5991 = vunpack.c.l.b16 %v2770
    %v5992 = vunpack.c.h.b16 %v2770
    %v5993 = vunpack.c.l.b16 %v2771
    %v5994 = vunpack.c.h.b16 %v2771
    %v5995 = vunpack.c.l.b16 %v2772
    %v5996 = vunpack.c.h.b16 %v2772
    %v5997 = vunpack.c.l.b16 %v2773
    %v5998 = vunpack.c.h.b16 %v2773
    %v5999 = vunpack.c.l.b16 %v2774
    %v6000 = vunpack.c.h.b16 %v2774
    %v6001 = vunpack.c.l.b16 %v2775
    %v6002 = vunpack.c.h.b16 %v2775
    %v6003 = vunpack.c.l.b16 %v2776
    %v6004 = vunpack.c.h.b16 %v2776
    %v6005 = vunpack.c.l.b16 %v2777
    %v6006 = vunpack.c.h.b16 %v2777
    %v6007 = vunpack.c.l.b16 %v2778
    %v6008 = vunpack.c.h.b16 %v2778
    %v6009 = vunpack.c.l.b16 %v2779
    %v6010 = vunpack.c.h.b16 %v2779
    %v6011 = vunpack.c.l.b16 %v2780
    %v6012 = vunpack.c.h.b16 %v2780
    %v6013 = vunpack.c.l.b16 %v2781
    %v6014 = vunpack.c.h.b16 %v2781
    %v6015 = vunpack.c.l.b16 %v2782
    %v6016 = vunpack.c.h.b16 %v2782
    %v6017 = vunpack.c.l.b16 %v2783
    %v6018 = vunpack.c.h.b16 %v2783
    %v6019 = vunpack.c.l.b16 %v2784
    %v6020 = vunpack.c.h.b16 %v2784
    %v6021 = vunpack.c.l.b16 %v2785
    %v6022 = vunpack.c.h.b16 %v2785
    %v6023 = vunpack.c.l.b16 %v2786
    %v6024 = vunpack.c.h.b16 %v2786
    %v6025 = vunpack.c.l.b16 %v2787
    %v6026 = vunpack.c.h.b16 %v2787
    %v6027 = vunpack.c.l.b16 %v2788
    %v6028 = vunpack.c.h.b16 %v2788
    %v6029 = vunpack.c.l.b16 %v2789
    %v6030 = vunpack.c.h.b16 %v2789
    %v6031 = vunpack.c.l.b16 %v2790
    %v6032 = vunpack.c.h.b16 %v2790
    %v6033 = vunpack.c.l.b16 %v2791
    %v6034 = vunpack.c.h.b16 %v2791
    %v6035 = vunpack.c.l.b16 %v2792
    %v6036 = vunpack.c.h.b16 %v2792
    %v6037 = vunpack.c.l.b16 %v2793
    %v6038 = vunpack.c.h.b16 %v2793
    %v6039 = vunpack.c.l.b16 %v2794
    %v6040 = vunpack.c.h.b16 %v2794
    %v6041 = vunpack.c.l.b16 %v2795
    %v6042 = vunpack.c.h.b16 %v2795
    %v6043 = vunpack.c.l.b16 %v2796
    %v6044 = vunpack.c.h.b16 %v2796
    %v6045 = vunpack.c.l.b16 %v2797
    %v6046 = vunpack.c.h.b16 %v2797
    %v6047 = vunpack.c.l.b16 %v2798
    %v6048 = vunpack.c.h.b16 %v2798
    %v6049 = vunpack.c.l.b16 %v2799
    %v6050 = vunpack.c.h.b16 %v2799
    %v6051 = vunpack.c.l.b16 %v2800
    %v6052 = vunpack.c.h.b16 %v2800
    %v6053 = vunpack.c.l.b16 %v2801
    %v6054 = vunpack.c.h.b16 %v2801
    %v6055 = vunpack.c.l.b16 %v2802
    %v6056 = vunpack.c.h.b16 %v2802
    %v6057 = vunpack.c.l.b16 %v2803
    %v6058 = vunpack.c.h.b16 %v2803
    %v6059 = vunpack.c.l.b16 %v2804
    %v6060 = vunpack.c.h.b16 %v2804
    %v6061 = vunpack.c.l.b16 %v2805
    %v6062 = vunpack.c.h.b16 %v2805
    %v6063 = vunpack.c.l.b16 %v2806
    %v6064 = vunpack.c.h.b16 %v2806
    %v6065 = vunpack.c.l.b16 %v2807
    %v6066 = vunpack.c.h.b16 %v2807
    %v6067 = vunpack.c.l.b16 %v2808
    %v6068 = vunpack.c.h.b16 %v2808
    %v6069 = vunpack.c.l.b16 %v2809
    %v6070 = vunpack.c.h.b16 %v2809
    %v6071 = vunpack.c.l.b16 %v2810
    %v6072 = vunpack.c.h.b16 %v2810
    %v6073 = vunpack.c.l.b16 %v2811
    %v6074 = vunpack.c.h.b16 %v2811
    %v6075 = vunpack.c.l.b16 %v2812
    %v6076 = vunpack.c.h.b16 %v2812
    %v6077 = vunpack.c.l.b16 %v2813
    %v6078 = vunpack.c.h.b16 %v2813
    %v6079 = vunpack.c.l.b16 %v2814
    %v6080 = vunpack.c.h.b16 %v2814
    %v6081 = vunpack.c.l.b16 %v2815
    %v6082 = vunpack.c.h.b16 %v2815
    %v6083 = vunpack.c.l.b16 %v2816
    %v6084 = vunpack.c.h.b16 %v2816
    %v6085 = vunpack.c.l.b16 %v2817
    %v6086 = vunpack.c.h.b16 %v2817
    %v6087 = vunpack.c.l.b16 %v2818
    %v6088 = vunpack.c.h.b16 %v2818
    %v6089 = vunpack.c.l.b16 %v2819
    %v6090 = vunpack.c.h.b16 %v2819
    %v6091 = vunpack.c.l.b16 %v2820
    %v6092 = vunpack.c.h.b16 %v2820
    %v6093 = vunpack.c.l.b16 %v2821
    %v6094 = vunpack.c.h.b16 %v2821
    %v6095 = vunpack.c.l.b16 %v2822
    %v6096 = vunpack.c.h.b16 %v2822
    %v6097 = vunpack.c.l.b16 %v2823
    %v6098 = vunpack.c.h.b16 %v2823
    %v6099 = vunpack.c.l.b16 %v2824
    %v6100 = vunpack.c.h.b16 %v2824
    %v6101 = vunpack.c.l.b16 %v2825
    %v6102 = vunpack.c.h.b16 %v2825
    %v6103 = vunpack.c.l.b16 %v2826
    %v6104 = vunpack.c.h.b16 %v2826
    %v6105 = vunpack.c.l.b16 %v2827
    %v6106 = vunpack.c.h.b16 %v2827
    %v6107 = vunpack.c.l.b16 %v2828
    %v6108 = vunpack.c.h.b16 %v2828
    %v6109 = vunpack.c.l.b16 %v2829
    %v6110 = vunpack.c.h.b16 %v2829
    %v6111 = vunpack.c.l.b16 %v2830
    %v6112 = vunpack.c.h.b16 %v2830
    %v6113 = vunpack.c.l.b16 %v2831
    %v6114 = vunpack.c.h.b16 %v2831
    %v6115 = vunpack.c.l.b16 %v2832
    %v6116 = vunpack.c.h.b16 %v2832
    %v6117 = vunpack.c.l.b16 %v2833
    %v6118 = vunpack.c.h.b16 %v2833
    %v6119 = vunpack.c.l.b16 %v2834
    %v6120 = vunpack.c.h.b16 %v2834
    %v6121 = vunpack.c.l.b16 %v2835
    %v6122 = vunpack.c.h.b16 %v2835
    %v6123 = vunpack.c.l.b16 %v2836
    %v6124 = vunpack.c.h.b16 %v2836
    %v6125 = vunpack.c.l.b16 %v2837
    %v6126 = vunpack.c.h.b16 %v2837
    %v6127 = vunpack.c.l.b16 %v2838
    %v6128 = vunpack.c.h.b16 %v2838
    %v6129 = vunpack.c.l.b16 %v2839
    %v6130 = vunpack.c.h.b16 %v2839
    %v6131 = vunpack.c.l.b16 %v2840
    %v6132 = vunpack.c.h.b16 %v2840
    %v6133 = vunpack.c.l.b16 %v2841
    %v6134 = vunpack.c.h.b16 %v2841
    %v6135 = vunpack.c.l.b16 %v2842
    %v6136 = vunpack.c.h.b16 %v2842
    %v6137 = vunpack.c.l.b16 %v2843
    %v6138 = vunpack.c.h.b16 %v2843
    %v6139 = vunpack.c.l.b16 %v2844
    %v6140 = vunpack.c.h.b16 %v2844
    %v6141 = vunpack.c.l.b16 %v2845
    %v6142 = vunpack.c.h.b16 %v2845
    %v6143 = vunpack.c.l.b16 %v2846
    %v6144 = vunpack.c.h.b16 %v2846
    %v6145 = vunpack.c.l.b16 %v2847
    %v6146 = vunpack.c.h.b16 %v2847
    %v6147 = vunpack.c.l.b16 %v2848
    %v6148 = vunpack.c.h.b16 %v2848
    %v6149 = vunpack.c.l.b16 %v2849
    %v6150 = vunpack.c.h.b16 %v2849
    %v6151 = vunpack.c.l.b16 %v2850
    %v6152 = vunpack.c.h.b16 %v2850
    %v6153 = vunpack.c.l.b16 %v2851
    %v6154 = vunpack.c.h.b16 %v2851
    %v6155 = vunpack.c.l.b16 %v2852
    %v6156 = vunpack.c.h.b16 %v2852
    %v6157 = vunpack.c.l.b16 %v2853
    %v6158 = vunpack.c.h.b16 %v2853
    %v6159 = vunpack.c.l.b16 %v2854
    %v6160 = vunpack.c.h.b16 %v2854
    %v6161 = vunpack.c.l.b16 %v2855
    %v6162 = vunpack.c.h.b16 %v2855
    %v6163 = vunpack.c.l.b16 %v2856
    %v6164 = vunpack.c.h.b16 %v2856
    %v6165 = vunpack.c.l.b16 %v2857
    %v6166 = vunpack.c.h.b16 %v2857
    %v6167 = vunpack.c.l.b16 %v2858
    %v6168 = vunpack.c.h.b16 %v2858
    %v6169 = vunpack.c.l.b16 %v2859
    %v6170 = vunpack.c.h.b16 %v2859
    %v6171 = vunpack.c.l.b16 %v2860
    %v6172 = vunpack.c.h.b16 %v2860
    %v6173 = vunpack.c.l.b16 %v2861
    %v6174 = vunpack.c.h.b16 %v2861
    %v6175 = vunpack.c.l.b16 %v2862
    %v6176 = vunpack.c.h.b16 %v2862
    %v6177 = vunpack.c.l.b16 %v2863
    %v6178 = vunpack.c.h.b16 %v2863
    %v6179 = vunpack.c.l.b16 %v2864
    %v6180 = vunpack.c.h.b16 %v2864
    %v6181 = vunpack.c.l.b16 %v2865
    %v6182 = vunpack.c.h.b16 %v2865
    %v6183 = vunpack.c.l.b16 %v2866
    %v6184 = vunpack.c.h.b16 %v2866
    %v6185 = vunpack.c.l.b16 %v2867
    %v6186 = vunpack.c.h.b16 %v2867
    %v6187 = vunpack.c.l.b16 %v2868
    %v6188 = vunpack.c.h.b16 %v2868
    %v6189 = vunpack.c.l.b16 %v2869
    %v6190 = vunpack.c.h.b16 %v2869
    %v6191 = vunpack.c.l.b16 %v2870
    %v6192 = vunpack.c.h.b16 %v2870
    %v6193 = vunpack.c.l.b16 %v2871
    %v6194 = vunpack.c.h.b16 %v2871
    %v6195 = vunpack.c.l.b16 %v2872
    %v6196 = vunpack.c.h.b16 %v2872
    %v6197 = vunpack.c.l.b16 %v2873
    %v6198 = vunpack.c.h.b16 %v2873
    %v6199 = vunpack.c.l.b16 %v2874
    %v6200 = vunpack.c.h.b16 %v2874
    %v6201 = vunpack.c.l.b16 %v2875
    %v6202 = vunpack.c.h.b16 %v2875
    %v6203 = vunpack.c.l.b16 %v2876
    %v6204 = vunpack.c.h.b16 %v2876
    %v6205 = vunpack.c.l.b16 %v2877
    %v6206 = vunpack.c.h.b16 %v2877
    %v6207 = vunpack.c.l.b16 %v2878
    %v6208 = vunpack.c.h.b16 %v2878
    %v6209 = vunpack.c.l.b16 %v2879
    %v6210 = vunpack.c.h.b16 %v2879
    %v6211 = vunpack.c.l.b16 %v2880
    %v6212 = vunpack.c.h.b16 %v2880
    %v6213 = vunpack.c.l.b16 %v2881
    %v6214 = vunpack.c.h.b16 %v2881
    %v6215 = vunpack.c.l.b16 %v2882
    %v6216 = vunpack.c.h.b16 %v2882
    %v6217 = vunpack.c.l.b16 %v2883
    %v6218 = vunpack.c.h.b16 %v2883
    %v6219 = vunpack.c.l.b16 %v2884
    %v6220 = vunpack.c.h.b16 %v2884
    %v6221 = vunpack.c.l.b16 %v2885
    %v6222 = vunpack.c.h.b16 %v2885
    %v6223 = vunpack.c.l.b16 %v2886
    %v6224 = vunpack.c.h.b16 %v2886
    %v6225 = vunpack.c.l.b16 %v2887
    %v6226 = vunpack.c.h.b16 %v2887
    %v6227 = vunpack.c.l.b16 %v2888
    %v6228 = vunpack.c.h.b16 %v2888
    %v6229 = vunpack.c.l.b16 %v2889
    %v6230 = vunpack.c.h.b16 %v2889
    %v6231 = vunpack.c.l.b16 %v2890
    %v6232 = vunpack.c.h.b16 %v2890
    %v6233 = vunpack.c.l.b16 %v2891
    %v6234 = vunpack.c.h.b16 %v2891
    %v6235 = vunpack.c.l.b16 %v2892
    %v6236 = vunpack.c.h.b16 %v2892
    %v6237 = vunpack.c.l.b16 %v2893
    %v6238 = vunpack.c.h.b16 %v2893
    %v6239 = vunpack.c.l.b16 %v2894
    %v6240 = vunpack.c.h.b16 %v2894
    %v6241 = vunpack.c.l.b16 %v2895
    %v6242 = vunpack.c.h.b16 %v2895
    %v6243 = vunpack.c.l.b16 %v2896
    %v6244 = vunpack.c.h.b16 %v2896
    %v6245 = vunpack.c.l.b16 %v2897
    %v6246 = vunpack.c.h.b16 %v2897
    %v6247 = vunpack.c.l.b16 %v2898
    %v6248 = vunpack.c.h.b16 %v2898
    %v6249 = vunpack.c.l.b16 %v2899
    %v6250 = vunpack.c.h.b16 %v2899
    %v6251 = vunpack.c.l.b16 %v2900
    %v6252 = vunpack.c.h.b16 %v2900
    %v6253 = vunpack.c.l.b16 %v2901
    %v6254 = vunpack.c.h.b16 %v2901
    %v6255 = vunpack.c.l.b16 %v2902
    %v6256 = vunpack.c.h.b16 %v2902
    %v6257 = vunpack.c.l.b16 %v2903
    %v6258 = vunpack.c.h.b16 %v2903
    %v6259 = vunpack.c.l.b16 %v2904
    %v6260 = vunpack.c.h.b16 %v2904
    %v6261 = vunpack.c.l.b16 %v2905
    %v6262 = vunpack.c.h.b16 %v2905
    %v6263 = vunpack.c.l.b16 %v2906
    %v6264 = vunpack.c.h.b16 %v2906
    %v6265 = vunpack.c.l.b16 %v2907
    %v6266 = vunpack.c.h.b16 %v2907
    %v6267 = vunpack.c.l.b16 %v2908
    %v6268 = vunpack.c.h.b16 %v2908
    %v6269 = vunpack.c.l.b16 %v2909
    %v6270 = vunpack.c.h.b16 %v2909
    %v6271 = vunpack.c.l.b16 %v2910
    %v6272 = vunpack.c.h.b16 %v2910
    %v6273 = vunpack.c.l.b16 %v2911
    %v6274 = vunpack.c.h.b16 %v2911
    %v6275 = vunpack.c.l.b16 %v2912
    %v6276 = vunpack.c.h.b16 %v2912
    %v6277 = vunpack.c.l.b16 %v2913
    %v6278 = vunpack.c.h.b16 %v2913
    %v6279 = vunpack.c.l.b16 %v2914
    %v6280 = vunpack.c.h.b16 %v2914
    %v6281 = vunpack.c.l.b16 %v2915
    %v6282 = vunpack.c.h.b16 %v2915
    %v6283 = vunpack.c.l.b16 %v2916
    %v6284 = vunpack.c.h.b16 %v2916
    %v6285 = vunpack.c.l.b16 %v2917
    %v6286 = vunpack.c.h.b16 %v2917
    %v6287 = vunpack.c.l.b16 %v2918
    %v6288 = vunpack.c.h.b16 %v2918
    %v6289 = vunpack.c.l.b16 %v2919
    %v6290 = vunpack.c.h.b16 %v2919
    %v6291 = vunpack.c.l.b16 %v2920
    %v6292 = vunpack.c.h.b16 %v2920
    %v6293 = vunpack.c.l.b16 %v2921
    %v6294 = vunpack.c.h.b16 %v2921
    %v6295 = vunpack.c.l.b16 %v2922
    %v6296 = vunpack.c.h.b16 %v2922
    %v6297 = vunpack.c.l.b16 %v2923
    %v6298 = vunpack.c.h.b16 %v2923
    %v6299 = vunpack.c.l.b16 %v2924
    %v6300 = vunpack.c.h.b16 %v2924
    %v6301 = vunpack.c.l.b16 %v2925
    %v6302 = vunpack.c.h.b16 %v2925
    %v6303 = vunpack.c.l.b16 %v2926
    %v6304 = vunpack.c.h.b16 %v2926
    %v6305 = vunpack.c.l.b16 %v2927
    %v6306 = vunpack.c.h.b16 %v2927
    %v6307 = vunpack.c.l.b16 %v2928
    %v6308 = vunpack.c.h.b16 %v2928
    %v6309 = vunpack.c.l.b16 %v2929
    %v6310 = vunpack.c.h.b16 %v2929
    %v6311 = vunpack.c.l.b16 %v2930
    %v6312 = vunpack.c.h.b16 %v2930
    %v6313 = vunpack.c.l.b16 %v2931
    %v6314 = vunpack.c.h.b16 %v2931
    %v6315 = vunpack.c.l.b16 %v2932
    %v6316 = vunpack.c.h.b16 %v2932
    %v6317 = vunpack.c.l.b16 %v2933
    %v6318 = vunpack.c.h.b16 %v2933
    %v6319 = vunpack.c.l.b16 %v2934
    %v6320 = vunpack.c.h.b16 %v2934
    %v6321 = vunpack.c.l.b16 %v2935
    %v6322 = vunpack.c.h.b16 %v2935
    %v6323 = vunpack.c.l.b16 %v2936
    %v6324 = vunpack.c.h.b16 %v2936
    %v6325 = vunpack.c.l.b16 %v2937
    %v6326 = vunpack.c.h.b16 %v2937
    %v6327 = vunpack.c.l.b16 %v2938
    %v6328 = vunpack.c.h.b16 %v2938
    %v6329 = vunpack.c.l.b16 %v2939
    %v6330 = vunpack.c.h.b16 %v2939
    %v6331 = vunpack.c.l.b16 %v2940
    %v6332 = vunpack.c.h.b16 %v2940
    %v6333 = vunpack.c.l.b16 %v2941
    %v6334 = vunpack.c.h.b16 %v2941
    %v6335 = vunpack.c.l.b16 %v2942
    %v6336 = vunpack.c.h.b16 %v2942
    %v6337 = vunpack.c.l.b16 %v2943
    %v6338 = vunpack.c.h.b16 %v2943
    %v6339 = vunpack.c.l.b16 %v2944
    %v6340 = vunpack.c.h.b16 %v2944
    %v6341 = vunpack.c.l.b16 %v2945
    %v6342 = vunpack.c.h.b16 %v2945
    %v6343 = vunpack.c.l.b16 %v2946
    %v6344 = vunpack.c.h.b16 %v2946
    %v6345 = vunpack.c.l.b16 %v2947
    %v6346 = vunpack.c.h.b16 %v2947
    %v6347 = vunpack.c.l.b16 %v2948
    %v6348 = vunpack.c.h.b16 %v2948
    %v6349 = vunpack.c.l.b16 %v2949
    %v6350 = vunpack.c.h.b16 %v2949
    %v6351 = vunpack.c.l.b16 %v2950
    %v6352 = vunpack.c.h.b16 %v2950
    %v6353 = vunpack.c.l.b16 %v2951
    %v6354 = vunpack.c.h.b16 %v2951
    %v6355 = vunpack.c.l.b16 %v2952
    %v6356 = vunpack.c.h.b16 %v2952
    %v6357 = vunpack.c.l.b16 %v2953
    %v6358 = vunpack.c.h.b16 %v2953
    %v6359 = vunpack.c.l.b16 %v2954
    %v6360 = vunpack.c.h.b16 %v2954
    %v6361 = vunpack.c.l.b16 %v2955
    %v6362 = vunpack.c.h.b16 %v2955
    %v6363 = vunpack.c.l.b16 %v2956
    %v6364 = vunpack.c.h.b16 %v2956
    %v6365 = vunpack.c.l.b16 %v2957
    %v6366 = vunpack.c.h.b16 %v2957
    %v6367 = vunpack.c.l.b16 %v2958
    %v6368 = vunpack.c.h.b16 %v2958
    %v6369 = vunpack.c.l.b16 %v2959
    %v6370 = vunpack.c.h.b16 %v2959
    %v6371 = vunpack.c.l.b16 %v2960
    %v6372 = vunpack.c.h.b16 %v2960
    %v6373 = vunpack.c.l.b16 %v2961
    %v6374 = vunpack.c.h.b16 %v2961
    %v6375 = vunpack.c.l.b16 %v2962
    %v6376 = vunpack.c.h.b16 %v2962
    %v6377 = vunpack.c.l.b16 %v2963
    %v6378 = vunpack.c.h.b16 %v2963
    %v6379 = vunpack.c.l.b16 %v2964
    %v6380 = vunpack.c.h.b16 %v2964
    %v6381 = vunpack.c.l.b16 %v2965
    %v6382 = vunpack.c.h.b16 %v2965
    %v6383 = vunpack.c.l.b16 %v2966
    %v6384 = vunpack.c.h.b16 %v2966
    %v6385 = vunpack.c.l.b16 %v2967
    %v6386 = vunpack.c.h.b16 %v2967
    %v6387 = vunpack.c.l.b16 %v2968
    %v6388 = vunpack.c.h.b16 %v2968
    %v6389 = vunpack.c.l.b16 %v2969
    %v6390 = vunpack.c.h.b16 %v2969
    %v6391 = vunpack.c.l.b16 %v2970
    %v6392 = vunpack.c.h.b16 %v2970
    %v6393 = vunpack.c.l.b16 %v2971
    %v6394 = vunpack.c.h.b16 %v2971
    %v6395 = vunpack.c.l.b16 %v2972
    %v6396 = vunpack.c.h.b16 %v2972
    %v6397 = vunpack.c.l.b16 %v2973
    %v6398 = vunpack.c.h.b16 %v2973
    %v6399 = vunpack.c.l.b16 %v2974
    %v6400 = vunpack.c.h.b16 %v2974
    %v6401 = vunpack.c.l.b16 %v2975
    %v6402 = vunpack.c.h.b16 %v2975
    %v6403 = vunpack.c.l.b16 %v2976
    %v6404 = vunpack.c.h.b16 %v2976
    %v6405 = vunpack.c.l.b16 %v2977
    %v6406 = vunpack.c.h.b16 %v2977
    %v6407 = vunpack.c.l.b16 %v2978
    %v6408 = vunpack.c.h.b16 %v2978
    %v6409 = vunpack.c.l.b16 %v2979
    %v6410 = vunpack.c.h.b16 %v2979
    %v6411 = vunpack.c.l.b16 %v2980
    %v6412 = vunpack.c.h.b16 %v2980
    %v6413 = vunpack.c.l.b16 %v2981
    %v6414 = vunpack.c.h.b16 %v2981
    %v6415 = vunpack.c.l.b16 %v2982
    %v6416 = vunpack.c.h.b16 %v2982
    %v6417 = vunpack.c.l.b16 %v2983
    %v6418 = vunpack.c.h.b16 %v2983
    %v6419 = vunpack.c.l.b16 %v2984
    %v6420 = vunpack.c.h.b16 %v2984
    %v6421 = vunpack.c.l.b16 %v2985
    %v6422 = vunpack.c.h.b16 %v2985
    %v6423 = vunpack.c.l.b16 %v2986
    %v6424 = vunpack.c.h.b16 %v2986
    %v6425 = vunpack.c.l.b16 %v2987
    %v6426 = vunpack.c.h.b16 %v2987
    %v6427 = vunpack.c.l.b16 %v2988
    %v6428 = vunpack.c.h.b16 %v2988
    %v6429 = vunpack.c.l.b16 %v2989
    %v6430 = vunpack.c.h.b16 %v2989
    %v6431 = vunpack.c.l.b16 %v2990
    %v6432 = vunpack.c.h.b16 %v2990
    %v6433 = vunpack.c.l.b16 %v2991
    %v6434 = vunpack.c.h.b16 %v2991
    %v6435 = vunpack.c.l.b16 %v2992
    %v6436 = vunpack.c.h.b16 %v2992
    %v6437 = vunpack.c.l.b16 %v2993
    %v6438 = vunpack.c.h.b16 %v2993
    %v6439 = vunpack.c.l.b16 %v2994
    %v6440 = vunpack.c.h.b16 %v2994
    %v6441 = vunpack.c.l.b16 %v2995
    %v6442 = vunpack.c.h.b16 %v2995
    %v6443 = vunpack.c.l.b16 %v2996
    %v6444 = vunpack.c.h.b16 %v2996
    %v6445 = vunpack.c.l.b16 %v2997
    %v6446 = vunpack.c.h.b16 %v2997
    %v6447 = vunpack.c.l.b16 %v2998
    %v6448 = vunpack.c.h.b16 %v2998
    %v6449 = vunpack.c.l.b16 %v2999
    %v6450 = vunpack.c.h.b16 %v2999
    %v6451 = vunpack.c.l.b16 %v3000
    %v6452 = vunpack.c.h.b16 %v3000
    %v6453 = vunpack.c.l.b16 %v3001
    %v6454 = vunpack.c.h.b16 %v3001
    %v6455 = vunpack.c.l.b16 %v3002
    %v6456 = vunpack.c.h.b16 %v3002
    %v6457 = vunpack.c.l.b16 %v3003
    %v6458 = vunpack.c.h.b16 %v3003
    %v6459 = vunpack.c.l.b16 %v3004
    %v6460 = vunpack.c.h.b16 %v3004
    %v6461 = vunpack.c.l.b16 %v3005
    %v6462 = vunpack.c.h.b16 %v3005
    %v6463 = vunpack.c.l.b16 %v3006
    %v6464 = vunpack.c.h.b16 %v3006
    %v6465 = vunpack.c.l.b16 %v3007
    %v6466 = vunpack.c.h.b16 %v3007
    %v6467 = vunpack.c.l.b16 %v3008
    %v6468 = vunpack.c.h.b16 %v3008
    %v6469 = vunpack.c.l.b16 %v3009
    %v6470 = vunpack.c.h.b16 %v3009
    %v6471 = vunpack.c.l.b16 %v3010
    %v6472 = vunpack.c.h.b16 %v3010
    %v6473 = vunpack.c.l.b16 %v3011
    %v6474 = vunpack.c.h.b16 %v3011
    %v6475 = vunpack.c.l.b16 %v3012
    %v6476 = vunpack.c.h.b16 %v3012
    %v6477 = vunpack.c.l.b16 %v3013
    %v6478 = vunpack.c.h.b16 %v3013
    %v6479 = vunpack.c.l.b16 %v3014
    %v6480 = vunpack.c.h.b16 %v3014
    %v6481 = vunpack.c.l.b16 %v3015
    %v6482 = vunpack.c.h.b16 %v3015
    %v6483 = vunpack.c.l.b16 %v3016
    %v6484 = vunpack.c.h.b16 %v3016
    %v6485 = vunpack.c.l.b16 %v3017
    %v6486 = vunpack.c.h.b16 %v3017
    %v6487 = vunpack.c.l.b16 %v3018
    %v6488 = vunpack.c.h.b16 %v3018
    %v6489 = vunpack.c.l.b16 %v3019
    %v6490 = vunpack.c.h.b16 %v3019
    %v6491 = vunpack.c.l.b16 %v3020
    %v6492 = vunpack.c.h.b16 %v3020
    %v6493 = vunpack.c.l.b16 %v3021
    %v6494 = vunpack.c.h.b16 %v3021
    %v6495 = vunpack.c.l.b16 %v3022
    %v6496 = vunpack.c.h.b16 %v3022
    %v6497 = vunpack.c.l.b16 %v3023
    %v6498 = vunpack.c.h.b16 %v3023
    %v6499 = vunpack.c.l.b16 %v3024
    %v6500 = vunpack.c.h.b16 %v3024
    %v6501 = vunpack.c.l.b16 %v3025
    %v6502 = vunpack.c.h.b16 %v3025
    %v6503 = vunpack.c.l.b16 %v3026
    %v6504 = vunpack.c.h.b16 %v3026
    %v6505 = vunpack.c.l.b16 %v3027
    %v6506 = vunpack.c.h.b16 %v3027
    %v6507 = vunpack.c.l.b16 %v3028
    %v6508 = vunpack.c.h.b16 %v3028
    %v6509 = vunpack.c.l.b16 %v3029
    %v6510 = vunpack.c.h.b16 %v3029
    %v6511 = vunpack.c.l.b16 %v3030
    %v6512 = vunpack.c.h.b16 %v3030
    %v6513 = vunpack.c.l.b16 %v3031
    %v6514 = vunpack.c.h.b16 %v3031
    %v6515 = vunpack.c.l.b16 %v3032
    %v6516 = vunpack.c.h.b16 %v3032
    %v6517 = vunpack.c.l.b16 %v3033
    %v6518 = vunpack.c.h.b16 %v3033
    %v6519 = vunpack.c.l.b16 %v3034
    %v6520 = vunpack.c.h.b16 %v3034
    %v6521 = vunpack.c.l.b16 %v3035
    %v6522 = vunpack.c.h.b16 %v3035
    %v6523 = vunpack.c.l.b16 %v3036
    %v6524 = vunpack.c.h.b16 %v3036
    %v6525 = vunpack.c.l.b16 %v3037
    %v6526 = vunpack.c.h.b16 %v3037
    %v6527 = vunpack.c.l.b16 %v3038
    %v6528 = vunpack.c.h.b16 %v3038
    %v6529 = vunpack.c.l.b16 %v3039
    %v6530 = vunpack.c.h.b16 %v3039
    %v6531 = vunpack.c.l.b16 %v3040
    %v6532 = vunpack.c.h.b16 %v3040
    %v6533 = vunpack.c.l.b16 %v3041
    %v6534 = vunpack.c.h.b16 %v3041
    %v6535 = vunpack.c.l.b16 %v3042
    %v6536 = vunpack.c.h.b16 %v3042
    %v6537 = vunpack.c.l.b16 %v3043
    %v6538 = vunpack.c.h.b16 %v3043
    %v6539 = vunpack.c.l.b16 %v3044
    %v6540 = vunpack.c.h.b16 %v3044
    %v6541 = vunpack.c.l.b16 %v3045
    %v6542 = vunpack.c.h.b16 %v3045
    %v6543 = vunpack.c.l.b16 %v3046
    %v6544 = vunpack.c.h.b16 %v3046
    %v6545 = vunpack.c.l.b16 %v3047
    %v6546 = vunpack.c.h.b16 %v3047
    %v6547 = vunpack.c.l.b16 %v3048
    %v6548 = vunpack.c.h.b16 %v3048
    %v6549 = vunpack.c.l.b16 %v3049
    %v6550 = vunpack.c.h.b16 %v3049
    %v6551 = vunpack.c.l.b16 %v3050
    %v6552 = vunpack.c.h.b16 %v3050
    %v6553 = vunpack.c.l.b16 %v3051
    %v6554 = vunpack.c.h.b16 %v3051
    %v6555 = vunpack.c.l.b16 %v3052
    %v6556 = vunpack.c.h.b16 %v3052
    %v6557 = vunpack.c.l.b16 %v3053
    %v6558 = vunpack.c.h.b16 %v3053
    %v6559 = vunpack.c.l.b16 %v3054
    %v6560 = vunpack.c.h.b16 %v3054
    %v6561 = vunpack.c.l.b16 %v3055
    %v6562 = vunpack.c.h.b16 %v3055
    %v6563 = vunpack.c.l.b16 %v3056
    %v6564 = vunpack.c.h.b16 %v3056
    %v6565 = vunpack.c.l.b16 %v3057
    %v6566 = vunpack.c.h.b16 %v3057
    %v6567 = vunpack.c.l.b16 %v3058
    %v6568 = vunpack.c.h.b16 %v3058
    %v6569 = vunpack.c.l.b16 %v3059
    %v6570 = vunpack.c.h.b16 %v3059
    %v6571 = vunpack.c.l.b16 %v3060
    %v6572 = vunpack.c.h.b16 %v3060
    %v6573 = vunpack.c.l.b16 %v3061
    %v6574 = vunpack.c.h.b16 %v3061
    %v6575 = vunpack.c.l.b16 %v3062
    %v6576 = vunpack.c.h.b16 %v3062
    %v6577 = vunpack.c.l.b16 %v3063
    %v6578 = vunpack.c.h.b16 %v3063
    %v6579 = vunpack.c.l.b16 %v3064
    %v6580 = vunpack.c.h.b16 %v3064
    %v6581 = vunpack.c.l.b16 %v3065
    %v6582 = vunpack.c.h.b16 %v3065
    %v6583 = vunpack.c.l.b16 %v3066
    %v6584 = vunpack.c.h.b16 %v3066
    %v6585 = vunpack.c.l.b16 %v3067
    %v6586 = vunpack.c.h.b16 %v3067
    %v6587 = vunpack.c.l.b16 %v3068
    %v6588 = vunpack.c.h.b16 %v3068
    %v6589 = vunpack.c.l.b16 %v3069
    %v6590 = vunpack.c.h.b16 %v3069
    %v6591 = vunpack.c.l.b16 %v3070
    %v6592 = vunpack.c.h.b16 %v3070
    %v6593 = vunpack.c.l.b16 %v3071
    %v6594 = vunpack.c.h.b16 %v3071
    %v6595 = vunpack.c.l.b16 %v3072
    %v6596 = vunpack.c.h.b16 %v3072
    %v6597 = vunpack.c.l.b16 %v3073
    %v6598 = vunpack.c.h.b16 %v3073
    %v6599 = vunpack.c.l.b16 %v3074
    %v6600 = vunpack.c.h.b16 %v3074
    %v6601 = vunpack.c.l.b16 %v3075
    %v6602 = vunpack.c.h.b16 %v3075
    %v6603 = vunpack.c.l.b16 %v3076
    %v6604 = vunpack.c.h.b16 %v3076
    %v6605 = vunpack.c.l.b16 %v3077
    %v6606 = vunpack.c.h.b16 %v3077
    %v6607 = vunpack.c.l.b16 %v3078
    %v6608 = vunpack.c.h.b16 %v3078
    %v6609 = vunpack.c.l.b16 %v3079
    %v6610 = vunpack.c.h.b16 %v3079
    %v6611 = vunpack.c.l.b16 %v3080
    %v6612 = vunpack.c.h.b16 %v3080
    %v6613 = vunpack.c.l.b16 %v3081
    %v6614 = vunpack.c.h.b16 %v3081
    %v6615 = vunpack.c.l.b16 %v3082
    %v6616 = vunpack.c.h.b16 %v3082
    %v6617 = vunpack.c.l.b16 %v3083
    %v6618 = vunpack.c.h.b16 %v3083
    %v6619 = vunpack.c.l.b16 %v3084
    %v6620 = vunpack.c.h.b16 %v3084
    %v6621 = vunpack.c.l.b16 %v3085
    %v6622 = vunpack.c.h.b16 %v3085
    %v6623 = vunpack.c.l.b16 %v3086
    %v6624 = vunpack.c.h.b16 %v3086
    %v6625 = vunpack.c.l.b16 %v3087
    %v6626 = vunpack.c.h.b16 %v3087
    %v6627 = vunpack.c.l.b16 %v3088
    %v6628 = vunpack.c.h.b16 %v3088
    %v6629 = vunpack.c.l.b16 %v3089
    %v6630 = vunpack.c.h.b16 %v3089
    %v6631 = vunpack.c.l.b16 %v3090
    %v6632 = vunpack.c.h.b16 %v3090
    %v6633 = vunpack.c.l.b16 %v3091
    %v6634 = vunpack.c.h.b16 %v3091
    %v6635 = vunpack.c.l.b16 %v3092
    %v6636 = vunpack.c.h.b16 %v3092
    %v6637 = vunpack.c.l.b16 %v3093
    %v6638 = vunpack.c.h.b16 %v3093
    %v6639 = vunpack.c.l.b16 %v3094
    %v6640 = vunpack.c.h.b16 %v3094
    %v6641 = vunpack.c.l.b16 %v3095
    %v6642 = vunpack.c.h.b16 %v3095
    %v6643 = vunpack.c.l.b16 %v3096
    %v6644 = vunpack.c.h.b16 %v3096
    %v6645 = vunpack.c.l.b16 %v3097
    %v6646 = vunpack.c.h.b16 %v3097
    %v6647 = vunpack.c.l.b16 %v3098
    %v6648 = vunpack.c.h.b16 %v3098
    %v6649 = vunpack.c.l.b16 %v3099
    %v6650 = vunpack.c.h.b16 %v3099
    %v6651 = vunpack.c.l.b16 %v3100
    %v6652 = vunpack.c.h.b16 %v3100
    %v6653 = vunpack.c.l.b16 %v3101
    %v6654 = vunpack.c.h.b16 %v3101
    %v6655 = vunpack.c.l.b16 %v3102
    %v6656 = vunpack.c.h.b16 %v3102
    %v6657 = vunpack.c.l.b16 %v3103
    %v6658 = vunpack.c.h.b16 %v3103
    %v6659 = vunpack.c.l.b16 %v3104
    %v6660 = vunpack.c.h.b16 %v3104
    %v6661 = vunpack.c.l.b16 %v3105
    %v6662 = vunpack.c.h.b16 %v3105
    %v6663 = vunpack.c.l.b16 %v3106
    %v6664 = vunpack.c.h.b16 %v3106
    %v6665 = vunpack.c.l.b16 %v3107
    %v6666 = vunpack.c.h.b16 %v3107
    %v6667 = vunpack.c.l.b16 %v3108
    %v6668 = vunpack.c.h.b16 %v3108
    %v6669 = vunpack.c.l.b16 %v3109
    %v6670 = vunpack.c.h.b16 %v3109
    %v6671 = vunpack.c.l.b16 %v3110
    %v6672 = vunpack.c.h.b16 %v3110
    %v6673 = vunpack.c.l.b16 %v3111
    %v6674 = vunpack.c.h.b16 %v3111
    %v6675 = vunpack.c.l.b16 %v3112
    %v6676 = vunpack.c.h.b16 %v3112
    %v6677 = vunpack.c.l.b16 %v3113
    %v6678 = vunpack.c.h.b16 %v3113
    %v6679 = vunpack.c.l.b16 %v3114
    %v6680 = vunpack.c.h.b16 %v3114
    %v6681 = vunpack.c.l.b16 %v3115
    %v6682 = vunpack.c.h.b16 %v3115
    %v6683 = vunpack.c.l.b16 %v3116
    %v6684 = vunpack.c.h.b16 %v3116
    %v6685 = vunpack.c.l.b16 %v3117
    %v6686 = vunpack.c.h.b16 %v3117
    %v6687 = vunpack.c.l.b16 %v3118
    %v6688 = vunpack.c.h.b16 %v3118
    %v6689 = vunpack.c.l.b16 %v3119
    %v6690 = vunpack.c.h.b16 %v3119
    %v6691 = vunpack.c.l.b16 %v3120
    %v6692 = vunpack.c.h.b16 %v3120
    %v6693 = vunpack.c.l.b16 %v3121
    %v6694 = vunpack.c.h.b16 %v3121
    %v6695 = vunpack.c.l.b16 %v3122
    %v6696 = vunpack.c.h.b16 %v3122
    %v6697 = vunpack.c.l.b16 %v3123
    %v6698 = vunpack.c.h.b16 %v3123
    %v6699 = vunpack.c.l.b16 %v3124
    %v6700 = vunpack.c.h.b16 %v3124
    %v6701 = vunpack.c.l.b16 %v3125
    %v6702 = vunpack.c.h.b16 %v3125
    %v6703 = vunpack.c.l.b16 %v3126
    %v6704 = vunpack.c.h.b16 %v3126
    %v6705 = vunpack.c.l.b16 %v3127
    %v6706 = vunpack.c.h.b16 %v3127
    %v6707 = vunpack.c.l.b16 %v3128
    %v6708 = vunpack.c.h.b16 %v3128
    %v6709 = vunpack.c.l.b16 %v3129
    %v6710 = vunpack.c.h.b16 %v3129
    %v6711 = vunpack.c.l.b16 %v3130
    %v6712 = vunpack.c.h.b16 %v3130
    %v6713 = vunpack.c.l.b16 %v3131
    %v6714 = vunpack.c.h.b16 %v3131
    %v6715 = vunpack.c.l.b16 %v3132
    %v6716 = vunpack.c.h.b16 %v3132
    %v6717 = vunpack.c.l.b16 %v3133
    %v6718 = vunpack.c.h.b16 %v3133
    %v6719 = vunpack.c.l.b16 %v3134
    %v6720 = vunpack.c.h.b16 %v3134
    %v6721 = vunpack.c.l.b16 %v3135
    %v6722 = vunpack.c.h.b16 %v3135
    %v6723 = vunpack.c.l.b16 %v3136
    %v6724 = vunpack.c.h.b16 %v3136
    %v6725 = vunpack.c.l.b16 %v3137
    %v6726 = vunpack.c.h.b16 %v3137
    %v6727 = vunpack.c.l.b16 %v3138
    %v6728 = vunpack.c.h.b16 %v3138
    %v6729 = vunpack.c.l.b16 %v3139
    %v6730 = vunpack.c.h.b16 %v3139
    %v6731 = vunpack.c.l.b16 %v3140
    %v6732 = vunpack.c.h.b16 %v3140
    %v6733 = vunpack.c.l.b16 %v3141
    %v6734 = vunpack.c.h.b16 %v3141
    %v6735 = vunpack.c.l.b16 %v3142
    %v6736 = vunpack.c.h.b16 %v3142
    %v6737 = vunpack.c.l.b16 %v3143
    %v6738 = vunpack.c.h.b16 %v3143
    %v6739 = vunpack.c.l.b16 %v3144
    %v6740 = vunpack.c.h.b16 %v3144
    %v6741 = vunpack.c.l.b16 %v3145
    %v6742 = vunpack.c.h.b16 %v3145
    %v6743 = vunpack.c.l.b16 %v3146
    %v6744 = vunpack.c.h.b16 %v3146
    %v6745 = vunpack.c.l.b16 %v3147
    %v6746 = vunpack.c.h.b16 %v3147
    %v6747 = vunpack.c.l.b16 %v3148
    %v6748 = vunpack.c.h.b16 %v3148
    %v6749 = vunpack.c.l.b16 %v3149
    %v6750 = vunpack.c.h.b16 %v3149
    %v6751 = vunpack.c.l.b16 %v3150
    %v6752 = vunpack.c.h.b16 %v3150
    %v6753 = vunpack.c.l.b16 %v3151
    %v6754 = vunpack.c.h.b16 %v3151
    %v6755 = vunpack.c.l.b16 %v3152
    %v6756 = vunpack.c.h.b16 %v3152
    %v6757 = vunpack.c.l.b16 %v3153
    %v6758 = vunpack.c.h.b16 %v3153
    %v6759 = vunpack.c.l.b16 %v3154
    %v6760 = vunpack.c.h.b16 %v3154
    %v6761 = vunpack.c.l.b16 %v3155
    %v6762 = vunpack.c.h.b16 %v3155
    %v6763 = vunpack.c.l.b16 %v3156
    %v6764 = vunpack.c.h.b16 %v3156
    %v6765 = vunpack.c.l.b16 %v3157
    %v6766 = vunpack.c.h.b16 %v3157
    %v6767 = vunpack.c.l.b16 %v3158
    %v6768 = vunpack.c.h.b16 %v3158
    %v6769 = vunpack.c.l.b16 %v3159
    %v6770 = vunpack.c.h.b16 %v3159
    %v6771 = vunpack.c.l.b16 %v3160
    %v6772 = vunpack.c.h.b16 %v3160
    %v6773 = vunpack.c.l.b16 %v3161
    %v6774 = vunpack.c.h.b16 %v3161
    %v6775 = vunpack.c.l.b16 %v3162
    %v6776 = vunpack.c.h.b16 %v3162
    %v6777 = vunpack.c.l.b16 %v3163
    %v6778 = vunpack.c.h.b16 %v3163
    %v6779 = vunpack.c.l.b16 %v3164
    %v6780 = vunpack.c.h.b16 %v3164
    %v6781 = vunpack.c.l.b16 %v3165
    %v6782 = vunpack.c.h.b16 %v3165
    %v6783 = vunpack.c.l.b16 %v3166
    %v6784 = vunpack.c.h.b16 %v3166
    %v6785 = vunpack.c.l.b16 %v3167
    %v6786 = vunpack.c.h.b16 %v3167
    %v6787 = vunpack.c.l.b16 %v3168
    %v6788 = vunpack.c.h.b16 %v3168
    %v6789 = vunpack.c.l.b16 %v3169
    %v6790 = vunpack.c.h.b16 %v3169
    %v6791 = vunpack.c.l.b16 %v3170
    %v6792 = vunpack.c.h.b16 %v3170
    %v6793 = vunpack.c.l.b16 %v3171
    %v6794 = vunpack.c.h.b16 %v3171
    %v6795 = vunpack.c.l.b16 %v3172
    %v6796 = vunpack.c.h.b16 %v3172
    %v6797 = vunpack.c.l.b16 %v3173
    %v6798 = vunpack.c.h.b16 %v3173
    %v6799 = vunpack.c.l.b16 %v3174
    %v6800 = vunpack.c.h.b16 %v3174
    %v6801 = vunpack.c.l.b16 %v3175
    %v6802 = vunpack.c.h.b16 %v3175
    %v6803 = vunpack.c.l.b16 %v3176
    %v6804 = vunpack.c.h.b16 %v3176
    %v6805 = vunpack.c.l.b16 %v3177
    %v6806 = vunpack.c.h.b16 %v3177
    %v6807 = vunpack.c.l.b16 %v3178
    %v6808 = vunpack.c.h.b16 %v3178
    %v6809 = vunpack.c.l.b16 %v3179
    %v6810 = vunpack.c.h.b16 %v3179
    %v6811 = vunpack.c.l.b16 %v3180
    %v6812 = vunpack.c.h.b16 %v3180
    %v6813 = vunpack.c.l.b16 %v3181
    %v6814 = vunpack.c.h.b16 %v3181
    %v6815 = vunpack.c.l.b16 %v3182
    %v6816 = vunpack.c.h.b16 %v3182
    %v6817 = vunpack.c.l.b16 %v3183
    %v6818 = vunpack.c.h.b16 %v3183
    %v6819 = vunpack.c.l.b16 %v3184
    %v6820 = vunpack.c.h.b16 %v3184
    %v6821 = vunpack.c.l.b16 %v3185
    %v6822 = vunpack.c.h.b16 %v3185
    %v6823 = vunpack.c.l.b16 %v3186
    %v6824 = vunpack.c.h.b16 %v3186
    %v6825 = vunpack.c.l.b16 %v3187
    %v6826 = vunpack.c.h.b16 %v3187
    %v6827 = vunpack.c.l.b16 %v3188
    %v6828 = vunpack.c.h.b16 %v3188
    %v6829 = vunpack.c.l.b16 %v3189
    %v6830 = vunpack.c.h.b16 %v3189
    %v6831 = vunpack.c.l.b16 %v3190
    %v6832 = vunpack.c.h.b16 %v3190
    %v6833 = vunpack.c.l.b16 %v3191
    %v6834 = vunpack.c.h.b16 %v3191
    %v6835 = vunpack.c.l.b16 %v3192
    %v6836 = vunpack.c.h.b16 %v3192
    %v6837 = vunpack.c.l.b16 %v3193
    %v6838 = vunpack.c.h.b16 %v3193
    %v6839 = vunpack.c.l.b16 %v3194
    %v6840 = vunpack.c.h.b16 %v3194
    %v6841 = vunpack.c.l.b16 %v3195
    %v6842 = vunpack.c.h.b16 %v3195
    %v6843 = vunpack.c.l.b16 %v3196
    %v6844 = vunpack.c.h.b16 %v3196
    %v6845 = vunpack.c.l.b16 %v3197
    %v6846 = vunpack.c.h.b16 %v3197
    %v6847 = vunpack.c.l.b16 %v3198
    %v6848 = vunpack.c.h.b16 %v3198
    %v6849 = vunpack.c.l.b16 %v3199
    %v6850 = vunpack.c.h.b16 %v3199
    %v6851 = vunpack.c.l.b16 %v3200
    %v6852 = vunpack.c.h.b16 %v3200
    %v6853 = vunpack.c.l.b16 %v3201
    %v6854 = vunpack.c.h.b16 %v3201
    %v6855 = vunpack.c.l.b16 %v3202
    %v6856 = vunpack.c.h.b16 %v3202
    %v6857 = vunpack.c.l.b16 %v3203
    %v6858 = vunpack.c.h.b16 %v3203
    %v6859 = vunpack.c.l.b16 %v3204
    %v6860 = vunpack.c.h.b16 %v3204
    %v6861 = vunpack.c.l.b16 %v3205
    %v6862 = vunpack.c.h.b16 %v3205
    %v6863 = vunpack.c.l.b16 %v3206
    %v6864 = vunpack.c.h.b16 %v3206
    %v6865 = vunpack.c.l.b16 %v3207
    %v6866 = vunpack.c.h.b16 %v3207
    %v6867 = vunpack.c.l.b16 %v3208
    %v6868 = vunpack.c.h.b16 %v3208
    %v6869 = vunpack.c.l.b16 %v3209
    %v6870 = vunpack.c.h.b16 %v3209
    %v6871 = vunpack.c.l.b16 %v3210
    %v6872 = vunpack.c.h.b16 %v3210
    %v6873 = vunpack.c.l.b16 %v3211
    %v6874 = vunpack.c.h.b16 %v3211
    %v6875 = vunpack.c.l.b16 %v3212
    %v6876 = vunpack.c.h.b16 %v3212
    %v6877 = vunpack.c.l.b16 %v3213
    %v6878 = vunpack.c.h.b16 %v3213
    %v6879 = vunpack.c.l.b16 %v3214
    %v6880 = vunpack.c.h.b16 %v3214
    %v6881 = vunpack.c.l.b16 %v3215
    %v6882 = vunpack.c.h.b16 %v3215
    %v6883 = vunpack.c.l.b16 %v3216
    %v6884 = vunpack.c.h.b16 %v3216
    %v6885 = vunpack.c.l.b16 %v3217
    %v6886 = vunpack.c.h.b16 %v3217
    %v6887 = vunpack.c.l.b16 %v3218
    %v6888 = vunpack.c.h.b16 %v3218
    %v6889 = vunpack.c.l.b16 %v3219
    %v6890 = vunpack.c.h.b16 %v3219
    %v6891 = vunpack.c.l.b16 %v3220
    %v6892 = vunpack.c.h.b16 %v3220
    %v6893 = vunpack.c.l.b16 %v3221
    %v6894 = vunpack.c.h.b16 %v3221
    %v6895 = vunpack.c.l.b16 %v3222
    %v6896 = vunpack.c.h.b16 %v3222
    %v6897 = vunpack.c.l.b16 %v3223
    %v6898 = vunpack.c.h.b16 %v3223
    %v6899 = vunpack.c.l.b16 %v3224
    %v6900 = vunpack.c.h.b16 %v3224
    %v6901 = vunpack.c.l.b16 %v3225
    %v6902 = vunpack.c.h.b16 %v3225
    %v6903 = vunpack.c.l.b16 %v3226
    %v6904 = vunpack.c.h.b16 %v3226
    %v6905 = vunpack.c.l.b16 %v3227
    %v6906 = vunpack.c.h.b16 %v3227
    %v6907 = vunpack.c.l.b16 %v3228
    %v6908 = vunpack.c.h.b16 %v3228
    %v6909 = vunpack.c.l.b16 %v3229
    %v6910 = vunpack.c.h.b16 %v3229
    %v6911 = vunpack.c.l.b16 %v3230
    %v6912 = vunpack.c.h.b16 %v3230
    %v6913 = vunpack.c.l.b16 %v3231
    %v6914 = vunpack.c.h.b16 %v3231
    %v6915 = vunpack.c.l.b16 %v3232
    %v6916 = vunpack.c.h.b16 %v3232
    %v6917 = vunpack.c.l.b16 %v3233
    %v6918 = vunpack.c.h.b16 %v3233
    %v6919 = vunpack.c.l.b16 %v3234
    %v6920 = vunpack.c.h.b16 %v3234
    %v6921 = vunpack.c.l.b16 %v3235
    %v6922 = vunpack.c.h.b16 %v3235
    %v6923 = vunpack.c.l.b16 %v3236
    %v6924 = vunpack.c.h.b16 %v3236
    %v6925 = vunpack.c.l.b16 %v3237
    %v6926 = vunpack.c.h.b16 %v3237
    %v6927 = vunpack.c.l.b16 %v3238
    %v6928 = vunpack.c.h.b16 %v3238
    %v6929 = vunpack.c.l.b16 %v3239
    %v6930 = vunpack.c.h.b16 %v3239
    %v6931 = vunpack.c.l.b16 %v3240
    %v6932 = vunpack.c.h.b16 %v3240
    %v6933 = vunpack.c.l.b16 %v3241
    %v6934 = vunpack.c.h.b16 %v3241
    %v6935 = vunpack.c.l.b16 %v3242
    %v6936 = vunpack.c.h.b16 %v3242
    %v6937 = vunpack.c.l.b16 %v3243
    %v6938 = vunpack.c.h.b16 %v3243
    %v6939 = vunpack.c.l.b16 %v3244
    %v6940 = vunpack.c.h.b16 %v3244
    %v6941 = vunpack.c.l.b16 %v3245
    %v6942 = vunpack.c.h.b16 %v3245
    %v6943 = vunpack.c.l.b16 %v3246
    %v6944 = vunpack.c.h.b16 %v3246
    %v6945 = vunpack.c.l.b16 %v3247
    %v6946 = vunpack.c.h.b16 %v3247
    %v6947 = vunpack.c.l.b16 %v3248
    %v6948 = vunpack.c.h.b16 %v3248
    %v6949 = vunpack.c.l.b16 %v3249
    %v6950 = vunpack.c.h.b16 %v3249
    %v6951 = vunpack.c.l.b16 %v3250
    %v6952 = vunpack.c.h.b16 %v3250
    %v6953 = vunpack.c.l.b16 %v3251
    %v6954 = vunpack.c.h.b16 %v3251
    %v6955 = vunpack.c.l.b16 %v3252
    %v6956 = vunpack.c.h.b16 %v3252
    %v6957 = vunpack.c.l.b16 %v3253
    %v6958 = vunpack.c.h.b16 %v3253
    %v6959 = vunpack.c.l.b16 %v3254
    %v6960 = vunpack.c.h.b16 %v3254
    %v6961 = vunpack.c.l.b16 %v3255
    %v6962 = vunpack.c.h.b16 %v3255
    %v6963 = vunpack.c.l.b16 %v3256
    %v6964 = vunpack.c.h.b16 %v3256
    %v6965 = vunpack.c.l.b16 %v3257
    %v6966 = vunpack.c.h.b16 %v3257
    %v6967 = vunpack.c.l.b16 %v3258
    %v6968 = vunpack.c.h.b16 %v3258
    %v6969 = vunpack.c.l.b16 %v3259
    %v6970 = vunpack.c.h.b16 %v3259
    %v6971 = vunpack.c.l.b16 %v3260
    %v6972 = vunpack.c.h.b16 %v3260
    %v6973 = vunpack.c.l.b16 %v3261
    %v6974 = vunpack.c.h.b16 %v3261
    %v6975 = vunpack.c.l.b16 %v3262
    %v6976 = vunpack.c.h.b16 %v3262
    %v6977 = vunpack.c.l.b16 %v3263
    %v6978 = vunpack.c.h.b16 %v3263
    %v6979 = vunpack.c.l.b16 %v3264
    %v6980 = vunpack.c.h.b16 %v3264
    %v6981 = vunpack.c.l.b16 %v3265
    %v6982 = vunpack.c.h.b16 %v3265
    %v6983 = vunpack.c.l.b16 %v3266
    %v6984 = vunpack.c.h.b16 %v3266
    %v6985 = vunpack.c.l.b16 %v3267
    %v6986 = vunpack.c.h.b16 %v3267
    %v6987 = vunpack.c.l.b16 %v3268
    %v6988 = vunpack.c.h.b16 %v3268
    %v6989 = vunpack.c.l.b16 %v3269
    %v6990 = vunpack.c.h.b16 %v3269
    %v6991 = vunpack.c.l.b16 %v3270
    %v6992 = vunpack.c.h.b16 %v3270
    %v6993 = vunpack.c.l.b16 %v3271
    %v6994 = vunpack.c.h.b16 %v3271
    %v6995 = vunpack.c.l.b16 %v3272
    %v6996 = vunpack.c.h.b16 %v3272
    %v6997 = vunpack.c.l.b16 %v3273
    %v6998 = vunpack.c.h.b16 %v3273
    %v6999 = vunpack.c.l.b16 %v3274
    %v7000 = vunpack.c.h.b16 %v3274
    %v7001 = vunpack.c.l.b16 %v3275
    %v7002 = vunpack.c.h.b16 %v3275
    %v7003 = vunpack.c.l.b16 %v3276
    %v7004 = vunpack.c.h.b16 %v3276
    %v7005 = vunpack.c.l.b16 %v3277
    %v7006 = vunpack.c.h.b16 %v3277
    %v7007 = vunpack.c.l.b16 %v3278
    %v7008 = vunpack.c.h.b16 %v3278
    %v7009 = vunpack.c.l.b16 %v3279
    %v7010 = vunpack.c.h.b16 %v3279
    %v7011 = vunpack.c.l.b16 %v3280
    %v7012 = vunpack.c.h.b16 %v3280
    %v7013 = vunpack.c.l.b16 %v3281
    %v7014 = vunpack.c.h.b16 %v3281
    %v7015 = vunpack.c.l.b16 %v3282
    %v7016 = vunpack.c.h.b16 %v3282
    %v7017 = vunpack.c.l.b16 %v3283
    %v7018 = vunpack.c.h.b16 %v3283
    %v7019 = vunpack.c.l.b16 %v3284
    %v7020 = vunpack.c.h.b16 %v3284
    %v7021 = vunpack.c.l.b16 %v3285
    %v7022 = vunpack.c.h.b16 %v3285
    %v7023 = vunpack.c.l.b16 %v3286
    %v7024 = vunpack.c.h.b16 %v3286
    %v7025 = vunpack.c.l.b16 %v3287
    %v7026 = vunpack.c.h.b16 %v3287
    %v7027 = vunpack.c.l.b16 %v3288
    %v7028 = vunpack.c.h.b16 %v3288
    %v7029 = vunpack.c.l.b16 %v3289
    %v7030 = vunpack.c.h.b16 %v3289
    %v7031 = vunpack.c.l.b16 %v3290
    %v7032 = vunpack.c.h.b16 %v3290
    %v7033 = vunpack.c.l.b16 %v3291
    %v7034 = vunpack.c.h.b16 %v3291
    %v7035 = vunpack.c.l.b16 %v3292
    %v7036 = vunpack.c.h.b16 %v3292
    %v7037 = vunpack.c.l.b16 %v3293
    %v7038 = vunpack.c.h.b16 %v3293
    %v7039 = vunpack.c.l.b16 %v3294
    %v7040 = vunpack.c.h.b16 %v3294
    %v7041 = vunpack.c.l.b16 %v3295
    %v7042 = vunpack.c.h.b16 %v3295
    %v7043 = vunpack.c.l.b16 %v3296
    %v7044 = vunpack.c.h.b16 %v3296
    %v7045 = vunpack.c.l.b16 %v3297
    %v7046 = vunpack.c.h.b16 %v3297
    %v7047 = vunpack.c.l.b16 %v3298
    %v7048 = vunpack.c.h.b16 %v3298
    %v7049 = vunpack.c.l.b16 %v3299
    %v7050 = vunpack.c.h.b16 %v3299
    %v7051 = vunpack.c.l.b16 %v3300
    %v7052 = vunpack.c.h.b16 %v3300
    %v7053 = vunpack.c.l.b16 %v3301
    %v7054 = vunpack.c.h.b16 %v3301
    %v7055 = vunpack.c.l.b16 %v3302
    %v7056 = vunpack.c.h.b16 %v3302
    %v7057 = vunpack.c.l.b16 %v3303
    %v7058 = vunpack.c.h.b16 %v3303
    %v7059 = vunpack.c.l.b16 %v3304
    %v7060 = vunpack.c.h.b16 %v3304
    %v7061 = vunpack.c.l.b16 %v3305
    %v7062 = vunpack.c.h.b16 %v3305
    %v7063 = vunpack.c.l.b16 %v3306
    %v7064 = vunpack.c.h.b16 %v3306
    %v7065 = vunpack.c.l.b16 %v3307
    %v7066 = vunpack.c.h.b16 %v3307
    %v7067 = vunpack.c.l.b16 %v3308
    %v7068 = vunpack.c.h.b16 %v3308
    %v7069 = vunpack.c.l.b16 %v3309
    %v7070 = vunpack.c.h.b16 %v3309
    %v7071 = vunpack.c.l.b16 %v3310
    %v7072 = vunpack.c.h.b16 %v3310
    %v7073 = vunpack.c.l.b16 %v3311
    %v7074 = vunpack.c.h.b16 %v3311
    %v7075 = vunpack.c.l.b16 %v3312
    %v7076 = vunpack.c.h.b16 %v3312
    %v7077 = vunpack.c.l.b16 %v3313
    %v7078 = vunpack.c.h.b16 %v3313
    %v7079 = vunpack.c.l.b16 %v3314
    %v7080 = vunpack.c.h.b16 %v3314
    %v7081 = vunpack.c.l.b16 %v3315
    %v7082 = vunpack.c.h.b16 %v3315
    %v7083 = vunpack.c.l.b16 %v3316
    %v7084 = vunpack.c.h.b16 %v3316
    %v7085 = vunpack.c.l.b16 %v3317
    %v7086 = vunpack.c.h.b16 %v3317
    %v7087 = vunpack.c.l.b16 %v3318
    %v7088 = vunpack.c.h.b16 %v3318
    %v7089 = vunpack.c.l.b16 %v3319
    %v7090 = vunpack.c.h.b16 %v3319
    %v7091 = vunpack.c.l.b16 %v3320
    %v7092 = vunpack.c.h.b16 %v3320
    %v7093 = vunpack.c.l.b16 %v3321
    %v7094 = vunpack.c.h.b16 %v3321
    %v7095 = vunpack.c.l.b16 %v3322
    %v7096 = vunpack.c.h.b16 %v3322
    %v7097 = vunpack.c.l.b16 %v3323
    %v7098 = vunpack.c.h.b16 %v3323
    %v7099 = vunpack.c.l.b16 %v3324
    %v7100 = vunpack.c.h.b16 %v3324
    %v7101 = vunpack.c.l.b16 %v3325
    %v7102 = vunpack.c.h.b16 %v3325
    %v7103 = vunpack.c.l.b16 %v3326
    %v7104 = vunpack.c.h.b16 %v3326
    %v7105 = vunpack.c.l.b16 %v3327
    %v7106 = vunpack.c.h.b16 %v3327
    %v7107 = vunpack.c.l.b16 %v3328
    %v7108 = vunpack.c.h.b16 %v3328
    %v7109 = vunpack.c.l.b16 %v3329
    %v7110 = vunpack.c.h.b16 %v3329
    %v7111 = vunpack.c.l.b16 %v3330
    %v7112 = vunpack.c.h.b16 %v3330
    %v7113 = vunpack.c.l.b16 %v3331
    %v7114 = vunpack.c.h.b16 %v3331
    %v7115 = vunpack.c.l.b16 %v3332
    %v7116 = vunpack.c.h.b16 %v3332
    %v7117 = vunpack.c.l.b16 %v3333
    %v7118 = vunpack.c.h.b16 %v3333
    %v7119 = vunpack.c.l.b16 %v3334
    %v7120 = vunpack.c.h.b16 %v3334
    %v7121 = vunpack.c.l.b16 %v3335
    %v7122 = vunpack.c.h.b16 %v3335
    %v7123 = vunpack.c.l.b16 %v3336
    %v7124 = vunpack.c.h.b16 %v3336
    %v7125 = vunpack.c.l.b16 %v3337
    %v7126 = vunpack.c.h.b16 %v3337
    %v7127 = vunpack.c.l.b16 %v3338
    %v7128 = vunpack.c.h.b16 %v3338
    %v7129 = vunpack.c.l.b16 %v3339
    %v7130 = vunpack.c.h.b16 %v3339
    %v7131 = vunpack.c.l.b16 %v3340
    %v7132 = vunpack.c.h.b16 %v3340
    %v7133 = vunpack.c.l.b16 %v3341
    %v7134 = vunpack.c.h.b16 %v3341
    %v7135 = vunpack.c.l.b16 %v3342
    %v7136 = vunpack.c.h.b16 %v3342
    %v7137 = vunpack.c.l.b16 %v3343
    %v7138 = vunpack.c.h.b16 %v3343
    %v7139 = vunpack.c.l.b16 %v3344
    %v7140 = vunpack.c.h.b16 %v3344
    %v7141 = vunpack.c.l.b16 %v3345
    %v7142 = vunpack.c.h.b16 %v3345
    %v7143 = vunpack.c.l.b16 %v3346
    %v7144 = vunpack.c.h.b16 %v3346
    %v7145 = vunpack.c.l.b16 %v3347
    %v7146 = vunpack.c.h.b16 %v3347
    %v7147 = vunpack.c.l.b16 %v3348
    %v7148 = vunpack.c.h.b16 %v3348
    %v7149 = vunpack.c.l.b16 %v3349
    %v7150 = vunpack.c.h.b16 %v3349
    %v7151 = vunpack.c.l.b16 %v3350
    %v7152 = vunpack.c.h.b16 %v3350
    %v7153 = vunpack.c.l.b16 %v3351
    %v7154 = vunpack.c.h.b16 %v3351
    %v7155 = vunpack.c.l.b16 %v3352
    %v7156 = vunpack.c.h.b16 %v3352
    %v7157 = vunpack.c.l.b16 %v3353
    %v7158 = vunpack.c.h.b16 %v3353
    %v7159 = vunpack.c.l.b16 %v3354
    %v7160 = vunpack.c.h.b16 %v3354
    %v7161 = vunpack.c.l.b16 %v3355
    %v7162 = vunpack.c.h.b16 %v3355
    %v7163 = vunpack.c.l.b16 %v3356
    %v7164 = vunpack.c.h.b16 %v3356
    %v7165 = vunpack.c.l.b16 %v3357
    %v7166 = vunpack.c.h.b16 %v3357
    %v7167 = vunpack.c.l.b16 %v3358
    %v7168 = vunpack.c.h.b16 %v3358
    %v7169 = vunpack.c.l.b16 %v3359
    %v7170 = vunpack.c.h.b16 %v3359
    %v7171 = vunpack.c.l.b16 %v3360
    %v7172 = vunpack.c.h.b16 %v3360
    %v7173 = vunpack.c.l.b16 %v3361
    %v7174 = vunpack.c.h.b16 %v3361
    %v7175 = vunpack.c.l.b16 %v3362
    %v7176 = vunpack.c.h.b16 %v3362
    %v7177 = vunpack.c.l.b16 %v3363
    %v7178 = vunpack.c.h.b16 %v3363
    %v7179 = vunpack.c.l.b16 %v3364
    %v7180 = vunpack.c.h.b16 %v3364
    %v7181 = vunpack.c.l.b16 %v3365
    %v7182 = vunpack.c.h.b16 %v3365
    %v7183 = vunpack.c.l.b16 %v3366
    %v7184 = vunpack.c.h.b16 %v3366
    %v7185 = vunpack.c.l.b16 %v3367
    %v7186 = vunpack.c.h.b16 %v3367
    %v7187 = vunpack.c.l.b16 %v3368
    %v7188 = vunpack.c.h.b16 %v3368
    %v7189 = vunpack.c.l.b16 %v3369
    %v7190 = vunpack.c.h.b16 %v3369
    %v7191 = vunpack.c.l.b16 %v3370
    %v7192 = vunpack.c.h.b16 %v3370
    %v7193 = vunpack.c.l.b16 %v3371
    %v7194 = vunpack.c.h.b16 %v3371
    %v7195 = vunpack.c.l.b16 %v3372
    %v7196 = vunpack.c.h.b16 %v3372
    %v7197 = vunpack.c.l.b16 %v3373
    %v7198 = vunpack.c.h.b16 %v3373
    %v7199 = vunpack.c.l.b16 %v3374
    %v7200 = vunpack.c.h.b16 %v3374
    %v7201 = vunpack.c.l.b16 %v3375
    %v7202 = vunpack.c.h.b16 %v3375
    %v7203 = vunpack.c.l.b16 %v3376
    %v7204 = vunpack.c.h.b16 %v3376
    %v7205 = vunpack.c.l.b16 %v3377
    %v7206 = vunpack.c.h.b16 %v3377
    %v7207 = vunpack.c.l.b16 %v3378
    %v7208 = vunpack.c.h.b16 %v3378
    %v7209 = vunpack.c.l.b16 %v3379
    %v7210 = vunpack.c.h.b16 %v3379
    %v7211 = vunpack.c.l.b16 %v3380
    %v7212 = vunpack.c.h.b16 %v3380
    %v7213 = vunpack.c.l.b16 %v3381
    %v7214 = vunpack.c.h.b16 %v3381
    %v7215 = vunpack.c.l.b16 %v3382
    %v7216 = vunpack.c.h.b16 %v3382
    %v7217 = vunpack.c.l.b16 %v3383
    %v7218 = vunpack.c.h.b16 %v3383
    %v7219 = vunpack.c.l.b16 %v3384
    %v7220 = vunpack.c.h.b16 %v3384
    %v7221 = vunpack.c.l.b16 %v3385
    %v7222 = vunpack.c.h.b16 %v3385
    %v7223 = vunpack.c.l.b16 %v3386
    %v7224 = vunpack.c.h.b16 %v3386
    %v7225 = vunpack.c.l.b16 %v3387
    %v7226 = vunpack.c.h.b16 %v3387
    %v7227 = vunpack.c.l.b16 %v3388
    %v7228 = vunpack.c.h.b16 %v3388
    %v7229 = vunpack.c.l.b16 %v3389
    %v7230 = vunpack.c.h.b16 %v3389
    %v7231 = vunpack.c.l.b16 %v3390
    %v7232 = vunpack.c.h.b16 %v3390
    %v7233 = vunpack.c.l.b16 %v3391
    %v7234 = vunpack.c.h.b16 %v3391
    %v7235 = vunpack.c.l.b16 %v3392
    %v7236 = vunpack.c.h.b16 %v3392
    %v7237 = vunpack.c.l.b16 %v3393
    %v7238 = vunpack.c.h.b16 %v3393
    %v7239 = vunpack.c.l.b16 %v3394
    %v7240 = vunpack.c.h.b16 %v3394
    %v7241 = vunpack.c.l.b16 %v3395
    %v7242 = vunpack.c.h.b16 %v3395
    %v7243 = vunpack.c.l.b16 %v3396
    %v7244 = vunpack.c.h.b16 %v3396
    %v7245 = vunpack.c.l.b16 %v3397
    %v7246 = vunpack.c.h.b16 %v3397
    %v7247 = vunpack.c.l.b16 %v3398
    %v7248 = vunpack.c.h.b16 %v3398
    %v7249 = vunpack.c.l.b16 %v3399
    %v7250 = vunpack.c.h.b16 %v3399
    %v7251 = vunpack.c.l.b16 %v3400
    %v7252 = vunpack.c.h.b16 %v3400
    %v7253 = vunpack.c.l.b16 %v3401
    %v7254 = vunpack.c.h.b16 %v3401
    %v7255 = vunpack.c.l.b16 %v3402
    %v7256 = vunpack.c.h.b16 %v3402
    %v7257 = vunpack.c.l.b16 %v3403
    %v7258 = vunpack.c.h.b16 %v3403
    %v7259 = vunpack.c.l.b16 %v3404
    %v7260 = vunpack.c.h.b16 %v3404
    %v7261 = vunpack.c.l.b16 %v3405
    %v7262 = vunpack.c.h.b16 %v3405
    %v7263 = vunpack.c.l.b16 %v3406
    %v7264 = vunpack.c.h.b16 %v3406
    %v7265 = vunpack.c.l.b16 %v3407
    %v7266 = vunpack.c.h.b16 %v3407
    %v7267 = vunpack.c.l.b16 %v3408
    %v7268 = vunpack.c.h.b16 %v3408
    %v7269 = vunpack.c.l.b16 %v3409
    %v7270 = vunpack.c.h.b16 %v3409
    %v7271 = vunpack.c.l.b16 %v3410
    %v7272 = vunpack.c.h.b16 %v3410
    %v7273 = vunpack.c.l.b16 %v3411
    %v7274 = vunpack.c.h.b16 %v3411
    %v7275 = vunpack.c.l.b16 %v3412
    %v7276 = vunpack.c.h.b16 %v3412
    %v7277 = vunpack.c.l.b16 %v3413
    %v7278 = vunpack.c.h.b16 %v3413
    %v7279 = vunpack.c.l.b16 %v3414
    %v7280 = vunpack.c.h.b16 %v3414
    %v7281 = vunpack.c.l.b16 %v3415
    %v7282 = vunpack.c.h.b16 %v3415
    %v7283 = vunpack.c.l.b16 %v3416
    %v7284 = vunpack.c.h.b16 %v3416
    %v7285 = vunpack.c.l.b16 %v3417
    %v7286 = vunpack.c.h.b16 %v3417
    %v7287 = vunpack.c.l.b16 %v3418
    %v7288 = vunpack.c.h.b16 %v3418
    %v7289 = vunpack.c.l.b16 %v3419
    %v7290 = vunpack.c.h.b16 %v3419
    %v7291 = vunpack.c.l.b16 %v3420
    %v7292 = vunpack.c.h.b16 %v3420
    %v7293 = vunpack.c.l.b16 %v3421
    %v7294 = vunpack.c.h.b16 %v3421
    %v7295 = vunpack.c.l.b16 %v3422
    %v7296 = vunpack.c.h.b16 %v3422
    %v7297 = vunpack.c.l.b16 %v3423
    %v7298 = vunpack.c.h.b16 %v3423
    %v7299 = vunpack.c.l.b16 %v3424
    %v7300 = vunpack.c.h.b16 %v3424
    %v7301 = vunpack.c.l.b16 %v3425
    %v7302 = vunpack.c.h.b16 %v3425
    %v7303 = vunpack.c.l.b16 %v3426
    %v7304 = vunpack.c.h.b16 %v3426
    %v7305 = vunpack.c.l.b16 %v3427
    %v7306 = vunpack.c.h.b16 %v3427
    %v7307 = vunpack.c.l.b16 %v3428
    %v7308 = vunpack.c.h.b16 %v3428
    %v7309 = vunpack.c.l.b16 %v3429
    %v7310 = vunpack.c.h.b16 %v3429
    %v7311 = vunpack.c.l.b16 %v3430
    %v7312 = vunpack.c.h.b16 %v3430
    %v7313 = vunpack.c.l.b16 %v3431
    %v7314 = vunpack.c.h.b16 %v3431
    %v7315 = vunpack.c.l.b16 %v3432
    %v7316 = vunpack.c.h.b16 %v3432
    %v7317 = vunpack.c.l.b16 %v3433
    %v7318 = vunpack.c.h.b16 %v3433
    %v7319 = vunpack.c.l.b16 %v3434
    %v7320 = vunpack.c.h.b16 %v3434
    %v7321 = vunpack.c.l.b16 %v3435
    %v7322 = vunpack.c.h.b16 %v3435
    %v7323 = vunpack.c.l.b16 %v3436
    %v7324 = vunpack.c.h.b16 %v3436
    %v7325 = vunpack.c.l.b16 %v3437
    %v7326 = vunpack.c.h.b16 %v3437
    %v7327 = vunpack.c.l.b16 %v3438
    %v7328 = vunpack.c.h.b16 %v3438
    %v7329 = vunpack.c.l.b16 %v3439
    %v7330 = vunpack.c.h.b16 %v3439
    %v7331 = vunpack.c.l.b16 %v3440
    %v7332 = vunpack.c.h.b16 %v3440
    %v7333 = vunpack.c.l.b16 %v3441
    %v7334 = vunpack.c.h.b16 %v3441
    %v7335 = vunpack.c.l.b16 %v3442
    %v7336 = vunpack.c.h.b16 %v3442
    %v7337 = vunpack.c.l.b16 %v3443
    %v7338 = vunpack.c.h.b16 %v3443
    %v7339 = vunpack.c.l.b16 %v3444
    %v7340 = vunpack.c.h.b16 %v3444
    %v7341 = vunpack.c.l.b16 %v3445
    %v7342 = vunpack.c.h.b16 %v3445
    %v7343 = vunpack.c.l.b16 %v3446
    %v7344 = vunpack.c.h.b16 %v3446
    %v7345 = vunpack.c.l.b16 %v3447
    %v7346 = vunpack.c.h.b16 %v3447
    %v7347 = vunpack.c.l.b16 %v3448
    %v7348 = vunpack.c.h.b16 %v3448
    %v7349 = vunpack.c.l.b16 %v3449
    %v7350 = vunpack.c.h.b16 %v3449
    %v7351 = vunpack.c.l.b16 %v3450
    %v7352 = vunpack.c.h.b16 %v3450
    %v7353 = vunpack.c.l.b16 %v3451
    %v7354 = vunpack.c.h.b16 %v3451
    %v7355 = vunpack.c.l.b16 %v3452
    %v7356 = vunpack.c.h.b16 %v3452
    %v7357 = vunpack.c.l.b16 %v3453
    %v7358 = vunpack.c.h.b16 %v3453
    %v7359 = vunpack.c.l.b16 %v3454
    %v7360 = vunpack.c.h.b16 %v3454
    %v7361 = vunpack.c.l.b16 %v3455
    %v7362 = vunpack.c.h.b16 %v3455
    %v7363 = vunpack.c.l.b16 %v3456
    %v7364 = vunpack.c.h.b16 %v3456
    %v7365 = vunpack.c.l.b16 %v3457
    %v7366 = vunpack.c.h.b16 %v3457
    %v7367 = vunpack.c.l.b16 %v3458
    %v7368 = vunpack.c.h.b16 %v3458
    %v7369 = vunpack.c.l.b16 %v3459
    %v7370 = vunpack.c.h.b16 %v3459
    %v7371 = vunpack.c.l.b16 %v3460
    %v7372 = vunpack.c.h.b16 %v3460
    %v7373 = vunpack.c.l.b16 %v3461
    %v7374 = vunpack.c.h.b16 %v3461
    %v7375 = vunpack.c.l.b16 %v3462
    %v7376 = vunpack.c.h.b16 %v3462
    %v7377 = vunpack.c.l.b16 %v3463
    %v7378 = vunpack.c.h.b16 %v3463
    %v7379 = vunpack.c.l.b16 %v3464
    %v7380 = vunpack.c.h.b16 %v3464
    %v7381 = vunpack.c.l.b16 %v3465
    %v7382 = vunpack.c.h.b16 %v3465
    %v7383 = vunpack.c.l.b16 %v3466
    %v7384 = vunpack.c.h.b16 %v3466
    %v7385 = vunpack.c.l.b16 %v3467
    %v7386 = vunpack.c.h.b16 %v3467
    %v7387 = vunpack.c.l.b16 %v3468
    %v7388 = vunpack.c.h.b16 %v3468
    %v7389 = vunpack.c.l.b16 %v3469
    %v7390 = vunpack.c.h.b16 %v3469
    %v7391 = vunpack.c.l.b16 %v3470
    %v7392 = vunpack.c.h.b16 %v3470
    %v7393 = vunpack.c.l.b16 %v3471
    %v7394 = vunpack.c.h.b16 %v3471
    %v7395 = vunpack.c.l.b16 %v3472
    %v7396 = vunpack.c.h.b16 %v3472
    %v7397 = vunpack.c.l.b16 %v3473
    %v7398 = vunpack.c.h.b16 %v3473
    %v7399 = vunpack.c.l.b16 %v3474
    %v7400 = vunpack.c.h.b16 %v3474
    %v7401 = vunpack.c.l.b16 %v3475
    %v7402 = vunpack.c.h.b16 %v3475
    %v7403 = vunpack.c.l.b16 %v3476
    %v7404 = vunpack.c.h.b16 %v3476
    %v7405 = vunpack.c.l.b16 %v3477
    %v7406 = vunpack.c.h.b16 %v3477
    %v7407 = vunpack.c.l.b16 %v3478
    %v7408 = vunpack.c.h.b16 %v3478
    %v7409 = vunpack.c.l.b16 %v3479
    %v7410 = vunpack.c.h.b16 %v3479
    %v7411 = vunpack.c.l.b16 %v3480
    %v7412 = vunpack.c.h.b16 %v3480
    %v7413 = vunpack.c.l.b16 %v3481
    %v7414 = vunpack.c.h.b16 %v3481
    %v7415 = vunpack.c.l.b16 %v3482
    %v7416 = vunpack.c.h.b16 %v3482
    %v7417 = vunpack.c.l.b16 %v3483
    %v7418 = vunpack.c.h.b16 %v3483
    %v7419 = vunpack.c.l.b16 %v3484
    %v7420 = vunpack.c.h.b16 %v3484
    %v7421 = vunpack.c.l.b16 %v3485
    %v7422 = vunpack.c.h.b16 %v3485
    %v7423 = vunpack.c.l.b16 %v3486
    %v7424 = vunpack.c.h.b16 %v3486
    %v7425 = vunpack.c.l.b16 %v3487
    %v7426 = vunpack.c.h.b16 %v3487
    %v7427 = vunpack.c.l.b16 %v3488
    %v7428 = vunpack.c.h.b16 %v3488
    %v7429 = vunpack.c.l.b16 %v3489
    %v7430 = vunpack.c.h.b16 %v3489
    %v7431 = vunpack.c.l.b16 %v3490
    %v7432 = vunpack.c.h.b16 %v3490
    %v7433 = vunpack.c.l.b16 %v3491
    %v7434 = vunpack.c.h.b16 %v3491
    %v7435 = vunpack.c.l.b16 %v3492
    %v7436 = vunpack.c.h.b16 %v3492
    %v7437 = vunpack.c.l.b16 %v3493
    %v7438 = vunpack.c.h.b16 %v3493
    %v7439 = vunpack.c.l.b16 %v3494
    %v7440 = vunpack.c.h.b16 %v3494
    %v7441 = vunpack.c.l.b16 %v3495
    %v7442 = vunpack.c.h.b16 %v3495
    %v7443 = vunpack.c.l.b16 %v3496
    %v7444 = vunpack.c.h.b16 %v3496
    %v7445 = vunpack.c.l.b16 %v3497
    %v7446 = vunpack.c.h.b16 %v3497
    %v7447 = vunpack.c.l.b16 %v3498
    %v7448 = vunpack.c.h.b16 %v3498
    %v7449 = vunpack.c.l.b16 %v3499
    %v7450 = vunpack.c.h.b16 %v3499
    %v7451 = vunpack.c.l.b16 %v3500
    %v7452 = vunpack.c.h.b16 %v3500
    %v7453 = vunpack.c.l.b16 %v3501
    %v7454 = vunpack.c.h.b16 %v3501
    %v7455 = vunpack.c.l.b16 %v3502
    %v7456 = vunpack.c.h.b16 %v3502
    %v7457 = vunpack.c.l.b16 %v3503
    %v7458 = vunpack.c.h.b16 %v3503
    %v7459 = vunpack.c.l.b16 %v3504
    %v7460 = vunpack.c.h.b16 %v3504
    %v7461 = vunpack.c.l.b16 %v3505
    %v7462 = vunpack.c.h.b16 %v3505
    %v7463 = vunpack.c.l.b16 %v3506
    %v7464 = vunpack.c.h.b16 %v3506
    %v7465 = vunpack.c.l.b16 %v3507
    %v7466 = vunpack.c.h.b16 %v3507
    %v7467 = vunpack.c.l.b16 %v3508
    %v7468 = vunpack.c.h.b16 %v3508
    %v7469 = vunpack.c.l.b16 %v3509
    %v7470 = vunpack.c.h.b16 %v3509
    %v7471 = vunpack.c.l.b16 %v3510
    %v7472 = vunpack.c.h.b16 %v3510
    %v7473 = vunpack.c.l.b16 %v3511
    %v7474 = vunpack.c.h.b16 %v3511
    %v7475 = vunpack.c.l.b16 %v3512
    %v7476 = vunpack.c.h.b16 %v3512
    %v7477 = vunpack.c.l.b16 %v3513
    %v7478 = vunpack.c.h.b16 %v3513
    %v7479 = vunpack.c.l.b16 %v3514
    %v7480 = vunpack.c.h.b16 %v3514
    %v7481 = vunpack.c.l.b16 %v3515
    %v7482 = vunpack.c.h.b16 %v3515
    %v7483 = vunpack.c.l.b16 %v3516
    %v7484 = vunpack.c.h.b16 %v3516
    %v7485 = vunpack.c.l.b16 %v3517
    %v7486 = vunpack.c.h.b16 %v3517
    %v7487 = vunpack.c.l.b16 %v3518
    %v7488 = vunpack.c.h.b16 %v3518
    %v7489 = vunpack.c.l.b16 %v3519
    %v7490 = vunpack.c.h.b16 %v3519
    %v7491 = vunpack.c.l.b16 %v3520
    %v7492 = vunpack.c.h.b16 %v3520
    %v7493 = vunpack.c.l.b16 %v3521
    %v7494 = vunpack.c.h.b16 %v3521
    %v7495 = vunpack.c.l.b16 %v3522
    %v7496 = vunpack.c.h.b16 %v3522
    %v7497 = vunpack.c.l.b16 %v3523
    %v7498 = vunpack.c.h.b16 %v3523
    %v7499 = vunpack.c.l.b16 %v3524
    %v7500 = vunpack.c.h.b16 %v3524
    %v7501 = vunpack.c.l.b16 %v3525
    %v7502 = vunpack.c.h.b16 %v3525
    %v7503 = vunpack.c.l.b16 %v3526
    %v7504 = vunpack.c.h.b16 %v3526
    %v7505 = vunpack.c.l.b16 %v3527
    %v7506 = vunpack.c.h.b16 %v3527
    %v7507 = vunpack.c.l.b16 %v3528
    %v7508 = vunpack.c.h.b16 %v3528
    %v7509 = vunpack.c.l.b16 %v3529
    %v7510 = vunpack.c.h.b16 %v3529
    %v7511 = vunpack.c.l.b16 %v3530
    %v7512 = vunpack.c.h.b16 %v3530
    %v7513 = vunpack.c.l.b16 %v3531
    %v7514 = vunpack.c.h.b16 %v3531
    %v7515 = vunpack.c.l.b16 %v3532
    %v7516 = vunpack.c.h.b16 %v3532
    %v7517 = vunpack.c.l.b16 %v3533
    %v7518 = vunpack.c.h.b16 %v3533
    %v7519 = vunpack.c.l.b16 %v3534
    %v7520 = vunpack.c.h.b16 %v3534
    %v7521 = vunpack.c.l.b16 %v3535
    %v7522 = vunpack.c.h.b16 %v3535
    %v7523 = vunpack.c.l.b16 %v3536
    %v7524 = vunpack.c.h.b16 %v3536
    %v7525 = vunpack.c.l.b16 %v3537
    %v7526 = vunpack.c.h.b16 %v3537
    %v7527 = vunpack.c.l.b16 %v3538
    %v7528 = vunpack.c.h.b16 %v3538
    %v7529 = vunpack.c.l.b16 %v3539
    %v7530 = vunpack.c.h.b16 %v3539
    %v7531 = vunpack.c.l.b16 %v3540
    %v7532 = vunpack.c.h.b16 %v3540
    %v7533 = vunpack.c.l.b16 %v3541
    %v7534 = vunpack.c.h.b16 %v3541
    %v7535 = vunpack.c.l.b16 %v3542
    %v7536 = vunpack.c.h.b16 %v3542
    %v7537 = vunpack.c.l.b16 %v3543
    %v7538 = vunpack.c.h.b16 %v3543
    %v7539 = vunpack.c.l.b16 %v3544
    %v7540 = vunpack.c.h.b16 %v3544
    %v7541 = vunpack.c.l.b16 %v3545
    %v7542 = vunpack.c.h.b16 %v3545
    %v7543 = vunpack.c.l.b16 %v3546
    %v7544 = vunpack.c.h.b16 %v3546
    %v7545 = vunpack.c.l.b16 %v3547
    %v7546 = vunpack.c.h.b16 %v3547
    %v7547 = vunpack.c.l.b16 %v3548
    %v7548 = vunpack.c.h.b16 %v3548
    %v7549 = vunpack.c.l.b16 %v3549
    %v7550 = vunpack.c.h.b16 %v3549
    %v7551 = vunpack.c.l.b16 %v3550
    %v7552 = vunpack.c.h.b16 %v3550
    %v7553 = vunpack.c.l.b16 %v3551
    %v7554 = vunpack.c.h.b16 %v3551
    %v7555 = vunpack.c.l.b16 %v3552
    %v7556 = vunpack.c.h.b16 %v3552
    %v7557 = vunpack.c.l.b16 %v3553
    %v7558 = vunpack.c.h.b16 %v3553
    %v7559 = vunpack.c.l.b16 %v3554
    %v7560 = vunpack.c.h.b16 %v3554
    %v7561 = vunpack.c.l.b16 %v3555
    %v7562 = vunpack.c.h.b16 %v3555
    %v7563 = vunpack.c.l.b16 %v3556
    %v7564 = vunpack.c.h.b16 %v3556
    %v7565 = vunpack.c.l.b16 %v3557
    %v7566 = vunpack.c.h.b16 %v3557
    %v7567 = vunpack.c.l.b16 %v3558
    %v7568 = vunpack.c.h.b16 %v3558
    %v7569 = vunpack.c.l.b16 %v3559
    %v7570 = vunpack.c.h.b16 %v3559
    %v7571 = vunpack.c.l.b16 %v3560
    %v7572 = vunpack.c.h.b16 %v3560
    %v7573 = vunpack.c.l.b16 %v3561
    %v7574 = vunpack.c.h.b16 %v3561
    %v7575 = vunpack.c.l.b16 %v3562
    %v7576 = vunpack.c.h.b16 %v3562
    %v7577 = vunpack.c.l.b16 %v3563
    %v7578 = vunpack.c.h.b16 %v3563
    %v7579 = vunpack.c.l.b16 %v3564
    %v7580 = vunpack.c.h.b16 %v3564
    %v7581 = vunpack.c.l.b16 %v3565
    %v7582 = vunpack.c.h.b16 %v3565
    %v7583 = vunpack.c.l.b16 %v3566
    %v7584 = vunpack.c.h.b16 %v3566
    %v7585 = vunpack.c.l.b16 %v3567
    %v7586 = vunpack.c.h.b16 %v3567
    %v7587 = vunpack.c.l.b16 %v3568
    %v7588 = vunpack.c.h.b16 %v3568
    %v7589 = vunpack.c.l.b16 %v3569
    %v7590 = vunpack.c.h.b16 %v3569
    %v7591 = vunpack.c.l.b16 %v3570
    %v7592 = vunpack.c.h.b16 %v3570
    %v7593 = vunpack.c.l.b16 %v3571
    %v7594 = vunpack.c.h.b16 %v3571
    %v7595 = vunpack.c.l.b16 %v3572
    %v7596 = vunpack.c.h.b16 %v3572
    %v7597 = vunpack.c.l.b16 %v3573
    %v7598 = vunpack.c.h.b16 %v3573
    %v7599 = vunpack.c.l.b16 %v3574
    %v7600 = vunpack.c.h.b16 %v3574
    %v7601 = vunpack.c.l.b16 %v3575
    %v7602 = vunpack.c.h.b16 %v3575
    %v7603 = vunpack.c.l.b16 %v3576
    %v7604 = vunpack.c.h.b16 %v3576
    %v7605 = vunpack.c.l.b16 %v3577
    %v7606 = vunpack.c.h.b16 %v3577
    %v7607 = vunpack.c.l.b16 %v3578
    %v7608 = vunpack.c.h.b16 %v3578
    %v7609 = vunpack.c.l.b16 %v3579
    %v7610 = vunpack.c.h.b16 %v3579
    %v7611 = vunpack.c.l.b16 %v3580
    %v7612 = vunpack.c.h.b16 %v3580
    %v7613 = vunpack.c.l.b16 %v3581
    %v7614 = vunpack.c.h.b16 %v3581
    %v7615 = vunpack.c.l.b16 %v3582
    %v7616 = vunpack.c.h.b16 %v3582
    %v7617 = vunpack.c.l.b16 %v3583
    %v7618 = vunpack.c.h.b16 %v3583
    %v7619 = vunpack.c.l.b16 %v3584
    %v7620 = vunpack.c.h.b16 %v3584
    %v7621 = vunpack.c.l.b16 %v3585
    %v7622 = vunpack.c.h.b16 %v3585
    %v7623 = vunpack.c.l.b16 %v3586
    %v7624 = vunpack.c.h.b16 %v3586
    %v7625 = vunpack.c.l.b16 %v3587
    %v7626 = vunpack.c.h.b16 %v3587
    %v7627 = vunpack.c.l.b16 %v3588
    %v7628 = vunpack.c.h.b16 %v3588
    %v7629 = vunpack.c.l.b16 %v3589
    %v7630 = vunpack.c.h.b16 %v3589
    %v7631 = vunpack.c.l.b16 %v3590
    %v7632 = vunpack.c.h.b16 %v3590
    %v7633 = vunpack.c.l.b16 %v3591
    %v7634 = vunpack.c.h.b16 %v3591
    %v7635 = vunpack.c.l.b16 %v3592
    %v7636 = vunpack.c.h.b16 %v3592
    %v7637 = vunpack.c.l.b16 %v3593
    %v7638 = vunpack.c.h.b16 %v3593
    %v7639 = vunpack.c.l.b16 %v3594
    %v7640 = vunpack.c.h.b16 %v3594
    %v7641 = vunpack.c.l.b16 %v3595
    %v7642 = vunpack.c.h.b16 %v3595
    %v7643 = vunpack.c.l.b16 %v3596
    %v7644 = vunpack.c.h.b16 %v3596
    %v7645 = vunpack.c.l.b16 %v3597
    %v7646 = vunpack.c.h.b16 %v3597
    %v7647 = vunpack.c.l.b16 %v3598
    %v7648 = vunpack.c.h.b16 %v3598
    %v7649 = vunpack.c.l.b16 %v3599
    %v7650 = vunpack.c.h.b16 %v3599
    %v7651 = vunpack.c.l.b16 %v3600
    %v7652 = vunpack.c.h.b16 %v3600
    %v7653 = vunpack.c.l.b16 %v3601
    %v7654 = vunpack.c.h.b16 %v3601
    %v7655 = vunpack.c.l.b16 %v3602
    %v7656 = vunpack.c.h.b16 %v3602
    %v7657 = vunpack.c.l.b16 %v3603
    %v7658 = vunpack.c.h.b16 %v3603
    %v7659 = vunpack.c.l.b16 %v3604
    %v7660 = vunpack.c.h.b16 %v3604
    %v7661 = vunpack.c.l.b16 %v3605
    %v7662 = vunpack.c.h.b16 %v3605
    %v7663 = vunpack.c.l.b16 %v3606
    %v7664 = vunpack.c.h.b16 %v3606
    %v7665 = vunpack.c.l.b16 %v3607
    %v7666 = vunpack.c.h.b16 %v3607
    %v7667 = vunpack.c.l.b16 %v3608
    %v7668 = vunpack.c.h.b16 %v3608
    %v7669 = vunpack.c.l.b16 %v3609
    %v7670 = vunpack.c.h.b16 %v3609
    %v7671 = vunpack.c.l.b16 %v3610
    %v7672 = vunpack.c.h.b16 %v3610
    %v7673 = vunpack.c.l.b16 %v3611
    %v7674 = vunpack.c.h.b16 %v3611
    %v7675 = vunpack.c.l.b16 %v3612
    %v7676 = vunpack.c.h.b16 %v3612
    %v7677 = vunpack.c.l.b16 %v3613
    %v7678 = vunpack.c.h.b16 %v3613
    %v7679 = vunpack.c.l.b16 %v3614
    %v7680 = vunpack.c.h.b16 %v3614
    %v7681 = vunpack.c.l.b16 %v3615
    %v7682 = vunpack.c.h.b16 %v3615
    %v7683 = vunpack.c.l.b16 %v3616
    %v7684 = vunpack.c.h.b16 %v3616
    %v7685 = vunpack.c.l.b16 %v3617
    %v7686 = vunpack.c.h.b16 %v3617
    %v7687 = vunpack.c.l.b16 %v3618
    %v7688 = vunpack.c.h.b16 %v3618
    %v7689 = vunpack.c.l.b16 %v3619
    %v7690 = vunpack.c.h.b16 %v3619
    %v7691 = vunpack.c.l.b16 %v3620
    %v7692 = vunpack.c.h.b16 %v3620
    %v7693 = vunpack.c.l.b16 %v3621
    %v7694 = vunpack.c.h.b16 %v3621
    %v7695 = vunpack.c.l.b16 %v3622
    %v7696 = vunpack.c.h.b16 %v3622
    %v7697 = vunpack.c.l.b16 %v3623
    %v7698 = vunpack.c.h.b16 %v3623
    %v7699 = vunpack.c.l.b16 %v3624
    %v7700 = vunpack.c.h.b16 %v3624
    %v7701 = vunpack.c.l.b16 %v3625
    %v7702 = vunpack.c.h.b16 %v3625
    %v7703 = vunpack.c.l.b16 %v3626
    %v7704 = vunpack.c.h.b16 %v3626
    %v7705 = vunpack.c.l.b16 %v3627
    %v7706 = vunpack.c.h.b16 %v3627
    %v7707 = vunpack.c.l.b16 %v3628
    %v7708 = vunpack.c.h.b16 %v3628
    %v7709 = vunpack.c.l.b16 %v3629
    %v7710 = vunpack.c.h.b16 %v3629
    %v7711 = vunpack.c.l.b16 %v3630
    %v7712 = vunpack.c.h.b16 %v3630
    %v7713 = vunpack.c.l.b16 %v3631
    %v7714 = vunpack.c.h.b16 %v3631
    %v7715 = vunpack.c.l.b16 %v3632
    %v7716 = vunpack.c.h.b16 %v3632
    %v7717 = vunpack.c.l.b16 %v3633
    %v7718 = vunpack.c.h.b16 %v3633
    %v7719 = vunpack.c.l.b16 %v3634
    %v7720 = vunpack.c.h.b16 %v3634
    %v7721 = vunpack.c.l.b16 %v3635
    %v7722 = vunpack.c.h.b16 %v3635
    %v7723 = vunpack.c.l.b16 %v3636
    %v7724 = vunpack.c.h.b16 %v3636
    %v7725 = vunpack.c.l.b16 %v3637
    %v7726 = vunpack.c.h.b16 %v3637
    %v7727 = vunpack.c.l.b16 %v3638
    %v7728 = vunpack.c.h.b16 %v3638
    %v7729 = vunpack.c.l.b16 %v3639
    %v7730 = vunpack.c.h.b16 %v3639
    %v7731 = vunpack.c.l.b16 %v3640
    %v7732 = vunpack.c.h.b16 %v3640
    %v7733 = vunpack.c.l.b16 %v3641
    %v7734 = vunpack.c.h.b16 %v3641
    %v7735 = vunpack.c.l.b16 %v3642
    %v7736 = vunpack.c.h.b16 %v3642
    %v7737 = vunpack.c.l.b16 %v3643
    %v7738 = vunpack.c.h.b16 %v3643
    %v7739 = vunpack.c.l.b16 %v3644
    %v7740 = vunpack.c.h.b16 %v3644
    %v7741 = vunpack.c.l.b16 %v3645
    %v7742 = vunpack.c.h.b16 %v3645
    %v7743 = vunpack.c.l.b16 %v3646
    %v7744 = vunpack.c.h.b16 %v3646
    %v7745 = vunpack.c.l.b16 %v3647
    %v7746 = vunpack.c.h.b16 %v3647
    %v7747 = vunpack.c.l.b16 %v3648
    %v7748 = vunpack.c.h.b16 %v3648
    %v7749 = vunpack.c.l.b16 %v3649
    %v7750 = vunpack.c.h.b16 %v3649
    %v7751 = vunpack.c.l.b16 %v3650
    %v7752 = vunpack.c.h.b16 %v3650
    %v7753 = vunpack.c.l.b16 %v3651
    %v7754 = vunpack.c.h.b16 %v3651
    %v7755 = vunpack.c.l.b16 %v3652
    %v7756 = vunpack.c.h.b16 %v3652
    %v7757 = vunpack.c.l.b16 %v3653
    %v7758 = vunpack.c.h.b16 %v3653
    %v7759 = vunpack.c.l.b16 %v3654
    %v7760 = vunpack.c.h.b16 %v3654
    %v7761 = vunpack.c.l.b16 %v3655
    %v7762 = vunpack.c.h.b16 %v3655
    %v7763 = vunpack.c.l.b16 %v3656
    %v7764 = vunpack.c.h.b16 %v3656
    %v7765 = vunpack.c.l.b16 %v3657
    %v7766 = vunpack.c.h.b16 %v3657
    %v7767 = vunpack.c.l.b16 %v3658
    %v7768 = vunpack.c.h.b16 %v3658
    %v7769 = vunpack.c.l.b16 %v3659
    %v7770 = vunpack.c.h.b16 %v3659
    %v7771 = vunpack.c.l.b16 %v3660
    %v7772 = vunpack.c.h.b16 %v3660
    %v7773 = vunpack.c.l.b16 %v3661
    %v7774 = vunpack.c.h.b16 %v3661
    %v7775 = vunpack.c.l.b16 %v3662
    %v7776 = vunpack.c.h.b16 %v3662
    %v7777 = vunpack.c.l.b16 %v3663
    %v7778 = vunpack.c.h.b16 %v3663
    %v7779 = vunpack.c.l.b16 %v3664
    %v7780 = vunpack.c.h.b16 %v3664
    %v7781 = vunpack.c.l.b16 %v3665
    %v7782 = vunpack.c.h.b16 %v3665
    %v7783 = vunpack.c.l.b16 %v3666
    %v7784 = vunpack.c.h.b16 %v3666
    %v7785 = vunpack.c.l.b16 %v3667
    %v7786 = vunpack.c.h.b16 %v3667
    %v7787 = vunpack.c.l.b16 %v3668
    %v7788 = vunpack.c.h.b16 %v3668
    %v7789 = vunpack.c.l.b16 %v3669
    %v7790 = vunpack.c.h.b16 %v3669
    %v7791 = vunpack.c.l.b16 %v3670
    %v7792 = vunpack.c.h.b16 %v3670
    %v7793 = vunpack.c.l.b16 %v3671
    %v7794 = vunpack.c.h.b16 %v3671
    %v7795 = vunpack.c.l.b16 %v3672
    %v7796 = vunpack.c.h.b16 %v3672
    %v7797 = vunpack.c.l.b16 %v3673
    %v7798 = vunpack.c.h.b16 %v3673
    %v7799 = vunpack.c.l.b16 %v3674
    %v7800 = vunpack.c.h.b16 %v3674
    %v7801 = vunpack.c.l.b16 %v3675
    %v7802 = vunpack.c.h.b16 %v3675
    %v7803 = vunpack.c.l.b16 %v3676
    %v7804 = vunpack.c.h.b16 %v3676
    %v7805 = vunpack.c.l.b16 %v3677
    %v7806 = vunpack.c.h.b16 %v3677
    %v7807 = vunpack.c.l.b16 %v3678
    %v7808 = vunpack.c.h.b16 %v3678
    %v7809 = vunpack.c.l.b16 %v3679
    %v7810 = vunpack.c.h.b16 %v3679
    %v7811 = vunpack.c.l.b16 %v3680
    %v7812 = vunpack.c.h.b16 %v3680
    %v7813 = vunpack.c.l.b16 %v3681
    %v7814 = vunpack.c.h.b16 %v3681
    %v7815 = vunpack.c.l.b16 %v3682
    %v7816 = vunpack.c.h.b16 %v3682
    %v7817 = vunpack.c.l.b16 %v3683
    %v7818 = vunpack.c.h.b16 %v3683
    %v7819 = vunpack.c.l.b16 %v3684
    %v7820 = vunpack.c.h.b16 %v3684
    %v7821 = vunpack.c.l.b16 %v3685
    %v7822 = vunpack.c.h.b16 %v3685
    %v7823 = vunpack.c.l.b16 %v3686
    %v7824 = vunpack.c.h.b16 %v3686
    %v7825 = vunpack.c.l.b16 %v3687
    %v7826 = vunpack.c.h.b16 %v3687
    %v7827 = vunpack.c.l.b16 %v3688
    %v7828 = vunpack.c.h.b16 %v3688
    %v7829 = vunpack.c.l.b16 %v3689
    %v7830 = vunpack.c.h.b16 %v3689
    %v7831 = vunpack.c.l.b16 %v3690
    %v7832 = vunpack.c.h.b16 %v3690
    %v7833 = vunpack.c.l.b16 %v3691
    %v7834 = vunpack.c.h.b16 %v3691
    %v7835 = vunpack.c.l.b16 %v3692
    %v7836 = vunpack.c.h.b16 %v3692
    %v7837 = vunpack.c.l.b16 %v3693
    %v7838 = vunpack.c.h.b16 %v3693
    %v7839 = vunpack.c.l.b16 %v3694
    %v7840 = vunpack.c.h.b16 %v3694
    %v7841 = vunpack.c.l.b16 %v3695
    %v7842 = vunpack.c.h.b16 %v3695
    %v7843 = vunpack.c.l.b16 %v3696
    %v7844 = vunpack.c.h.b16 %v3696
    %v7845 = vunpack.c.l.b16 %v3697
    %v7846 = vunpack.c.h.b16 %v3697
    %v7847 = vunpack.c.l.b16 %v3698
    %v7848 = vunpack.c.h.b16 %v3698
    %v7849 = vunpack.c.l.b16 %v3699
    %v7850 = vunpack.c.h.b16 %v3699
    %v7851 = vunpack.c.l.b16 %v3700
    %v7852 = vunpack.c.h.b16 %v3700
    %v7853 = vunpack.c.l.b16 %v3701
    %v7854 = vunpack.c.h.b16 %v3701
    %v7855 = vunpack.c.l.b16 %v3702
    %v7856 = vunpack.c.h.b16 %v3702
    %v7857 = vunpack.c.l.b16 %v3703
    %v7858 = vunpack.c.h.b16 %v3703
    %v7859 = vunpack.c.l.b16 %v3704
    %v7860 = vunpack.c.h.b16 %v3704
    %v7861 = vunpack.c.l.b16 %v3705
    %v7862 = vunpack.c.h.b16 %v3705
    %v7863 = vunpack.c.l.b16 %v3706
    %v7864 = vunpack.c.h.b16 %v3706
    %v7865 = vunpack.c.l.b16 %v3707
    %v7866 = vunpack.c.h.b16 %v3707
    %v7867 = vunpack.c.l.b16 %v3708
    %v7868 = vunpack.c.h.b16 %v3708
    %v7869 = vunpack.c.l.b16 %v3709
    %v7870 = vunpack.c.h.b16 %v3709
    %v7871 = vunpack.c.l.b16 %v3710
    %v7872 = vunpack.c.h.b16 %v3710
    %v7873 = vunpack.c.l.b16 %v3711
    %v7874 = vunpack.c.h.b16 %v3711
    %v7875 = vunpack.c.l.b16 %v3712
    %v7876 = vunpack.c.h.b16 %v3712
    %v7877 = vunpack.c.l.b16 %v3713
    %v7878 = vunpack.c.h.b16 %v3713
    %v7879 = vunpack.c.l.b16 %v3714
    %v7880 = vunpack.c.h.b16 %v3714
    %v7881 = vunpack.c.l.b16 %v3715
    %v7882 = vunpack.c.h.b16 %v3715
    %v7883 = vunpack.c.l.b16 %v3716
    %v7884 = vunpack.c.h.b16 %v3716
    %v7885 = vunpack.c.l.b16 %v3717
    %v7886 = vunpack.c.h.b16 %v3717
    %v7887 = vunpack.c.l.b16 %v3718
    %v7888 = vunpack.c.h.b16 %v3718
    %v7889 = vunpack.c.l.b16 %v3719
    %v7890 = vunpack.c.h.b16 %v3719
    %v7891 = vunpack.c.l.b16 %v3720
    %v7892 = vunpack.c.h.b16 %v3720
    %v7893 = vunpack.c.l.b16 %v3721
    %v7894 = vunpack.c.h.b16 %v3721
    %v7895 = vunpack.c.l.b16 %v3722
    %v7896 = vunpack.c.h.b16 %v3722
    %v7897 = vunpack.c.l.b16 %v3723
    %v7898 = vunpack.c.h.b16 %v3723
    %v7899 = vunpack.c.l.b16 %v3724
    %v7900 = vunpack.c.h.b16 %v3724
    %v7901 = vunpack.c.l.b16 %v3725
    %v7902 = vunpack.c.h.b16 %v3725
    %v7903 = vunpack.c.l.b16 %v3726
    %v7904 = vunpack.c.h.b16 %v3726
    %v7905 = vunpack.c.l.b16 %v3727
    %v7906 = vunpack.c.h.b16 %v3727
    %v7907 = vunpack.c.l.b16 %v3728
    %v7908 = vunpack.c.h.b16 %v3728
    %v7909 = vunpack.c.l.b16 %v3729
    %v7910 = vunpack.c.h.b16 %v3729
    %v7911 = vunpack.c.l.b16 %v3730
    %v7912 = vunpack.c.h.b16 %v3730
    %v7913 = vunpack.c.l.b16 %v3731
    %v7914 = vunpack.c.h.b16 %v3731
    %v7915 = vunpack.c.l.b16 %v3732
    %v7916 = vunpack.c.h.b16 %v3732
    %v7917 = vunpack.c.l.b16 %v3733
    %v7918 = vunpack.c.h.b16 %v3733
    %v7919 = vunpack.c.l.b16 %v3734
    %v7920 = vunpack.c.h.b16 %v3734
    %v7921 = vunpack.c.l.b16 %v3735
    %v7922 = vunpack.c.h.b16 %v3735
    %v7923 = vunpack.c.l.b16 %v3736
    %v7924 = vunpack.c.h.b16 %v3736
    %v7925 = vunpack.c.l.b16 %v3737
    %v7926 = vunpack.c.h.b16 %v3737
    %v7927 = vunpack.c.l.b16 %v3738
    %v7928 = vunpack.c.h.b16 %v3738
    %v7929 = vunpack.c.l.b16 %v3739
    %v7930 = vunpack.c.h.b16 %v3739
    %v7931 = vunpack.c.l.b16 %v3740
    %v7932 = vunpack.c.h.b16 %v3740
    %v7933 = vunpack.c.l.b16 %v3741
    %v7934 = vunpack.c.h.b16 %v3741
    %v7935 = vunpack.c.l.b16 %v3742
    %v7936 = vunpack.c.h.b16 %v3742
    %v7937 = vunpack.c.l.b16 %v3743
    %v7938 = vunpack.c.h.b16 %v3743
    %v7939 = vunpack.c.l.b16 %v3744
    %v7940 = vunpack.c.h.b16 %v3744
    %v7941 = vunpack.c.l.b16 %v3745
    %v7942 = vunpack.c.h.b16 %v3745
    %v7943 = vunpack.c.l.b16 %v3746
    %v7944 = vunpack.c.h.b16 %v3746
    %v7945 = vunpack.c.l.b16 %v3747
    %v7946 = vunpack.c.h.b16 %v3747
    %v7947 = vunpack.c.l.b16 %v3748
    %v7948 = vunpack.c.h.b16 %v3748
    %v7949 = vunpack.c.l.b16 %v3749
    %v7950 = vunpack.c.h.b16 %v3749
    %v7951 = vunpack.c.l.b16 %v3750
    %v7952 = vunpack.c.h.b16 %v3750
    %v7953 = vunpack.c.l.b16 %v3751
    %v7954 = vunpack.c.h.b16 %v3751
    %v7955 = vunpack.c.l.b16 %v3752
    %v7956 = vunpack.c.h.b16 %v3752
    %v7957 = vunpack.c.l.b16 %v3753
    %v7958 = vunpack.c.h.b16 %v3753
    %v7959 = vunpack.c.l.b16 %v3754
    %v7960 = vunpack.c.h.b16 %v3754
    %v7961 = vunpack.c.l.b16 %v3755
    %v7962 = vunpack.c.h.b16 %v3755
    %v7963 = vunpack.c.l.b16 %v3756
    %v7964 = vunpack.c.h.b16 %v3756
    %v7965 = vunpack.c.l.b16 %v3757
    %v7966 = vunpack.c.h.b16 %v3757
    %v7967 = vunpack.c.l.b16 %v3758
    %v7968 = vunpack.c.h.b16 %v3758
    %v7969 = vunpack.c.l.b16 %v3759
    %v7970 = vunpack.c.h.b16 %v3759
    %v7971 = vunpack.c.l.b16 %v3760
    %v7972 = vunpack.c.h.b16 %v3760
    %v7973 = vunpack.c.l.b16 %v3761
    %v7974 = vunpack.c.h.b16 %v3761
    %v7975 = vunpack.c.l.b16 %v3762
    %v7976 = vunpack.c.h.b16 %v3762
    %v7977 = vunpack.c.l.b16 %v3763
    %v7978 = vunpack.c.h.b16 %v3763
    %v7979 = vunpack.c.l.b16 %v3764
    %v7980 = vunpack.c.h.b16 %v3764
    %v7981 = vunpack.c.l.b16 %v3765
    %v7982 = vunpack.c.h.b16 %v3765
    %v7983 = vunpack.c.l.b16 %v3766
    %v7984 = vunpack.c.h.b16 %v3766
    %v7985 = vunpack.c.l.b16 %v3767
    %v7986 = vunpack.c.h.b16 %v3767
    %v7987 = vunpack.c.l.b16 %v3768
    %v7988 = vunpack.c.h.b16 %v3768
    %v7989 = vunpack.c.l.b16 %v3769
    %v7990 = vunpack.c.h.b16 %v3769
    %v7991 = vunpack.c.l.b16 %v3770
    %v7992 = vunpack.c.h.b16 %v3770
    %v7993 = vunpack.c.l.b16 %v3771
    %v7994 = vunpack.c.h.b16 %v3771
    %v7995 = vunpack.c.l.b16 %v3772
    %v7996 = vunpack.c.h.b16 %v3772
    %v7997 = vunpack.c.l.b16 %v3773
    %v7998 = vunpack.c.h.b16 %v3773
    %v7999 = vunpack.c.l.b16 %v3774
    %v8000 = vunpack.c.h.b16 %v3774
    %v8001 = vunpack.c.l.b16 %v3775
    %v8002 = vunpack.c.h.b16 %v3775
    %v8003 = vunpack.c.l.b16 %v3776
    %v8004 = vunpack.c.h.b16 %v3776
    %v8005 = vunpack.c.l.b16 %v3777
    %v8006 = vunpack.c.h.b16 %v3777
    %v8007 = vunpack.c.l.b16 %v3778
    %v8008 = vunpack.c.h.b16 %v3778
    %v8009 = vunpack.c.l.b16 %v3779
    %v8010 = vunpack.c.h.b16 %v3779
    %v8011 = vunpack.c.l.b16 %v3780
    %v8012 = vunpack.c.h.b16 %v3780
    %v8013 = vunpack.c.l.b16 %v3781
    %v8014 = vunpack.c.h.b16 %v3781
    %v8015 = vunpack.c.l.b16 %v3782
    %v8016 = vunpack.c.h.b16 %v3782
    %v8017 = vunpack.c.l.b16 %v3783
    %v8018 = vunpack.c.h.b16 %v3783
    %v8019 = vunpack.c.l.b16 %v3784
    %v8020 = vunpack.c.h.b16 %v3784
    %v8021 = vunpack.c.l.b16 %v3785
    %v8022 = vunpack.c.h.b16 %v3785
    %v8023 = vunpack.c.l.b16 %v3786
    %v8024 = vunpack.c.h.b16 %v3786
    %v8025 = vunpack.c.l.b16 %v3787
    %v8026 = vunpack.c.h.b16 %v3787
    %v8027 = vunpack.c.l.b16 %v3788
    %v8028 = vunpack.c.h.b16 %v3788
    %v8029 = vunpack.c.l.b16 %v3789
    %v8030 = vunpack.c.h.b16 %v3789
    %v8031 = vunpack.c.l.b16 %v3790
    %v8032 = vunpack.c.h.b16 %v3790
    %v8033 = vunpack.c.l.b16 %v3791
    %v8034 = vunpack.c.h.b16 %v3791
    %v8035 = vunpack.c.l.b16 %v3792
    %v8036 = vunpack.c.h.b16 %v3792
    %v8037 = vunpack.c.l.b16 %v3793
    %v8038 = vunpack.c.h.b16 %v3793
    %v8039 = vunpack.c.l.b16 %v3794
    %v8040 = vunpack.c.h.b16 %v3794
    %v8041 = vunpack.c.l.b16 %v3795
    %v8042 = vunpack.c.h.b16 %v3795
    %v8043 = vunpack.c.l.b16 %v3796
    %v8044 = vunpack.c.h.b16 %v3796
    %v8045 = vunpack.c.l.b16 %v3797
    %v8046 = vunpack.c.h.b16 %v3797
    %v8047 = vunpack.c.l.b16 %v3798
    %v8048 = vunpack.c.h.b16 %v3798
    %v8049 = vunpack.c.l.b16 %v3799
    %v8050 = vunpack.c.h.b16 %v3799
    %v8051 = vunpack.c.l.b16 %v3800
    %v8052 = vunpack.c.h.b16 %v3800
    %v8053 = vunpack.c.l.b16 %v3801
    %v8054 = vunpack.c.h.b16 %v3801
    %v8055 = vunpack.c.l.b16 %v3802
    %v8056 = vunpack.c.h.b16 %v3802
    %v8057 = vunpack.c.l.b16 %v3803
    %v8058 = vunpack.c.h.b16 %v3803
    %v8059 = vunpack.c.l.b16 %v3804
    %v8060 = vunpack.c.h.b16 %v3804
    %v8061 = vunpack.c.l.b16 %v3805
    %v8062 = vunpack.c.h.b16 %v3805
    %v8063 = vunpack.c.l.b16 %v3806
    %v8064 = vunpack.c.h.b16 %v3806
    %v8065 = vunpack.c.l.b16 %v3807
    %v8066 = vunpack.c.h.b16 %v3807
    %v8067 = vunpack.c.l.b16 %v3808
    %v8068 = vunpack.c.h.b16 %v3808
    %v8069 = vunpack.c.l.b16 %v3809
    %v8070 = vunpack.c.h.b16 %v3809
    %v8071 = vunpack.c.l.b16 %v3810
    %v8072 = vunpack.c.h.b16 %v3810
    %v8073 = vunpack.c.l.b16 %v3811
    %v8074 = vunpack.c.h.b16 %v3811
    %v8075 = vunpack.c.l.b16 %v3812
    %v8076 = vunpack.c.h.b16 %v3812
    %v8077 = vunpack.c.l.b16 %v3813
    %v8078 = vunpack.c.h.b16 %v3813
    %v8079 = vunpack.c.l.b16 %v3814
    %v8080 = vunpack.c.h.b16 %v3814
    %v8081 = vunpack.c.l.b16 %v3815
    %v8082 = vunpack.c.h.b16 %v3815
    %v8083 = vunpack.c.l.b16 %v3816
    %v8084 = vunpack.c.h.b16 %v3816
    %v8085 = vunpack.c.l.b16 %v3817
    %v8086 = vunpack.c.h.b16 %v3817
    %v8087 = vunpack.c.l.b16 %v3818
    %v8088 = vunpack.c.h.b16 %v3818
    %v8089 = vunpack.c.l.b16 %v3819
    %v8090 = vunpack.c.h.b16 %v3819
    %v8091 = vunpack.c.l.b16 %v3820
    %v8092 = vunpack.c.h.b16 %v3820
    %v8093 = vunpack.c.l.b16 %v3821
    %v8094 = vunpack.c.h.b16 %v3821
    %v8095 = vunpack.c.l.b16 %v3822
    %v8096 = vunpack.c.h.b16 %v3822
    %v8097 = vunpack.c.l.b16 %v3823
    %v8098 = vunpack.c.h.b16 %v3823
    %v8099 = vunpack.c.l.b16 %v3824
    %v8100 = vunpack.c.h.b16 %v3824
    %v8101 = vunpack.c.l.b16 %v3825
    %v8102 = vunpack.c.h.b16 %v3825
    %v8103 = vunpack.c.l.b16 %v3826
    %v8104 = vunpack.c.h.b16 %v3826
    %v8105 = vunpack.c.l.b16 %v3827
    %v8106 = vunpack.c.h.b16 %v3827
    %v8107 = vunpack.c.l.b16 %v3828
    %v8108 = vunpack.c.h.b16 %v3828
    %v8109 = vunpack.c.l.b16 %v3829
    %v8110 = vunpack.c.h.b16 %v3829
    %v8111 = vunpack.c.l.b16 %v3830
    %v8112 = vunpack.c.h.b16 %v3830
    %v8113 = vunpack.c.l.b16 %v3831
    %v8114 = vunpack.c.h.b16 %v3831
    %v8115 = vunpack.c.l.b16 %v3832
    %v8116 = vunpack.c.h.b16 %v3832
    %v8117 = vunpack.c.l.b16 %v3833
    %v8118 = vunpack.c.h.b16 %v3833
    %v8119 = vunpack.c.l.b16 %v3834
    %v8120 = vunpack.c.h.b16 %v3834
    %v8121 = vunpack.c.l.b16 %v3835
    %v8122 = vunpack.c.h.b16 %v3835
    %v8123 = vunpack.c.l.b16 %v3836
    %v8124 = vunpack.c.h.b16 %v3836
    %v8125 = vunpack.c.l.b16 %v3837
    %v8126 = vunpack.c.h.b16 %v3837
    %v8127 = vunpack.c.l.b16 %v3838
    %v8128 = vunpack.c.h.b16 %v3838
    %v8129 = vunpack.c.l.b16 %v3839
    %v8130 = vunpack.c.h.b16 %v3839
    %v8131 = vunpack.c.l.b16 %v3840
    %v8132 = vunpack.c.h.b16 %v3840
    %v8133 = vunpack.c.l.b16 %v3841
    %v8134 = vunpack.c.h.b16 %v3841
    %v8135 = vunpack.c.l.b16 %v3842
    %v8136 = vunpack.c.h.b16 %v3842
    %v8137 = vunpack.c.l.b16 %v3843
    %v8138 = vunpack.c.h.b16 %v3843
    %v8139 = vunpack.c.l.b16 %v3844
    %v8140 = vunpack.c.h.b16 %v3844
    %v8141 = vunpack.c.l.b16 %v3845
    %v8142 = vunpack.c.h.b16 %v3845
    %v8143 = vunpack.c.l.b16 %v3846
    %v8144 = vunpack.c.h.b16 %v3846
    %v8145 = vunpack.c.l.b16 %v3847
    %v8146 = vunpack.c.h.b16 %v3847
    %v8147 = vunpack.c.l.b16 %v3848
    %v8148 = vunpack.c.h.b16 %v3848
    %v8149 = vunpack.c.l.b16 %v3849
    %v8150 = vunpack.c.h.b16 %v3849
    %v8151 = vunpack.c.l.b16 %v3850
    %v8152 = vunpack.c.h.b16 %v3850
    %v8153 = vunpack.c.l.b16 %v3851
    %v8154 = vunpack.c.h.b16 %v3851
    %v8155 = vunpack.c.l.b16 %v3852
    %v8156 = vunpack.c.h.b16 %v3852
    %v8157 = vunpack.c.l.b16 %v3853
    %v8158 = vunpack.c.h.b16 %v3853
    %v8159 = vunpack.c.l.b16 %v3854
    %v8160 = vunpack.c.h.b16 %v3854
    %v8161 = vunpack.c.l.b16 %v3855
    %v8162 = vunpack.c.h.b16 %v3855
    %v8163 = vunpack.c.l.b16 %v3856
    %v8164 = vunpack.c.h.b16 %v3856
    %v8165 = vunpack.c.l.b16 %v3857
    %v8166 = vunpack.c.h.b16 %v3857
    %v8167 = vunpack.c.l.b16 %v3858
    %v8168 = vunpack.c.h.b16 %v3858
    %v8169 = vunpack.c.l.b16 %v3859
    %v8170 = vunpack.c.h.b16 %v3859
    %v8171 = vunpack.c.l.b16 %v3860
    %v8172 = vunpack.c.h.b16 %v3860
    %v8173 = vunpack.c.l.b16 %v3861
    %v8174 = vunpack.c.h.b16 %v3861
    %v8175 = vunpack.c.l.b16 %v3862
    %v8176 = vunpack.c.h.b16 %v3862
    %v8177 = vunpack.c.l.b16 %v3863
    %v8178 = vunpack.c.h.b16 %v3863
    %v8179 = vunpack.c.l.b16 %v3864
    %v8180 = vunpack.c.h.b16 %v3864
    %v8181 = vunpack.c.l.b16 %v3865
    %v8182 = vunpack.c.h.b16 %v3865
    %v8183 = vunpack.c.l.b16 %v3866
    %v8184 = vunpack.c.h.b16 %v3866
    %v8185 = vunpack.c.l.b16 %v3867
    %v8186 = vunpack.c.h.b16 %v3867
    %v8187 = vunpack.c.l.b16 %v3868
    %v8188 = vunpack.c.h.b16 %v3868
    %v8189 = vunpack.c.l.b16 %v3869
    %v8190 = vunpack.c.h.b16 %v3869
    %v8191 = vunpack.c.l.b16 %v3870
    %v8192 = vunpack.c.h.b16 %v3870
    %v8193 = vunpack.c.l.b16 %v3871
    %v8194 = vunpack.c.h.b16 %v3871
    %v8195 = vunpack.c.l.b16 %v3872
    %v8196 = vunpack.c.h.b16 %v3872
    %v8197 = vunpack.c.l.b16 %v3873
    %v8198 = vunpack.c.h.b16 %v3873
    %v8199 = vunpack.c.l.b16 %v3874
    %v8200 = vunpack.c.h.b16 %v3874
    %v8201 = vunpack.c.l.b16 %v3875
    %v8202 = vunpack.c.h.b16 %v3875
    %v8203 = vunpack.c.l.b16 %v3876
    %v8204 = vunpack.c.h.b16 %v3876
    %v8205 = vunpack.c.l.b16 %v3877
    %v8206 = vunpack.c.h.b16 %v3877
    %v8207 = vunpack.c.l.b16 %v3878
    %v8208 = vunpack.c.h.b16 %v3878
    %v8209 = vunpack.c.l.b16 %v3879
    %v8210 = vunpack.c.h.b16 %v3879
    %v8211 = vunpack.c.l.b16 %v3880
    %v8212 = vunpack.c.h.b16 %v3880
    %v8213 = vunpack.c.l.b16 %v3881
    %v8214 = vunpack.c.h.b16 %v3881
    %v8215 = vunpack.c.l.b16 %v3882
    %v8216 = vunpack.c.h.b16 %v3882
    %v8217 = vunpack.c.l.b16 %v3883
    %v8218 = vunpack.c.h.b16 %v3883
    %v8219 = vunpack.c.l.b16 %v3884
    %v8220 = vunpack.c.h.b16 %v3884
    %v8221 = vunpack.c.l.b16 %v3885
    %v8222 = vunpack.c.h.b16 %v3885
    %v8223 = vunpack.c.l.b16 %v3886
    %v8224 = vunpack.c.h.b16 %v3886
    %v8225 = vunpack.c.l.b16 %v3887
    %v8226 = vunpack.c.h.b16 %v3887
    %v8227 = vunpack.c.l.b16 %v3888
    %v8228 = vunpack.c.h.b16 %v3888
    %v8229 = vunpack.c.l.b16 %v3889
    %v8230 = vunpack.c.h.b16 %v3889
    %v8231 = vunpack.c.l.b16 %v3890
    %v8232 = vunpack.c.h.b16 %v3890
    %v8233 = vunpack.c.l.b16 %v3891
    %v8234 = vunpack.c.h.b16 %v3891
    %v8235 = vunpack.c.l.b16 %v3892
    %v8236 = vunpack.c.h.b16 %v3892
    %v8237 = vunpack.c.l.b16 %v3893
    %v8238 = vunpack.c.h.b16 %v3893
    %v8239 = vunpack.c.l.b16 %v3894
    %v8240 = vunpack.c.h.b16 %v3894
    %v8241 = vunpack.c.l.b16 %v3895
    %v8242 = vunpack.c.h.b16 %v3895
    %v8243 = vunpack.c.l.b16 %v3896
    %v8244 = vunpack.c.h.b16 %v3896
    %v8245 = vunpack.c.l.b16 %v3897
    %v8246 = vunpack.c.h.b16 %v3897
    %v8247 = vunpack.c.l.b16 %v3898
    %v8248 = vunpack.c.h.b16 %v3898
    %v8249 = vunpack.c.l.b16 %v3899
    %v8250 = vunpack.c.h.b16 %v3899
    %v8251 = vunpack.c.l.b16 %v3900
    %v8252 = vunpack.c.h.b16 %v3900
    %v8253 = vunpack.c.l.b16 %v3901
    %v8254 = vunpack.c.h.b16 %v3901
    %v8255 = vunpack.c.l.b16 %v3902
    %v8256 = vunpack.c.h.b16 %v3902
    %v8257 = vunpack.c.l.b16 %v3903
    %v8258 = vunpack.c.h.b16 %v3903
    %v8259 = vunpack.c.l.b16 %v3904
    %v8260 = vunpack.c.h.b16 %v3904
    %v8261 = vunpack.c.l.b16 %v3905
    %v8262 = vunpack.c.h.b16 %v3905
    %v8263 = vunpack.c.l.b16 %v3906
    %v8264 = vunpack.c.h.b16 %v3906
    %v8265 = vunpack.c.l.b16 %v3907
    %v8266 = vunpack.c.h.b16 %v3907
    %v8267 = vunpack.c.l.b16 %v3908
    %v8268 = vunpack.c.h.b16 %v3908
    %v8269 = vunpack.c.l.b16 %v3909
    %v8270 = vunpack.c.h.b16 %v3909
    %v8271 = vunpack.c.l.b16 %v3910
    %v8272 = vunpack.c.h.b16 %v3910
    %v8273 = vunpack.c.l.b16 %v3911
    %v8274 = vunpack.c.h.b16 %v3911
    %v8275 = vunpack.c.l.b16 %v3912
    %v8276 = vunpack.c.h.b16 %v3912
    %v8277 = vunpack.c.l.b16 %v3913
    %v8278 = vunpack.c.h.b16 %v3913
    %v8279 = vunpack.c.l.b16 %v3914
    %v8280 = vunpack.c.h.b16 %v3914
    %v8281 = vunpack.c.l.b16 %v3915
    %v8282 = vunpack.c.h.b16 %v3915
    %v8283 = vunpack.c.l.b16 %v3916
    %v8284 = vunpack.c.h.b16 %v3916
    %v8285 = vunpack.c.l.b16 %v3917
    %v8286 = vunpack.c.h.b16 %v3917
    %v8287 = vunpack.c.l.b16 %v3918
    %v8288 = vunpack.c.h.b16 %v3918
    %v8289 = vunpack.c.l.b16 %v3919
    %v8290 = vunpack.c.h.b16 %v3919
    %v8291 = vunpack.c.l.b16 %v3920
    %v8292 = vunpack.c.h.b16 %v3920
    %v8293 = vunpack.c.l.b16 %v3921
    %v8294 = vunpack.c.h.b16 %v3921
    %v8295 = vunpack.c.l.b16 %v3922
    %v8296 = vunpack.c.h.b16 %v3922
    %v8297 = vunpack.c.l.b16 %v3923
    %v8298 = vunpack.c.h.b16 %v3923
    %v8299 = vunpack.c.l.b16 %v3924
    %v8300 = vunpack.c.h.b16 %v3924
    %v8301 = vunpack.c.l.b16 %v3925
    %v8302 = vunpack.c.h.b16 %v3925
    %v8303 = vunpack.c.l.b16 %v3926
    %v8304 = vunpack.c.h.b16 %v3926
    %v8305 = vunpack.c.l.b16 %v3927
    %v8306 = vunpack.c.h.b16 %v3927
    %v8307 = vunpack.c.l.b16 %v3928
    %v8308 = vunpack.c.h.b16 %v3928
    %v8309 = vunpack.c.l.b16 %v3929
    %v8310 = vunpack.c.h.b16 %v3929
    %v8311 = vunpack.c.l.b16 %v3930
    %v8312 = vunpack.c.h.b16 %v3930
    %v8313 = vunpack.c.l.b16 %v3931
    %v8314 = vunpack.c.h.b16 %v3931
    %v8315 = vunpack.c.l.b16 %v3932
    %v8316 = vunpack.c.h.b16 %v3932
    %v8317 = vunpack.c.l.b16 %v3933
    %v8318 = vunpack.c.h.b16 %v3933
    %v8319 = vunpack.c.l.b16 %v3934
    %v8320 = vunpack.c.h.b16 %v3934
    %v8321 = vunpack.c.l.b16 %v3935
    %v8322 = vunpack.c.h.b16 %v3935
    %v8323 = vunpack.c.l.b16 %v3936
    %v8324 = vunpack.c.h.b16 %v3936
    %v8325 = vunpack.c.l.b16 %v3937
    %v8326 = vunpack.c.h.b16 %v3937
    %v8327 = vunpack.c.l.b16 %v3938
    %v8328 = vunpack.c.h.b16 %v3938
    %v8329 = vunpack.c.l.b16 %v3939
    %v8330 = vunpack.c.h.b16 %v3939
    %v8331 = vunpack.c.l.b16 %v3940
    %v8332 = vunpack.c.h.b16 %v3940
    %v8333 = vunpack.c.l.b16 %v3941
    %v8334 = vunpack.c.h.b16 %v3941
    %v8335 = vunpack.c.l.b16 %v3942
    %v8336 = vunpack.c.h.b16 %v3942
    %v8337 = vunpack.c.l.b16 %v3943
    %v8338 = vunpack.c.h.b16 %v3943
    %v8339 = vunpack.c.l.b16 %v3944
    %v8340 = vunpack.c.h.b16 %v3944
    %v8341 = vunpack.c.l.b16 %v3945
    %v8342 = vunpack.c.h.b16 %v3945
    %v8343 = vunpack.c.l.b16 %v3946
    %v8344 = vunpack.c.h.b16 %v3946
    %v8345 = vunpack.c.l.b16 %v3947
    %v8346 = vunpack.c.h.b16 %v3947
    %v8347 = vunpack.c.l.b16 %v3948
    %v8348 = vunpack.c.h.b16 %v3948
    %v8349 = vunpack.c.l.b16 %v3949
    %v8350 = vunpack.c.h.b16 %v3949
    %v8351 = vunpack.c.l.b16 %v3950
    %v8352 = vunpack.c.h.b16 %v3950
    %v8353 = vunpack.c.l.b16 %v3951
    %v8354 = vunpack.c.h.b16 %v3951
    %v8355 = vunpack.c.l.b16 %v3952
    %v8356 = vunpack.c.h.b16 %v3952
    %v8357 = vunpack.c.l.b16 %v3953
    %v8358 = vunpack.c.h.b16 %v3953
    %v8359 = vunpack.c.l.b16 %v3954
    %v8360 = vunpack.c.h.b16 %v3954
    %v8361 = vunpack.c.l.b16 %v3955
    %v8362 = vunpack.c.h.b16 %v3955
    %v8363 = vunpack.c.l.b16 %v3956
    %v8364 = vunpack.c.h.b16 %v3956
    %v8365 = vunpack.c.l.b16 %v3957
    %v8366 = vunpack.c.h.b16 %v3957
    %v8367 = vunpack.c.l.b16 %v3958
    %v8368 = vunpack.c.h.b16 %v3958
    %v8369 = vunpack.c.l.b16 %v3959
    %v8370 = vunpack.c.h.b16 %v3959
    %v8371 = vunpack.c.l.b16 %v3960
    %v8372 = vunpack.c.h.b16 %v3960
    %v8373 = vunpack.c.l.b16 %v3961
    %v8374 = vunpack.c.h.b16 %v3961
    %v8375 = vunpack.c.l.b16 %v3962
    %v8376 = vunpack.c.h.b16 %v3962
    %v8377 = vunpack.c.l.b16 %v3963
    %v8378 = vunpack.c.h.b16 %v3963
    %v8379 = vunpack.c.l.b16 %v3964
    %v8380 = vunpack.c.h.b16 %v3964
    %v8381 = vunpack.c.l.b16 %v3965
    %v8382 = vunpack.c.h.b16 %v3965
    %v8383 = vunpack.c.l.b16 %v3966
    %v8384 = vunpack.c.h.b16 %v3966
    %v8385 = vunpack.c.l.b16 %v3967
    %v8386 = vunpack.c.h.b16 %v3967
    %v8387 = vunpack.c.l.b16 %v3968
    %v8388 = vunpack.c.h.b16 %v3968
    %v8389 = vunpack.c.l.b16 %v3969
    %v8390 = vunpack.c.h.b16 %v3969
    %v8391 = vunpack.c.l.b16 %v3970
    %v8392 = vunpack.c.h.b16 %v3970
    %v8393 = vunpack.c.l.b16 %v3971
    %v8394 = vunpack.c.h.b16 %v3971
    %v8395 = vunpack.c.l.b16 %v3972
    %v8396 = vunpack.c.h.b16 %v3972
    %v8397 = vunpack.c.l.b16 %v3973
    %v8398 = vunpack.c.h.b16 %v3973
    %v8399 = vunpack.c.l.b16 %v3974
    %v8400 = vunpack.c.h.b16 %v3974
    %v8401 = vunpack.c.l.b16 %v3975
    %v8402 = vunpack.c.h.b16 %v3975
    %v8403 = vunpack.c.l.b16 %v3976
    %v8404 = vunpack.c.h.b16 %v3976
    %v8405 = vunpack.c.l.b16 %v3977
    %v8406 = vunpack.c.h.b16 %v3977
    %v8407 = vunpack.c.l.b16 %v3978
    %v8408 = vunpack.c.h.b16 %v3978
    %v8409 = vunpack.c.l.b16 %v3979
    %v8410 = vunpack.c.h.b16 %v3979
    %v8411 = vunpack.c.l.b16 %v3980
    %v8412 = vunpack.c.h.b16 %v3980
    %v8413 = vunpack.c.l.b16 %v3981
    %v8414 = vunpack.c.h.b16 %v3981
    %v8415 = vunpack.c.l.b16 %v3982
    %v8416 = vunpack.c.h.b16 %v3982
    %v8417 = vunpack.c.l.b16 %v3983
    %v8418 = vunpack.c.h.b16 %v3983
    %v8419 = vunpack.c.l.b16 %v3984
    %v8420 = vunpack.c.h.b16 %v3984
    %v8421 = vunpack.c.l.b16 %v3985
    %v8422 = vunpack.c.h.b16 %v3985
    %v8423 = vunpack.c.l.b16 %v3986
    %v8424 = vunpack.c.h.b16 %v3986
    %v8425 = vunpack.c.l.b16 %v3987
    %v8426 = vunpack.c.h.b16 %v3987
    %v8427 = vunpack.c.l.b16 %v3988
    %v8428 = vunpack.c.h.b16 %v3988
    %v8429 = vunpack.c.l.b16 %v3989
    %v8430 = vunpack.c.h.b16 %v3989
    %v8431 = vunpack.c.l.b16 %v3990
    %v8432 = vunpack.c.h.b16 %v3990
    %v8433 = vunpack.c.l.b16 %v3991
    %v8434 = vunpack.c.h.b16 %v3991
    %v8435 = vunpack.c.l.b16 %v3992
    %v8436 = vunpack.c.h.b16 %v3992
    %v8437 = vunpack.c.l.b16 %v3993
    %v8438 = vunpack.c.h.b16 %v3993
    %v8439 = vunpack.c.l.b16 %v3994
    %v8440 = vunpack.c.h.b16 %v3994
    %v8441 = vunpack.c.l.b16 %v3995
    %v8442 = vunpack.c.h.b16 %v3995
    %v8443 = vunpack.c.l.b16 %v3996
    %v8444 = vunpack.c.h.b16 %v3996
    %v8445 = vunpack.c.l.b16 %v3997
    %v8446 = vunpack.c.h.b16 %v3997
    %v8447 = vunpack.c.l.b16 %v3998
    %v8448 = vunpack.c.h.b16 %v3998
    %v8449 = vunpack.c.l.b16 %v3999
    %v8450 = vunpack.c.h.b16 %v3999
    %v8451 = vunpack.c.l.b16 %v4000
    %v8452 = vunpack.c.h.b16 %v4000
    %v8453 = vunpack.c.l.b16 %v4001
    %v8454 = vunpack.c.h.b16 %v4001
    %v8455 = vunpack.c.l.b16 %v4002
    %v8456 = vunpack.c.h.b16 %v4002
    %v8457 = vunpack.c.l.b16 %v4003
    %v8458 = vunpack.c.h.b16 %v4003
    %v8459 = vunpack.c.l.b16 %v4004
    %v8460 = vunpack.c.h.b16 %v4004
    %v8461 = vunpack.c.l.b16 %v4005
    %v8462 = vunpack.c.h.b16 %v4005
    %v8463 = vunpack.c.l.b16 %v4006
    %v8464 = vunpack.c.h.b16 %v4006
    %v8465 = vunpack.c.l.b16 %v4007
    %v8466 = vunpack.c.h.b16 %v4007
    %v8467 = vunpack.c.l.b16 %v4008
    %v8468 = vunpack.c.h.b16 %v4008
    %v8469 = vunpack.c.l.b16 %v4009
    %v8470 = vunpack.c.h.b16 %v4009
    %v8471 = vunpack.c.l.b16 %v4010
    %v8472 = vunpack.c.h.b16 %v4010
    %v8473 = vunpack.c.l.b16 %v4011
    %v8474 = vunpack.c.h.b16 %v4011
    %v8475 = vunpack.c.l.b16 %v4012
    %v8476 = vunpack.c.h.b16 %v4012
    %v8477 = vunpack.c.l.b16 %v4013
    %v8478 = vunpack.c.h.b16 %v4013
    %v8479 = vunpack.c.l.b16 %v4014
    %v8480 = vunpack.c.h.b16 %v4014
    %v8481 = vunpack.c.l.b16 %v4015
    %v8482 = vunpack.c.h.b16 %v4015
    %v8483 = vunpack.c.l.b16 %v4016
    %v8484 = vunpack.c.h.b16 %v4016
    %v8485 = vunpack.c.l.b16 %v4017
    %v8486 = vunpack.c.h.b16 %v4017
    %v8487 = vunpack.c.l.b16 %v4018
    %v8488 = vunpack.c.h.b16 %v4018
    %v8489 = vunpack.c.l.b16 %v4019
    %v8490 = vunpack.c.h.b16 %v4019
    %v8491 = vunpack.c.l.b16 %v4020
    %v8492 = vunpack.c.h.b16 %v4020
    %v8493 = vunpack.c.l.b16 %v4021
    %v8494 = vunpack.c.h.b16 %v4021
    %v8495 = vunpack.c.l.b16 %v4022
    %v8496 = vunpack.c.h.b16 %v4022
    %v8497 = vunpack.c.l.b16 %v4023
    %v8498 = vunpack.c.h.b16 %v4023
    %v8499 = vunpack.c.l.b16 %v4024
    %v8500 = vunpack.c.h.b16 %v4024
    %v8501 = vunpack.c.l.b16 %v4025
    %v8502 = vunpack.c.h.b16 %v4025
    %v8503 = vunpack.c.l.b16 %v4026
    %v8504 = vunpack.c.h.b16 %v4026
    %v8505 = vunpack.c.l.b16 %v4027
    %v8506 = vunpack.c.h.b16 %v4027
    %v8507 = vunpack.c.l.b16 %v4028
    %v8508 = vunpack.c.h.b16 %v4028
    %v8509 = vunpack.c.l.b16 %v4029
    %v8510 = vunpack.c.h.b16 %v4029
    %v8511 = vunpack.c.l.b16 %v4030
    %v8512 = vunpack.c.h.b16 %v4030
    %v8513 = vunpack.c.l.b16 %v4031
    %v8514 = vunpack.c.h.b16 %v4031
    %v8515 = vunpack.c.l.b16 %v4032
    %v8516 = vunpack.c.h.b16 %v4032
    %v8517 = vunpack.c.l.b16 %v4033
    %v8518 = vunpack.c.h.b16 %v4033
    %v8519 = vunpack.c.l.b16 %v4034
    %v8520 = vunpack.c.h.b16 %v4034
    %v8521 = vunpack.c.l.b16 %v4035
    %v8522 = vunpack.c.h.b16 %v4035
    %v8523 = vunpack.c.l.b16 %v4036
    %v8524 = vunpack.c.h.b16 %v4036
    %v8525 = vunpack.c.l.b16 %v4037
    %v8526 = vunpack.c.h.b16 %v4037
    %v8527 = vunpack.c.l.b16 %v4038
    %v8528 = vunpack.c.h.b16 %v4038
    %v8529 = vunpack.c.l.b16 %v4039
    %v8530 = vunpack.c.h.b16 %v4039
    %v8531 = vunpack.c.l.b16 %v4040
    %v8532 = vunpack.c.h.b16 %v4040
    %v8533 = vunpack.c.l.b16 %v4041
    %v8534 = vunpack.c.h.b16 %v4041
    %v8535 = vunpack.c.l.b16 %v4042
    %v8536 = vunpack.c.h.b16 %v4042
    %v8537 = vunpack.c.l.b16 %v4043
    %v8538 = vunpack.c.h.b16 %v4043
    %v8539 = vunpack.c.l.b16 %v4044
    %v8540 = vunpack.c.h.b16 %v4044
    %v8541 = vunpack.c.l.b16 %v4045
    %v8542 = vunpack.c.h.b16 %v4045
    %v8543 = vunpack.c.l.b16 %v4046
    %v8544 = vunpack.c.h.b16 %v4046
    %v8545 = vunpack.c.l.b16 %v4047
    %v8546 = vunpack.c.h.b16 %v4047
    %v8547 = vunpack.c.l.b16 %v4048
    %v8548 = vunpack.c.h.b16 %v4048
    %v8549 = vunpack.c.l.b16 %v4049
    %v8550 = vunpack.c.h.b16 %v4049
    %v8551 = vunpack.c.l.b16 %v4050
    %v8552 = vunpack.c.h.b16 %v4050
    %v8553 = vunpack.c.l.b16 %v4051
    %v8554 = vunpack.c.h.b16 %v4051
    %v8555 = vunpack.c.l.b16 %v4052
    %v8556 = vunpack.c.h.b16 %v4052
    %v8557 = vunpack.c.l.b16 %v4053
    %v8558 = vunpack.c.h.b16 %v4053
    %v8559 = vunpack.c.l.b16 %v4054
    %v8560 = vunpack.c.h.b16 %v4054
    %v8561 = vunpack.c.l.b16 %v4055
    %v8562 = vunpack.c.h.b16 %v4055
    %v8563 = vunpack.c.l.b16 %v4056
    %v8564 = vunpack.c.h.b16 %v4056
    %v8565 = vunpack.c.l.b16 %v4057
    %v8566 = vunpack.c.h.b16 %v4057
    %v8567 = vunpack.c.l.b16 %v4058
    %v8568 = vunpack.c.h.b16 %v4058
    %v8569 = vunpack.c.l.b16 %v4059
    %v8570 = vunpack.c.h.b16 %v4059
    %v8571 = vunpack.c.l.b16 %v4060
    %v8572 = vunpack.c.h.b16 %v4060
    %v8573 = vunpack.c.l.b16 %v4061
    %v8574 = vunpack.c.h.b16 %v4061
    %v8575 = vunpack.c.l.b16 %v4062
    %v8576 = vunpack.c.h.b16 %v4062
    %v8577 = vunpack.c.l.b16 %v4063
    %v8578 = vunpack.c.h.b16 %v4063
    %v8579 = vunpack.c.l.b16 %v4064
    %v8580 = vunpack.c.h.b16 %v4064
    %v8581 = vunpack.c.l.b16 %v4065
    %v8582 = vunpack.c.h.b16 %v4065
    %v8583 = vunpack.c.l.b16 %v4066
    %v8584 = vunpack.c.h.b16 %v4066
    %v8585 = vunpack.c.l.b16 %v4067
    %v8586 = vunpack.c.h.b16 %v4067
    %v8587 = vunpack.c.l.b16 %v4068
    %v8588 = vunpack.c.h.b16 %v4068
    %v8589 = vunpack.c.l.b16 %v4069
    %v8590 = vunpack.c.h.b16 %v4069
    %v8591 = vunpack.c.l.b16 %v4070
    %v8592 = vunpack.c.h.b16 %v4070
    %v8593 = vunpack.c.l.b16 %v4071
    %v8594 = vunpack.c.h.b16 %v4071
    %v8595 = vunpack.c.l.b16 %v4072
    %v8596 = vunpack.c.h.b16 %v4072
    %v8597 = vunpack.c.l.b16 %v4073
    %v8598 = vunpack.c.h.b16 %v4073
    %v8599 = vunpack.c.l.b16 %v4074
    %v8600 = vunpack.c.h.b16 %v4074
    %v8601 = vunpack.c.l.b16 %v4075
    %v8602 = vunpack.c.h.b16 %v4075
    %v8603 = vunpack.c.l.b16 %v4076
    %v8604 = vunpack.c.h.b16 %v4076
    %v8605 = vunpack.c.l.b16 %v4077
    %v8606 = vunpack.c.h.b16 %v4077
    %v8607 = vunpack.c.l.b16 %v4078
    %v8608 = vunpack.c.h.b16 %v4078
    %v8609 = vunpack.c.l.b16 %v4079
    %v8610 = vunpack.c.h.b16 %v4079
    %v8611 = vunpack.c.l.b16 %v4080
    %v8612 = vunpack.c.h.b16 %v4080
    %v8613 = vunpack.c.l.b16 %v4081
    %v8614 = vunpack.c.h.b16 %v4081
    %v8615 = vunpack.c.l.b16 %v4082
    %v8616 = vunpack.c.h.b16 %v4082
    %v8617 = vunpack.c.l.b16 %v4083
    %v8618 = vunpack.c.h.b16 %v4083
    %v8619 = vunpack.c.l.b16 %v4084
    %v8620 = vunpack.c.h.b16 %v4084
    %v8621 = vunpack.c.l.b16 %v4085
    %v8622 = vunpack.c.h.b16 %v4085
    %v8623 = vunpack.c.l.b16 %v4086
    %v8624 = vunpack.c.h.b16 %v4086
    %v8625 = vunpack.c.l.b16 %v4087
    %v8626 = vunpack.c.h.b16 %v4087
    %v8627 = vunpack.c.l.b16 %v4088
    %v8628 = vunpack.c.h.b16 %v4088
    %v8629 = vunpack.c.l.b16 %v4089
    %v8630 = vunpack.c.h.b16 %v4089
    %v8631 = vunpack.c.l.b16 %v4090
    %v8632 = vunpack.c.h.b16 %v4090
    %v8633 = vunpack.c.l.b16 %v4091
    %v8634 = vunpack.c.h.b16 %v4091
    %v8635 = vunpack.c.l.b16 %v4092
    %v8636 = vunpack.c.h.b16 %v4092
    %v8637 = vunpack.c.l.b16 %v4093
    %v8638 = vunpack.c.h.b16 %v4093
    %v8639 = vunpack.c.l.b16 %v4094
    %v8640 = vunpack.c.h.b16 %v4094
    %v8641 = vunpack.c.l.b16 %v4095
    %v8642 = vunpack.c.h.b16 %v4095
    %v8643 = vunpack.c.l.b16 %v4096
    %v8644 = vunpack.c.h.b16 %v4096
    %v8645 = vunpack.c.l.b16 %v4097
    %v8646 = vunpack.c.h.b16 %v4097
    %v8647 = vunpack.c.l.b16 %v4098
    %v8648 = vunpack.c.h.b16 %v4098
    %v8649 = vunpack.c.l.b16 %v4099
    %v8650 = vunpack.c.h.b16 %v4099
    %v8651 = vunpack.c.l.b16 %v4100
    %v8652 = vunpack.c.h.b16 %v4100
    %v8653 = vunpack.c.l.b16 %v4101
    %v8654 = vunpack.c.h.b16 %v4101
    %v8655 = vunpack.c.l.b16 %v4102
    %v8656 = vunpack.c.h.b16 %v4102
    %v8657 = vunpack.c.l.b16 %v4103
    %v8658 = vunpack.c.h.b16 %v4103
    %v8659 = vunpack.c.l.b16 %v4104
    %v8660 = vunpack.c.h.b16 %v4104
    %v8661 = vunpack.c.l.b16 %v4105
    %v8662 = vunpack.c.h.b16 %v4105
    %v8663 = vunpack.c.l.b16 %v4106
    %v8664 = vunpack.c.h.b16 %v4106
    %v8665 = vunpack.c.l.b16 %v4107
    %v8666 = vunpack.c.h.b16 %v4107
    %v8667 = vunpack.c.l.b16 %v4108
    %v8668 = vunpack.c.h.b16 %v4108
    %v8669 = vunpack.c.l.b16 %v4109
    %v8670 = vunpack.c.h.b16 %v4109
    %v8671 = vunpack.c.l.b16 %v4110
    %v8672 = vunpack.c.h.b16 %v4110
    %v8673 = vunpack.c.l.b16 %v4111
    %v8674 = vunpack.c.h.b16 %v4111
    %v8675 = vunpack.c.l.b16 %v4112
    %v8676 = vunpack.c.h.b16 %v4112
    %v8677 = vunpack.c.l.b16 %v4113
    %v8678 = vunpack.c.h.b16 %v4113
    %v8679 = vunpack.c.l.b16 %v4114
    %v8680 = vunpack.c.h.b16 %v4114
    %v8681 = vunpack.c.l.b16 %v4115
    %v8682 = vunpack.c.h.b16 %v4115
    %v8683 = vunpack.c.l.b16 %v4116
    %v8684 = vunpack.c.h.b16 %v4116
    %v8685 = vunpack.c.l.b16 %v4117
    %v8686 = vunpack.c.h.b16 %v4117
    %v8687 = vunpack.c.l.b16 %v4118
    %v8688 = vunpack.c.h.b16 %v4118
    %v8689 = vunpack.c.l.b16 %v4119
    %v8690 = vunpack.c.h.b16 %v4119
    %v8691 = vunpack.c.l.b16 %v4120
    %v8692 = vunpack.c.h.b16 %v4120
    %v8693 = vunpack.c.l.b16 %v4121
    %v8694 = vunpack.c.h.b16 %v4121
    %v8695 = vunpack.c.l.b16 %v4122
    %v8696 = vunpack.c.h.b16 %v4122
    %v8697 = vunpack.c.l.b16 %v4123
    %v8698 = vunpack.c.h.b16 %v4123
    %v8699 = vunpack.c.l.b16 %v4124
    %v8700 = vunpack.c.h.b16 %v4124
    %v8701 = vunpack.c.l.b16 %v4125
    %v8702 = vunpack.c.h.b16 %v4125
    %v8703 = vunpack.c.l.b16 %v4126
    %v8704 = vunpack.c.h.b16 %v4126
    %v8705 = vunpack.c.l.b16 %v4127
    %v8706 = vunpack.c.h.b16 %v4127
    %v8707 = vunpack.c.l.b16 %v4128
    %v8708 = vunpack.c.h.b16 %v4128
    %v8709 = vunpack.c.l.b16 %v4129
    %v8710 = vunpack.c.h.b16 %v4129
    %v8711 = vunpack.c.l.b16 %v4130
    %v8712 = vunpack.c.h.b16 %v4130
    %v8713 = vunpack.c.l.b16 %v4131
    %v8714 = vunpack.c.h.b16 %v4131
    %v8715 = vunpack.c.l.b16 %v4132
    %v8716 = vunpack.c.h.b16 %v4132
    %v8717 = vunpack.c.l.b16 %v4133
    %v8718 = vunpack.c.h.b16 %v4133
    %v8719 = vunpack.c.l.b16 %v4134
    %v8720 = vunpack.c.h.b16 %v4134
    %v8721 = vunpack.c.l.b16 %v4135
    %v8722 = vunpack.c.h.b16 %v4135
    %v8723 = vunpack.c.l.b16 %v4136
    %v8724 = vunpack.c.h.b16 %v4136
    %v8725 = vunpack.c.l.b16 %v4137
    %v8726 = vunpack.c.h.b16 %v4137
    %v8727 = vunpack.c.l.b16 %v4138
    %v8728 = vunpack.c.h.b16 %v4138
    %v8729 = vunpack.c.l.b16 %v4139
    %v8730 = vunpack.c.h.b16 %v4139
    %v8731 = vunpack.c.l.b16 %v4140
    %v8732 = vunpack.c.h.b16 %v4140
    %v8733 = vunpack.c.l.b16 %v4141
    %v8734 = vunpack.c.h.b16 %v4141
    %v8735 = vunpack.c.l.b16 %v4142
    %v8736 = vunpack.c.h.b16 %v4142
    %v8737 = vunpack.c.l.b16 %v4143
    %v8738 = vunpack.c.h.b16 %v4143
    %v8739 = vunpack.c.l.b16 %v4144
    %v8740 = vunpack.c.h.b16 %v4144
    %v8741 = vunpack.c.l.b16 %v4145
    %v8742 = vunpack.c.h.b16 %v4145
    %v8743 = vunpack.c.l.b16 %v4146
    %v8744 = vunpack.c.h.b16 %v4146
    %v8745 = vunpack.c.l.b16 %v4147
    %v8746 = vunpack.c.h.b16 %v4147
    %v8747 = vunpack.c.l.b16 %v4148
    %v8748 = vunpack.c.h.b16 %v4148
    %v8749 = vunpack.c.l.b16 %v4149
    %v8750 = vunpack.c.h.b16 %v4149
    %v8751 = vunpack.c.l.b16 %v4150
    %v8752 = vunpack.c.h.b16 %v4150
    %v8753 = vunpack.c.l.b16 %v4151
    %v8754 = vunpack.c.h.b16 %v4151
    %v8755 = vunpack.c.l.b16 %v4152
    %v8756 = vunpack.c.h.b16 %v4152
    %v8757 = vunpack.c.l.b16 %v4153
    %v8758 = vunpack.c.h.b16 %v4153
    %v8759 = vunpack.c.l.b16 %v4154
    %v8760 = vunpack.c.h.b16 %v4154
    %v8761 = vunpack.c.l.b16 %v4155
    %v8762 = vunpack.c.h.b16 %v4155
    %v8763 = vunpack.c.l.b16 %v4156
    %v8764 = vunpack.c.h.b16 %v4156
    %v8765 = vunpack.c.l.b16 %v4157
    %v8766 = vunpack.c.h.b16 %v4157
    %v8767 = vunpack.c.l.b16 %v4158
    %v8768 = vunpack.c.h.b16 %v4158
    %v8769 = vunpack.c.l.b16 %v4159
    %v8770 = vunpack.c.h.b16 %v4159
    %v8771 = vunpack.c.l.b16 %v4160
    %v8772 = vunpack.c.h.b16 %v4160
    %v8773 = vunpack.c.l.b16 %v4161
    %v8774 = vunpack.c.h.b16 %v4161
    %v8775 = vunpack.c.l.b16 %v4162
    %v8776 = vunpack.c.h.b16 %v4162
    %v8777 = vunpack.c.l.b16 %v4163
    %v8778 = vunpack.c.h.b16 %v4163
    %v8779 = vunpack.c.l.b16 %v4164
    %v8780 = vunpack.c.h.b16 %v4164
    %v8781 = vunpack.c.l.b16 %v4165
    %v8782 = vunpack.c.h.b16 %v4165
    %v8783 = vunpack.c.l.b16 %v4166
    %v8784 = vunpack.c.h.b16 %v4166
    %v8785 = vunpack.c.l.b16 %v4167
    %v8786 = vunpack.c.h.b16 %v4167
    %v8787 = vunpack.c.l.b16 %v4168
    %v8788 = vunpack.c.h.b16 %v4168
    %v8789 = vunpack.c.l.b16 %v4169
    %v8790 = vunpack.c.h.b16 %v4169
    %v8791 = vunpack.c.l.b16 %v4170
    %v8792 = vunpack.c.h.b16 %v4170
    %v8793 = vunpack.c.l.b16 %v4171
    %v8794 = vunpack.c.h.b16 %v4171
    %v8795 = vunpack.c.l.b16 %v4172
    %v8796 = vunpack.c.h.b16 %v4172
    %v8797 = vunpack.c.l.b16 %v4173
    %v8798 = vunpack.c.h.b16 %v4173
    %v8799 = vunpack.c.l.b16 %v4174
    %v8800 = vunpack.c.h.b16 %v4174
    %v8801 = vunpack.c.l.b16 %v4175
    %v8802 = vunpack.c.h.b16 %v4175
    %v8803 = vunpack.c.l.b16 %v4176
    %v8804 = vunpack.c.h.b16 %v4176
    %v8805 = vunpack.c.l.b16 %v4177
    %v8806 = vunpack.c.h.b16 %v4177
    %v8807 = vunpack.c.l.b16 %v4178
    %v8808 = vunpack.c.h.b16 %v4178
    %v8809 = vunpack.c.l.b16 %v4179
    %v8810 = vunpack.c.h.b16 %v4179
    %v8811 = vunpack.c.l.b16 %v4180
    %v8812 = vunpack.c.h.b16 %v4180
    %v8813 = vunpack.c.l.b16 %v4181
    %v8814 = vunpack.c.h.b16 %v4181
    %v8815 = vunpack.c.l.b16 %v4182
    %v8816 = vunpack.c.h.b16 %v4182
    %v8817 = vunpack.c.l.b16 %v4183
    %v8818 = vunpack.c.h.b16 %v4183
    %v8819 = vunpack.c.l.b16 %v4184
    %v8820 = vunpack.c.h.b16 %v4184
    %v8821 = vunpack.c.l.b16 %v4185
    %v8822 = vunpack.c.h.b16 %v4185
    %v8823 = vunpack.c.l.b16 %v4186
    %v8824 = vunpack.c.h.b16 %v4186
    %v8825 = vunpack.c.l.b16 %v4187
    %v8826 = vunpack.c.h.b16 %v4187
    %v8827 = vunpack.c.l.b16 %v4188
    %v8828 = vunpack.c.h.b16 %v4188
    %v8829 = vunpack.c.l.b16 %v4189
    %v8830 = vunpack.c.h.b16 %v4189
    %v8831 = vunpack.c.l.b16 %v4190
    %v8832 = vunpack.c.h.b16 %v4190
    %v8833 = vunpack.c.l.b16 %v4191
    %v8834 = vunpack.c.h.b16 %v4191
    %v8835 = vunpack.c.l.b16 %v4192
    %v8836 = vunpack.c.h.b16 %v4192
    %v8837 = vunpack.c.l.b16 %v4193
    %v8838 = vunpack.c.h.b16 %v4193
    %v8839 = vunpack.c.l.b16 %v4194
    %v8840 = vunpack.c.h.b16 %v4194
    %v8841 = vunpack.c.l.b16 %v4195
    %v8842 = vunpack.c.h.b16 %v4195
    %v8843 = vunpack.c.l.b16 %v4196
    %v8844 = vunpack.c.h.b16 %v4196
    %v8845 = vunpack.c.l.b16 %v4197
    %v8846 = vunpack.c.h.b16 %v4197
    %v8847 = vunpack.c.l.b16 %v4198
    %v8848 = vunpack.c.h.b16 %v4198
    %v8849 = vunpack.c.l.b16 %v4199
    %v8850 = vunpack.c.h.b16 %v4199
    %v8851 = vunpack.c.l.b16 %v4200
    %v8852 = vunpack.c.h.b16 %v4200
    %v8853 = vunpack.c.l.b16 %v4201
    %v8854 = vunpack.c.h.b16 %v4201
    %v8855 = vunpack.c.l.b16 %v4202
    %v8856 = vunpack.c.h.b16 %v4202
    %v8857 = vunpack.c.l.b16 %v4203
    %v8858 = vunpack.c.h.b16 %v4203
    %v8859 = vunpack.c.l.b16 %v4204
    %v8860 = vunpack.c.h.b16 %v4204
    %v8861 = vunpack.c.l.b16 %v4205
    %v8862 = vunpack.c.h.b16 %v4205
    %v8863 = vunpack.c.l.b16 %v4206
    %v8864 = vunpack.c.h.b16 %v4206
    %v8865 = vunpack.c.l.b16 %v4207
    %v8866 = vunpack.c.h.b16 %v4207
    %v8867 = vunpack.c.l.b16 %v4208
    %v8868 = vunpack.c.h.b16 %v4208
    %v8869 = vunpack.c.l.b16 %v4209
    %v8870 = vunpack.c.h.b16 %v4209
    %v8871 = vunpack.c.l.b16 %v4210
    %v8872 = vunpack.c.h.b16 %v4210
    %v8873 = vunpack.c.l.b16 %v4211
    %v8874 = vunpack.c.h.b16 %v4211
    %v8875 = vunpack.c.l.b16 %v4212
    %v8876 = vunpack.c.h.b16 %v4212
    %v8877 = vunpack.c.l.b16 %v4213
    %v8878 = vunpack.c.h.b16 %v4213
    %v8879 = vunpack.c.l.b16 %v4214
    %v8880 = vunpack.c.h.b16 %v4214
    %v8881 = vunpack.c.l.b16 %v4215
    %v8882 = vunpack.c.h.b16 %v4215
    %v8883 = vunpack.c.l.b16 %v4216
    %v8884 = vunpack.c.h.b16 %v4216
    %v8885 = vunpack.c.l.b16 %v4217
    %v8886 = vunpack.c.h.b16 %v4217
    %v8887 = vunpack.c.l.b16 %v4218
    %v8888 = vunpack.c.h.b16 %v4218
    %v8889 = vunpack.c.l.b16 %v4219
    %v8890 = vunpack.c.h.b16 %v4219
    %v8891 = vunpack.c.l.b16 %v4220
    %v8892 = vunpack.c.h.b16 %v4220
    %v8893 = vunpack.c.l.b16 %v4221
    %v8894 = vunpack.c.h.b16 %v4221
    %v8895 = vunpack.c.l.b16 %v4222
    %v8896 = vunpack.c.h.b16 %v4222
    %v8897 = vunpack.c.l.b16 %v4223
    %v8898 = vunpack.c.h.b16 %v4223
    %v8899 = vunpack.c.l.b16 %v4224
    %v8900 = vunpack.c.h.b16 %v4224
    %v8901 = vunpack.c.l.b16 %v4225
    %v8902 = vunpack.c.h.b16 %v4225
    %v8903 = vunpack.c.l.b16 %v4226
    %v8904 = vunpack.c.h.b16 %v4226
    %v8905 = vunpack.c.l.b16 %v4227
    %v8906 = vunpack.c.h.b16 %v4227
    %v8907 = vunpack.c.l.b16 %v4228
    %v8908 = vunpack.c.h.b16 %v4228
    %v8909 = vunpack.c.l.b16 %v4229
    %v8910 = vunpack.c.h.b16 %v4229
    %v8911 = vunpack.c.l.b16 %v4230
    %v8912 = vunpack.c.h.b16 %v4230
    %v8913 = vunpack.c.l.b16 %v4231
    %v8914 = vunpack.c.h.b16 %v4231
    %v8915 = vunpack.c.l.b16 %v4232
    %v8916 = vunpack.c.h.b16 %v4232
    %v8917 = vunpack.c.l.b16 %v4233
    %v8918 = vunpack.c.h.b16 %v4233
    %v8919 = vunpack.c.l.b16 %v4234
    %v8920 = vunpack.c.h.b16 %v4234
    %v8921 = vunpack.c.l.b16 %v4235
    %v8922 = vunpack.c.h.b16 %v4235
    %v8923 = vunpack.c.l.b16 %v4236
    %v8924 = vunpack.c.h.b16 %v4236
    %v8925 = vunpack.c.l.b16 %v4237
    %v8926 = vunpack.c.h.b16 %v4237
    %v8927 = vunpack.c.l.b16 %v4238
    %v8928 = vunpack.c.h.b16 %v4238
    %v8929 = vunpack.c.l.b16 %v4239
    %v8930 = vunpack.c.h.b16 %v4239
    %v8931 = vunpack.c.l.b16 %v4240
    %v8932 = vunpack.c.h.b16 %v4240
    %v8933 = vunpack.c.l.b16 %v4241
    %v8934 = vunpack.c.h.b16 %v4241
    %v8935 = vunpack.c.l.b16 %v4242
    %v8936 = vunpack.c.h.b16 %v4242
    %v8937 = vunpack.c.l.b16 %v4243
    %v8938 = vunpack.c.h.b16 %v4243
    %v8939 = vunpack.c.l.b16 %v4244
    %v8940 = vunpack.c.h.b16 %v4244
    %v8941 = vunpack.c.l.b16 %v4245
    %v8942 = vunpack.c.h.b16 %v4245
    %v8943 = vunpack.c.l.b16 %v4246
    %v8944 = vunpack.c.h.b16 %v4246
    %v8945 = vunpack.c.l.b16 %v4247
    %v8946 = vunpack.c.h.b16 %v4247
    %v8947 = vunpack.c.l.b16 %v4248
    %v8948 = vunpack.c.h.b16 %v4248
    %v8949 = vunpack.c.l.b16 %v4249
    %v8950 = vunpack.c.h.b16 %v4249
    %v8951 = vunpack.c.l.b16 %v4250
    %v8952 = vunpack.c.h.b16 %v4250
    %v8953 = vunpack.c.l.b16 %v4251
    %v8954 = vunpack.c.h.b16 %v4251
    %v8955 = vunpack.c.l.b16 %v4252
    %v8956 = vunpack.c.h.b16 %v4252
    %v8957 = vunpack.c.l.b16 %v4253
    %v8958 = vunpack.c.h.b16 %v4253
    %v8959 = vunpack.c.l.b16 %v4254
    %v8960 = vunpack.c.h.b16 %v4254
    %v8961 = vunpack.c.l.b16 %v4255
    %v8962 = vunpack.c.h.b16 %v4255
    %v8963 = vunpack.c.l.b16 %v4256
    %v8964 = vunpack.c.h.b16 %v4256
    %v8965 = vunpack.c.l.b16 %v4257
    %v8966 = vunpack.c.h.b16 %v4257
    %v8967 = vunpack.c.l.b16 %v4258
    %v8968 = vunpack.c.h.b16 %v4258
    %v8969 = vunpack.c.l.b16 %v4259
    %v8970 = vunpack.c.h.b16 %v4259
    %v8971 = vunpack.c.l.b16 %v4260
    %v8972 = vunpack.c.h.b16 %v4260
    %v8973 = vunpack.c.l.b16 %v4261
    %v8974 = vunpack.c.h.b16 %v4261
    %v8975 = vunpack.c.l.b16 %v4262
    %v8976 = vunpack.c.h.b16 %v4262
    %v8977 = vunpack.c.l.b16 %v4263
    %v8978 = vunpack.c.h.b16 %v4263
    %v8979 = vunpack.c.l.b16 %v4264
    %v8980 = vunpack.c.h.b16 %v4264
    %v8981 = vunpack.c.l.b16 %v4265
    %v8982 = vunpack.c.h.b16 %v4265
    %v8983 = vunpack.c.l.b16 %v4266
    %v8984 = vunpack.c.h.b16 %v4266
    %v8985 = vunpack.c.l.b16 %v4267
    %v8986 = vunpack.c.h.b16 %v4267
    %v8987 = vunpack.c.l.b16 %v4268
    %v8988 = vunpack.c.h.b16 %v4268
    %v8989 = vunpack.c.l.b16 %v4269
    %v8990 = vunpack.c.h.b16 %v4269
    %v8991 = vunpack.c.l.b16 %v4270
    %v8992 = vunpack.c.h.b16 %v4270
    %v8993 = vunpack.c.l.b16 %v4271
    %v8994 = vunpack.c.h.b16 %v4271
    %v8995 = vunpack.c.l.b16 %v4272
    %v8996 = vunpack.c.h.b16 %v4272
    %v8997 = vunpack.c.l.b16 %v4273
    %v8998 = vunpack.c.h.b16 %v4273
    %v8999 = vunpack.c.l.b16 %v4274
    %v9000 = vunpack.c.h.b16 %v4274
    %v9001 = vunpack.c.l.b16 %v4275
    %v9002 = vunpack.c.h.b16 %v4275
    %v9003 = vunpack.c.l.b16 %v4276
    %v9004 = vunpack.c.h.b16 %v4276
    %v9005 = vunpack.c.l.b16 %v4277
    %v9006 = vunpack.c.h.b16 %v4277
    %v9007 = vunpack.c.l.b16 %v4278
    %v9008 = vunpack.c.h.b16 %v4278
    %v9009 = vunpack.c.l.b16 %v4279
    %v9010 = vunpack.c.h.b16 %v4279
    %v9011 = vunpack.c.l.b16 %v4280
    %v9012 = vunpack.c.h.b16 %v4280
    %v9013 = vunpack.c.l.b16 %v4281
    %v9014 = vunpack.c.h.b16 %v4281
    %v9015 = vunpack.c.l.b16 %v4282
    %v9016 = vunpack.c.h.b16 %v4282
    %v9017 = vpack.c.b16 %v5969, %v5945
    %v9018 = vpack.c.b16 %v5970, %v5946
    %v9019 = vpack.c.b16 %v5971, %v5947
    %v9020 = vpack.c.b16 %v5972, %v5948
    %v9021 = vpack.c.b16 %v5973, %v5949
    %v9022 = vpack.c.b16 %v5974, %v5950
    %v9023 = vpack.c.b16 %v5975, %v5951
    %v9024 = vpack.c.b16 %v5976, %v5952
    %v9025 = vpack.c.b16 %v5977, %v5953
    %v9026 = vpack.c.b16 %v5978, %v5954
    %v9027 = vpack.c.b16 %v5979, %v5955
    %v9028 = vpack.c.b16 %v5980, %v5956
    %v9029 = vpack.c.b16 %v5981, %v5957
    %v9030 = vpack.c.b16 %v5982, %v5958
    %v9031 = vpack.c.b16 %v5983, %v5959
    %v9032 = vpack.c.b16 %v5984, %v5960
    %v9033 = vpack.c.b16 %v5985, %v5961
    %v9034 = vpack.c.b16 %v5986, %v5962
    %v9035 = vpack.c.b16 %v5987, %v5963
    %v9036 = vpack.c.b16 %v5988, %v5964
    %v9037 = vpack.c.b16 %v5989, %v5965
    %v9038 = vpack.c.b16 %v5990, %v5966
    %v9039 = vpack.c.b16 %v5991, %v5967
    %v9040 = vpack.c.b16 %v5992, %v5968
    %v9041 = vpack.c.b16 %v6017, %v5993
    %v9042 = vpack.c.b16 %v6018, %v5994
    %v9043 = vpack.c.b16 %v6019, %v5995
    %v9044 = vpack.c.b16 %v6020, %v5996
    %v9045 = vpack.c.b16 %v6021, %v5997
    %v9046 = vpack.c.b16 %v6022, %v5998
    %v9047 = vpack.c.b16 %v6023, %v5999
    %v9048 = vpack.c.b16 %v6024, %v6000
    %v9049 = vpack.c.b16 %v6025, %v6001
    %v9050 = vpack.c.b16 %v6026, %v6002
    %v9051 = vpack.c.b16 %v6027, %v6003
    %v9052 = vpack.c.b16 %v6028, %v6004
    %v9053 = vpack.c.b16 %v6029, %v6005
    %v9054 = vpack.c.b16 %v6030, %v6006
    %v9055 = vpack.c.b16 %v6031, %v6007
    %v9056 = vpack.c.b16 %v6032, %v6008
    %v9057 = vpack.c.b16 %v6033, %v6009
    %v9058 = vpack.c.b16 %v6034, %v6010
    %v9059 = vpack.c.b16 %v6035, %v6011
    %v9060 = vpack.c.b16 %v6036, %v6012
    %v9061 = vpack.c.b16 %v6037, %v6013
    %v9062 = vpack.c.b16 %v6038, %v6014
    %v9063 = vpack.c.b16 %v6039, %v6015
    %v9064 = vpack.c.b16 %v6040, %v6016
    %v9065 = vpack.c.b16 %v6065, %v6041
    %v9066 = vpack.c.b16 %v6066, %v6042
    %v9067 = vpack.c.b16 %v6067, %v6043
    %v9068 = vpack.c.b16 %v6068, %v6044
    %v9069 = vpack.c.b16 %v6069, %v6045
    %v9070 = vpack.c.b16 %v6070, %v6046
    %v9071 = vpack.c.b16 %v6071, %v6047
    %v9072 = vpack.c.b16 %v6072, %v6048
    %v9073 = vpack.c.b16 %v6073, %v6049
    %v9074 = vpack.c.b16 %v6074, %v6050
    %v9075 = vpack.c.b16 %v6075, %v6051
    %v9076 = vpack.c.b16 %v6076, %v6052
    %v9077 = vpack.c.b16 %v6077, %v6053
    %v9078 = vpack.c.b16 %v6078, %v6054
    %v9079 = vpack.c.b16 %v6079, %v6055
    %v9080 = vpack.c.b16 %v6080, %v6056
    %v9081 = vpack.c.b16 %v6081, %v6057
    %v9082 = vpack.c.b16 %v6082, %v6058
    %v9083 = vpack.c.b16 %v6083, %v6059
    %v9084 = vpack.c.b16 %v6084, %v6060
    %v9085 = vpack.c.b16 %v6085, %v6061
    %v9086 = vpack.c.b16 %v6086, %v6062
    %v9087 = vpack.c.b16 %v6087, %v6063
    %v9088 = vpack.c.b16 %v6088, %v6064
    %v9089 = vpack.c.b16 %v6113, %v6089
    %v9090 = vpack.c.b16 %v6114, %v6090
    %v9091 = vpack.c.b16 %v6115, %v6091
    %v9092 = vpack.c.b16 %v6116, %v6092
    %v9093 = vpack.c.b16 %v6117, %v6093
    %v9094 = vpack.c.b16 %v6118, %v6094
    %v9095 = vpack.c.b16 %v6119, %v6095
    %v9096 = vpack.c.b16 %v6120, %v6096
    %v9097 = vpack.c.b16 %v6121, %v6097
    %v9098 = vpack.c.b16 %v6122, %v6098
    %v9099 = vpack.c.b16 %v6123, %v6099
    %v9100 = vpack.c.b16 %v6124, %v6100
    %v9101 = vpack.c.b16 %v6125, %v6101
    %v9102 = vpack.c.b16 %v6126, %v6102
    %v9103 = vpack.c.b16 %v6127, %v6103
    %v9104 = vpack.c.b16 %v6128, %v6104
    %v9105 = vpack.c.b16 %v6129, %v6105
    %v9106 = vpack.c.b16 %v6130, %v6106
    %v9107 = vpack.c.b16 %v6131, %v6107
    %v9108 = vpack.c.b16 %v6132, %v6108
    %v9109 = vpack.c.b16 %v6133, %v6109
    %v9110 = vpack.c.b16 %v6134, %v6110
    %v9111 = vpack.c.b16 %v6135, %v6111
    %v9112 = vpack.c.b16 %v6136, %v6112
    %v9113 = vpack.c.b16 %v6161, %v6137
    %v9114 = vpack.c.b16 %v6162, %v6138
    %v9115 = vpack.c.b16 %v6163, %v6139
    %v9116 = vpack.c.b16 %v6164, %v6140
    %v9117 = vpack.c.b16 %v6165, %v6141
    %v9118 = vpack.c.b16 %v6166, %v6142
    %v9119 = vpack.c.b16 %v6167, %v6143
    %v9120 = vpack.c.b16 %v6168, %v6144
    %v9121 = vpack.c.b16 %v6169, %v6145
    %v9122 = vpack.c.b16 %v6170, %v6146
    %v9123 = vpack.c.b16 %v6171, %v6147
    %v9124 = vpack.c.b16 %v6172, %v6148
    %v9125 = vpack.c.b16 %v6173, %v6149
    %v9126 = vpack.c.b16 %v6174, %v6150
    %v9127 = vpack.c.b16 %v6175, %v6151
    %v9128 = vpack.c.b16 %v6176, %v6152
    %v9129 = vpack.c.b16 %v6177, %v6153
    %v9130 = vpack.c.b16 %v6178, %v6154
    %v9131 = vpack.c.b16 %v6179, %v6155
    %v9132 = vpack.c.b16 %v6180, %v6156
    %v9133 = vpack.c.b16 %v6181, %v6157
    %v9134 = vpack.c.b16 %v6182, %v6158
    %v9135 = vpack.c.b16 %v6183, %v6159
    %v9136 = vpack.c.b16 %v6184, %v6160
    %v9137 = vpack.c.b16 %v6209, %v6185
    %v9138 = vpack.c.b16 %v6210, %v6186
    %v9139 = vpack.c.b16 %v6211, %v6187
    %v9140 = vpack.c.b16 %v6212, %v6188
    %v9141 = vpack.c.b16 %v6213, %v6189
    %v9142 = vpack.c.b16 %v6214, %v6190
    %v9143 = vpack.c.b16 %v6215, %v6191
    %v9144 = vpack.c.b16 %v6216, %v6192
    %v9145 = vpack.c.b16 %v6217, %v6193
    %v9146 = vpack.c.b16 %v6218, %v6194
    %v9147 = vpack.c.b16 %v6219, %v6195
    %v9148 = vpack.c.b16 %v6220, %v6196
    %v9149 = vpack.c.b16 %v6221, %v6197
    %v9150 = vpack.c.b16 %v6222, %v6198
    %v9151 = vpack.c.b16 %v6223, %v6199
    %v9152 = vpack.c.b16 %v6224, %v6200
    %v9153 = vpack.c.b16 %v6225, %v6201
    %v9154 = vpack.c.b16 %v6226, %v6202
    %v9155 = vpack.c.b16 %v6227, %v6203
    %v9156 = vpack.c.b16 %v6228, %v6204
    %v9157 = vpack.c.b16 %v6229, %v6205
    %v9158 = vpack.c.b16 %v6230, %v6206
    %v9159 = vpack.c.b16 %v6231, %v6207
    %v9160 = vpack.c.b16 %v6232, %v6208
    %v9161 = vpack.c.b16 %v6257, %v6233
    %v9162 = vpack.c.b16 %v6258, %v6234
    %v9163 = vpack.c.b16 %v6259, %v6235
    %v9164 = vpack.c.b16 %v6260, %v6236
    %v9165 = vpack.c.b16 %v6261, %v6237
    %v9166 = vpack.c.b16 %v6262, %v6238
    %v9167 = vpack.c.b16 %v6263, %v6239
    %v9168 = vpack.c.b16 %v6264, %v6240
    %v9169 = vpack.c.b16 %v6265, %v6241
    %v9170 = vpack.c.b16 %v6266, %v6242
    %v9171 = vpack.c.b16 %v6267, %v6243
    %v9172 = vpack.c.b16 %v6268, %v6244
    %v9173 = vpack.c.b16 %v6269, %v6245
    %v9174 = vpack.c.b16 %v6270, %v6246
    %v9175 = vpack.c.b16 %v6271, %v6247
    %v9176 = vpack.c.b16 %v6272, %v6248
    %v9177 = vpack.c.b16 %v6273, %v6249
    %v9178 = vpack.c.b16 %v6274, %v6250
    %v9179 = vpack.c.b16 %v6275, %v6251
    %v9180 = vpack.c.b16 %v6276, %v6252
    %v9181 = vpack.c.b16 %v6277, %v6253
    %v9182 = vpack.c.b16 %v6278, %v6254
    %v9183 = vpack.c.b16 %v6279, %v6255
    %v9184 = vpack.c.b16 %v6280, %v6256
    %v9185 = vpack.c.b16 %v6305, %v6281
    %v9186 = vpack.c.b16 %v6306, %v6282
    %v9187 = vpack.c.b16 %v6307, %v6283
    %v9188 = vpack.c.b16 %v6308, %v6284
    %v9189 = vpack.c.b16 %v6309, %v6285
    %v9190 = vpack.c.b16 %v6310, %v6286
    %v9191 = vpack.c.b16 %v6311, %v6287
    %v9192 = vpack.c.b16 %v6312, %v6288
    %v9193 = vpack.c.b16 %v6313, %v6289
    %v9194 = vpack.c.b16 %v6314, %v6290
    %v9195 = vpack.c.b16 %v6315, %v6291
    %v9196 = vpack.c.b16 %v6316, %v6292
    %v9197 = vpack.c.b16 %v6317, %v6293
    %v9198 = vpack.c.b16 %v6318, %v6294
    %v9199 = vpack.c.b16 %v6319, %v6295
    %v9200 = vpack.c.b16 %v6320, %v6296
    %v9201 = vpack.c.b16 %v6321, %v6297
    %v9202 = vpack.c.b16 %v6322, %v6298
    %v9203 = vpack.c.b16 %v6323, %v6299
    %v9204 = vpack.c.b16 %v6324, %v6300
    %v9205 = vpack.c.b16 %v6325, %v6301
    %v9206 = vpack.c.b16 %v6326, %v6302
    %v9207 = vpack.c.b16 %v6327, %v6303
    %v9208 = vpack.c.b16 %v6328, %v6304
    %v9209 = vpack.c.b16 %v6353, %v6329
    %v9210 = vpack.c.b16 %v6354, %v6330
    %v9211 = vpack.c.b16 %v6355, %v6331
    %v9212 = vpack.c.b16 %v6356, %v6332
    %v9213 = vpack.c.b16 %v6357, %v6333
    %v9214 = vpack.c.b16 %v6358, %v6334
    %v9215 = vpack.c.b16 %v6359, %v6335
    %v9216 = vpack.c.b16 %v6360, %v6336
    %v9217 = vpack.c.b16 %v6361, %v6337
    %v9218 = vpack.c.b16 %v6362, %v6338
    %v9219 = vpack.c.b16 %v6363, %v6339
    %v9220 = vpack.c.b16 %v6364, %v6340
    %v9221 = vpack.c.b16 %v6365, %v6341
    %v9222 = vpack.c.b16 %v6366, %v6342
    %v9223 = vpack.c.b16 %v6367, %v6343
    %v9224 = vpack.c.b16 %v6368, %v6344
    %v9225 = vpack.c.b16 %v6369, %v6345
    %v9226 = vpack.c.b16 %v6370, %v6346
    %v9227 = vpack.c.b16 %v6371, %v6347
    %v9228 = vpack.c.b16 %v6372, %v6348
    %v9229 = vpack.c.b16 %v6373, %v6349
    %v9230 = vpack.c.b16 %v6374, %v6350
    %v9231 = vpack.c.b16 %v6375, %v6351
    %v9232 = vpack.c.b16 %v6376, %v6352
    %v9233 = vpack.c.b16 %v6401, %v6377
    %v9234 = vpack.c.b16 %v6402, %v6378
    %v9235 = vpack.c.b16 %v6403, %v6379
    %v9236 = vpack.c.b16 %v6404, %v6380
    %v9237 = vpack.c.b16 %v6405, %v6381
    %v9238 = vpack.c.b16 %v6406, %v6382
    %v9239 = vpack.c.b16 %v6407, %v6383
    %v9240 = vpack.c.b16 %v6408, %v6384
    %v9241 = vpack.c.b16 %v6409, %v6385
    %v9242 = vpack.c.b16 %v6410, %v6386
    %v9243 = vpack.c.b16 %v6411, %v6387
    %v9244 = vpack.c.b16 %v6412, %v6388
    %v9245 = vpack.c.b16 %v6413, %v6389
    %v9246 = vpack.c.b16 %v6414, %v6390
    %v9247 = vpack.c.b16 %v6415, %v6391
    %v9248 = vpack.c.b16 %v6416, %v6392
    %v9249 = vpack.c.b16 %v6417, %v6393
    %v9250 = vpack.c.b16 %v6418, %v6394
    %v9251 = vpack.c.b16 %v6419, %v6395
    %v9252 = vpack.c.b16 %v6420, %v6396
    %v9253 = vpack.c.b16 %v6421, %v6397
    %v9254 = vpack.c.b16 %v6422, %v6398
    %v9255 = vpack.c.b16 %v6423, %v6399
    %v9256 = vpack.c.b16 %v6424, %v6400
    %v9257 = vpack.c.b16 %v6449, %v6425
    %v9258 = vpack.c.b16 %v6450, %v6426
    %v9259 = vpack.c.b16 %v6451, %v6427
    %v9260 = vpack.c.b16 %v6452, %v6428
    %v9261 = vpack.c.b16 %v6453, %v6429
    %v9262 = vpack.c.b16 %v6454, %v6430
    %v9263 = vpack.c.b16 %v6455, %v6431
    %v9264 = vpack.c.b16 %v6456, %v6432
    %v9265 = vpack.c.b16 %v6457, %v6433
    %v9266 = vpack.c.b16 %v6458, %v6434
    %v9267 = vpack.c.b16 %v6459, %v6435
    %v9268 = vpack.c.b16 %v6460, %v6436
    %v9269 = vpack.c.b16 %v6461, %v6437
    %v9270 = vpack.c.b16 %v6462, %v6438
    %v9271 = vpack.c.b16 %v6463, %v6439
    %v9272 = vpack.c.b16 %v6464, %v6440
    %v9273 = vpack.c.b16 %v6465, %v6441
    %v9274 = vpack.c.b16 %v6466, %v6442
    %v9275 = vpack.c.b16 %v6467, %v6443
    %v9276 = vpack.c.b16 %v6468, %v6444
    %v9277 = vpack.c.b16 %v6469, %v6445
    %v9278 = vpack.c.b16 %v6470, %v6446
    %v9279 = vpack.c.b16 %v6471, %v6447
    %v9280 = vpack.c.b16 %v6472, %v6448
    %v9281 = vpack.c.b16 %v6497, %v6473
    %v9282 = vpack.c.b16 %v6498, %v6474
    %v9283 = vpack.c.b16 %v6499, %v6475
    %v9284 = vpack.c.b16 %v6500, %v6476
    %v9285 = vpack.c.b16 %v6501, %v6477
    %v9286 = vpack.c.b16 %v6502, %v6478
    %v9287 = vpack.c.b16 %v6503, %v6479
    %v9288 = vpack.c.b16 %v6504, %v6480
    %v9289 = vpack.c.b16 %v6505, %v6481
    %v9290 = vpack.c.b16 %v6506, %v6482
    %v9291 = vpack.c.b16 %v6507, %v6483
    %v9292 = vpack.c.b16 %v6508, %v6484
    %v9293 = vpack.c.b16 %v6509, %v6485
    %v9294 = vpack.c.b16 %v6510, %v6486
    %v9295 = vpack.c.b16 %v6511, %v6487
    %v9296 = vpack.c.b16 %v6512, %v6488
    %v9297 = vpack.c.b16 %v6513, %v6489
    %v9298 = vpack.c.b16 %v6514, %v6490
    %v9299 = vpack.c.b16 %v6515, %v6491
    %v9300 = vpack.c.b16 %v6516, %v6492
    %v9301 = vpack.c.b16 %v6517, %v6493
    %v9302 = vpack.c.b16 %v6518, %v6494
    %v9303 = vpack.c.b16 %v6519, %v6495
    %v9304 = vpack.c.b16 %v6520, %v6496
    %v9305 = vpack.c.b16 %v6545, %v6521
    %v9306 = vpack.c.b16 %v6546, %v6522
    %v9307 = vpack.c.b16 %v6547, %v6523
    %v9308 = vpack.c.b16 %v6548, %v6524
    %v9309 = vpack.c.b16 %v6549, %v6525
    %v9310 = vpack.c.b16 %v6550, %v6526
    %v9311 = vpack.c.b16 %v6551, %v6527
    %v9312 = vpack.c.b16 %v6552, %v6528
    %v9313 = vpack.c.b16 %v6553, %v6529
    %v9314 = vpack.c.b16 %v6554, %v6530
    %v9315 = vpack.c.b16 %v6555, %v6531
    %v9316 = vpack.c.b16 %v6556, %v6532
    %v9317 = vpack.c.b16 %v6557, %v6533
    %v9318 = vpack.c.b16 %v6558, %v6534
    %v9319 = vpack.c.b16 %v6559, %v6535
    %v9320 = vpack.c.b16 %v6560, %v6536
    %v9321 = vpack.c.b16 %v6561, %v6537
    %v9322 = vpack.c.b16 %v6562, %v6538
    %v9323 = vpack.c.b16 %v6563, %v6539
    %v9324 = vpack.c.b16 %v6564, %v6540
    %v9325 = vpack.c.b16 %v6565, %v6541
    %v9326 = vpack.c.b16 %v6566, %v6542
    %v9327 = vpack.c.b16 %v6567, %v6543
    %v9328 = vpack.c.b16 %v6568, %v6544
    %v9329 = vpack.c.b16 %v6593, %v6569
    %v9330 = vpack.c.b16 %v6594, %v6570
    %v9331 = vpack.c.b16 %v6595, %v6571
    %v9332 = vpack.c.b16 %v6596, %v6572
    %v9333 = vpack.c.b16 %v6597, %v6573
    %v9334 = vpack.c.b16 %v6598, %v6574
    %v9335 = vpack.c.b16 %v6599, %v6575
    %v9336 = vpack.c.b16 %v6600, %v6576
    %v9337 = vpack.c.b16 %v6601, %v6577
    %v9338 = vpack.c.b16 %v6602, %v6578
    %v9339 = vpack.c.b16 %v6603, %v6579
    %v9340 = vpack.c.b16 %v6604, %v6580
    %v9341 = vpack.c.b16 %v6605, %v6581
    %v9342 = vpack.c.b16 %v6606, %v6582
    %v9343 = vpack.c.b16 %v6607, %v6583
    %v9344 = vpack.c.b16 %v6608, %v6584
    %v9345 = vpack.c.b16 %v6609, %v6585
    %v9346 = vpack.c.b16 %v6610, %v6586
    %v9347 = vpack.c.b16 %v6611, %v6587
    %v9348 = vpack.c.b16 %v6612, %v6588
    %v9349 = vpack.c.b16 %v6613, %v6589
    %v9350 = vpack.c.b16 %v6614, %v6590
    %v9351 = vpack.c.b16 %v6615, %v6591
    %v9352 = vpack.c.b16 %v6616, %v6592
    %v9353 = vpack.c.b16 %v6641, %v6617
    %v9354 = vpack.c.b16 %v6642, %v6618
    %v9355 = vpack.c.b16 %v6643, %v6619
    %v9356 = vpack.c.b16 %v6644, %v6620
    %v9357 = vpack.c.b16 %v6645, %v6621
    %v9358 = vpack.c.b16 %v6646, %v6622
    %v9359 = vpack.c.b16 %v6647, %v6623
    %v9360 = vpack.c.b16 %v6648, %v6624
    %v9361 = vpack.c.b16 %v6649, %v6625
    %v9362 = vpack.c.b16 %v6650, %v6626
    %v9363 = vpack.c.b16 %v6651, %v6627
    %v9364 = vpack.c.b16 %v6652, %v6628
    %v9365 = vpack.c.b16 %v6653, %v6629
    %v9366 = vpack.c.b16 %v6654, %v6630
    %v9367 = vpack.c.b16 %v6655, %v6631
    %v9368 = vpack.c.b16 %v6656, %v6632
    %v9369 = vpack.c.b16 %v6657, %v6633
    %v9370 = vpack.c.b16 %v6658, %v6634
    %v9371 = vpack.c.b16 %v6659, %v6635
    %v9372 = vpack.c.b16 %v6660, %v6636
    %v9373 = vpack.c.b16 %v6661, %v6637
    %v9374 = vpack.c.b16 %v6662, %v6638
    %v9375 = vpack.c.b16 %v6663, %v6639
    %v9376 = vpack.c.b16 %v6664, %v6640
    %v9377 = vpack.c.b16 %v6689, %v6665
    %v9378 = vpack.c.b16 %v6690, %v6666
    %v9379 = vpack.c.b16 %v6691, %v6667
    %v9380 = vpack.c.b16 %v6692, %v6668
    %v9381 = vpack.c.b16 %v6693, %v6669
    %v9382 = vpack.c.b16 %v6694, %v6670
    %v9383 = vpack.c.b16 %v6695, %v6671
    %v9384 = vpack.c.b16 %v6696, %v6672
    %v9385 = vpack.c.b16 %v6697, %v6673
    %v9386 = vpack.c.b16 %v6698, %v6674
    %v9387 = vpack.c.b16 %v6699, %v6675
    %v9388 = vpack.c.b16 %v6700, %v6676
    %v9389 = vpack.c.b16 %v6701, %v6677
    %v9390 = vpack.c.b16 %v6702, %v6678
    %v9391 = vpack.c.b16 %v6703, %v6679
    %v9392 = vpack.c.b16 %v6704, %v6680
    %v9393 = vpack.c.b16 %v6705, %v6681
    %v9394 = vpack.c.b16 %v6706, %v6682
    %v9395 = vpack.c.b16 %v6707, %v6683
    %v9396 = vpack.c.b16 %v6708, %v6684
    %v9397 = vpack.c.b16 %v6709, %v6685
    %v9398 = vpack.c.b16 %v6710, %v6686
    %v9399 = vpack.c.b16 %v6711, %v6687
    %v9400 = vpack.c.b16 %v6712, %v6688
    %v9401 = vpack.c.b16 %v6737, %v6713
    %v9402 = vpack.c.b16 %v6738, %v6714
    %v9403 = vpack.c.b16 %v6739, %v6715
    %v9404 = vpack.c.b16 %v6740, %v6716
    %v9405 = vpack.c.b16 %v6741, %v6717
    %v9406 = vpack.c.b16 %v6742, %v6718
    %v9407 = vpack.c.b16 %v6743, %v6719
    %v9408 = vpack.c.b16 %v6744, %v6720
    %v9409 = vpack.c.b16 %v6745, %v6721
    %v9410 = vpack.c.b16 %v6746, %v6722
    %v9411 = vpack.c.b16 %v6747, %v6723
    %v9412 = vpack.c.b16 %v6748, %v6724
    %v9413 = vpack.c.b16 %v6749, %v6725
    %v9414 = vpack.c.b16 %v6750, %v6726
    %v9415 = vpack.c.b16 %v6751, %v6727
    %v9416 = vpack.c.b16 %v6752, %v6728
    %v9417 = vpack.c.b16 %v6753, %v6729
    %v9418 = vpack.c.b16 %v6754, %v6730
    %v9419 = vpack.c.b16 %v6755, %v6731
    %v9420 = vpack.c.b16 %v6756, %v6732
    %v9421 = vpack.c.b16 %v6757, %v6733
    %v9422 = vpack.c.b16 %v6758, %v6734
    %v9423 = vpack.c.b16 %v6759, %v6735
    %v9424 = vpack.c.b16 %v6760, %v6736
    %v9425 = vpack.c.b16 %v6785, %v6761
    %v9426 = vpack.c.b16 %v6786, %v6762
    %v9427 = vpack.c.b16 %v6787, %v6763
    %v9428 = vpack.c.b16 %v6788, %v6764
    %v9429 = vpack.c.b16 %v6789, %v6765
    %v9430 = vpack.c.b16 %v6790, %v6766
    %v9431 = vpack.c.b16 %v6791, %v6767
    %v9432 = vpack.c.b16 %v6792, %v6768
    %v9433 = vpack.c.b16 %v6793, %v6769
    %v9434 = vpack.c.b16 %v6794, %v6770
    %v9435 = vpack.c.b16 %v6795, %v6771
    %v9436 = vpack.c.b16 %v6796, %v6772
    %v9437 = vpack.c.b16 %v6797, %v6773
    %v9438 = vpack.c.b16 %v6798, %v6774
    %v9439 = vpack.c.b16 %v6799, %v6775
    %v9440 = vpack.c.b16 %v6800, %v6776
    %v9441 = vpack.c.b16 %v6801, %v6777
    %v9442 = vpack.c.b16 %v6802, %v6778
    %v9443 = vpack.c.b16 %v6803, %v6779
    %v9444 = vpack.c.b16 %v6804, %v6780
    %v9445 = vpack.c.b16 %v6805, %v6781
    %v9446 = vpack.c.b16 %v6806, %v6782
    %v9447 = vpack.c.b16 %v6807, %v6783
    %v9448 = vpack.c.b16 %v6808, %v6784
    %v9449 = vpack.c.b16 %v6833, %v6809
    %v9450 = vpack.c.b16 %v6834, %v6810
    %v9451 = vpack.c.b16 %v6835, %v6811
    %v9452 = vpack.c.b16 %v6836, %v6812
    %v9453 = vpack.c.b16 %v6837, %v6813
    %v9454 = vpack.c.b16 %v6838, %v6814
    %v9455 = vpack.c.b16 %v6839, %v6815
    %v9456 = vpack.c.b16 %v6840, %v6816
    %v9457 = vpack.c.b16 %v6841, %v6817
    %v9458 = vpack.c.b16 %v6842, %v6818
    %v9459 = vpack.c.b16 %v6843, %v6819
    %v9460 = vpack.c.b16 %v6844, %v6820
    %v9461 = vpack.c.b16 %v6845, %v6821
    %v9462 = vpack.c.b16 %v6846, %v6822
    %v9463 = vpack.c.b16 %v6847, %v6823
    %v9464 = vpack.c.b16 %v6848, %v6824
    %v9465 = vpack.c.b16 %v6849, %v6825
    %v9466 = vpack.c.b16 %v6850, %v6826
    %v9467 = vpack.c.b16 %v6851, %v6827
    %v9468 = vpack.c.b16 %v6852, %v6828
    %v9469 = vpack.c.b16 %v6853, %v6829
    %v9470 = vpack.c.b16 %v6854, %v6830
    %v9471 = vpack.c.b16 %v6855, %v6831
    %v9472 = vpack.c.b16 %v6856, %v6832
    %v9473 = vpack.c.b16 %v6881, %v6857
    %v9474 = vpack.c.b16 %v6882, %v6858
    %v9475 = vpack.c.b16 %v6883, %v6859
    %v9476 = vpack.c.b16 %v6884, %v6860
    %v9477 = vpack.c.b16 %v6885, %v6861
    %v9478 = vpack.c.b16 %v6886, %v6862
    %v9479 = vpack.c.b16 %v6887, %v6863
    %v9480 = vpack.c.b16 %v6888, %v6864
    %v9481 = vpack.c.b16 %v6889, %v6865
    %v9482 = vpack.c.b16 %v6890, %v6866
    %v9483 = vpack.c.b16 %v6891, %v6867
    %v9484 = vpack.c.b16 %v6892, %v6868
    %v9485 = vpack.c.b16 %v6893, %v6869
    %v9486 = vpack.c.b16 %v6894, %v6870
    %v9487 = vpack.c.b16 %v6895, %v6871
    %v9488 = vpack.c.b16 %v6896, %v6872
    %v9489 = vpack.c.b16 %v6897, %v6873
    %v9490 = vpack.c.b16 %v6898, %v6874
    %v9491 = vpack.c.b16 %v6899, %v6875
    %v9492 = vpack.c.b16 %v6900, %v6876
    %v9493 = vpack.c.b16 %v6901, %v6877
    %v9494 = vpack.c.b16 %v6902, %v6878
    %v9495 = vpack.c.b16 %v6903, %v6879
    %v9496 = vpack.c.b16 %v6904, %v6880
    %v9497 = vpack.c.b16 %v6929, %v6905
    %v9498 = vpack.c.b16 %v6930, %v6906
    %v9499 = vpack.c.b16 %v6931, %v6907
    %v9500 = vpack.c.b16 %v6932, %v6908
    %v9501 = vpack.c.b16 %v6933, %v6909
    %v9502 = vpack.c.b16 %v6934, %v6910
    %v9503 = vpack.c.b16 %v6935, %v6911
    %v9504 = vpack.c.b16 %v6936, %v6912
    %v9505 = vpack.c.b16 %v6937, %v6913
    %v9506 = vpack.c.b16 %v6938, %v6914
    %v9507 = vpack.c.b16 %v6939, %v6915
    %v9508 = vpack.c.b16 %v6940, %v6916
    %v9509 = vpack.c.b16 %v6941, %v6917
    %v9510 = vpack.c.b16 %v6942, %v6918
    %v9511 = vpack.c.b16 %v6943, %v6919
    %v9512 = vpack.c.b16 %v6944, %v6920
    %v9513 = vpack.c.b16 %v6945, %v6921
    %v9514 = vpack.c.b16 %v6946, %v6922
    %v9515 = vpack.c.b16 %v6947, %v6923
    %v9516 = vpack.c.b16 %v6948, %v6924
    %v9517 = vpack.c.b16 %v6949, %v6925
    %v9518 = vpack.c.b16 %v6950, %v6926
    %v9519 = vpack.c.b16 %v6951, %v6927
    %v9520 = vpack.c.b16 %v6952, %v6928
    %v9521 = vpack.c.b16 %v6977, %v6953
    %v9522 = vpack.c.b16 %v6978, %v6954
    %v9523 = vpack.c.b16 %v6979, %v6955
    %v9524 = vpack.c.b16 %v6980, %v6956
    %v9525 = vpack.c.b16 %v6981, %v6957
    %v9526 = vpack.c.b16 %v6982, %v6958
    %v9527 = vpack.c.b16 %v6983, %v6959
    %v9528 = vpack.c.b16 %v6984, %v6960
    %v9529 = vpack.c.b16 %v6985, %v6961
    %v9530 = vpack.c.b16 %v6986, %v6962
    %v9531 = vpack.c.b16 %v6987, %v6963
    %v9532 = vpack.c.b16 %v6988, %v6964
    %v9533 = vpack.c.b16 %v6989, %v6965
    %v9534 = vpack.c.b16 %v6990, %v6966
    %v9535 = vpack.c.b16 %v6991, %v6967
    %v9536 = vpack.c.b16 %v6992, %v6968
    %v9537 = vpack.c.b16 %v6993, %v6969
    %v9538 = vpack.c.b16 %v6994, %v6970
    %v9539 = vpack.c.b16 %v6995, %v6971
    %v9540 = vpack.c.b16 %v6996, %v6972
    %v9541 = vpack.c.b16 %v6997, %v6973
    %v9542 = vpack.c.b16 %v6998, %v6974
    %v9543 = vpack.c.b16 %v6999, %v6975
    %v9544 = vpack.c.b16 %v7000, %v6976
    %v9545 = vpack.c.b16 %v7025, %v7001
    %v9546 = vpack.c.b16 %v7026, %v7002
    %v9547 = vpack.c.b16 %v7027, %v7003
    %v9548 = vpack.c.b16 %v7028, %v7004
    %v9549 = vpack.c.b16 %v7029, %v7005
    %v9550 = vpack.c.b16 %v7030, %v7006
    %v9551 = vpack.c.b16 %v7031, %v7007
    %v9552 = vpack.c.b16 %v7032, %v7008
    %v9553 = vpack.c.b16 %v7033, %v7009
    %v9554 = vpack.c.b16 %v7034, %v7010
    %v9555 = vpack.c.b16 %v7035, %v7011
    %v9556 = vpack.c.b16 %v7036, %v7012
    %v9557 = vpack.c.b16 %v7037, %v7013
    %v9558 = vpack.c.b16 %v7038, %v7014
    %v9559 = vpack.c.b16 %v7039, %v7015
    %v9560 = vpack.c.b16 %v7040, %v7016
    %v9561 = vpack.c.b16 %v7041, %v7017
    %v9562 = vpack.c.b16 %v7042, %v7018
    %v9563 = vpack.c.b16 %v7043, %v7019
    %v9564 = vpack.c.b16 %v7044, %v7020
    %v9565 = vpack.c.b16 %v7045, %v7021
    %v9566 = vpack.c.b16 %v7046, %v7022
    %v9567 = vpack.c.b16 %v7047, %v7023
    %v9568 = vpack.c.b16 %v7048, %v7024
    %v9569 = vpack.c.b16 %v7073, %v7049
    %v9570 = vpack.c.b16 %v7074, %v7050
    %v9571 = vpack.c.b16 %v7075, %v7051
    %v9572 = vpack.c.b16 %v7076, %v7052
    %v9573 = vpack.c.b16 %v7077, %v7053
    %v9574 = vpack.c.b16 %v7078, %v7054
    %v9575 = vpack.c.b16 %v7079, %v7055
    %v9576 = vpack.c.b16 %v7080, %v7056
    %v9577 = vpack.c.b16 %v7081, %v7057
    %v9578 = vpack.c.b16 %v7082, %v7058
    %v9579 = vpack.c.b16 %v7083, %v7059
    %v9580 = vpack.c.b16 %v7084, %v7060
    %v9581 = vpack.c.b16 %v7085, %v7061
    %v9582 = vpack.c.b16 %v7086, %v7062
    %v9583 = vpack.c.b16 %v7087, %v7063
    %v9584 = vpack.c.b16 %v7088, %v7064
    %v9585 = vpack.c.b16 %v7089, %v7065
    %v9586 = vpack.c.b16 %v7090, %v7066
    %v9587 = vpack.c.b16 %v7091, %v7067
    %v9588 = vpack.c.b16 %v7092, %v7068
    %v9589 = vpack.c.b16 %v7093, %v7069
    %v9590 = vpack.c.b16 %v7094, %v7070
    %v9591 = vpack.c.b16 %v7095, %v7071
    %v9592 = vpack.c.b16 %v7096, %v7072
    %v9593 = vpack.c.b16 %v7121, %v7097
    %v9594 = vpack.c.b16 %v7122, %v7098
    %v9595 = vpack.c.b16 %v7123, %v7099
    %v9596 = vpack.c.b16 %v7124, %v7100
    %v9597 = vpack.c.b16 %v7125, %v7101
    %v9598 = vpack.c.b16 %v7126, %v7102
    %v9599 = vpack.c.b16 %v7127, %v7103
    %v9600 = vpack.c.b16 %v7128, %v7104
    %v9601 = vpack.c.b16 %v7129, %v7105
    %v9602 = vpack.c.b16 %v7130, %v7106
    %v9603 = vpack.c.b16 %v7131, %v7107
    %v9604 = vpack.c.b16 %v7132, %v7108
    %v9605 = vpack.c.b16 %v7133, %v7109
    %v9606 = vpack.c.b16 %v7134, %v7110
    %v9607 = vpack.c.b16 %v7135, %v7111
    %v9608 = vpack.c.b16 %v7136, %v7112
    %v9609 = vpack.c.b16 %v7137, %v7113
    %v9610 = vpack.c.b16 %v7138, %v7114
    %v9611 = vpack.c.b16 %v7139, %v7115
    %v9612 = vpack.c.b16 %v7140, %v7116
    %v9613 = vpack.c.b16 %v7141, %v7117
    %v9614 = vpack.c.b16 %v7142, %v7118
    %v9615 = vpack.c.b16 %v7143, %v7119
    %v9616 = vpack.c.b16 %v7144, %v7120
    %v9617 = vpack.c.b16 %v7169, %v7145
    %v9618 = vpack.c.b16 %v7170, %v7146
    %v9619 = vpack.c.b16 %v7171, %v7147
    %v9620 = vpack.c.b16 %v7172, %v7148
    %v9621 = vpack.c.b16 %v7173, %v7149
    %v9622 = vpack.c.b16 %v7174, %v7150
    %v9623 = vpack.c.b16 %v7175, %v7151
    %v9624 = vpack.c.b16 %v7176, %v7152
    %v9625 = vpack.c.b16 %v7177, %v7153
    %v9626 = vpack.c.b16 %v7178, %v7154
    %v9627 = vpack.c.b16 %v7179, %v7155
    %v9628 = vpack.c.b16 %v7180, %v7156
    %v9629 = vpack.c.b16 %v7181, %v7157
    %v9630 = vpack.c.b16 %v7182, %v7158
    %v9631 = vpack.c.b16 %v7183, %v7159
    %v9632 = vpack.c.b16 %v7184, %v7160
    %v9633 = vpack.c.b16 %v7185, %v7161
    %v9634 = vpack.c.b16 %v7186, %v7162
    %v9635 = vpack.c.b16 %v7187, %v7163
    %v9636 = vpack.c.b16 %v7188, %v7164
    %v9637 = vpack.c.b16 %v7189, %v7165
    %v9638 = vpack.c.b16 %v7190, %v7166
    %v9639 = vpack.c.b16 %v7191, %v7167
    %v9640 = vpack.c.b16 %v7192, %v7168
    %v9641 = vpack.c.b16 %v7217, %v7193
    %v9642 = vpack.c.b16 %v7218, %v7194
    %v9643 = vpack.c.b16 %v7219, %v7195
    %v9644 = vpack.c.b16 %v7220, %v7196
    %v9645 = vpack.c.b16 %v7221, %v7197
    %v9646 = vpack.c.b16 %v7222, %v7198
    %v9647 = vpack.c.b16 %v7223, %v7199
    %v9648 = vpack.c.b16 %v7224, %v7200
    %v9649 = vpack.c.b16 %v7225, %v7201
    %v9650 = vpack.c.b16 %v7226, %v7202
    %v9651 = vpack.c.b16 %v7227, %v7203
    %v9652 = vpack.c.b16 %v7228, %v7204
    %v9653 = vpack.c.b16 %v7229, %v7205
    %v9654 = vpack.c.b16 %v7230, %v7206
    %v9655 = vpack.c.b16 %v7231, %v7207
    %v9656 = vpack.c.b16 %v7232, %v7208
    %v9657 = vpack.c.b16 %v7233, %v7209
    %v9658 = vpack.c.b16 %v7234, %v7210
    %v9659 = vpack.c.b16 %v7235, %v7211
    %v9660 = vpack.c.b16 %v7236, %v7212
    %v9661 = vpack.c.b16 %v7237, %v7213
    %v9662 = vpack.c.b16 %v7238, %v7214
    %v9663 = vpack.c.b16 %v7239, %v7215
    %v9664 = vpack.c.b16 %v7240, %v7216
    %v9665 = vpack.c.b16 %v7265, %v7241
    %v9666 = vpack.c.b16 %v7266, %v7242
    %v9667 = vpack.c.b16 %v7267, %v7243
    %v9668 = vpack.c.b16 %v7268, %v7244
    %v9669 = vpack.c.b16 %v7269, %v7245
    %v9670 = vpack.c.b16 %v7270, %v7246
    %v9671 = vpack.c.b16 %v7271, %v7247
    %v9672 = vpack.c.b16 %v7272, %v7248
    %v9673 = vpack.c.b16 %v7273, %v7249
    %v9674 = vpack.c.b16 %v7274, %v7250
    %v9675 = vpack.c.b16 %v7275, %v7251
    %v9676 = vpack.c.b16 %v7276, %v7252
    %v9677 = vpack.c.b16 %v7277, %v7253
    %v9678 = vpack.c.b16 %v7278, %v7254
    %v9679 = vpack.c.b16 %v7279, %v7255
    %v9680 = vpack.c.b16 %v7280, %v7256
    %v9681 = vpack.c.b16 %v7281, %v7257
    %v9682 = vpack.c.b16 %v7282, %v7258
    %v9683 = vpack.c.b16 %v7283, %v7259
    %v9684 = vpack.c.b16 %v7284, %v7260
    %v9685 = vpack.c.b16 %v7285, %v7261
    %v9686 = vpack.c.b16 %v7286, %v7262
    %v9687 = vpack.c.b16 %v7287, %v7263
    %v9688 = vpack.c.b16 %v7288, %v7264
    %v9689 = vpack.c.b16 %v7313, %v7289
    %v9690 = vpack.c.b16 %v7314, %v7290
    %v9691 = vpack.c.b16 %v7315, %v7291
    %v9692 = vpack.c.b16 %v7316, %v7292
    %v9693 = vpack.c.b16 %v7317, %v7293
    %v9694 = vpack.c.b16 %v7318, %v7294
    %v9695 = vpack.c.b16 %v7319, %v7295
    %v9696 = vpack.c.b16 %v7320, %v7296
    %v9697 = vpack.c.b16 %v7321, %v7297
    %v9698 = vpack.c.b16 %v7322, %v7298
    %v9699 = vpack.c.b16 %v7323, %v7299
    %v9700 = vpack.c.b16 %v7324, %v7300
    %v9701 = vpack.c.b16 %v7325, %v7301
    %v9702 = vpack.c.b16 %v7326, %v7302
    %v9703 = vpack.c.b16 %v7327, %v7303
    %v9704 = vpack.c.b16 %v7328, %v7304
    %v9705 = vpack.c.b16 %v7329, %v7305
    %v9706 = vpack.c.b16 %v7330, %v7306
    %v9707 = vpack.c.b16 %v7331, %v7307
    %v9708 = vpack.c.b16 %v7332, %v7308
    %v9709 = vpack.c.b16 %v7333, %v7309
    %v9710 = vpack.c.b16 %v7334, %v7310
    %v9711 = vpack.c.b16 %v7335, %v7311
    %v9712 = vpack.c.b16 %v7336, %v7312
    %v9713 = vpack.c.b16 %v7361, %v7337
    %v9714 = vpack.c.b16 %v7362, %v7338
    %v9715 = vpack.c.b16 %v7363, %v7339
    %v9716 = vpack.c.b16 %v7364, %v7340
    %v9717 = vpack.c.b16 %v7365, %v7341
    %v9718 = vpack.c.b16 %v7366, %v7342
    %v9719 = vpack.c.b16 %v7367, %v7343
    %v9720 = vpack.c.b16 %v7368, %v7344
    %v9721 = vpack.c.b16 %v7369, %v7345
    %v9722 = vpack.c.b16 %v7370, %v7346
    %v9723 = vpack.c.b16 %v7371, %v7347
    %v9724 = vpack.c.b16 %v7372, %v7348
    %v9725 = vpack.c.b16 %v7373, %v7349
    %v9726 = vpack.c.b16 %v7374, %v7350
    %v9727 = vpack.c.b16 %v7375, %v7351
    %v9728 = vpack.c.b16 %v7376, %v7352
    %v9729 = vpack.c.b16 %v7377, %v7353
    %v9730 = vpack.c.b16 %v7378, %v7354
    %v9731 = vpack.c.b16 %v7379, %v7355
    %v9732 = vpack.c.b16 %v7380, %v7356
    %v9733 = vpack.c.b16 %v7381, %v7357
    %v9734 = vpack.c.b16 %v7382, %v7358
    %v9735 = vpack.c.b16 %v7383, %v7359
    %v9736 = vpack.c.b16 %v7384, %v7360
    %v9737 = vpack.c.b16 %v7409, %v7385
    %v9738 = vpack.c.b16 %v7410, %v7386
    %v9739 = vpack.c.b16 %v7411, %v7387
    %v9740 = vpack.c.b16 %v7412, %v7388
    %v9741 = vpack.c.b16 %v7413, %v7389
    %v9742 = vpack.c.b16 %v7414, %v7390
    %v9743 = vpack.c.b16 %v7415, %v7391
    %v9744 = vpack.c.b16 %v7416, %v7392
    %v9745 = vpack.c.b16 %v7417, %v7393
    %v9746 = vpack.c.b16 %v7418, %v7394
    %v9747 = vpack.c.b16 %v7419, %v7395
    %v9748 = vpack.c.b16 %v7420, %v7396
    %v9749 = vpack.c.b16 %v7421, %v7397
    %v9750 = vpack.c.b16 %v7422, %v7398
    %v9751 = vpack.c.b16 %v7423, %v7399
    %v9752 = vpack.c.b16 %v7424, %v7400
    %v9753 = vpack.c.b16 %v7425, %v7401
    %v9754 = vpack.c.b16 %v7426, %v7402
    %v9755 = vpack.c.b16 %v7427, %v7403
    %v9756 = vpack.c.b16 %v7428, %v7404
    %v9757 = vpack.c.b16 %v7429, %v7405
    %v9758 = vpack.c.b16 %v7430, %v7406
    %v9759 = vpack.c.b16 %v7431, %v7407
    %v9760 = vpack.c.b16 %v7432, %v7408
    %v9761 = vpack.c.b16 %v7457, %v7433
    %v9762 = vpack.c.b16 %v7458, %v7434
    %v9763 = vpack.c.b16 %v7459, %v7435
    %v9764 = vpack.c.b16 %v7460, %v7436
    %v9765 = vpack.c.b16 %v7461, %v7437
    %v9766 = vpack.c.b16 %v7462, %v7438
    %v9767 = vpack.c.b16 %v7463, %v7439
    %v9768 = vpack.c.b16 %v7464, %v7440
    %v9769 = vpack.c.b16 %v7465, %v7441
    %v9770 = vpack.c.b16 %v7466, %v7442
    %v9771 = vpack.c.b16 %v7467, %v7443
    %v9772 = vpack.c.b16 %v7468, %v7444
    %v9773 = vpack.c.b16 %v7469, %v7445
    %v9774 = vpack.c.b16 %v7470, %v7446
    %v9775 = vpack.c.b16 %v7471, %v7447
    %v9776 = vpack.c.b16 %v7472, %v7448
    %v9777 = vpack.c.b16 %v7473, %v7449
    %v9778 = vpack.c.b16 %v7474, %v7450
    %v9779 = vpack.c.b16 %v7475, %v7451
    %v9780 = vpack.c.b16 %v7476, %v7452
    %v9781 = vpack.c.b16 %v7477, %v7453
    %v9782 = vpack.c.b16 %v7478, %v7454
    %v9783 = vpack.c.b16 %v7479, %v7455
    %v9784 = vpack.c.b16 %v7480, %v7456
    %v9785 = vpack.c.b16 %v7505, %v7481
    %v9786 = vpack.c.b16 %v7506, %v7482
    %v9787 = vpack.c.b16 %v7507, %v7483
    %v9788 = vpack.c.b16 %v7508, %v7484
    %v9789 = vpack.c.b16 %v7509, %v7485
    %v9790 = vpack.c.b16 %v7510, %v7486
    %v9791 = vpack.c.b16 %v7511, %v7487
    %v9792 = vpack.c.b16 %v7512, %v7488
    %v9793 = vpack.c.b16 %v7513, %v7489
    %v9794 = vpack.c.b16 %v7514, %v7490
    %v9795 = vpack.c.b16 %v7515, %v7491
    %v9796 = vpack.c.b16 %v7516, %v7492
    %v9797 = vpack.c.b16 %v7517, %v7493
    %v9798 = vpack.c.b16 %v7518, %v7494
    %v9799 = vpack.c.b16 %v7519, %v7495
    %v9800 = vpack.c.b16 %v7520, %v7496
    %v9801 = vpack.c.b16 %v7521, %v7497
    %v9802 = vpack.c.b16 %v7522, %v7498
    %v9803 = vpack.c.b16 %v7523, %v7499
    %v9804 = vpack.c.b16 %v7524, %v7500
    %v9805 = vpack.c.b16 %v7525, %v7501
    %v9806 = vpack.c.b16 %v7526, %v7502
    %v9807 = vpack.c.b16 %v7527, %v7503
    %v9808 = vpack.c.b16 %v7528, %v7504
    %v9809 = vpack.c.b16 %v7553, %v7529
    %v9810 = vpack.c.b16 %v7554, %v7530
    %v9811 = vpack.c.b16 %v7555, %v7531
    %v9812 = vpack.c.b16 %v7556, %v7532
    %v9813 = vpack.c.b16 %v7557, %v7533
    %v9814 = vpack.c.b16 %v7558, %v7534
    %v9815 = vpack.c.b16 %v7559, %v7535
    %v9816 = vpack.c.b16 %v7560, %v7536
    %v9817 = vpack.c.b16 %v7561, %v7537
    %v9818 = vpack.c.b16 %v7562, %v7538
    %v9819 = vpack.c.b16 %v7563, %v7539
    %v9820 = vpack.c.b16 %v7564, %v7540
    %v9821 = vpack.c.b16 %v7565, %v7541
    %v9822 = vpack.c.b16 %v7566, %v7542
    %v9823 = vpack.c.b16 %v7567, %v7543
    %v9824 = vpack.c.b16 %v7568, %v7544
    %v9825 = vpack.c.b16 %v7569, %v7545
    %v9826 = vpack.c.b16 %v7570, %v7546
    %v9827 = vpack.c.b16 %v7571, %v7547
    %v9828 = vpack.c.b16 %v7572, %v7548
    %v9829 = vpack.c.b16 %v7573, %v7549
    %v9830 = vpack.c.b16 %v7574, %v7550
    %v9831 = vpack.c.b16 %v7575, %v7551
    %v9832 = vpack.c.b16 %v7576, %v7552
    %v9833 = vpack.c.b16 %v7601, %v7577
    %v9834 = vpack.c.b16 %v7602, %v7578
    %v9835 = vpack.c.b16 %v7603, %v7579
    %v9836 = vpack.c.b16 %v7604, %v7580
    %v9837 = vpack.c.b16 %v7605, %v7581
    %v9838 = vpack.c.b16 %v7606, %v7582
    %v9839 = vpack.c.b16 %v7607, %v7583
    %v9840 = vpack.c.b16 %v7608, %v7584
    %v9841 = vpack.c.b16 %v7609, %v7585
    %v9842 = vpack.c.b16 %v7610, %v7586
    %v9843 = vpack.c.b16 %v7611, %v7587
    %v9844 = vpack.c.b16 %v7612, %v7588
    %v9845 = vpack.c.b16 %v7613, %v7589
    %v9846 = vpack.c.b16 %v7614, %v7590
    %v9847 = vpack.c.b16 %v7615, %v7591
    %v9848 = vpack.c.b16 %v7616, %v7592
    %v9849 = vpack.c.b16 %v7617, %v7593
    %v9850 = vpack.c.b16 %v7618, %v7594
    %v9851 = vpack.c.b16 %v7619, %v7595
    %v9852 = vpack.c.b16 %v7620, %v7596
    %v9853 = vpack.c.b16 %v7621, %v7597
    %v9854 = vpack.c.b16 %v7622, %v7598
    %v9855 = vpack.c.b16 %v7623, %v7599
    %v9856 = vpack.c.b16 %v7624, %v7600
    %v9857 = vpack.c.b16 %v7649, %v7625
    %v9858 = vpack.c.b16 %v7650, %v7626
    %v9859 = vpack.c.b16 %v7651, %v7627
    %v9860 = vpack.c.b16 %v7652, %v7628
    %v9861 = vpack.c.b16 %v7653, %v7629
    %v9862 = vpack.c.b16 %v7654, %v7630
    %v9863 = vpack.c.b16 %v7655, %v7631
    %v9864 = vpack.c.b16 %v7656, %v7632
    %v9865 = vpack.c.b16 %v7657, %v7633
    %v9866 = vpack.c.b16 %v7658, %v7634
    %v9867 = vpack.c.b16 %v7659, %v7635
    %v9868 = vpack.c.b16 %v7660, %v7636
    %v9869 = vpack.c.b16 %v7661, %v7637
    %v9870 = vpack.c.b16 %v7662, %v7638
    %v9871 = vpack.c.b16 %v7663, %v7639
    %v9872 = vpack.c.b16 %v7664, %v7640
    %v9873 = vpack.c.b16 %v7665, %v7641
    %v9874 = vpack.c.b16 %v7666, %v7642
    %v9875 = vpack.c.b16 %v7667, %v7643
    %v9876 = vpack.c.b16 %v7668, %v7644
    %v9877 = vpack.c.b16 %v7669, %v7645
    %v9878 = vpack.c.b16 %v7670, %v7646
    %v9879 = vpack.c.b16 %v7671, %v7647
    %v9880 = vpack.c.b16 %v7672, %v7648
    %v9881 = vpack.c.b16 %v7697, %v7673
    %v9882 = vpack.c.b16 %v7698, %v7674
    %v9883 = vpack.c.b16 %v7699, %v7675
    %v9884 = vpack.c.b16 %v7700, %v7676
    %v9885 = vpack.c.b16 %v7701, %v7677
    %v9886 = vpack.c.b16 %v7702, %v7678
    %v9887 = vpack.c.b16 %v7703, %v7679
    %v9888 = vpack.c.b16 %v7704, %v7680
    %v9889 = vpack.c.b16 %v7705, %v7681
    %v9890 = vpack.c.b16 %v7706, %v7682
    %v9891 = vpack.c.b16 %v7707, %v7683
    %v9892 = vpack.c.b16 %v7708, %v7684
    %v9893 = vpack.c.b16 %v7709, %v7685
    %v9894 = vpack.c.b16 %v7710, %v7686
    %v9895 = vpack.c.b16 %v7711, %v7687
    %v9896 = vpack.c.b16 %v7712, %v7688
    %v9897 = vpack.c.b16 %v7713, %v7689
    %v9898 = vpack.c.b16 %v7714, %v7690
    %v9899 = vpack.c.b16 %v7715, %v7691
    %v9900 = vpack.c.b16 %v7716, %v7692
    %v9901 = vpack.c.b16 %v7717, %v7693
    %v9902 = vpack.c.b16 %v7718, %v7694
    %v9903 = vpack.c.b16 %v7719, %v7695
    %v9904 = vpack.c.b16 %v7720, %v7696
    %v9905 = vpack.c.b16 %v7745, %v7721
    %v9906 = vpack.c.b16 %v7746, %v7722
    %v9907 = vpack.c.b16 %v7747, %v7723
    %v9908 = vpack.c.b16 %v7748, %v7724
    %v9909 = vpack.c.b16 %v7749, %v7725
    %v9910 = vpack.c.b16 %v7750, %v7726
    %v9911 = vpack.c.b16 %v7751, %v7727
    %v9912 = vpack.c.b16 %v7752, %v7728
    %v9913 = vpack.c.b16 %v7753, %v7729
    %v9914 = vpack.c.b16 %v7754, %v7730
    %v9915 = vpack.c.b16 %v7755, %v7731
    %v9916 = vpack.c.b16 %v7756, %v7732
    %v9917 = vpack.c.b16 %v7757, %v7733
    %v9918 = vpack.c.b16 %v7758, %v7734
    %v9919 = vpack.c.b16 %v7759, %v7735
    %v9920 = vpack.c.b16 %v7760, %v7736
    %v9921 = vpack.c.b16 %v7761, %v7737
    %v9922 = vpack.c.b16 %v7762, %v7738
    %v9923 = vpack.c.b16 %v7763, %v7739
    %v9924 = vpack.c.b16 %v7764, %v7740
    %v9925 = vpack.c.b16 %v7765, %v7741
    %v9926 = vpack.c.b16 %v7766, %v7742
    %v9927 = vpack.c.b16 %v7767, %v7743
    %v9928 = vpack.c.b16 %v7768, %v7744
    %v9929 = vpack.c.b16 %v7793, %v7769
    %v9930 = vpack.c.b16 %v7794, %v7770
    %v9931 = vpack.c.b16 %v7795, %v7771
    %v9932 = vpack.c.b16 %v7796, %v7772
    %v9933 = vpack.c.b16 %v7797, %v7773
    %v9934 = vpack.c.b16 %v7798, %v7774
    %v9935 = vpack.c.b16 %v7799, %v7775
    %v9936 = vpack.c.b16 %v7800, %v7776
    %v9937 = vpack.c.b16 %v7801, %v7777
    %v9938 = vpack.c.b16 %v7802, %v7778
    %v9939 = vpack.c.b16 %v7803, %v7779
    %v9940 = vpack.c.b16 %v7804, %v7780
    %v9941 = vpack.c.b16 %v7805, %v7781
    %v9942 = vpack.c.b16 %v7806, %v7782
    %v9943 = vpack.c.b16 %v7807, %v7783
    %v9944 = vpack.c.b16 %v7808, %v7784
    %v9945 = vpack.c.b16 %v7809, %v7785
    %v9946 = vpack.c.b16 %v7810, %v7786
    %v9947 = vpack.c.b16 %v7811, %v7787
    %v9948 = vpack.c.b16 %v7812, %v7788
    %v9949 = vpack.c.b16 %v7813, %v7789
    %v9950 = vpack.c.b16 %v7814, %v7790
    %v9951 = vpack.c.b16 %v7815, %v7791
    %v9952 = vpack.c.b16 %v7816, %v7792
    %v9953 = vpack.c.b16 %v7841, %v7817
    %v9954 = vpack.c.b16 %v7842, %v7818
    %v9955 = vpack.c.b16 %v7843, %v7819
    %v9956 = vpack.c.b16 %v7844, %v7820
    %v9957 = vpack.c.b16 %v7845, %v7821
    %v9958 = vpack.c.b16 %v7846, %v7822
    %v9959 = vpack.c.b16 %v7847, %v7823
    %v9960 = vpack.c.b16 %v7848, %v7824
    %v9961 = vpack.c.b16 %v7849, %v7825
    %v9962 = vpack.c.b16 %v7850, %v7826
    %v9963 = vpack.c.b16 %v7851, %v7827
    %v9964 = vpack.c.b16 %v7852, %v7828
    %v9965 = vpack.c.b16 %v7853, %v7829
    %v9966 = vpack.c.b16 %v7854, %v7830
    %v9967 = vpack.c.b16 %v7855, %v7831
    %v9968 = vpack.c.b16 %v7856, %v7832
    %v9969 = vpack.c.b16 %v7857, %v7833
    %v9970 = vpack.c.b16 %v7858, %v7834
    %v9971 = vpack.c.b16 %v7859, %v7835
    %v9972 = vpack.c.b16 %v7860, %v7836
    %v9973 = vpack.c.b16 %v7861, %v7837
    %v9974 = vpack.c.b16 %v7862, %v7838
    %v9975 = vpack.c.b16 %v7863, %v7839
    %v9976 = vpack.c.b16 %v7864, %v7840
    %v9977 = vpack.c.b16 %v7889, %v7865
    %v9978 = vpack.c.b16 %v7890, %v7866
    %v9979 = vpack.c.b16 %v7891, %v7867
    %v9980 = vpack.c.b16 %v7892, %v7868
    %v9981 = vpack.c.b16 %v7893, %v7869
    %v9982 = vpack.c.b16 %v7894, %v7870
    %v9983 = vpack.c.b16 %v7895, %v7871
    %v9984 = vpack.c.b16 %v7896, %v7872
    %v9985 = vpack.c.b16 %v7897, %v7873
    %v9986 = vpack.c.b16 %v7898, %v7874
    %v9987 = vpack.c.b16 %v7899, %v7875
    %v9988 = vpack.c.b16 %v7900, %v7876
    %v9989 = vpack.c.b16 %v7901, %v7877
    %v9990 = vpack.c.b16 %v7902, %v7878
    %v9991 = vpack.c.b16 %v7903, %v7879
    %v9992 = vpack.c.b16 %v7904, %v7880
    %v9993 = vpack.c.b16 %v7905, %v7881
    %v9994 = vpack.c.b16 %v7906, %v7882
    %v9995 = vpack.c.b16 %v7907, %v7883
    %v9996 = vpack.c.b16 %v7908, %v7884
    %v9997 = vpack.c.b16 %v7909, %v7885
    %v9998 = vpack.c.b16 %v7910, %v7886
    %v9999 = vpack.c.b16 %v7911, %v7887
    %v10000 = vpack.c.b16 %v7912, %v7888
    %v10001 = vpack.c.b16 %v7937, %v7913
    %v10002 = vpack.c.b16 %v7938, %v7914
    %v10003 = vpack.c.b16 %v7939, %v7915
    %v10004 = vpack.c.b16 %v7940, %v7916
    %v10005 = vpack.c.b16 %v7941, %v7917
    %v10006 = vpack.c.b16 %v7942, %v7918
    %v10007 = vpack.c.b16 %v7943, %v7919
    %v10008 = vpack.c.b16 %v7944, %v7920
    %v10009 = vpack.c.b16 %v7945, %v7921
    %v10010 = vpack.c.b16 %v7946, %v7922
    %v10011 = vpack.c.b16 %v7947, %v7923
    %v10012 = vpack.c.b16 %v7948, %v7924
    %v10013 = vpack.c.b16 %v7949, %v7925
    %v10014 = vpack.c.b16 %v7950, %v7926
    %v10015 = vpack.c.b16 %v7951, %v7927
    %v10016 = vpack.c.b16 %v7952, %v7928
    %v10017 = vpack.c.b16 %v7953, %v7929
    %v10018 = vpack.c.b16 %v7954, %v7930
    %v10019 = vpack.c.b16 %v7955, %v7931
    %v10020 = vpack.c.b16 %v7956, %v7932
    %v10021 = vpack.c.b16 %v7957, %v7933
    %v10022 = vpack.c.b16 %v7958, %v7934
    %v10023 = vpack.c.b16 %v7959, %v7935
    %v10024 = vpack.c.b16 %v7960, %v7936
    %v10025 = vpack.c.b16 %v7985, %v7961
    %v10026 = vpack.c.b16 %v7986, %v7962
    %v10027 = vpack.c.b16 %v7987, %v7963
    %v10028 = vpack.c.b16 %v7988, %v7964
    %v10029 = vpack.c.b16 %v7989, %v7965
    %v10030 = vpack.c.b16 %v7990, %v7966
    %v10031 = vpack.c.b16 %v7991, %v7967
    %v10032 = vpack.c.b16 %v7992, %v7968
    %v10033 = vpack.c.b16 %v7993, %v7969
    %v10034 = vpack.c.b16 %v7994, %v7970
    %v10035 = vpack.c.b16 %v7995, %v7971
    %v10036 = vpack.c.b16 %v7996, %v7972
    %v10037 = vpack.c.b16 %v7997, %v7973
    %v10038 = vpack.c.b16 %v7998, %v7974
    %v10039 = vpack.c.b16 %v7999, %v7975
    %v10040 = vpack.c.b16 %v8000, %v7976
    %v10041 = vpack.c.b16 %v8001, %v7977
    %v10042 = vpack.c.b16 %v8002, %v7978
    %v10043 = vpack.c.b16 %v8003, %v7979
    %v10044 = vpack.c.b16 %v8004, %v7980
    %v10045 = vpack.c.b16 %v8005, %v7981
    %v10046 = vpack.c.b16 %v8006, %v7982
    %v10047 = vpack.c.b16 %v8007, %v7983
    %v10048 = vpack.c.b16 %v8008, %v7984
    %v10049 = vpack.c.b16 %v8033, %v8009
    %v10050 = vpack.c.b16 %v8034, %v8010
    %v10051 = vpack.c.b16 %v8035, %v8011
    %v10052 = vpack.c.b16 %v8036, %v8012
    %v10053 = vpack.c.b16 %v8037, %v8013
    %v10054 = vpack.c.b16 %v8038, %v8014
    %v10055 = vpack.c.b16 %v8039, %v8015
    %v10056 = vpack.c.b16 %v8040, %v8016
    %v10057 = vpack.c.b16 %v8041, %v8017
    %v10058 = vpack.c.b16 %v8042, %v8018
    %v10059 = vpack.c.b16 %v8043, %v8019
    %v10060 = vpack.c.b16 %v8044, %v8020
    %v10061 = vpack.c.b16 %v8045, %v8021
    %v10062 = vpack.c.b16 %v8046, %v8022
    %v10063 = vpack.c.b16 %v8047, %v8023
    %v10064 = vpack.c.b16 %v8048, %v8024
    %v10065 = vpack.c.b16 %v8049, %v8025
    %v10066 = vpack.c.b16 %v8050, %v8026
    %v10067 = vpack.c.b16 %v8051, %v8027
    %v10068 = vpack.c.b16 %v8052, %v8028
    %v10069 = vpack.c.b16 %v8053, %v8029
    %v10070 = vpack.c.b16 %v8054, %v8030
    %v10071 = vpack.c.b16 %v8055, %v8031
    %v10072 = vpack.c.b16 %v8056, %v8032
    %v10073 = vpack.c.b16 %v8081, %v8057
    %v10074 = vpack.c.b16 %v8082, %v8058
    %v10075 = vpack.c.b16 %v8083, %v8059
    %v10076 = vpack.c.b16 %v8084, %v8060
    %v10077 = vpack.c.b16 %v8085, %v8061
    %v10078 = vpack.c.b16 %v8086, %v8062
    %v10079 = vpack.c.b16 %v8087, %v8063
    %v10080 = vpack.c.b16 %v8088, %v8064
    %v10081 = vpack.c.b16 %v8089, %v8065
    %v10082 = vpack.c.b16 %v8090, %v8066
    %v10083 = vpack.c.b16 %v8091, %v8067
    %v10084 = vpack.c.b16 %v8092, %v8068
    %v10085 = vpack.c.b16 %v8093, %v8069
    %v10086 = vpack.c.b16 %v8094, %v8070
    %v10087 = vpack.c.b16 %v8095, %v8071
    %v10088 = vpack.c.b16 %v8096, %v8072
    %v10089 = vpack.c.b16 %v8097, %v8073
    %v10090 = vpack.c.b16 %v8098, %v8074
    %v10091 = vpack.c.b16 %v8099, %v8075
    %v10092 = vpack.c.b16 %v8100, %v8076
    %v10093 = vpack.c.b16 %v8101, %v8077
    %v10094 = vpack.c.b16 %v8102, %v8078
    %v10095 = vpack.c.b16 %v8103, %v8079
    %v10096 = vpack.c.b16 %v8104, %v8080
    %v10097 = vpack.c.b16 %v8129, %v8105
    %v10098 = vpack.c.b16 %v8130, %v8106
    %v10099 = vpack.c.b16 %v8131, %v8107
    %v10100 = vpack.c.b16 %v8132, %v8108
    %v10101 = vpack.c.b16 %v8133, %v8109
    %v10102 = vpack.c.b16 %v8134, %v8110
    %v10103 = vpack.c.b16 %v8135, %v8111
    %v10104 = vpack.c.b16 %v8136, %v8112
    %v10105 = vpack.c.b16 %v8137, %v8113
    %v10106 = vpack.c.b16 %v8138, %v8114
    %v10107 = vpack.c.b16 %v8139, %v8115
    %v10108 = vpack.c.b16 %v8140, %v8116
    %v10109 = vpack.c.b16 %v8141, %v8117
    %v10110 = vpack.c.b16 %v8142, %v8118
    %v10111 = vpack.c.b16 %v8143, %v8119
    %v10112 = vpack.c.b16 %v8144, %v8120
    %v10113 = vpack.c.b16 %v8145, %v8121
    %v10114 = vpack.c.b16 %v8146, %v8122
    %v10115 = vpack.c.b16 %v8147, %v8123
    %v10116 = vpack.c.b16 %v8148, %v8124
    %v10117 = vpack.c.b16 %v8149, %v8125
    %v10118 = vpack.c.b16 %v8150, %v8126
    %v10119 = vpack.c.b16 %v8151, %v8127
    %v10120 = vpack.c.b16 %v8152, %v8128
    %v10121 = vpack.c.b16 %v8177, %v8153
    %v10122 = vpack.c.b16 %v8178, %v8154
    %v10123 = vpack.c.b16 %v8179, %v8155
    %v10124 = vpack.c.b16 %v8180, %v8156
    %v10125 = vpack.c.b16 %v8181, %v8157
    %v10126 = vpack.c.b16 %v8182, %v8158
    %v10127 = vpack.c.b16 %v8183, %v8159
    %v10128 = vpack.c.b16 %v8184, %v8160
    %v10129 = vpack.c.b16 %v8185, %v8161
    %v10130 = vpack.c.b16 %v8186, %v8162
    %v10131 = vpack.c.b16 %v8187, %v8163
    %v10132 = vpack.c.b16 %v8188, %v8164
    %v10133 = vpack.c.b16 %v8189, %v8165
    %v10134 = vpack.c.b16 %v8190, %v8166
    %v10135 = vpack.c.b16 %v8191, %v8167
    %v10136 = vpack.c.b16 %v8192, %v8168
    %v10137 = vpack.c.b16 %v8193, %v8169
    %v10138 = vpack.c.b16 %v8194, %v8170
    %v10139 = vpack.c.b16 %v8195, %v8171
    %v10140 = vpack.c.b16 %v8196, %v8172
    %v10141 = vpack.c.b16 %v8197, %v8173
    %v10142 = vpack.c.b16 %v8198, %v8174
    %v10143 = vpack.c.b16 %v8199, %v8175
    %v10144 = vpack.c.b16 %v8200, %v8176
    %v10145 = vpack.c.b16 %v8225, %v8201
    %v10146 = vpack.c.b16 %v8226, %v8202
    %v10147 = vpack.c.b16 %v8227, %v8203
    %v10148 = vpack.c.b16 %v8228, %v8204
    %v10149 = vpack.c.b16 %v8229, %v8205
    %v10150 = vpack.c.b16 %v8230, %v8206
    %v10151 = vpack.c.b16 %v8231, %v8207
    %v10152 = vpack.c.b16 %v8232, %v8208
    %v10153 = vpack.c.b16 %v8233, %v8209
    %v10154 = vpack.c.b16 %v8234, %v8210
    %v10155 = vpack.c.b16 %v8235, %v8211
    %v10156 = vpack.c.b16 %v8236, %v8212
    %v10157 = vpack.c.b16 %v8237, %v8213
    %v10158 = vpack.c.b16 %v8238, %v8214
    %v10159 = vpack.c.b16 %v8239, %v8215
    %v10160 = vpack.c.b16 %v8240, %v8216
    %v10161 = vpack.c.b16 %v8241, %v8217
    %v10162 = vpack.c.b16 %v8242, %v8218
    %v10163 = vpack.c.b16 %v8243, %v8219
    %v10164 = vpack.c.b16 %v8244, %v8220
    %v10165 = vpack.c.b16 %v8245, %v8221
    %v10166 = vpack.c.b16 %v8246, %v8222
    %v10167 = vpack.c.b16 %v8247, %v8223
    %v10168 = vpack.c.b16 %v8248, %v8224
    %v10169 = vpack.c.b16 %v8273, %v8249
    %v10170 = vpack.c.b16 %v8274, %v8250
    %v10171 = vpack.c.b16 %v8275, %v8251
    %v10172 = vpack.c.b16 %v8276, %v8252
    %v10173 = vpack.c.b16 %v8277, %v8253
    %v10174 = vpack.c.b16 %v8278, %v8254
    %v10175 = vpack.c.b16 %v8279, %v8255
    %v10176 = vpack.c.b16 %v8280, %v8256
    %v10177 = vpack.c.b16 %v8281, %v8257
    %v10178 = vpack.c.b16 %v8282, %v8258
    %v10179 = vpack.c.b16 %v8283, %v8259
    %v10180 = vpack.c.b16 %v8284, %v8260
    %v10181 = vpack.c.b16 %v8285, %v8261
    %v10182 = vpack.c.b16 %v8286, %v8262
    %v10183 = vpack.c.b16 %v8287, %v8263
    %v10184 = vpack.c.b16 %v8288, %v8264
    %v10185 = vpack.c.b16 %v8289, %v8265
    %v10186 = vpack.c.b16 %v8290, %v8266
    %v10187 = vpack.c.b16 %v8291, %v8267
    %v10188 = vpack.c.b16 %v8292, %v8268
    %v10189 = vpack.c.b16 %v8293, %v8269
    %v10190 = vpack.c.b16 %v8294, %v8270
    %v10191 = vpack.c.b16 %v8295, %v8271
    %v10192 = vpack.c.b16 %v8296, %v8272
    %v10193 = vpack.c.b16 %v8321, %v8297
    %v10194 = vpack.c.b16 %v8322, %v8298
    %v10195 = vpack.c.b16 %v8323, %v8299
    %v10196 = vpack.c.b16 %v8324, %v8300
    %v10197 = vpack.c.b16 %v8325, %v8301
    %v10198 = vpack.c.b16 %v8326, %v8302
    %v10199 = vpack.c.b16 %v8327, %v8303
    %v10200 = vpack.c.b16 %v8328, %v8304
    %v10201 = vpack.c.b16 %v8329, %v8305
    %v10202 = vpack.c.b16 %v8330, %v8306
    %v10203 = vpack.c.b16 %v8331, %v8307
    %v10204 = vpack.c.b16 %v8332, %v8308
    %v10205 = vpack.c.b16 %v8333, %v8309
    %v10206 = vpack.c.b16 %v8334, %v8310
    %v10207 = vpack.c.b16 %v8335, %v8311
    %v10208 = vpack.c.b16 %v8336, %v8312
    %v10209 = vpack.c.b16 %v8337, %v8313
    %v10210 = vpack.c.b16 %v8338, %v8314
    %v10211 = vpack.c.b16 %v8339, %v8315
    %v10212 = vpack.c.b16 %v8340, %v8316
    %v10213 = vpack.c.b16 %v8341, %v8317
    %v10214 = vpack.c.b16 %v8342, %v8318
    %v10215 = vpack.c.b16 %v8343, %v8319
    %v10216 = vpack.c.b16 %v8344, %v8320
    %v10217 = vpack.c.b16 %v8369, %v8345
    %v10218 = vpack.c.b16 %v8370, %v8346
    %v10219 = vpack.c.b16 %v8371, %v8347
    %v10220 = vpack.c.b16 %v8372, %v8348
    %v10221 = vpack.c.b16 %v8373, %v8349
    %v10222 = vpack.c.b16 %v8374, %v8350
    %v10223 = vpack.c.b16 %v8375, %v8351
    %v10224 = vpack.c.b16 %v8376, %v8352
    %v10225 = vpack.c.b16 %v8377, %v8353
    %v10226 = vpack.c.b16 %v8378, %v8354
    %v10227 = vpack.c.b16 %v8379, %v8355
    %v10228 = vpack.c.b16 %v8380, %v8356
    %v10229 = vpack.c.b16 %v8381, %v8357
    %v10230 = vpack.c.b16 %v8382, %v8358
    %v10231 = vpack.c.b16 %v8383, %v8359
    %v10232 = vpack.c.b16 %v8384, %v8360
    %v10233 = vpack.c.b16 %v8385, %v8361
    %v10234 = vpack.c.b16 %v8386, %v8362
    %v10235 = vpack.c.b16 %v8387, %v8363
    %v10236 = vpack.c.b16 %v8388, %v8364
    %v10237 = vpack.c.b16 %v8389, %v8365
    %v10238 = vpack.c.b16 %v8390, %v8366
    %v10239 = vpack.c.b16 %v8391, %v8367
    %v10240 = vpack.c.b16 %v8392, %v8368
    %v10241 = vpack.c.b16 %v8417, %v8393
    %v10242 = vpack.c.b16 %v8418, %v8394
    %v10243 = vpack.c.b16 %v8419, %v8395
    %v10244 = vpack.c.b16 %v8420, %v8396
    %v10245 = vpack.c.b16 %v8421, %v8397
    %v10246 = vpack.c.b16 %v8422, %v8398
    %v10247 = vpack.c.b16 %v8423, %v8399
    %v10248 = vpack.c.b16 %v8424, %v8400
    %v10249 = vpack.c.b16 %v8425, %v8401
    %v10250 = vpack.c.b16 %v8426, %v8402
    %v10251 = vpack.c.b16 %v8427, %v8403
    %v10252 = vpack.c.b16 %v8428, %v8404
    %v10253 = vpack.c.b16 %v8429, %v8405
    %v10254 = vpack.c.b16 %v8430, %v8406
    %v10255 = vpack.c.b16 %v8431, %v8407
    %v10256 = vpack.c.b16 %v8432, %v8408
    %v10257 = vpack.c.b16 %v8433, %v8409
    %v10258 = vpack.c.b16 %v8434, %v8410
    %v10259 = vpack.c.b16 %v8435, %v8411
    %v10260 = vpack.c.b16 %v8436, %v8412
    %v10261 = vpack.c.b16 %v8437, %v8413
    %v10262 = vpack.c.b16 %v8438, %v8414
    %v10263 = vpack.c.b16 %v8439, %v8415
    %v10264 = vpack.c.b16 %v8440, %v8416
    %v10265 = vpack.c.b16 %v8465, %v8441
    %v10266 = vpack.c.b16 %v8466, %v8442
    %v10267 = vpack.c.b16 %v8467, %v8443
    %v10268 = vpack.c.b16 %v8468, %v8444
    %v10269 = vpack.c.b16 %v8469, %v8445
    %v10270 = vpack.c.b16 %v8470, %v8446
    %v10271 = vpack.c.b16 %v8471, %v8447
    %v10272 = vpack.c.b16 %v8472, %v8448
    %v10273 = vpack.c.b16 %v8473, %v8449
    %v10274 = vpack.c.b16 %v8474, %v8450
    %v10275 = vpack.c.b16 %v8475, %v8451
    %v10276 = vpack.c.b16 %v8476, %v8452
    %v10277 = vpack.c.b16 %v8477, %v8453
    %v10278 = vpack.c.b16 %v8478, %v8454
    %v10279 = vpack.c.b16 %v8479, %v8455
    %v10280 = vpack.c.b16 %v8480, %v8456
    %v10281 = vpack.c.b16 %v8481, %v8457
    %v10282 = vpack.c.b16 %v8482, %v8458
    %v10283 = vpack.c.b16 %v8483, %v8459
    %v10284 = vpack.c.b16 %v8484, %v8460
    %v10285 = vpack.c.b16 %v8485, %v8461
    %v10286 = vpack.c.b16 %v8486, %v8462
    %v10287 = vpack.c.b16 %v8487, %v8463
    %v10288 = vpack.c.b16 %v8488, %v8464
    %v10289 = vpack.c.b16 %v8513, %v8489
    %v10290 = vpack.c.b16 %v8514, %v8490
    %v10291 = vpack.c.b16 %v8515, %v8491
    %v10292 = vpack.c.b16 %v8516, %v8492
    %v10293 = vpack.c.b16 %v8517, %v8493
    %v10294 = vpack.c.b16 %v8518, %v8494
    %v10295 = vpack.c.b16 %v8519, %v8495
    %v10296 = vpack.c.b16 %v8520, %v8496
    %v10297 = vpack.c.b16 %v8521, %v8497
    %v10298 = vpack.c.b16 %v8522, %v8498
    %v10299 = vpack.c.b16 %v8523, %v8499
    %v10300 = vpack.c.b16 %v8524, %v8500
    %v10301 = vpack.c.b16 %v8525, %v8501
    %v10302 = vpack.c.b16 %v8526, %v8502
    %v10303 = vpack.c.b16 %v8527, %v8503
    %v10304 = vpack.c.b16 %v8528, %v8504
    %v10305 = vpack.c.b16 %v8529, %v8505
    %v10306 = vpack.c.b16 %v8530, %v8506
    %v10307 = vpack.c.b16 %v8531, %v8507
    %v10308 = vpack.c.b16 %v8532, %v8508
    %v10309 = vpack.c.b16 %v8533, %v8509
    %v10310 = vpack.c.b16 %v8534, %v8510
    %v10311 = vpack.c.b16 %v8535, %v8511
    %v10312 = vpack.c.b16 %v8536, %v8512
    %v10313 = vpack.c.b16 %v8561, %v8537
    %v10314 = vpack.c.b16 %v8562, %v8538
    %v10315 = vpack.c.b16 %v8563, %v8539
    %v10316 = vpack.c.b16 %v8564, %v8540
    %v10317 = vpack.c.b16 %v8565, %v8541
    %v10318 = vpack.c.b16 %v8566, %v8542
    %v10319 = vpack.c.b16 %v8567, %v8543
    %v10320 = vpack.c.b16 %v8568, %v8544
    %v10321 = vpack.c.b16 %v8569, %v8545
    %v10322 = vpack.c.b16 %v8570, %v8546
    %v10323 = vpack.c.b16 %v8571, %v8547
    %v10324 = vpack.c.b16 %v8572, %v8548
    %v10325 = vpack.c.b16 %v8573, %v8549
    %v10326 = vpack.c.b16 %v8574, %v8550
    %v10327 = vpack.c.b16 %v8575, %v8551
    %v10328 = vpack.c.b16 %v8576, %v8552
    %v10329 = vpack.c.b16 %v8577, %v8553
    %v10330 = vpack.c.b16 %v8578, %v8554
    %v10331 = vpack.c.b16 %v8579, %v8555
    %v10332 = vpack.c.b16 %v8580, %v8556
    %v10333 = vpack.c.b16 %v8581, %v8557
    %v10334 = vpack.c.b16 %v8582, %v8558
    %v10335 = vpack.c.b16 %v8583, %v8559
    %v10336 = vpack.c.b16 %v8584, %v8560
    %v10337 = vpack.c.b16 %v8609, %v8585
    %v10338 = vpack.c.b16 %v8610, %v8586
    %v10339 = vpack.c.b16 %v8611, %v8587
    %v10340 = vpack.c.b16 %v8612, %v8588
    %v10341 = vpack.c.b16 %v8613, %v8589
    %v10342 = vpack.c.b16 %v8614, %v8590
    %v10343 = vpack.c.b16 %v8615, %v8591
    %v10344 = vpack.c.b16 %v8616, %v8592
    %v10345 = vpack.c.b16 %v8617, %v8593
    %v10346 = vpack.c.b16 %v8618, %v8594
    %v10347 = vpack.c.b16 %v8619, %v8595
    %v10348 = vpack.c.b16 %v8620, %v8596
    %v10349 = vpack.c.b16 %v8621, %v8597
    %v10350 = vpack.c.b16 %v8622, %v8598
    %v10351 = vpack.c.b16 %v8623, %v8599
    %v10352 = vpack.c.b16 %v8624, %v8600
    %v10353 = vpack.c.b16 %v8625, %v8601
    %v10354 = vpack.c.b16 %v8626, %v8602
    %v10355 = vpack.c.b16 %v8627, %v8603
    %v10356 = vpack.c.b16 %v8628, %v8604
    %v10357 = vpack.c.b16 %v8629, %v8605
    %v10358 = vpack.c.b16 %v8630, %v8606
    %v10359 = vpack.c.b16 %v8631, %v8607
    %v10360 = vpack.c.b16 %v8632, %v8608
    %v10361 = vpack.c.b16 %v8657, %v8633
    %v10362 = vpack.c.b16 %v8658, %v8634
    %v10363 = vpack.c.b16 %v8659, %v8635
    %v10364 = vpack.c.b16 %v8660, %v8636
    %v10365 = vpack.c.b16 %v8661, %v8637
    %v10366 = vpack.c.b16 %v8662, %v8638
    %v10367 = vpack.c.b16 %v8663, %v8639
    %v10368 = vpack.c.b16 %v8664, %v8640
    %v10369 = vpack.c.b16 %v8665, %v8641
    %v10370 = vpack.c.b16 %v8666, %v8642
    %v10371 = vpack.c.b16 %v8667, %v8643
    %v10372 = vpack.c.b16 %v8668, %v8644
    %v10373 = vpack.c.b16 %v8669, %v8645
    %v10374 = vpack.c.b16 %v8670, %v8646
    %v10375 = vpack.c.b16 %v8671, %v8647
    %v10376 = vpack.c.b16 %v8672, %v8648
    %v10377 = vpack.c.b16 %v8673, %v8649
    %v10378 = vpack.c.b16 %v8674, %v8650
    %v10379 = vpack.c.b16 %v8675, %v8651
    %v10380 = vpack.c.b16 %v8676, %v8652
    %v10381 = vpack.c.b16 %v8677, %v8653
    %v10382 = vpack.c.b16 %v8678, %v8654
    %v10383 = vpack.c.b16 %v8679, %v8655
    %v10384 = vpack.c.b16 %v8680, %v8656
    %v10385 = vpack.c.b16 %v8705, %v8681
    %v10386 = vpack.c.b16 %v8706, %v8682
    %v10387 = vpack.c.b16 %v8707, %v8683
    %v10388 = vpack.c.b16 %v8708, %v8684
    %v10389 = vpack.c.b16 %v8709, %v8685
    %v10390 = vpack.c.b16 %v8710, %v8686
    %v10391 = vpack.c.b16 %v8711, %v8687
    %v10392 = vpack.c.b16 %v8712, %v8688
    %v10393 = vpack.c.b16 %v8713, %v8689
    %v10394 = vpack.c.b16 %v8714, %v8690
    %v10395 = vpack.c.b16 %v8715, %v8691
    %v10396 = vpack.c.b16 %v8716, %v8692
    %v10397 = vpack.c.b16 %v8717, %v8693
    %v10398 = vpack.c.b16 %v8718, %v8694
    %v10399 = vpack.c.b16 %v8719, %v8695
    %v10400 = vpack.c.b16 %v8720, %v8696
    %v10401 = vpack.c.b16 %v8721, %v8697
    %v10402 = vpack.c.b16 %v8722, %v8698
    %v10403 = vpack.c.b16 %v8723, %v8699
    %v10404 = vpack.c.b16 %v8724, %v8700
    %v10405 = vpack.c.b16 %v8725, %v8701
    %v10406 = vpack.c.b16 %v8726, %v8702
    %v10407 = vpack.c.b16 %v8727, %v8703
    %v10408 = vpack.c.b16 %v8728, %v8704
    %v10409 = vpack.c.b16 %v8753, %v8729
    %v10410 = vpack.c.b16 %v8754, %v8730
    %v10411 = vpack.c.b16 %v8755, %v8731
    %v10412 = vpack.c.b16 %v8756, %v8732
    %v10413 = vpack.c.b16 %v8757, %v8733
    %v10414 = vpack.c.b16 %v8758, %v8734
    %v10415 = vpack.c.b16 %v8759, %v8735
    %v10416 = vpack.c.b16 %v8760, %v8736
    %v10417 = vpack.c.b16 %v8761, %v8737
    %v10418 = vpack.c.b16 %v8762, %v8738
    %v10419 = vpack.c.b16 %v8763, %v8739
    %v10420 = vpack.c.b16 %v8764, %v8740
    %v10421 = vpack.c.b16 %v8765, %v8741
    %v10422 = vpack.c.b16 %v8766, %v8742
    %v10423 = vpack.c.b16 %v8767, %v8743
    %v10424 = vpack.c.b16 %v8768, %v8744
    %v10425 = vpack.c.b16 %v8769, %v8745
    %v10426 = vpack.c.b16 %v8770, %v8746
    %v10427 = vpack.c.b16 %v8771, %v8747
    %v10428 = vpack.c.b16 %v8772, %v8748
    %v10429 = vpack.c.b16 %v8773, %v8749
    %v10430 = vpack.c.b16 %v8774, %v8750
    %v10431 = vpack.c.b16 %v8775, %v8751
    %v10432 = vpack.c.b16 %v8776, %v8752
    %v10433 = vpack.c.b16 %v8801, %v8777
    %v10434 = vpack.c.b16 %v8802, %v8778
    %v10435 = vpack.c.b16 %v8803, %v8779
    %v10436 = vpack.c.b16 %v8804, %v8780
    %v10437 = vpack.c.b16 %v8805, %v8781
    %v10438 = vpack.c.b16 %v8806, %v8782
    %v10439 = vpack.c.b16 %v8807, %v8783
    %v10440 = vpack.c.b16 %v8808, %v8784
    %v10441 = vpack.c.b16 %v8809, %v8785
    %v10442 = vpack.c.b16 %v8810, %v8786
    %v10443 = vpack.c.b16 %v8811, %v8787
    %v10444 = vpack.c.b16 %v8812, %v8788
    %v10445 = vpack.c.b16 %v8813, %v8789
    %v10446 = vpack.c.b16 %v8814, %v8790
    %v10447 = vpack.c.b16 %v8815, %v8791
    %v10448 = vpack.c.b16 %v8816, %v8792
    %v10449 = vpack.c.b16 %v8817, %v8793
    %v10450 = vpack.c.b16 %v8818, %v8794
    %v10451 = vpack.c.b16 %v8819, %v8795
    %v10452 = vpack.c.b16 %v8820, %v8796
    %v10453 = vpack.c.b16 %v8821, %v8797
    %v10454 = vpack.c.b16 %v8822, %v8798
    %v10455 = vpack.c.b16 %v8823, %v8799
    %v10456 = vpack.c.b16 %v8824, %v8800
    %v10457 = vpack.c.b16 %v8849, %v8825
    %v10458 = vpack.c.b16 %v8850, %v8826
    %v10459 = vpack.c.b16 %v8851, %v8827
    %v10460 = vpack.c.b16 %v8852, %v8828
    %v10461 = vpack.c.b16 %v8853, %v8829
    %v10462 = vpack.c.b16 %v8854, %v8830
    %v10463 = vpack.c.b16 %v8855, %v8831
    %v10464 = vpack.c.b16 %v8856, %v8832
    %v10465 = vpack.c.b16 %v8857, %v8833
    %v10466 = vpack.c.b16 %v8858, %v8834
    %v10467 = vpack.c.b16 %v8859, %v8835
    %v10468 = vpack.c.b16 %v8860, %v8836
    %v10469 = vpack.c.b16 %v8861, %v8837
    %v10470 = vpack.c.b16 %v8862, %v8838
    %v10471 = vpack.c.b16 %v8863, %v8839
    %v10472 = vpack.c.b16 %v8864, %v8840
    %v10473 = vpack.c.b16 %v8865, %v8841
    %v10474 = vpack.c.b16 %v8866, %v8842
    %v10475 = vpack.c.b16 %v8867, %v8843
    %v10476 = vpack.c.b16 %v8868, %v8844
    %v10477 = vpack.c.b16 %v8869, %v8845
    %v10478 = vpack.c.b16 %v8870, %v8846
    %v10479 = vpack.c.b16 %v8871, %v8847
    %v10480 = vpack.c.b16 %v8872, %v8848
    %v10481 = vpack.c.b16 %v8897, %v8873
    %v10482 = vpack.c.b16 %v8898, %v8874
    %v10483 = vpack.c.b16 %v8899, %v8875
    %v10484 = vpack.c.b16 %v8900, %v8876
    %v10485 = vpack.c.b16 %v8901, %v8877
    %v10486 = vpack.c.b16 %v8902, %v8878
    %v10487 = vpack.c.b16 %v8903, %v8879
    %v10488 = vpack.c.b16 %v8904, %v8880
    %v10489 = vpack.c.b16 %v8905, %v8881
    %v10490 = vpack.c.b16 %v8906, %v8882
    %v10491 = vpack.c.b16 %v8907, %v8883
    %v10492 = vpack.c.b16 %v8908, %v8884
    %v10493 = vpack.c.b16 %v8909, %v8885
    %v10494 = vpack.c.b16 %v8910, %v8886
    %v10495 = vpack.c.b16 %v8911, %v8887
    %v10496 = vpack.c.b16 %v8912, %v8888
    %v10497 = vpack.c.b16 %v8913, %v8889
    %v10498 = vpack.c.b16 %v8914, %v8890
    %v10499 = vpack.c.b16 %v8915, %v8891
    %v10500 = vpack.c.b16 %v8916, %v8892
    %v10501 = vpack.c.b16 %v8917, %v8893
    %v10502 = vpack.c.b16 %v8918, %v8894
    %v10503 = vpack.c.b16 %v8919, %v8895
    %v10504 = vpack.c.b16 %v8920, %v8896
    %v10505 = vpack.c.b16 %v8945, %v8921
    %v10506 = vpack.c.b16 %v8946, %v8922
    %v10507 = vpack.c.b16 %v8947, %v8923
    %v10508 = vpack.c.b16 %v8948, %v8924
    %v10509 = vpack.c.b16 %v8949, %v8925
    %v10510 = vpack.c.b16 %v8950, %v8926
    %v10511 = vpack.c.b16 %v8951, %v8927
    %v10512 = vpack.c.b16 %v8952, %v8928
    %v10513 = vpack.c.b16 %v8953, %v8929
    %v10514 = vpack.c.b16 %v8954, %v8930
    %v10515 = vpack.c.b16 %v8955, %v8931
    %v10516 = vpack.c.b16 %v8956, %v8932
    %v10517 = vpack.c.b16 %v8957, %v8933
    %v10518 = vpack.c.b16 %v8958, %v8934
    %v10519 = vpack.c.b16 %v8959, %v8935
    %v10520 = vpack.c.b16 %v8960, %v8936
    %v10521 = vpack.c.b16 %v8961, %v8937
    %v10522 = vpack.c.b16 %v8962, %v8938
    %v10523 = vpack.c.b16 %v8963, %v8939
    %v10524 = vpack.c.b16 %v8964, %v8940
    %v10525 = vpack.c.b16 %v8965, %v8941
    %v10526 = vpack.c.b16 %v8966, %v8942
    %v10527 = vpack.c.b16 %v8967, %v8943
    %v10528 = vpack.c.b16 %v8968, %v8944
    %v10529 = vpack.c.b16 %v8993, %v8969
    %v10530 = vpack.c.b16 %v8994, %v8970
    %v10531 = vpack.c.b16 %v8995, %v8971
    %v10532 = vpack.c.b16 %v8996, %v8972
    %v10533 = vpack.c.b16 %v8997, %v8973
    %v10534 = vpack.c.b16 %v8998, %v8974
    %v10535 = vpack.c.b16 %v8999, %v8975
    %v10536 = vpack.c.b16 %v9000, %v8976
    %v10537 = vpack.c.b16 %v9001, %v8977
    %v10538 = vpack.c.b16 %v9002, %v8978
    %v10539 = vpack.c.b16 %v9003, %v8979
    %v10540 = vpack.c.b16 %v9004, %v8980
    %v10541 = vpack.c.b16 %v9005, %v8981
    %v10542 = vpack.c.b16 %v9006, %v8982
    %v10543 = vpack.c.b16 %v9007, %v8983
    %v10544 = vpack.c.b16 %v9008, %v8984
    %v10545 = vpack.c.b16 %v9009, %v8985
    %v10546 = vpack.c.b16 %v9010, %v8986
    %v10547 = vpack.c.b16 %v9011, %v8987
    %v10548 = vpack.c.b16 %v9012, %v8988
    %v10549 = vpack.c.b16 %v9013, %v8989
    %v10550 = vpack.c.b16 %v9014, %v8990
    %v10551 = vpack.c.b16 %v9015, %v8991
    %v10552 = vpack.c.b16 %v9016, %v8992
    %12089 = vmatprep.subr.bf16.mxu0 %v9018
    %12090 = vmatpush1.bf16.msra.mxu0 %v9017
    %12091 = vmatprep.subr.bf16.mxu0 %v9042
    %12092 = vmatpush1.bf16.msra.mxu0 %v9041
    %12093 = vmatprep.subr.bf16.mxu0 %v9066
    %12094 = vmatpush1.bf16.msra.mxu0 %v9065
    %12095 = vmatprep.subr.bf16.mxu0 %v9090
    %12096 = vmatpush1.bf16.msra.mxu0 %v9089
    %12097 = vmatprep.subr.bf16.mxu0 %v9114
    %12098 = vmatpush1.bf16.msra.mxu0 %v9113
    %12099 = vmatprep.subr.bf16.mxu0 %v9138
    %12100 = vmatpush1.bf16.msra.mxu0 %v9137
    %12101 = vmatprep.subr.bf16.mxu0 %v9162
    %12102 = vmatpush1.bf16.msra.mxu0 %v9161
    %12103 = vmatprep.subr.bf16.mxu0 %v9186
    %12104 = vmatpush1.bf16.msra.mxu0 %v9185
    %12105 = vmatprep.subr.bf16.mxu0 %v9210
    %12106 = vmatpush1.bf16.msra.mxu0 %v9209
    %12107 = vmatprep.subr.bf16.mxu0 %v9234
    %12108 = vmatpush1.bf16.msra.mxu0 %v9233
    %12109 = vmatprep.subr.bf16.mxu0 %v9258
    %12110 = vmatpush1.bf16.msra.mxu0 %v9257
    %12111 = vmatprep.subr.bf16.mxu0 %v9282
    %12112 = vmatpush1.bf16.msra.mxu0 %v9281
    %12113 = vmatprep.subr.bf16.mxu0 %v9306
    %12114 = vmatpush1.bf16.msra.mxu0 %v9305
    %12115 = vmatprep.subr.bf16.mxu0 %v9330
    %12116 = vmatpush1.bf16.msra.mxu0 %v9329
    %12117 = vmatprep.subr.bf16.mxu0 %v9354
    %12118 = vmatpush1.bf16.msra.mxu0 %v9353
    %12119 = vmatprep.subr.bf16.mxu0 %v9378
    %12120 = vmatpush1.bf16.msra.mxu0 %v9377
    %12121 = vmatprep.mubr.bf16.mxu0 %v2740
    %12122 = vmatmul.mubr.bf16.gmra.mrb[0].mxu0 %v2739
    %v12123 = vpop.f32.mrb[0].mxu0
    %v12124 = vadd.f32 %v4292, %v12123
    %v12125 = vpop.f32.mrb[0].mxu0
    %v12126 = vadd.f32 %v4296, %v12125
    %v12127 = vpop.f32.mrb[0].mxu0
    %v12128 = vpop.f32.mrb[0].mxu0
    %12129 = vdwg.mxu0
    %12130 = vmatprep.subr.bf16.mxu0 %v9402
    %12131 = vmatpush1.bf16.msra.mxu0 %v9401
    %12132 = vmatprep.subr.bf16.mxu0 %v9426
    %12133 = vmatpush1.bf16.msra.mxu0 %v9425
    %12134 = vmatprep.subr.bf16.mxu0 %v9450
    %12135 = vmatpush1.bf16.msra.mxu0 %v9449
    %12136 = vmatprep.subr.bf16.mxu0 %v9474
    %12137 = vmatpush1.bf16.msra.mxu0 %v9473
    %12138 = vmatprep.subr.bf16.mxu0 %v9498
    %12139 = vmatpush1.bf16.msra.mxu0 %v9497
    %12140 = vmatprep.subr.bf16.mxu0 %v9522
    %12141 = vmatpush1.bf16.msra.mxu0 %v9521
    %12142 = vmatprep.subr.bf16.mxu0 %v9546
    %12143 = vmatpush1.bf16.msra.mxu0 %v9545
    %12144 = vmatprep.subr.bf16.mxu0 %v9570
    %12145 = vmatpush1.bf16.msra.mxu0 %v9569
    %12146 = vmatprep.subr.bf16.mxu0 %v9594
    %12147 = vmatpush1.bf16.msra.mxu0 %v9593
    %12148 = vmatprep.subr.bf16.mxu0 %v9618
    %12149 = vmatpush1.bf16.msra.mxu0 %v9617
    %12150 = vmatprep.subr.bf16.mxu0 %v9642
    %12151 = vmatpush1.bf16.msra.mxu0 %v9641
    %12152 = vmatprep.subr.bf16.mxu0 %v9666
    %12153 = vmatpush1.bf16.msra.mxu0 %v9665
    %12154 = vmatprep.subr.bf16.mxu0 %v9690
    %12155 = vmatpush1.bf16.msra.mxu0 %v9689
    %12156 = vmatprep.subr.bf16.mxu0 %v9714
    %12157 = vmatpush1.bf16.msra.mxu0 %v9713
    %12158 = vmatprep.subr.bf16.mxu0 %v9738
    %12159 = vmatpush1.bf16.msra.mxu0 %v9737
    %12160 = vmatprep.subr.bf16.mxu0 %v9762
    %12161 = vmatpush1.bf16.msra.mxu0 %v9761
    %12162 = vmatprep.mubr.bf16.mxu0 %v2742
    %12163 = vmatmul.mubr.bf16.gmra.mrb[0].mxu0 %v2741
    %v12164 = vpop.f32.mrb[0].mxu0
    %v12165 = vadd.f32 %v12124, %v12164
    %v12166 = vpop.f32.mrb[0].mxu0
    %v12167 = vadd.f32 %v12126, %v12166
    %v12168 = vpop.f32.mrb[0].mxu0
    %v12169 = vpop.f32.mrb[0].mxu0
    %12170 = vdwg.mxu0
    %12171 = vmatprep.subr.bf16.mxu0 %v9786
    %12172 = vmatpush1.bf16.msra.mxu0 %v9785
    %12173 = vmatprep.subr.bf16.mxu0 %v9810
    %12174 = vmatpush1.bf16.msra.mxu0 %v9809
    %12175 = vmatprep.subr.bf16.mxu0 %v9834
    %12176 = vmatpush1.bf16.msra.mxu0 %v9833
    %12177 = vmatprep.subr.bf16.mxu0 %v9858
    %12178 = vmatpush1.bf16.msra.mxu0 %v9857
    %12179 = vmatprep.subr.bf16.mxu0 %v9882
    %12180 = vmatpush1.bf16.msra.mxu0 %v9881
    %12181 = vmatprep.subr.bf16.mxu0 %v9906
    %12182 = vmatpush1.bf16.msra.mxu0 %v9905
    %12183 = vmatprep.subr.bf16.mxu0 %v9930
    %12184 = vmatpush1.bf16.msra.mxu0 %v9929
    %12185 = vmatprep.subr.bf16.mxu0 %v9954
    %12186 = vmatpush1.bf16.msra.mxu0 %v9953
    %12187 = vmatprep.subr.bf16.mxu0 %v9978
    %12188 = vmatpush1.bf16.msra.mxu0 %v9977
    %12189 = vmatprep.subr.bf16.mxu0 %v10002
    %12190 = vmatpush1.bf16.msra.mxu0 %v10001
    %12191 = vmatprep.subr.bf16.mxu0 %v10026
    %12192 = vmatpush1.bf16.msra.mxu0 %v10025
    %12193 = vmatprep.subr.bf16.mxu0 %v10050
    %12194 = vmatpush1.bf16.msra.mxu0 %v10049
    %12195 = vmatprep.subr.bf16.mxu0 %v10074
    %12196 = vmatpush1.bf16.msra.mxu0 %v10073
    %12197 = vmatprep.subr.bf16.mxu0 %v10098
    %12198 = vmatpush1.bf16.msra.mxu0 %v10097
    %12199 = vmatprep.subr.bf16.mxu0 %v10122
    %12200 = vmatpush1.bf16.msra.mxu0 %v10121
    %12201 = vmatprep.subr.bf16.mxu0 %v10146
    %12202 = vmatpush1.bf16.msra.mxu0 %v10145
    %12203 = vmatprep.mubr.bf16.mxu0 %v2744
    %12204 = vmatmul.mubr.bf16.gmra.mrb[0].mxu0 %v2743
    %v12205 = vpop.f32.mrb[0].mxu0
    %v12206 = vadd.f32 %v12165, %v12205
    %v12207 = vpop.f32.mrb[0].mxu0
    %v12208 = vadd.f32 %v12167, %v12207
    %v12209 = vpop.f32.mrb[0].mxu0
    %v12210 = vpop.f32.mrb[0].mxu0
    %12211 = vdwg.mxu0
    %12212 = vmatprep.subr.bf16.mxu0 %v10170
    %12213 = vmatpush1.bf16.msra.mxu0 %v10169
    %12214 = vmatprep.subr.bf16.mxu0 %v10194
    %12215 = vmatpush1.bf16.msra.mxu0 %v10193
    %12216 = vmatprep.subr.bf16.mxu0 %v10218
    %12217 = vmatpush1.bf16.msra.mxu0 %v10217
    %12218 = vmatprep.subr.bf16.mxu0 %v10242
    %12219 = vmatpush1.bf16.msra.mxu0 %v10241
    %12220 = vmatprep.subr.bf16.mxu0 %v10266
    %12221 = vmatpush1.bf16.msra.mxu0 %v10265
    %12222 = vmatprep.subr.bf16.mxu0 %v10290
    %12223 = vmatpush1.bf16.msra.mxu0 %v10289
    %12224 = vmatprep.subr.bf16.mxu0 %v10314
    %12225 = vmatpush1.bf16.msra.mxu0 %v10313
    %12226 = vmatprep.subr.bf16.mxu0 %v10338
    %12227 = vmatpush1.bf16.msra.mxu0 %v10337
    %12228 = vmatprep.subr.bf16.mxu0 %v10362
    %12229 = vmatpush1.bf16.msra.mxu0 %v10361
    %12230 = vmatprep.subr.bf16.mxu0 %v10386
    %12231 = vmatpush1.bf16.msra.mxu0 %v10385
    %12232 = vmatprep.subr.bf16.mxu0 %v10410
    %12233 = vmatpush1.bf16.msra.mxu0 %v10409
    %12234 = vmatprep.subr.bf16.mxu0 %v10434
    %12235 = vmatpush1.bf16.msra.mxu0 %v10433
    %12236 = vmatprep.subr.bf16.mxu0 %v10458
    %12237 = vmatpush1.bf16.msra.mxu0 %v10457
    %12238 = vmatprep.subr.bf16.mxu0 %v10482
    %12239 = vmatpush1.bf16.msra.mxu0 %v10481
    %12240 = vmatprep.subr.bf16.mxu0 %v10506
    %12241 = vmatpush1.bf16.msra.mxu0 %v10505
    %12242 = vmatprep.subr.bf16.mxu0 %v10530
    %12243 = vmatpush1.bf16.msra.mxu0 %v10529
    %12244 = vmatprep.mubr.bf16.mxu0 %v2746
    %12245 = vmatmul.mubr.bf16.gmra.mrb[0].mxu0 %v2745
    %v12246 = vpop.f32.mrb[0].mxu0
    %v12247 = vadd.f32 %v12206, %v12246
    %v12248 = vpop.f32.mrb[0].mxu0
    %v12249 = vadd.f32 %v12208, %v12248
    %v12250 = vpop.f32.mrb[0].mxu0
    %v12251 = vpop.f32.mrb[0].mxu0
    %12252 = vdwg.mxu0
    %12253 = vmatprep.subr.bf16.mxu0 %v9020
    %12254 = vmatpush1.bf16.msra.mxu0 %v9019
    %12255 = vmatprep.subr.bf16.mxu0 %v9044
    %12256 = vmatpush1.bf16.msra.mxu0 %v9043
    %12257 = vmatprep.subr.bf16.mxu0 %v9068
    %12258 = vmatpush1.bf16.msra.mxu0 %v9067
    %12259 = vmatprep.subr.bf16.mxu0 %v9092
    %12260 = vmatpush1.bf16.msra.mxu0 %v9091
    %12261 = vmatprep.subr.bf16.mxu0 %v9116
    %12262 = vmatpush1.bf16.msra.mxu0 %v9115
    %12263 = vmatprep.subr.bf16.mxu0 %v9140
    %12264 = vmatpush1.bf16.msra.mxu0 %v9139
    %12265 = vmatprep.subr.bf16.mxu0 %v9164
    %12266 = vmatpush1.bf16.msra.mxu0 %v9163
    %12267 = vmatprep.subr.bf16.mxu0 %v9188
    %12268 = vmatpush1.bf16.msra.mxu0 %v9187
    %12269 = vmatprep.subr.bf16.mxu0 %v9212
    %12270 = vmatpush1.bf16.msra.mxu0 %v9211
    %12271 = vmatprep.subr.bf16.mxu0 %v9236
    %12272 = vmatpush1.bf16.msra.mxu0 %v9235
    %12273 = vmatprep.subr.bf16.mxu0 %v9260
    %12274 = vmatpush1.bf16.msra.mxu0 %v9259
    %12275 = vmatprep.subr.bf16.mxu0 %v9284
    %12276 = vmatpush1.bf16.msra.mxu0 %v9283
    %12277 = vmatprep.subr.bf16.mxu0 %v9308
    %12278 = vmatpush1.bf16.msra.mxu0 %v9307
    %12279 = vmatprep.subr.bf16.mxu0 %v9332
    %12280 = vmatpush1.bf16.msra.mxu0 %v9331
    %12281 = vmatprep.subr.bf16.mxu0 %v9356
    %12282 = vmatpush1.bf16.msra.mxu0 %v9355
    %12283 = vmatprep.subr.bf16.mxu0 %v9380
    %12284 = vmatpush1.bf16.msra.mxu0 %v9379
    %12285 = vmatprep.mubr.bf16.mxu0 %v2740
    %12286 = vmatmul.mubr.bf16.gmra.mrb[0].mxu0 %v2739
    %v12287 = vpop.f32.mrb[0].mxu0
    %v12288 = vadd.f32 %v4300, %v12287
    %v12289 = vpop.f32.mrb[0].mxu0
    %v12290 = vadd.f32 %v4304, %v12289
    %v12291 = vpop.f32.mrb[0].mxu0
    %v12292 = vpop.f32.mrb[0].mxu0
    %12293 = vdwg.mxu0
    %12294 = vmatprep.subr.bf16.mxu0 %v9404
    %12295 = vmatpush1.bf16.msra.mxu0 %v9403
    %12296 = vmatprep.subr.bf16.mxu0 %v9428
    %12297 = vmatpush1.bf16.msra.mxu0 %v9427
    %12298 = vmatprep.subr.bf16.mxu0 %v9452
    %12299 = vmatpush1.bf16.msra.mxu0 %v9451
    %12300 = vmatprep.subr.bf16.mxu0 %v9476
    %12301 = vmatpush1.bf16.msra.mxu0 %v9475
    %12302 = vmatprep.subr.bf16.mxu0 %v9500
    %12303 = vmatpush1.bf16.msra.mxu0 %v9499
    %12304 = vmatprep.subr.bf16.mxu0 %v9524
    %12305 = vmatpush1.bf16.msra.mxu0 %v9523
    %12306 = vmatprep.subr.bf16.mxu0 %v9548
    %12307 = vmatpush1.bf16.msra.mxu0 %v9547
    %12308 = vmatprep.subr.bf16.mxu0 %v9572
    %12309 = vmatpush1.bf16.msra.mxu0 %v9571
    %12310 = vmatprep.subr.bf16.mxu0 %v9596
    %12311 = vmatpush1.bf16.msra.mxu0 %v9595
    %12312 = vmatprep.subr.bf16.mxu0 %v9620
    %12313 = vmatpush1.bf16.msra.mxu0 %v9619
    %12314 = vmatprep.subr.bf16.mxu0 %v9644
    %12315 = vmatpush1.bf16.msra.mxu0 %v9643
    %12316 = vmatprep.subr.bf16.mxu0 %v9668
    %12317 = vmatpush1.bf16.msra.mxu0 %v9667
    %12318 = vmatprep.subr.bf16.mxu0 %v9692
    %12319 = vmatpush1.bf16.msra.mxu0 %v9691
    %12320 = vmatprep.subr.bf16.mxu0 %v9716
    %12321 = vmatpush1.bf16.msra.mxu0 %v9715
    %12322 = vmatprep.subr.bf16.mxu0 %v9740
    %12323 = vmatpush1.bf16.msra.mxu0 %v9739
    %12324 = vmatprep.subr.bf16.mxu0 %v9764
    %12325 = vmatpush1.bf16.msra.mxu0 %v9763
    %12326 = vmatprep.mubr.bf16.mxu0 %v2742
    %12327 = vmatmul.mubr.bf16.gmra.mrb[0].mxu0 %v2741
    %v12328 = vpop.f32.mrb[0].mxu0
    %v12329 = vadd.f32 %v12288, %v12328
    %v12330 = vpop.f32.mrb[0].mxu0
    %v12331 = vadd.f32 %v12290, %v12330
    %v12332 = vpop.f32.mrb[0].mxu0
    %v12333 = vpop.f32.mrb[0].mxu0
    %12334 = vdwg.mxu0
    %12335 = vmatprep.subr.bf16.mxu0 %v9788
    %12336 = vmatpush1.bf16.msra.mxu0 %v9787
    %12337 = vmatprep.subr.bf16.mxu0 %v9812
    %12338 = vmatpush1.bf16.msra.mxu0 %v9811
    %12339 = vmatprep.subr.bf16.mxu0 %v9836
    %12340 = vmatpush1.bf16.msra.mxu0 %v9835
    %12341 = vmatprep.subr.bf16.mxu0 %v9860
    %12342 = vmatpush1.bf16.msra.mxu0 %v9859
    %12343 = vmatprep.subr.bf16.mxu0 %v9884
    %12344 = vmatpush1.bf16.msra.mxu0 %v9883
    %12345 = vmatprep.subr.bf16.mxu0 %v9908
    %12346 = vmatpush1.bf16.msra.mxu0 %v9907
    %12347 = vmatprep.subr.bf16.mxu0 %v9932
    %12348 = vmatpush1.bf16.msra.mxu0 %v9931
    %12349 = vmatprep.subr.bf16.mxu0 %v9956
    %12350 = vmatpush1.bf16.msra.mxu0 %v9955
    %12351 = vmatprep.subr.bf16.mxu0 %v9980
    %12352 = vmatpush1.bf16.msra.mxu0 %v9979
    %12353 = vmatprep.subr.bf16.mxu0 %v10004
    %12354 = vmatpush1.bf16.msra.mxu0 %v10003
    %12355 = vmatprep.subr.bf16.mxu0 %v10028
    %12356 = vmatpush1.bf16.msra.mxu0 %v10027
    %12357 = vmatprep.subr.bf16.mxu0 %v10052
    %12358 = vmatpush1.bf16.msra.mxu0 %v10051
    %12359 = vmatprep.subr.bf16.mxu0 %v10076
    %12360 = vmatpush1.bf16.msra.mxu0 %v10075
    %12361 = vmatprep.subr.bf16.mxu0 %v10100
    %12362 = vmatpush1.bf16.msra.mxu0 %v10099
    %12363 = vmatprep.subr.bf16.mxu0 %v10124
    %12364 = vmatpush1.bf16.msra.mxu0 %v10123
    %12365 = vmatprep.subr.bf16.mxu0 %v10148
    %12366 = vmatpush1.bf16.msra.mxu0 %v10147
    %12367 = vmatprep.mubr.bf16.mxu0 %v2744
    %12368 = vmatmul.mubr.bf16.gmra.mrb[0].mxu0 %v2743
    %v12369 = vpop.f32.mrb[0].mxu0
    %v12370 = vadd.f32 %v12329, %v12369
    %v12371 = vpop.f32.mrb[0].mxu0
    %v12372 = vadd.f32 %v12331, %v12371
    %v12373 = vpop.f32.mrb[0].mxu0
    %v12374 = vpop.f32.mrb[0].mxu0
    %12375 = vdwg.mxu0
    %12376 = vmatprep.subr.bf16.mxu0 %v10172
    %12377 = vmatpush1.bf16.msra.mxu0 %v10171
    %12378 = vmatprep.subr.bf16.mxu0 %v10196
    %12379 = vmatpush1.bf16.msra.mxu0 %v10195
    %12380 = vmatprep.subr.bf16.mxu0 %v10220
    %12381 = vmatpush1.bf16.msra.mxu0 %v10219
    %12382 = vmatprep.subr.bf16.mxu0 %v10244
    %12383 = vmatpush1.bf16.msra.mxu0 %v10243
    %12384 = vmatprep.subr.bf16.mxu0 %v10268
    %12385 = vmatpush1.bf16.msra.mxu0 %v10267
    %12386 = vmatprep.subr.bf16.mxu0 %v10292
    %12387 = vmatpush1.bf16.msra.mxu0 %v10291
    %12388 = vmatprep.subr.bf16.mxu0 %v10316
    %12389 = vmatpush1.bf16.msra.mxu0 %v10315
    %12390 = vmatprep.subr.bf16.mxu0 %v10340
    %12391 = vmatpush1.bf16.msra.mxu0 %v10339
    %12392 = vmatprep.subr.bf16.mxu0 %v10364
    %12393 = vmatpush1.bf16.msra.mxu0 %v10363
    %12394 = vmatprep.subr.bf16.mxu0 %v10388
    %12395 = vmatpush1.bf16.msra.mxu0 %v10387
    %12396 = vmatprep.subr.bf16.mxu0 %v10412
    %12397 = vmatpush1.bf16.msra.mxu0 %v10411
    %12398 = vmatprep.subr.bf16.mxu0 %v10436
    %12399 = vmatpush1.bf16.msra.mxu0 %v10435
    %12400 = vmatprep.subr.bf16.mxu0 %v10460
    %12401 = vmatpush1.bf16.msra.mxu0 %v10459
    %12402 = vmatprep.subr.bf16.mxu0 %v10484
    %12403 = vmatpush1.bf16.msra.mxu0 %v10483
    %12404 = vmatprep.subr.bf16.mxu0 %v10508
    %12405 = vmatpush1.bf16.msra.mxu0 %v10507
    %12406 = vmatprep.subr.bf16.mxu0 %v10532
    %12407 = vmatpush1.bf16.msra.mxu0 %v10531
    %12408 = vmatprep.mubr.bf16.mxu0 %v2746
    %12409 = vmatmul.mubr.bf16.gmra.mrb[0].mxu0 %v2745
    %v12410 = vpop.f32.mrb[0].mxu0
    %v12411 = vadd.f32 %v12370, %v12410
    %v12412 = vpop.f32.mrb[0].mxu0
    %v12413 = vadd.f32 %v12372, %v12412
    %v12414 = vpop.f32.mrb[0].mxu0
    %v12415 = vpop.f32.mrb[0].mxu0
    %12416 = vdwg.mxu0
    %12417 = vmatprep.subr.bf16.mxu0 %v9022
    %12418 = vmatpush1.bf16.msra.mxu0 %v9021
    %12419 = vmatprep.subr.bf16.mxu0 %v9046
    %12420 = vmatpush1.bf16.msra.mxu0 %v9045
    %12421 = vmatprep.subr.bf16.mxu0 %v9070
    %12422 = vmatpush1.bf16.msra.mxu0 %v9069
    %12423 = vmatprep.subr.bf16.mxu0 %v9094
    %12424 = vmatpush1.bf16.msra.mxu0 %v9093
    %12425 = vmatprep.subr.bf16.mxu0 %v9118
    %12426 = vmatpush1.bf16.msra.mxu0 %v9117
    %12427 = vmatprep.subr.bf16.mxu0 %v9142
    %12428 = vmatpush1.bf16.msra.mxu0 %v9141
    %12429 = vmatprep.subr.bf16.mxu0 %v9166
    %12430 = vmatpush1.bf16.msra.mxu0 %v9165
    %12431 = vmatprep.subr.bf16.mxu0 %v9190
    %12432 = vmatpush1.bf16.msra.mxu0 %v9189
    %12433 = vmatprep.subr.bf16.mxu0 %v9214
    %12434 = vmatpush1.bf16.msra.mxu0 %v9213
    %12435 = vmatprep.subr.bf16.mxu0 %v9238
    %12436 = vmatpush1.bf16.msra.mxu0 %v9237
    %12437 = vmatprep.subr.bf16.mxu0 %v9262
    %12438 = vmatpush1.bf16.msra.mxu0 %v9261
    %12439 = vmatprep.subr.bf16.mxu0 %v9286
    %12440 = vmatpush1.bf16.msra.mxu0 %v9285
    %12441 = vmatprep.subr.bf16.mxu0 %v9310
    %12442 = vmatpush1.bf16.msra.mxu0 %v9309
    %12443 = vmatprep.subr.bf16.mxu0 %v9334
    %12444 = vmatpush1.bf16.msra.mxu0 %v9333
    %12445 = vmatprep.subr.bf16.mxu0 %v9358
    %12446 = vmatpush1.bf16.msra.mxu0 %v9357
    %12447 = vmatprep.subr.bf16.mxu0 %v9382
    %12448 = vmatpush1.bf16.msra.mxu0 %v9381
    %12449 = vmatprep.mubr.bf16.mxu0 %v2740
    %12450 = vmatmul.mubr.bf16.gmra.mrb[0].mxu0 %v2739
    %v12451 = vpop.f32.mrb[0].mxu0
    %v12452 = vadd.f32 %v4308, %v12451
    %v12453 = vpop.f32.mrb[0].mxu0
    %v12454 = vadd.f32 %v4312, %v12453
    %v12455 = vpop.f32.mrb[0].mxu0
    %v12456 = vpop.f32.mrb[0].mxu0
    %12457 = vdwg.mxu0
    %12458 = vmatprep.subr.bf16.mxu0 %v9406
    %12459 = vmatpush1.bf16.msra.mxu0 %v9405
    %12460 = vmatprep.subr.bf16.mxu0 %v9430
    %12461 = vmatpush1.bf16.msra.mxu0 %v9429
    %12462 = vmatprep.subr.bf16.mxu0 %v9454
    %12463 = vmatpush1.bf16.msra.mxu0 %v9453
    %12464 = vmatprep.subr.bf16.mxu0 %v9478
    %12465 = vmatpush1.bf16.msra.mxu0 %v9477
    %12466 = vmatprep.subr.bf16.mxu0 %v9502
    %12467 = vmatpush1.bf16.msra.mxu0 %v9501
    %12468 = vmatprep.subr.bf16.mxu0 %v9526
    %12469 = vmatpush1.bf16.msra.mxu0 %v9525
    %12470 = vmatprep.subr.bf16.mxu0 %v9550
    %12471 = vmatpush1.bf16.msra.mxu0 %v9549
    %12472 = vmatprep.subr.bf16.mxu0 %v9574
    %12473 = vmatpush1.bf16.msra.mxu0 %v9573
    %12474 = vmatprep.subr.bf16.mxu0 %v9598
    %12475 = vmatpush1.bf16.msra.mxu0 %v9597
    %12476 = vmatprep.subr.bf16.mxu0 %v9622
    %12477 = vmatpush1.bf16.msra.mxu0 %v9621
    %12478 = vmatprep.subr.bf16.mxu0 %v9646
    %12479 = vmatpush1.bf16.msra.mxu0 %v9645
    %12480 = vmatprep.subr.bf16.mxu0 %v9670
    %12481 = vmatpush1.bf16.msra.mxu0 %v9669
    %12482 = vmatprep.subr.bf16.mxu0 %v9694
    %12483 = vmatpush1.bf16.msra.mxu0 %v9693
    %12484 = vmatprep.subr.bf16.mxu0 %v9718
    %12485 = vmatpush1.bf16.msra.mxu0 %v9717
    %12486 = vmatprep.subr.bf16.mxu0 %v9742
    %12487 = vmatpush1.bf16.msra.mxu0 %v9741
    %12488 = vmatprep.subr.bf16.mxu0 %v9766
    %12489 = vmatpush1.bf16.msra.mxu0 %v9765
    %12490 = vmatprep.mubr.bf16.mxu0 %v2742
    %12491 = vmatmul.mubr.bf16.gmra.mrb[0].mxu0 %v2741
    %v12492 = vpop.f32.mrb[0].mxu0
    %v12493 = vadd.f32 %v12452, %v12492
    %v12494 = vpop.f32.mrb[0].mxu0
    %v12495 = vadd.f32 %v12454, %v12494
    %v12496 = vpop.f32.mrb[0].mxu0
    %v12497 = vpop.f32.mrb[0].mxu0
    %12498 = vdwg.mxu0
    %12499 = vmatprep.subr.bf16.mxu0 %v9790
    %12500 = vmatpush1.bf16.msra.mxu0 %v9789
    %12501 = vmatprep.subr.bf16.mxu0 %v9814
    %12502 = vmatpush1.bf16.msra.mxu0 %v9813
    %12503 = vmatprep.subr.bf16.mxu0 %v9838
    %12504 = vmatpush1.bf16.msra.mxu0 %v9837
    %12505 = vmatprep.subr.bf16.mxu0 %v9862
    %12506 = vmatpush1.bf16.msra.mxu0 %v9861
    %12507 = vmatprep.subr.bf16.mxu0 %v9886
    %12508 = vmatpush1.bf16.msra.mxu0 %v9885
    %12509 = vmatprep.subr.bf16.mxu0 %v9910
    %12510 = vmatpush1.bf16.msra.mxu0 %v9909
    %12511 = vmatprep.subr.bf16.mxu0 %v9934
    %12512 = vmatpush1.bf16.msra.mxu0 %v9933
    %12513 = vmatprep.subr.bf16.mxu0 %v9958
    %12514 = vmatpush1.bf16.msra.mxu0 %v9957
    %12515 = vmatprep.subr.bf16.mxu0 %v9982
    %12516 = vmatpush1.bf16.msra.mxu0 %v9981
    %12517 = vmatprep.subr.bf16.mxu0 %v10006
    %12518 = vmatpush1.bf16.msra.mxu0 %v10005
    %12519 = vmatprep.subr.bf16.mxu0 %v10030
    %12520 = vmatpush1.bf16.msra.mxu0 %v10029
    %12521 = vmatprep.subr.bf16.mxu0 %v10054
    %12522 = vmatpush1.bf16.msra.mxu0 %v10053
    %12523 = vmatprep.subr.bf16.mxu0 %v10078
    %12524 = vmatpush1.bf16.msra.mxu0 %v10077
    %12525 = vmatprep.subr.bf16.mxu0 %v10102
    %12526 = vmatpush1.bf16.msra.mxu0 %v10101
    %12527 = vmatprep.subr.bf16.mxu0 %v10126
    %12528 = vmatpush1.bf16.msra.mxu0 %v10125
    %12529 = vmatprep.subr.bf16.mxu0 %v10150
    %12530 = vmatpush1.bf16.msra.mxu0 %v10149
    %12531 = vmatprep.mubr.bf16.mxu0 %v2744
    %12532 = vmatmul.mubr.bf16.gmra.mrb[0].mxu0 %v2743
    %v12533 = vpop.f32.mrb[0].mxu0
    %v12534 = vadd.f32 %v12493, %v12533
    %v12535 = vpop.f32.mrb[0].mxu0
    %v12536 = vadd.f32 %v12495, %v12535
    %v12537 = vpop.f32.mrb[0].mxu0
    %v12538 = vpop.f32.mrb[0].mxu0
    %12539 = vdwg.mxu0
    %12540 = vmatprep.subr.bf16.mxu0 %v10174
    %12541 = vmatpush1.bf16.msra.mxu0 %v10173
    %12542 = vmatprep.subr.bf16.mxu0 %v10198
    %12543 = vmatpush1.bf16.msra.mxu0 %v10197
    %12544 = vmatprep.subr.bf16.mxu0 %v10222
    %12545 = vmatpush1.bf16.msra.mxu0 %v10221
    %12546 = vmatprep.subr.bf16.mxu0 %v10246
    %12547 = vmatpush1.bf16.msra.mxu0 %v10245
    %12548 = vmatprep.subr.bf16.mxu0 %v10270
    %12549 = vmatpush1.bf16.msra.mxu0 %v10269
    %12550 = vmatprep.subr.bf16.mxu0 %v10294
    %12551 = vmatpush1.bf16.msra.mxu0 %v10293
    %12552 = vmatprep.subr.bf16.mxu0 %v10318
    %12553 = vmatpush1.bf16.msra.mxu0 %v10317
    %12554 = vmatprep.subr.bf16.mxu0 %v10342
    %12555 = vmatpush1.bf16.msra.mxu0 %v10341
    %12556 = vmatprep.subr.bf16.mxu0 %v10366
    %12557 = vmatpush1.bf16.msra.mxu0 %v10365
    %12558 = vmatprep.subr.bf16.mxu0 %v10390
    %12559 = vmatpush1.bf16.msra.mxu0 %v10389
    %12560 = vmatprep.subr.bf16.mxu0 %v10414
    %12561 = vmatpush1.bf16.msra.mxu0 %v10413
    %12562 = vmatprep.subr.bf16.mxu0 %v10438
    %12563 = vmatpush1.bf16.msra.mxu0 %v10437
    %12564 = vmatprep.subr.bf16.mxu0 %v10462
    %12565 = vmatpush1.bf16.msra.mxu0 %v10461
    %12566 = vmatprep.subr.bf16.mxu0 %v10486
    %12567 = vmatpush1.bf16.msra.mxu0 %v10485
    %12568 = vmatprep.subr.bf16.mxu0 %v10510
    %12569 = vmatpush1.bf16.msra.mxu0 %v10509
    %12570 = vmatprep.subr.bf16.mxu0 %v10534
    %12571 = vmatpush1.bf16.msra.mxu0 %v10533
    %12572 = vmatprep.mubr.bf16.mxu0 %v2746
    %12573 = vmatmul.mubr.bf16.gmra.mrb[0].mxu0 %v2745
    %v12574 = vpop.f32.mrb[0].mxu0
    %v12575 = vadd.f32 %v12534, %v12574
    %v12576 = vpop.f32.mrb[0].mxu0
    %v12577 = vadd.f32 %v12536, %v12576
    %v12578 = vpop.f32.mrb[0].mxu0
    %v12579 = vpop.f32.mrb[0].mxu0
    %12580 = vdwg.mxu0
    %12581 = vmatprep.subr.bf16.mxu0 %v9024
    %12582 = vmatpush1.bf16.msra.mxu0 %v9023
    %12583 = vmatprep.subr.bf16.mxu0 %v9048
    %12584 = vmatpush1.bf16.msra.mxu0 %v9047
    %12585 = vmatprep.subr.bf16.mxu0 %v9072
    %12586 = vmatpush1.bf16.msra.mxu0 %v9071
    %12587 = vmatprep.subr.bf16.mxu0 %v9096
    %12588 = vmatpush1.bf16.msra.mxu0 %v9095
    %12589 = vmatprep.subr.bf16.mxu0 %v9120
    %12590 = vmatpush1.bf16.msra.mxu0 %v9119
    %12591 = vmatprep.subr.bf16.mxu0 %v9144
    %12592 = vmatpush1.bf16.msra.mxu0 %v9143
    %12593 = vmatprep.subr.bf16.mxu0 %v9168
    %12594 = vmatpush1.bf16.msra.mxu0 %v9167
    %12595 = vmatprep.subr.bf16.mxu0 %v9192
    %12596 = vmatpush1.bf16.msra.mxu0 %v9191
    %12597 = vmatprep.subr.bf16.mxu0 %v9216
    %12598 = vmatpush1.bf16.msra.mxu0 %v9215
    %12599 = vmatprep.subr.bf16.mxu0 %v9240
    %12600 = vmatpush1.bf16.msra.mxu0 %v9239
    %12601 = vmatprep.subr.bf16.mxu0 %v9264
    %12602 = vmatpush1.bf16.msra.mxu0 %v9263
    %12603 = vmatprep.subr.bf16.mxu0 %v9288
    %12604 = vmatpush1.bf16.msra.mxu0 %v9287
    %12605 = vmatprep.subr.bf16.mxu0 %v9312
    %12606 = vmatpush1.bf16.msra.mxu0 %v9311
    %12607 = vmatprep.subr.bf16.mxu0 %v9336
    %12608 = vmatpush1.bf16.msra.mxu0 %v9335
    %12609 = vmatprep.subr.bf16.mxu0 %v9360
    %12610 = vmatpush1.bf16.msra.mxu0 %v9359
    %12611 = vmatprep.subr.bf16.mxu0 %v9384
    %12612 = vmatpush1.bf16.msra.mxu0 %v9383
    %12613 = vmatprep.mubr.bf16.mxu0 %v2740
    %12614 = vmatmul.mubr.bf16.gmra.mrb[0].mxu0 %v2739
    %v12615 = vpop.f32.mrb[0].mxu0
    %v12616 = vadd.f32 %v4316, %v12615
    %v12617 = vpop.f32.mrb[0].mxu0
    %v12618 = vadd.f32 %v4320, %v12617
    %v12619 = vpop.f32.mrb[0].mxu0
    %v12620 = vpop.f32.mrb[0].mxu0
    %12621 = vdwg.mxu0
    %12622 = vmatprep.subr.bf16.mxu0 %v9408
    %12623 = vmatpush1.bf16.msra.mxu0 %v9407
    %12624 = vmatprep.subr.bf16.mxu0 %v9432
    %12625 = vmatpush1.bf16.msra.mxu0 %v9431
    %12626 = vmatprep.subr.bf16.mxu0 %v9456
    %12627 = vmatpush1.bf16.msra.mxu0 %v9455
    %12628 = vmatprep.subr.bf16.mxu0 %v9480
    %12629 = vmatpush1.bf16.msra.mxu0 %v9479
    %12630 = vmatprep.subr.bf16.mxu0 %v9504
    %12631 = vmatpush1.bf16.msra.mxu0 %v9503
    %12632 = vmatprep.subr.bf16.mxu0 %v9528
    %12633 = vmatpush1.bf16.msra.mxu0 %v9527
    %12634 = vmatprep.subr.bf16.mxu0 %v9552
    %12635 = vmatpush1.bf16.msra.mxu0 %v9551
    %12636 = vmatprep.subr.bf16.mxu0 %v9576
    %12637 = vmatpush1.bf16.msra.mxu0 %v9575
    %12638 = vmatprep.subr.bf16.mxu0 %v9600
    %12639 = vmatpush1.bf16.msra.mxu0 %v9599
    %12640 = vmatprep.subr.bf16.mxu0 %v9624
    %12641 = vmatpush1.bf16.msra.mxu0 %v9623
    %12642 = vmatprep.subr.bf16.mxu0 %v9648
    %12643 = vmatpush1.bf16.msra.mxu0 %v9647
    %12644 = vmatprep.subr.bf16.mxu0 %v9672
    %12645 = vmatpush1.bf16.msra.mxu0 %v9671
    %12646 = vmatprep.subr.bf16.mxu0 %v9696
    %12647 = vmatpush1.bf16.msra.mxu0 %v9695
    %12648 = vmatprep.subr.bf16.mxu0 %v9720
    %12649 = vmatpush1.bf16.msra.mxu0 %v9719
    %12650 = vmatprep.subr.bf16.mxu0 %v9744
    %12651 = vmatpush1.bf16.msra.mxu0 %v9743
    %12652 = vmatprep.subr.bf16.mxu0 %v9768
    %12653 = vmatpush1.bf16.msra.mxu0 %v9767
    %12654 = vmatprep.mubr.bf16.mxu0 %v2742
    %12655 = vmatmul.mubr.bf16.gmra.mrb[0].mxu0 %v2741
    %v12656 = vpop.f32.mrb[0].mxu0
    %v12657 = vadd.f32 %v12616, %v12656
    %v12658 = vpop.f32.mrb[0].mxu0
    %v12659 = vadd.f32 %v12618, %v12658
    %v12660 = vpop.f32.mrb[0].mxu0
    %v12661 = vpop.f32.mrb[0].mxu0
    %12662 = vdwg.mxu0
    %12663 = vmatprep.subr.bf16.mxu0 %v9792
    %12664 = vmatpush1.bf16.msra.mxu0 %v9791
    %12665 = vmatprep.subr.bf16.mxu0 %v9816
    %12666 = vmatpush1.bf16.msra.mxu0 %v9815
    %12667 = vmatprep.subr.bf16.mxu0 %v9840
    %12668 = vmatpush1.bf16.msra.mxu0 %v9839
    %12669 = vmatprep.subr.bf16.mxu0 %v9864
    %12670 = vmatpush1.bf16.msra.mxu0 %v9863
    %12671 = vmatprep.subr.bf16.mxu0 %v9888
    %12672 = vmatpush1.bf16.msra.mxu0 %v9887
    %12673 = vmatprep.subr.bf16.mxu0 %v9912
    %12674 = vmatpush1.bf16.msra.mxu0 %v9911
    %12675 = vmatprep.subr.bf16.mxu0 %v9936
    %12676 = vmatpush1.bf16.msra.mxu0 %v9935
    %12677 = vmatprep.subr.bf16.mxu0 %v9960
    %12678 = vmatpush1.bf16.msra.mxu0 %v9959
    %12679 = vmatprep.subr.bf16.mxu0 %v9984
    %12680 = vmatpush1.bf16.msra.mxu0 %v9983
    %12681 = vmatprep.subr.bf16.mxu0 %v10008
    %12682 = vmatpush1.bf16.msra.mxu0 %v10007
    %12683 = vmatprep.subr.bf16.mxu0 %v10032
    %12684 = vmatpush1.bf16.msra.mxu0 %v10031
    %12685 = vmatprep.subr.bf16.mxu0 %v10056
    %12686 = vmatpush1.bf16.msra.mxu0 %v10055
    %12687 = vmatprep.subr.bf16.mxu0 %v10080
    %12688 = vmatpush1.bf16.msra.mxu0 %v10079
    %12689 = vmatprep.subr.bf16.mxu0 %v10104
    %12690 = vmatpush1.bf16.msra.mxu0 %v10103
    %12691 = vmatprep.subr.bf16.mxu0 %v10128
    %12692 = vmatpush1.bf16.msra.mxu0 %v10127
    %12693 = vmatprep.subr.bf16.mxu0 %v10152
    %12694 = vmatpush1.bf16.msra.mxu0 %v10151
    %12695 = vmatprep.mubr.bf16.mxu0 %v2744
    %12696 = vmatmul.mubr.bf16.gmra.mrb[0].mxu0 %v2743
    %v12697 = vpop.f32.mrb[0].mxu0
    %v12698 = vadd.f32 %v12657, %v12697
    %v12699 = vpop.f32.mrb[0].mxu0
    %v12700 = vadd.f32 %v12659, %v12699
    %v12701 = vpop.f32.mrb[0].mxu0
    %v12702 = vpop.f32.mrb[0].mxu0
    %12703 = vdwg.mxu0
    %12704 = vmatprep.subr.bf16.mxu0 %v10176
    %12705 = vmatpush1.bf16.msra.mxu0 %v10175
    %12706 = vmatprep.subr.bf16.mxu0 %v10200
    %12707 = vmatpush1.bf16.msra.mxu0 %v10199
    %12708 = vmatprep.subr.bf16.mxu0 %v10224
    %12709 = vmatpush1.bf16.msra.mxu0 %v10223
    %12710 = vmatprep.subr.bf16.mxu0 %v10248
    %12711 = vmatpush1.bf16.msra.mxu0 %v10247
    %12712 = vmatprep.subr.bf16.mxu0 %v10272
    %12713 = vmatpush1.bf16.msra.mxu0 %v10271
    %12714 = vmatprep.subr.bf16.mxu0 %v10296
    %12715 = vmatpush1.bf16.msra.mxu0 %v10295
    %12716 = vmatprep.subr.bf16.mxu0 %v10320
    %12717 = vmatpush1.bf16.msra.mxu0 %v10319
    %12718 = vmatprep.subr.bf16.mxu0 %v10344
    %12719 = vmatpush1.bf16.msra.mxu0 %v10343
    %12720 = vmatprep.subr.bf16.mxu0 %v10368
    %12721 = vmatpush1.bf16.msra.mxu0 %v10367
    %12722 = vmatprep.subr.bf16.mxu0 %v10392
    %12723 = vmatpush1.bf16.msra.mxu0 %v10391
    %12724 = vmatprep.subr.bf16.mxu0 %v10416
    %12725 = vmatpush1.bf16.msra.mxu0 %v10415
    %12726 = vmatprep.subr.bf16.mxu0 %v10440
    %12727 = vmatpush1.bf16.msra.mxu0 %v10439
    %12728 = vmatprep.subr.bf16.mxu0 %v10464
    %12729 = vmatpush1.bf16.msra.mxu0 %v10463
    %12730 = vmatprep.subr.bf16.mxu0 %v10488
    %12731 = vmatpush1.bf16.msra.mxu0 %v10487
    %12732 = vmatprep.subr.bf16.mxu0 %v10512
    %12733 = vmatpush1.bf16.msra.mxu0 %v10511
    %12734 = vmatprep.subr.bf16.mxu0 %v10536
    %12735 = vmatpush1.bf16.msra.mxu0 %v10535
    %12736 = vmatprep.mubr.bf16.mxu0 %v2746
    %12737 = vmatmul.mubr.bf16.gmra.mrb[0].mxu0 %v2745
    %v12738 = vpop.f32.mrb[0].mxu0
    %v12739 = vadd.f32 %v12698, %v12738
    %v12740 = vpop.f32.mrb[0].mxu0
    %v12741 = vadd.f32 %v12700, %v12740
    %v12742 = vpop.f32.mrb[0].mxu0
    %v12743 = vpop.f32.mrb[0].mxu0
    %12744 = vdwg.mxu0
    %12745 = vmatprep.subr.bf16.mxu0 %v9026
    %12746 = vmatpush1.bf16.msra.mxu0 %v9025
    %12747 = vmatprep.subr.bf16.mxu0 %v9050
    %12748 = vmatpush1.bf16.msra.mxu0 %v9049
    %12749 = vmatprep.subr.bf16.mxu0 %v9074
    %12750 = vmatpush1.bf16.msra.mxu0 %v9073
    %12751 = vmatprep.subr.bf16.mxu0 %v9098
    %12752 = vmatpush1.bf16.msra.mxu0 %v9097
    %12753 = vmatprep.subr.bf16.mxu0 %v9122
    %12754 = vmatpush1.bf16.msra.mxu0 %v9121
    %12755 = vmatprep.subr.bf16.mxu0 %v9146
    %12756 = vmatpush1.bf16.msra.mxu0 %v9145
    %12757 = vmatprep.subr.bf16.mxu0 %v9170
    %12758 = vmatpush1.bf16.msra.mxu0 %v9169
    %12759 = vmatprep.subr.bf16.mxu0 %v9194
    %12760 = vmatpush1.bf16.msra.mxu0 %v9193
    %12761 = vmatprep.subr.bf16.mxu0 %v9218
    %12762 = vmatpush1.bf16.msra.mxu0 %v9217
    %12763 = vmatprep.subr.bf16.mxu0 %v9242
    %12764 = vmatpush1.bf16.msra.mxu0 %v9241
    %12765 = vmatprep.subr.bf16.mxu0 %v9266
    %12766 = vmatpush1.bf16.msra.mxu0 %v9265
    %12767 = vmatprep.subr.bf16.mxu0 %v9290
    %12768 = vmatpush1.bf16.msra.mxu0 %v9289
    %12769 = vmatprep.subr.bf16.mxu0 %v9314
    %12770 = vmatpush1.bf16.msra.mxu0 %v9313
    %12771 = vmatprep.subr.bf16.mxu0 %v9338
    %12772 = vmatpush1.bf16.msra.mxu0 %v9337
    %12773 = vmatprep.subr.bf16.mxu0 %v9362
    %12774 = vmatpush1.bf16.msra.mxu0 %v9361
    %12775 = vmatprep.subr.bf16.mxu0 %v9386
    %12776 = vmatpush1.bf16.msra.mxu0 %v9385
    %12777 = vmatprep.mubr.bf16.mxu0 %v2740
    %12778 = vmatmul.mubr.bf16.gmra.mrb[0].mxu0 %v2739
    %v12779 = vpop.f32.mrb[0].mxu0
    %v12780 = vadd.f32 %v4324, %v12779
    %v12781 = vpop.f32.mrb[0].mxu0
    %v12782 = vadd.f32 %v4328, %v12781
    %v12783 = vpop.f32.mrb[0].mxu0
    %v12784 = vpop.f32.mrb[0].mxu0
    %12785 = vdwg.mxu0
    %12786 = vmatprep.subr.bf16.mxu0 %v9410
    %12787 = vmatpush1.bf16.msra.mxu0 %v9409
    %12788 = vmatprep.subr.bf16.mxu0 %v9434
    %12789 = vmatpush1.bf16.msra.mxu0 %v9433
    %12790 = vmatprep.subr.bf16.mxu0 %v9458
    %12791 = vmatpush1.bf16.msra.mxu0 %v9457
    %12792 = vmatprep.subr.bf16.mxu0 %v9482
    %12793 = vmatpush1.bf16.msra.mxu0 %v9481
    %12794 = vmatprep.subr.bf16.mxu0 %v9506
    %12795 = vmatpush1.bf16.msra.mxu0 %v9505
    %12796 = vmatprep.subr.bf16.mxu0 %v9530
    %12797 = vmatpush1.bf16.msra.mxu0 %v9529
    %12798 = vmatprep.subr.bf16.mxu0 %v9554
    %12799 = vmatpush1.bf16.msra.mxu0 %v9553
    %12800 = vmatprep.subr.bf16.mxu0 %v9578
    %12801 = vmatpush1.bf16.msra.mxu0 %v9577
    %12802 = vmatprep.subr.bf16.mxu0 %v9602
    %12803 = vmatpush1.bf16.msra.mxu0 %v9601
    %12804 = vmatprep.subr.bf16.mxu0 %v9626
    %12805 = vmatpush1.bf16.msra.mxu0 %v9625
    %12806 = vmatprep.subr.bf16.mxu0 %v9650
    %12807 = vmatpush1.bf16.msra.mxu0 %v9649
    %12808 = vmatprep.subr.bf16.mxu0 %v9674
    %12809 = vmatpush1.bf16.msra.mxu0 %v9673
    %12810 = vmatprep.subr.bf16.mxu0 %v9698
    %12811 = vmatpush1.bf16.msra.mxu0 %v9697
    %12812 = vmatprep.subr.bf16.mxu0 %v9722
    %12813 = vmatpush1.bf16.msra.mxu0 %v9721
    %12814 = vmatprep.subr.bf16.mxu0 %v9746
    %12815 = vmatpush1.bf16.msra.mxu0 %v9745
    %12816 = vmatprep.subr.bf16.mxu0 %v9770
    %12817 = vmatpush1.bf16.msra.mxu0 %v9769
    %12818 = vmatprep.mubr.bf16.mxu0 %v2742
    %12819 = vmatmul.mubr.bf16.gmra.mrb[0].mxu0 %v2741
    %v12820 = vpop.f32.mrb[0].mxu0
    %v12821 = vadd.f32 %v12780, %v12820
    %v12822 = vpop.f32.mrb[0].mxu0
    %v12823 = vadd.f32 %v12782, %v12822
    %v12824 = vpop.f32.mrb[0].mxu0
    %v12825 = vpop.f32.mrb[0].mxu0
    %12826 = vdwg.mxu0
    %12827 = vmatprep.subr.bf16.mxu0 %v9794
    %12828 = vmatpush1.bf16.msra.mxu0 %v9793
    %12829 = vmatprep.subr.bf16.mxu0 %v9818
    %12830 = vmatpush1.bf16.msra.mxu0 %v9817
    %12831 = vmatprep.subr.bf16.mxu0 %v9842
    %12832 = vmatpush1.bf16.msra.mxu0 %v9841
    %12833 = vmatprep.subr.bf16.mxu0 %v9866
    %12834 = vmatpush1.bf16.msra.mxu0 %v9865
    %12835 = vmatprep.subr.bf16.mxu0 %v9890
    %12836 = vmatpush1.bf16.msra.mxu0 %v9889
    %12837 = vmatprep.subr.bf16.mxu0 %v9914
    %12838 = vmatpush1.bf16.msra.mxu0 %v9913
    %12839 = vmatprep.subr.bf16.mxu0 %v9938
    %12840 = vmatpush1.bf16.msra.mxu0 %v9937
    %12841 = vmatprep.subr.bf16.mxu0 %v9962
    %12842 = vmatpush1.bf16.msra.mxu0 %v9961
    %12843 = vmatprep.subr.bf16.mxu0 %v9986
    %12844 = vmatpush1.bf16.msra.mxu0 %v9985
    %12845 = vmatprep.subr.bf16.mxu0 %v10010
    %12846 = vmatpush1.bf16.msra.mxu0 %v10009
    %12847 = vmatprep.subr.bf16.mxu0 %v10034
    %12848 = vmatpush1.bf16.msra.mxu0 %v10033
    %12849 = vmatprep.subr.bf16.mxu0 %v10058
    %12850 = vmatpush1.bf16.msra.mxu0 %v10057
    %12851 = vmatprep.subr.bf16.mxu0 %v10082
    %12852 = vmatpush1.bf16.msra.mxu0 %v10081
    %12853 = vmatprep.subr.bf16.mxu0 %v10106
    %12854 = vmatpush1.bf16.msra.mxu0 %v10105
    %12855 = vmatprep.subr.bf16.mxu0 %v10130
    %12856 = vmatpush1.bf16.msra.mxu0 %v10129
    %12857 = vmatprep.subr.bf16.mxu0 %v10154
    %12858 = vmatpush1.bf16.msra.mxu0 %v10153
    %12859 = vmatprep.mubr.bf16.mxu0 %v2744
    %12860 = vmatmul.mubr.bf16.gmra.mrb[0].mxu0 %v2743
    %v12861 = vpop.f32.mrb[0].mxu0
    %v12862 = vadd.f32 %v12821, %v12861
    %v12863 = vpop.f32.mrb[0].mxu0
    %v12864 = vadd.f32 %v12823, %v12863
    %v12865 = vpop.f32.mrb[0].mxu0
    %v12866 = vpop.f32.mrb[0].mxu0
    %12867 = vdwg.mxu0
    %12868 = vmatprep.subr.bf16.mxu0 %v10178
    %12869 = vmatpush1.bf16.msra.mxu0 %v10177
    %12870 = vmatprep.subr.bf16.mxu0 %v10202
    %12871 = vmatpush1.bf16.msra.mxu0 %v10201
    %12872 = vmatprep.subr.bf16.mxu0 %v10226
    %12873 = vmatpush1.bf16.msra.mxu0 %v10225
    %12874 = vmatprep.subr.bf16.mxu0 %v10250
    %12875 = vmatpush1.bf16.msra.mxu0 %v10249
    %12876 = vmatprep.subr.bf16.mxu0 %v10274
    %12877 = vmatpush1.bf16.msra.mxu0 %v10273
    %12878 = vmatprep.subr.bf16.mxu0 %v10298
    %12879 = vmatpush1.bf16.msra.mxu0 %v10297
    %12880 = vmatprep.subr.bf16.mxu0 %v10322
    %12881 = vmatpush1.bf16.msra.mxu0 %v10321
    %12882 = vmatprep.subr.bf16.mxu0 %v10346
    %12883 = vmatpush1.bf16.msra.mxu0 %v10345
    %12884 = vmatprep.subr.bf16.mxu0 %v10370
    %12885 = vmatpush1.bf16.msra.mxu0 %v10369
    %12886 = vmatprep.subr.bf16.mxu0 %v10394
    %12887 = vmatpush1.bf16.msra.mxu0 %v10393
    %12888 = vmatprep.subr.bf16.mxu0 %v10418
    %12889 = vmatpush1.bf16.msra.mxu0 %v10417
    %12890 = vmatprep.subr.bf16.mxu0 %v10442
    %12891 = vmatpush1.bf16.msra.mxu0 %v10441
    %12892 = vmatprep.subr.bf16.mxu0 %v10466
    %12893 = vmatpush1.bf16.msra.mxu0 %v10465
    %12894 = vmatprep.subr.bf16.mxu0 %v10490
    %12895 = vmatpush1.bf16.msra.mxu0 %v10489
    %12896 = vmatprep.subr.bf16.mxu0 %v10514
    %12897 = vmatpush1.bf16.msra.mxu0 %v10513
    %12898 = vmatprep.subr.bf16.mxu0 %v10538
    %12899 = vmatpush1.bf16.msra.mxu0 %v10537
    %12900 = vmatprep.mubr.bf16.mxu0 %v2746
    %12901 = vmatmul.mubr.bf16.gmra.mrb[0].mxu0 %v2745
    %v12902 = vpop.f32.mrb[0].mxu0
    %v12903 = vadd.f32 %v12862, %v12902
    %v12904 = vpop.f32.mrb[0].mxu0
    %v12905 = vadd.f32 %v12864, %v12904
    %v12906 = vpop.f32.mrb[0].mxu0
    %v12907 = vpop.f32.mrb[0].mxu0
    %12908 = vdwg.mxu0
    %12909 = vmatprep.subr.bf16.mxu0 %v9028
    %12910 = vmatpush1.bf16.msra.mxu0 %v9027
    %12911 = vmatprep.subr.bf16.mxu0 %v9052
    %12912 = vmatpush1.bf16.msra.mxu0 %v9051
    %12913 = vmatprep.subr.bf16.mxu0 %v9076
    %12914 = vmatpush1.bf16.msra.mxu0 %v9075
    %12915 = vmatprep.subr.bf16.mxu0 %v9100
    %12916 = vmatpush1.bf16.msra.mxu0 %v9099
    %12917 = vmatprep.subr.bf16.mxu0 %v9124
    %12918 = vmatpush1.bf16.msra.mxu0 %v9123
    %12919 = vmatprep.subr.bf16.mxu0 %v9148
    %12920 = vmatpush1.bf16.msra.mxu0 %v9147
    %12921 = vmatprep.subr.bf16.mxu0 %v9172
    %12922 = vmatpush1.bf16.msra.mxu0 %v9171
    %12923 = vmatprep.subr.bf16.mxu0 %v9196
    %12924 = vmatpush1.bf16.msra.mxu0 %v9195
    %12925 = vmatprep.subr.bf16.mxu0 %v9220
    %12926 = vmatpush1.bf16.msra.mxu0 %v9219
    %12927 = vmatprep.subr.bf16.mxu0 %v9244
    %12928 = vmatpush1.bf16.msra.mxu0 %v9243
    %12929 = vmatprep.subr.bf16.mxu0 %v9268
    %12930 = vmatpush1.bf16.msra.mxu0 %v9267
    %12931 = vmatprep.subr.bf16.mxu0 %v9292
    %12932 = vmatpush1.bf16.msra.mxu0 %v9291
    %12933 = vmatprep.subr.bf16.mxu0 %v9316
    %12934 = vmatpush1.bf16.msra.mxu0 %v9315
    %12935 = vmatprep.subr.bf16.mxu0 %v9340
    %12936 = vmatpush1.bf16.msra.mxu0 %v9339
    %12937 = vmatprep.subr.bf16.mxu0 %v9364
    %12938 = vmatpush1.bf16.msra.mxu0 %v9363
    %12939 = vmatprep.subr.bf16.mxu0 %v9388
    %12940 = vmatpush1.bf16.msra.mxu0 %v9387
    %12941 = vmatprep.mubr.bf16.mxu0 %v2740
    %12942 = vmatmul.mubr.bf16.gmra.mrb[0].mxu0 %v2739
    %v12943 = vpop.f32.mrb[0].mxu0
    %v12944 = vadd.f32 %v4332, %v12943
    %v12945 = vpop.f32.mrb[0].mxu0
    %v12946 = vadd.f32 %v4336, %v12945
    %v12947 = vpop.f32.mrb[0].mxu0
    %v12948 = vpop.f32.mrb[0].mxu0
    %12949 = vdwg.mxu0
    %12950 = vmatprep.subr.bf16.mxu0 %v9412
    %12951 = vmatpush1.bf16.msra.mxu0 %v9411
    %12952 = vmatprep.subr.bf16.mxu0 %v9436
    %12953 = vmatpush1.bf16.msra.mxu0 %v9435
    %12954 = vmatprep.subr.bf16.mxu0 %v9460
    %12955 = vmatpush1.bf16.msra.mxu0 %v9459
    %12956 = vmatprep.subr.bf16.mxu0 %v9484
    %12957 = vmatpush1.bf16.msra.mxu0 %v9483
    %12958 = vmatprep.subr.bf16.mxu0 %v9508
    %12959 = vmatpush1.bf16.msra.mxu0 %v9507
    %12960 = vmatprep.subr.bf16.mxu0 %v9532
    %12961 = vmatpush1.bf16.msra.mxu0 %v9531
    %12962 = vmatprep.subr.bf16.mxu0 %v9556
    %12963 = vmatpush1.bf16.msra.mxu0 %v9555
    %12964 = vmatprep.subr.bf16.mxu0 %v9580
    %12965 = vmatpush1.bf16.msra.mxu0 %v9579
    %12966 = vmatprep.subr.bf16.mxu0 %v9604
    %12967 = vmatpush1.bf16.msra.mxu0 %v9603
    %12968 = vmatprep.subr.bf16.mxu0 %v9628
    %12969 = vmatpush1.bf16.msra.mxu0 %v9627
    %12970 = vmatprep.subr.bf16.mxu0 %v9652
    %12971 = vmatpush1.bf16.msra.mxu0 %v9651
    %12972 = vmatprep.subr.bf16.mxu0 %v9676
    %12973 = vmatpush1.bf16.msra.mxu0 %v9675
    %12974 = vmatprep.subr.bf16.mxu0 %v9700
    %12975 = vmatpush1.bf16.msra.mxu0 %v9699
    %12976 = vmatprep.subr.bf16.mxu0 %v9724
    %12977 = vmatpush1.bf16.msra.mxu0 %v9723
    %12978 = vmatprep.subr.bf16.mxu0 %v9748
    %12979 = vmatpush1.bf16.msra.mxu0 %v9747
    %12980 = vmatprep.subr.bf16.mxu0 %v9772
    %12981 = vmatpush1.bf16.msra.mxu0 %v9771
    %12982 = vmatprep.mubr.bf16.mxu0 %v2742
    %12983 = vmatmul.mubr.bf16.gmra.mrb[0].mxu0 %v2741
    %v12984 = vpop.f32.mrb[0].mxu0
    %v12985 = vadd.f32 %v12944, %v12984
    %v12986 = vpop.f32.mrb[0].mxu0
    %v12987 = vadd.f32 %v12946, %v12986
    %v12988 = vpop.f32.mrb[0].mxu0
    %v12989 = vpop.f32.mrb[0].mxu0
    %12990 = vdwg.mxu0
    %12991 = vmatprep.subr.bf16.mxu0 %v9796
    %12992 = vmatpush1.bf16.msra.mxu0 %v9795
    %12993 = vmatprep.subr.bf16.mxu0 %v9820
    %12994 = vmatpush1.bf16.msra.mxu0 %v9819
    %12995 = vmatprep.subr.bf16.mxu0 %v9844
    %12996 = vmatpush1.bf16.msra.mxu0 %v9843
    %12997 = vmatprep.subr.bf16.mxu0 %v9868
    %12998 = vmatpush1.bf16.msra.mxu0 %v9867
    %12999 = vmatprep.subr.bf16.mxu0 %v9892
    %13000 = vmatpush1.bf16.msra.mxu0 %v9891
    %13001 = vmatprep.subr.bf16.mxu0 %v9916
    %13002 = vmatpush1.bf16.msra.mxu0 %v9915
    %13003 = vmatprep.subr.bf16.mxu0 %v9940
    %13004 = vmatpush1.bf16.msra.mxu0 %v9939
    %13005 = vmatprep.subr.bf16.mxu0 %v9964
    %13006 = vmatpush1.bf16.msra.mxu0 %v9963
    %13007 = vmatprep.subr.bf16.mxu0 %v9988
    %13008 = vmatpush1.bf16.msra.mxu0 %v9987
    %13009 = vmatprep.subr.bf16.mxu0 %v10012
    %13010 = vmatpush1.bf16.msra.mxu0 %v10011
    %13011 = vmatprep.subr.bf16.mxu0 %v10036
    %13012 = vmatpush1.bf16.msra.mxu0 %v10035
    %13013 = vmatprep.subr.bf16.mxu0 %v10060
    %13014 = vmatpush1.bf16.msra.mxu0 %v10059
    %13015 = vmatprep.subr.bf16.mxu0 %v10084
    %13016 = vmatpush1.bf16.msra.mxu0 %v10083
    %13017 = vmatprep.subr.bf16.mxu0 %v10108
    %13018 = vmatpush1.bf16.msra.mxu0 %v10107
    %13019 = vmatprep.subr.bf16.mxu0 %v10132
    %13020 = vmatpush1.bf16.msra.mxu0 %v10131
    %13021 = vmatprep.subr.bf16.mxu0 %v10156
    %13022 = vmatpush1.bf16.msra.mxu0 %v10155
    %13023 = vmatprep.mubr.bf16.mxu0 %v2744
    %13024 = vmatmul.mubr.bf16.gmra.mrb[0].mxu0 %v2743
    %v13025 = vpop.f32.mrb[0].mxu0
    %v13026 = vadd.f32 %v12985, %v13025
    %v13027 = vpop.f32.mrb[0].mxu0
    %v13028 = vadd.f32 %v12987, %v13027
    %v13029 = vpop.f32.mrb[0].mxu0
    %v13030 = vpop.f32.mrb[0].mxu0
    %13031 = vdwg.mxu0
    %13032 = vmatprep.subr.bf16.mxu0 %v10180
    %13033 = vmatpush1.bf16.msra.mxu0 %v10179
    %13034 = vmatprep.subr.bf16.mxu0 %v10204
    %13035 = vmatpush1.bf16.msra.mxu0 %v10203
    %13036 = vmatprep.subr.bf16.mxu0 %v10228
    %13037 = vmatpush1.bf16.msra.mxu0 %v10227
    %13038 = vmatprep.subr.bf16.mxu0 %v10252
    %13039 = vmatpush1.bf16.msra.mxu0 %v10251
    %13040 = vmatprep.subr.bf16.mxu0 %v10276
    %13041 = vmatpush1.bf16.msra.mxu0 %v10275
    %13042 = vmatprep.subr.bf16.mxu0 %v10300
    %13043 = vmatpush1.bf16.msra.mxu0 %v10299
    %13044 = vmatprep.subr.bf16.mxu0 %v10324
    %13045 = vmatpush1.bf16.msra.mxu0 %v10323
    %13046 = vmatprep.subr.bf16.mxu0 %v10348
    %13047 = vmatpush1.bf16.msra.mxu0 %v10347
    %13048 = vmatprep.subr.bf16.mxu0 %v10372
    %13049 = vmatpush1.bf16.msra.mxu0 %v10371
    %13050 = vmatprep.subr.bf16.mxu0 %v10396
    %13051 = vmatpush1.bf16.msra.mxu0 %v10395
    %13052 = vmatprep.subr.bf16.mxu0 %v10420
    %13053 = vmatpush1.bf16.msra.mxu0 %v10419
    %13054 = vmatprep.subr.bf16.mxu0 %v10444
    %13055 = vmatpush1.bf16.msra.mxu0 %v10443
    %13056 = vmatprep.subr.bf16.mxu0 %v10468
    %13057 = vmatpush1.bf16.msra.mxu0 %v10467
    %13058 = vmatprep.subr.bf16.mxu0 %v10492
    %13059 = vmatpush1.bf16.msra.mxu0 %v10491
    %13060 = vmatprep.subr.bf16.mxu0 %v10516
    %13061 = vmatpush1.bf16.msra.mxu0 %v10515
    %13062 = vmatprep.subr.bf16.mxu0 %v10540
    %13063 = vmatpush1.bf16.msra.mxu0 %v10539
    %13064 = vmatprep.mubr.bf16.mxu0 %v2746
    %13065 = vmatmul.mubr.bf16.gmra.mrb[0].mxu0 %v2745
    %v13066 = vpop.f32.mrb[0].mxu0
    %v13067 = vadd.f32 %v13026, %v13066
    %v13068 = vpop.f32.mrb[0].mxu0
    %v13069 = vadd.f32 %v13028, %v13068
    %v13070 = vpop.f32.mrb[0].mxu0
    %v13071 = vpop.f32.mrb[0].mxu0
    %13072 = vdwg.mxu0
    %13073 = vmatprep.subr.bf16.mxu0 %v9030
    %13074 = vmatpush1.bf16.msra.mxu0 %v9029
    %13075 = vmatprep.subr.bf16.mxu0 %v9054
    %13076 = vmatpush1.bf16.msra.mxu0 %v9053
    %13077 = vmatprep.subr.bf16.mxu0 %v9078
    %13078 = vmatpush1.bf16.msra.mxu0 %v9077
    %13079 = vmatprep.subr.bf16.mxu0 %v9102
    %13080 = vmatpush1.bf16.msra.mxu0 %v9101
    %13081 = vmatprep.subr.bf16.mxu0 %v9126
    %13082 = vmatpush1.bf16.msra.mxu0 %v9125
    %13083 = vmatprep.subr.bf16.mxu0 %v9150
    %13084 = vmatpush1.bf16.msra.mxu0 %v9149
    %13085 = vmatprep.subr.bf16.mxu0 %v9174
    %13086 = vmatpush1.bf16.msra.mxu0 %v9173
    %13087 = vmatprep.subr.bf16.mxu0 %v9198
    %13088 = vmatpush1.bf16.msra.mxu0 %v9197
    %13089 = vmatprep.subr.bf16.mxu0 %v9222
    %13090 = vmatpush1.bf16.msra.mxu0 %v9221
    %13091 = vmatprep.subr.bf16.mxu0 %v9246
    %13092 = vmatpush1.bf16.msra.mxu0 %v9245
    %13093 = vmatprep.subr.bf16.mxu0 %v9270
    %13094 = vmatpush1.bf16.msra.mxu0 %v9269
    %13095 = vmatprep.subr.bf16.mxu0 %v9294
    %13096 = vmatpush1.bf16.msra.mxu0 %v9293
    %13097 = vmatprep.subr.bf16.mxu0 %v9318
    %13098 = vmatpush1.bf16.msra.mxu0 %v9317
    %13099 = vmatprep.subr.bf16.mxu0 %v9342
    %13100 = vmatpush1.bf16.msra.mxu0 %v9341
    %13101 = vmatprep.subr.bf16.mxu0 %v9366
    %13102 = vmatpush1.bf16.msra.mxu0 %v9365
    %13103 = vmatprep.subr.bf16.mxu0 %v9390
    %13104 = vmatpush1.bf16.msra.mxu0 %v9389
    %13105 = vmatprep.mubr.bf16.mxu0 %v2740
    %13106 = vmatmul.mubr.bf16.gmra.mrb[0].mxu0 %v2739
    %v13107 = vpop.f32.mrb[0].mxu0
    %v13108 = vadd.f32 %v4340, %v13107
    %v13109 = vpop.f32.mrb[0].mxu0
    %v13110 = vadd.f32 %v4344, %v13109
    %v13111 = vpop.f32.mrb[0].mxu0
    %v13112 = vpop.f32.mrb[0].mxu0
    %13113 = vdwg.mxu0
    %13114 = vmatprep.subr.bf16.mxu0 %v9414
    %13115 = vmatpush1.bf16.msra.mxu0 %v9413
    %13116 = vmatprep.subr.bf16.mxu0 %v9438
    %13117 = vmatpush1.bf16.msra.mxu0 %v9437
    %13118 = vmatprep.subr.bf16.mxu0 %v9462
    %13119 = vmatpush1.bf16.msra.mxu0 %v9461
    %13120 = vmatprep.subr.bf16.mxu0 %v9486
    %13121 = vmatpush1.bf16.msra.mxu0 %v9485
    %13122 = vmatprep.subr.bf16.mxu0 %v9510
    %13123 = vmatpush1.bf16.msra.mxu0 %v9509
    %13124 = vmatprep.subr.bf16.mxu0 %v9534
    %13125 = vmatpush1.bf16.msra.mxu0 %v9533
    %13126 = vmatprep.subr.bf16.mxu0 %v9558
    %13127 = vmatpush1.bf16.msra.mxu0 %v9557
    %13128 = vmatprep.subr.bf16.mxu0 %v9582
    %13129 = vmatpush1.bf16.msra.mxu0 %v9581
    %13130 = vmatprep.subr.bf16.mxu0 %v9606
    %13131 = vmatpush1.bf16.msra.mxu0 %v9605
    %13132 = vmatprep.subr.bf16.mxu0 %v9630
    %13133 = vmatpush1.bf16.msra.mxu0 %v9629
    %13134 = vmatprep.subr.bf16.mxu0 %v9654
    %13135 = vmatpush1.bf16.msra.mxu0 %v9653
    %13136 = vmatprep.subr.bf16.mxu0 %v9678
    %13137 = vmatpush1.bf16.msra.mxu0 %v9677
    %13138 = vmatprep.subr.bf16.mxu0 %v9702
    %13139 = vmatpush1.bf16.msra.mxu0 %v9701
    %13140 = vmatprep.subr.bf16.mxu0 %v9726
    %13141 = vmatpush1.bf16.msra.mxu0 %v9725
    %13142 = vmatprep.subr.bf16.mxu0 %v9750
    %13143 = vmatpush1.bf16.msra.mxu0 %v9749
    %13144 = vmatprep.subr.bf16.mxu0 %v9774
    %13145 = vmatpush1.bf16.msra.mxu0 %v9773
    %13146 = vmatprep.mubr.bf16.mxu0 %v2742
    %13147 = vmatmul.mubr.bf16.gmra.mrb[0].mxu0 %v2741
    %v13148 = vpop.f32.mrb[0].mxu0
    %v13149 = vadd.f32 %v13108, %v13148
    %v13150 = vpop.f32.mrb[0].mxu0
    %v13151 = vadd.f32 %v13110, %v13150
    %v13152 = vpop.f32.mrb[0].mxu0
    %v13153 = vpop.f32.mrb[0].mxu0
    %13154 = vdwg.mxu0
    %13155 = vmatprep.subr.bf16.mxu0 %v9798
    %13156 = vmatpush1.bf16.msra.mxu0 %v9797
    %13157 = vmatprep.subr.bf16.mxu0 %v9822
    %13158 = vmatpush1.bf16.msra.mxu0 %v9821
    %13159 = vmatprep.subr.bf16.mxu0 %v9846
    %13160 = vmatpush1.bf16.msra.mxu0 %v9845
    %13161 = vmatprep.subr.bf16.mxu0 %v9870
    %13162 = vmatpush1.bf16.msra.mxu0 %v9869
    %13163 = vmatprep.subr.bf16.mxu0 %v9894
    %13164 = vmatpush1.bf16.msra.mxu0 %v9893
    %13165 = vmatprep.subr.bf16.mxu0 %v9918
    %13166 = vmatpush1.bf16.msra.mxu0 %v9917
    %13167 = vmatprep.subr.bf16.mxu0 %v9942
    %13168 = vmatpush1.bf16.msra.mxu0 %v9941
    %13169 = vmatprep.subr.bf16.mxu0 %v9966
    %13170 = vmatpush1.bf16.msra.mxu0 %v9965
    %13171 = vmatprep.subr.bf16.mxu0 %v9990
    %13172 = vmatpush1.bf16.msra.mxu0 %v9989
    %13173 = vmatprep.subr.bf16.mxu0 %v10014
    %13174 = vmatpush1.bf16.msra.mxu0 %v10013
    %13175 = vmatprep.subr.bf16.mxu0 %v10038
    %13176 = vmatpush1.bf16.msra.mxu0 %v10037
    %13177 = vmatprep.subr.bf16.mxu0 %v10062
    %13178 = vmatpush1.bf16.msra.mxu0 %v10061
    %13179 = vmatprep.subr.bf16.mxu0 %v10086
    %13180 = vmatpush1.bf16.msra.mxu0 %v10085
    %13181 = vmatprep.subr.bf16.mxu0 %v10110
    %13182 = vmatpush1.bf16.msra.mxu0 %v10109
    %13183 = vmatprep.subr.bf16.mxu0 %v10134
    %13184 = vmatpush1.bf16.msra.mxu0 %v10133
    %13185 = vmatprep.subr.bf16.mxu0 %v10158
    %13186 = vmatpush1.bf16.msra.mxu0 %v10157
    %13187 = vmatprep.mubr.bf16.mxu0 %v2744
    %13188 = vmatmul.mubr.bf16.gmra.mrb[0].mxu0 %v2743
    %v13189 = vpop.f32.mrb[0].mxu0
    %v13190 = vadd.f32 %v13149, %v13189
    %v13191 = vpop.f32.mrb[0].mxu0
    %v13192 = vadd.f32 %v13151, %v13191
    %v13193 = vpop.f32.mrb[0].mxu0
    %v13194 = vpop.f32.mrb[0].mxu0
    %13195 = vdwg.mxu0
    %13196 = vmatprep.subr.bf16.mxu0 %v10182
    %13197 = vmatpush1.bf16.msra.mxu0 %v10181
    %13198 = vmatprep.subr.bf16.mxu0 %v10206
    %13199 = vmatpush1.bf16.msra.mxu0 %v10205
    %13200 = vmatprep.subr.bf16.mxu0 %v10230
    %13201 = vmatpush1.bf16.msra.mxu0 %v10229
    %13202 = vmatprep.subr.bf16.mxu0 %v10254
    %13203 = vmatpush1.bf16.msra.mxu0 %v10253
    %13204 = vmatprep.subr.bf16.mxu0 %v10278
    %13205 = vmatpush1.bf16.msra.mxu0 %v10277
    %13206 = vmatprep.subr.bf16.mxu0 %v10302
    %13207 = vmatpush1.bf16.msra.mxu0 %v10301
    %13208 = vmatprep.subr.bf16.mxu0 %v10326
    %13209 = vmatpush1.bf16.msra.mxu0 %v10325
    %13210 = vmatprep.subr.bf16.mxu0 %v10350
    %13211 = vmatpush1.bf16.msra.mxu0 %v10349
    %13212 = vmatprep.subr.bf16.mxu0 %v10374
    %13213 = vmatpush1.bf16.msra.mxu0 %v10373
    %13214 = vmatprep.subr.bf16.mxu0 %v10398
    %13215 = vmatpush1.bf16.msra.mxu0 %v10397
    %13216 = vmatprep.subr.bf16.mxu0 %v10422
    %13217 = vmatpush1.bf16.msra.mxu0 %v10421
    %13218 = vmatprep.subr.bf16.mxu0 %v10446
    %13219 = vmatpush1.bf16.msra.mxu0 %v10445
    %13220 = vmatprep.subr.bf16.mxu0 %v10470
    %13221 = vmatpush1.bf16.msra.mxu0 %v10469
    %13222 = vmatprep.subr.bf16.mxu0 %v10494
    %13223 = vmatpush1.bf16.msra.mxu0 %v10493
    %13224 = vmatprep.subr.bf16.mxu0 %v10518
    %13225 = vmatpush1.bf16.msra.mxu0 %v10517
    %13226 = vmatprep.subr.bf16.mxu0 %v10542
    %13227 = vmatpush1.bf16.msra.mxu0 %v10541
    %13228 = vmatprep.mubr.bf16.mxu0 %v2746
    %13229 = vmatmul.mubr.bf16.gmra.mrb[0].mxu0 %v2745
    %v13230 = vpop.f32.mrb[0].mxu0
    %v13231 = vadd.f32 %v13190, %v13230
    %v13232 = vpop.f32.mrb[0].mxu0
    %v13233 = vadd.f32 %v13192, %v13232
    %v13234 = vpop.f32.mrb[0].mxu0
    %v13235 = vpop.f32.mrb[0].mxu0
    %13236 = vdwg.mxu0
    %13237 = vmatprep.subr.bf16.mxu0 %v9032
    %13238 = vmatpush1.bf16.msra.mxu0 %v9031
    %13239 = vmatprep.subr.bf16.mxu0 %v9056
    %13240 = vmatpush1.bf16.msra.mxu0 %v9055
    %13241 = vmatprep.subr.bf16.mxu0 %v9080
    %13242 = vmatpush1.bf16.msra.mxu0 %v9079
    %13243 = vmatprep.subr.bf16.mxu0 %v9104
    %13244 = vmatpush1.bf16.msra.mxu0 %v9103
    %13245 = vmatprep.subr.bf16.mxu0 %v9128
    %13246 = vmatpush1.bf16.msra.mxu0 %v9127
    %13247 = vmatprep.subr.bf16.mxu0 %v9152
    %13248 = vmatpush1.bf16.msra.mxu0 %v9151
    %13249 = vmatprep.subr.bf16.mxu0 %v9176
    %13250 = vmatpush1.bf16.msra.mxu0 %v9175
    %13251 = vmatprep.subr.bf16.mxu0 %v9200
    %13252 = vmatpush1.bf16.msra.mxu0 %v9199
    %13253 = vmatprep.subr.bf16.mxu0 %v9224
    %13254 = vmatpush1.bf16.msra.mxu0 %v9223
    %13255 = vmatprep.subr.bf16.mxu0 %v9248
    %13256 = vmatpush1.bf16.msra.mxu0 %v9247
    %13257 = vmatprep.subr.bf16.mxu0 %v9272
    %13258 = vmatpush1.bf16.msra.mxu0 %v9271
    %13259 = vmatprep.subr.bf16.mxu0 %v9296
    %13260 = vmatpush1.bf16.msra.mxu0 %v9295
    %13261 = vmatprep.subr.bf16.mxu0 %v9320
    %13262 = vmatpush1.bf16.msra.mxu0 %v9319
    %13263 = vmatprep.subr.bf16.mxu0 %v9344
    %13264 = vmatpush1.bf16.msra.mxu0 %v9343
    %13265 = vmatprep.subr.bf16.mxu0 %v9368
    %13266 = vmatpush1.bf16.msra.mxu0 %v9367
    %13267 = vmatprep.subr.bf16.mxu0 %v9392
    %13268 = vmatpush1.bf16.msra.mxu0 %v9391
    %13269 = vmatprep.mubr.bf16.mxu0 %v2740
    %13270 = vmatmul.mubr.bf16.gmra.mrb[0].mxu0 %v2739
    %v13271 = vpop.f32.mrb[0].mxu0
    %v13272 = vadd.f32 %v4348, %v13271
    %v13273 = vpop.f32.mrb[0].mxu0
    %v13274 = vadd.f32 %v4352, %v13273
    %v13275 = vpop.f32.mrb[0].mxu0
    %v13276 = vpop.f32.mrb[0].mxu0
    %13277 = vdwg.mxu0
    %13278 = vmatprep.subr.bf16.mxu0 %v9416
    %13279 = vmatpush1.bf16.msra.mxu0 %v9415
    %13280 = vmatprep.subr.bf16.mxu0 %v9440
    %13281 = vmatpush1.bf16.msra.mxu0 %v9439
    %13282 = vmatprep.subr.bf16.mxu0 %v9464
    %13283 = vmatpush1.bf16.msra.mxu0 %v9463
    %13284 = vmatprep.subr.bf16.mxu0 %v9488
    %13285 = vmatpush1.bf16.msra.mxu0 %v9487
    %13286 = vmatprep.subr.bf16.mxu0 %v9512
    %13287 = vmatpush1.bf16.msra.mxu0 %v9511
    %13288 = vmatprep.subr.bf16.mxu0 %v9536
    %13289 = vmatpush1.bf16.msra.mxu0 %v9535
    %13290 = vmatprep.subr.bf16.mxu0 %v9560
    %13291 = vmatpush1.bf16.msra.mxu0 %v9559
    %13292 = vmatprep.subr.bf16.mxu0 %v9584
    %13293 = vmatpush1.bf16.msra.mxu0 %v9583
    %13294 = vmatprep.subr.bf16.mxu0 %v9608
    %13295 = vmatpush1.bf16.msra.mxu0 %v9607
    %13296 = vmatprep.subr.bf16.mxu0 %v9632
    %13297 = vmatpush1.bf16.msra.mxu0 %v9631
    %13298 = vmatprep.subr.bf16.mxu0 %v9656
    %13299 = vmatpush1.bf16.msra.mxu0 %v9655
    %13300 = vmatprep.subr.bf16.mxu0 %v9680
    %13301 = vmatpush1.bf16.msra.mxu0 %v9679
    %13302 = vmatprep.subr.bf16.mxu0 %v9704
    %13303 = vmatpush1.bf16.msra.mxu0 %v9703
    %13304 = vmatprep.subr.bf16.mxu0 %v9728
    %13305 = vmatpush1.bf16.msra.mxu0 %v9727
    %13306 = vmatprep.subr.bf16.mxu0 %v9752
    %13307 = vmatpush1.bf16.msra.mxu0 %v9751
    %13308 = vmatprep.subr.bf16.mxu0 %v9776
    %13309 = vmatpush1.bf16.msra.mxu0 %v9775
    %13310 = vmatprep.mubr.bf16.mxu0 %v2742
    %13311 = vmatmul.mubr.bf16.gmra.mrb[0].mxu0 %v2741
    %v13312 = vpop.f32.mrb[0].mxu0
    %v13313 = vadd.f32 %v13272, %v13312
    %v13314 = vpop.f32.mrb[0].mxu0
    %v13315 = vadd.f32 %v13274, %v13314
    %v13316 = vpop.f32.mrb[0].mxu0
    %v13317 = vpop.f32.mrb[0].mxu0
    %13318 = vdwg.mxu0
    %13319 = vmatprep.subr.bf16.mxu0 %v9800
    %13320 = vmatpush1.bf16.msra.mxu0 %v9799
    %13321 = vmatprep.subr.bf16.mxu0 %v9824
    %13322 = vmatpush1.bf16.msra.mxu0 %v9823
    %13323 = vmatprep.subr.bf16.mxu0 %v9848
    %13324 = vmatpush1.bf16.msra.mxu0 %v9847
    %13325 = vmatprep.subr.bf16.mxu0 %v9872
    %13326 = vmatpush1.bf16.msra.mxu0 %v9871
    %13327 = vmatprep.subr.bf16.mxu0 %v9896
    %13328 = vmatpush1.bf16.msra.mxu0 %v9895
    %13329 = vmatprep.subr.bf16.mxu0 %v9920
    %13330 = vmatpush1.bf16.msra.mxu0 %v9919
    %13331 = vmatprep.subr.bf16.mxu0 %v9944
    %13332 = vmatpush1.bf16.msra.mxu0 %v9943
    %13333 = vmatprep.subr.bf16.mxu0 %v9968
    %13334 = vmatpush1.bf16.msra.mxu0 %v9967
    %13335 = vmatprep.subr.bf16.mxu0 %v9992
    %13336 = vmatpush1.bf16.msra.mxu0 %v9991
    %13337 = vmatprep.subr.bf16.mxu0 %v10016
    %13338 = vmatpush1.bf16.msra.mxu0 %v10015
    %13339 = vmatprep.subr.bf16.mxu0 %v10040
    %13340 = vmatpush1.bf16.msra.mxu0 %v10039
    %13341 = vmatprep.subr.bf16.mxu0 %v10064
    %13342 = vmatpush1.bf16.msra.mxu0 %v10063
    %13343 = vmatprep.subr.bf16.mxu0 %v10088
    %13344 = vmatpush1.bf16.msra.mxu0 %v10087
    %13345 = vmatprep.subr.bf16.mxu0 %v10112
    %13346 = vmatpush1.bf16.msra.mxu0 %v10111
    %13347 = vmatprep.subr.bf16.mxu0 %v10136
    %13348 = vmatpush1.bf16.msra.mxu0 %v10135
    %13349 = vmatprep.subr.bf16.mxu0 %v10160
    %13350 = vmatpush1.bf16.msra.mxu0 %v10159
    %13351 = vmatprep.mubr.bf16.mxu0 %v2744
    %13352 = vmatmul.mubr.bf16.gmra.mrb[0].mxu0 %v2743
    %v13353 = vpop.f32.mrb[0].mxu0
    %v13354 = vadd.f32 %v13313, %v13353
    %v13355 = vpop.f32.mrb[0].mxu0
    %v13356 = vadd.f32 %v13315, %v13355
    %v13357 = vpop.f32.mrb[0].mxu0
    %v13358 = vpop.f32.mrb[0].mxu0
    %13359 = vdwg.mxu0
    %13360 = vmatprep.subr.bf16.mxu0 %v10184
    %13361 = vmatpush1.bf16.msra.mxu0 %v10183
    %13362 = vmatprep.subr.bf16.mxu0 %v10208
    %13363 = vmatpush1.bf16.msra.mxu0 %v10207
    %13364 = vmatprep.subr.bf16.mxu0 %v10232
    %13365 = vmatpush1.bf16.msra.mxu0 %v10231
    %13366 = vmatprep.subr.bf16.mxu0 %v10256
    %13367 = vmatpush1.bf16.msra.mxu0 %v10255
    %13368 = vmatprep.subr.bf16.mxu0 %v10280
    %13369 = vmatpush1.bf16.msra.mxu0 %v10279
    %13370 = vmatprep.subr.bf16.mxu0 %v10304
    %13371 = vmatpush1.bf16.msra.mxu0 %v10303
    %13372 = vmatprep.subr.bf16.mxu0 %v10328
    %13373 = vmatpush1.bf16.msra.mxu0 %v10327
    %13374 = vmatprep.subr.bf16.mxu0 %v10352
    %13375 = vmatpush1.bf16.msra.mxu0 %v10351
    %13376 = vmatprep.subr.bf16.mxu0 %v10376
    %13377 = vmatpush1.bf16.msra.mxu0 %v10375
    %13378 = vmatprep.subr.bf16.mxu0 %v10400
    %13379 = vmatpush1.bf16.msra.mxu0 %v10399
    %13380 = vmatprep.subr.bf16.mxu0 %v10424
    %13381 = vmatpush1.bf16.msra.mxu0 %v10423
    %13382 = vmatprep.subr.bf16.mxu0 %v10448
    %13383 = vmatpush1.bf16.msra.mxu0 %v10447
    %13384 = vmatprep.subr.bf16.mxu0 %v10472
    %13385 = vmatpush1.bf16.msra.mxu0 %v10471
    %13386 = vmatprep.subr.bf16.mxu0 %v10496
    %13387 = vmatpush1.bf16.msra.mxu0 %v10495
    %13388 = vmatprep.subr.bf16.mxu0 %v10520
    %13389 = vmatpush1.bf16.msra.mxu0 %v10519
    %13390 = vmatprep.subr.bf16.mxu0 %v10544
    %13391 = vmatpush1.bf16.msra.mxu0 %v10543
    %13392 = vmatprep.mubr.bf16.mxu0 %v2746
    %13393 = vmatmul.mubr.bf16.gmra.mrb[0].mxu0 %v2745
    %v13394 = vpop.f32.mrb[0].mxu0
    %v13395 = vadd.f32 %v13354, %v13394
    %v13396 = vpop.f32.mrb[0].mxu0
    %v13397 = vadd.f32 %v13356, %v13396
    %v13398 = vpop.f32.mrb[0].mxu0
    %v13399 = vpop.f32.mrb[0].mxu0
    %13400 = vdwg.mxu0
    %13401 = vmatprep.subr.bf16.mxu0 %v9034
    %13402 = vmatpush1.bf16.msra.mxu0 %v9033
    %13403 = vmatprep.subr.bf16.mxu0 %v9058
    %13404 = vmatpush1.bf16.msra.mxu0 %v9057
    %13405 = vmatprep.subr.bf16.mxu0 %v9082
    %13406 = vmatpush1.bf16.msra.mxu0 %v9081
    %13407 = vmatprep.subr.bf16.mxu0 %v9106
    %13408 = vmatpush1.bf16.msra.mxu0 %v9105
    %13409 = vmatprep.subr.bf16.mxu0 %v9130
    %13410 = vmatpush1.bf16.msra.mxu0 %v9129
    %13411 = vmatprep.subr.bf16.mxu0 %v9154
    %13412 = vmatpush1.bf16.msra.mxu0 %v9153
    %13413 = vmatprep.subr.bf16.mxu0 %v9178
    %13414 = vmatpush1.bf16.msra.mxu0 %v9177
    %13415 = vmatprep.subr.bf16.mxu0 %v9202
    %13416 = vmatpush1.bf16.msra.mxu0 %v9201
    %13417 = vmatprep.subr.bf16.mxu0 %v9226
    %13418 = vmatpush1.bf16.msra.mxu0 %v9225
    %13419 = vmatprep.subr.bf16.mxu0 %v9250
    %13420 = vmatpush1.bf16.msra.mxu0 %v9249
    %13421 = vmatprep.subr.bf16.mxu0 %v9274
    %13422 = vmatpush1.bf16.msra.mxu0 %v9273
    %13423 = vmatprep.subr.bf16.mxu0 %v9298
    %13424 = vmatpush1.bf16.msra.mxu0 %v9297
    %13425 = vmatprep.subr.bf16.mxu0 %v9322
    %13426 = vmatpush1.bf16.msra.mxu0 %v9321
    %13427 = vmatprep.subr.bf16.mxu0 %v9346
    %13428 = vmatpush1.bf16.msra.mxu0 %v9345
    %13429 = vmatprep.subr.bf16.mxu0 %v9370
    %13430 = vmatpush1.bf16.msra.mxu0 %v9369
    %13431 = vmatprep.subr.bf16.mxu0 %v9394
    %13432 = vmatpush1.bf16.msra.mxu0 %v9393
    %13433 = vmatprep.mubr.bf16.mxu0 %v2740
    %13434 = vmatmul.mubr.bf16.gmra.mrb[0].mxu0 %v2739
    %v13435 = vpop.f32.mrb[0].mxu0
    %v13436 = vadd.f32 %v4356, %v13435
    %v13437 = vpop.f32.mrb[0].mxu0
    %v13438 = vadd.f32 %v4360, %v13437
    %v13439 = vpop.f32.mrb[0].mxu0
    %v13440 = vpop.f32.mrb[0].mxu0
    %13441 = vdwg.mxu0
    %13442 = vmatprep.subr.bf16.mxu0 %v9418
    %13443 = vmatpush1.bf16.msra.mxu0 %v9417
    %13444 = vmatprep.subr.bf16.mxu0 %v9442
    %13445 = vmatpush1.bf16.msra.mxu0 %v9441
    %13446 = vmatprep.subr.bf16.mxu0 %v9466
    %13447 = vmatpush1.bf16.msra.mxu0 %v9465
    %13448 = vmatprep.subr.bf16.mxu0 %v9490
    %13449 = vmatpush1.bf16.msra.mxu0 %v9489
    %13450 = vmatprep.subr.bf16.mxu0 %v9514
    %13451 = vmatpush1.bf16.msra.mxu0 %v9513
    %13452 = vmatprep.subr.bf16.mxu0 %v9538
    %13453 = vmatpush1.bf16.msra.mxu0 %v9537
    %13454 = vmatprep.subr.bf16.mxu0 %v9562
    %13455 = vmatpush1.bf16.msra.mxu0 %v9561
    %13456 = vmatprep.subr.bf16.mxu0 %v9586
    %13457 = vmatpush1.bf16.msra.mxu0 %v9585
    %13458 = vmatprep.subr.bf16.mxu0 %v9610
    %13459 = vmatpush1.bf16.msra.mxu0 %v9609
    %13460 = vmatprep.subr.bf16.mxu0 %v9634
    %13461 = vmatpush1.bf16.msra.mxu0 %v9633
    %13462 = vmatprep.subr.bf16.mxu0 %v9658
    %13463 = vmatpush1.bf16.msra.mxu0 %v9657
    %13464 = vmatprep.subr.bf16.mxu0 %v9682
    %13465 = vmatpush1.bf16.msra.mxu0 %v9681
    %13466 = vmatprep.subr.bf16.mxu0 %v9706
    %13467 = vmatpush1.bf16.msra.mxu0 %v9705
    %13468 = vmatprep.subr.bf16.mxu0 %v9730
    %13469 = vmatpush1.bf16.msra.mxu0 %v9729
    %13470 = vmatprep.subr.bf16.mxu0 %v9754
    %13471 = vmatpush1.bf16.msra.mxu0 %v9753
    %13472 = vmatprep.subr.bf16.mxu0 %v9778
    %13473 = vmatpush1.bf16.msra.mxu0 %v9777
    %13474 = vmatprep.mubr.bf16.mxu0 %v2742
    %13475 = vmatmul.mubr.bf16.gmra.mrb[0].mxu0 %v2741
    %v13476 = vpop.f32.mrb[0].mxu0
    %v13477 = vadd.f32 %v13436, %v13476
    %v13478 = vpop.f32.mrb[0].mxu0
    %v13479 = vadd.f32 %v13438, %v13478
    %v13480 = vpop.f32.mrb[0].mxu0
    %v13481 = vpop.f32.mrb[0].mxu0
    %13482 = vdwg.mxu0
    %13483 = vmatprep.subr.bf16.mxu0 %v9802
    %13484 = vmatpush1.bf16.msra.mxu0 %v9801
    %13485 = vmatprep.subr.bf16.mxu0 %v9826
    %13486 = vmatpush1.bf16.msra.mxu0 %v9825
    %13487 = vmatprep.subr.bf16.mxu0 %v9850
    %13488 = vmatpush1.bf16.msra.mxu0 %v9849
    %13489 = vmatprep.subr.bf16.mxu0 %v9874
    %13490 = vmatpush1.bf16.msra.mxu0 %v9873
    %13491 = vmatprep.subr.bf16.mxu0 %v9898
    %13492 = vmatpush1.bf16.msra.mxu0 %v9897
    %13493 = vmatprep.subr.bf16.mxu0 %v9922
    %13494 = vmatpush1.bf16.msra.mxu0 %v9921
    %13495 = vmatprep.subr.bf16.mxu0 %v9946
    %13496 = vmatpush1.bf16.msra.mxu0 %v9945
    %13497 = vmatprep.subr.bf16.mxu0 %v9970
    %13498 = vmatpush1.bf16.msra.mxu0 %v9969
    %13499 = vmatprep.subr.bf16.mxu0 %v9994
    %13500 = vmatpush1.bf16.msra.mxu0 %v9993
    %13501 = vmatprep.subr.bf16.mxu0 %v10018
    %13502 = vmatpush1.bf16.msra.mxu0 %v10017
    %13503 = vmatprep.subr.bf16.mxu0 %v10042
    %13504 = vmatpush1.bf16.msra.mxu0 %v10041
    %13505 = vmatprep.subr.bf16.mxu0 %v10066
    %13506 = vmatpush1.bf16.msra.mxu0 %v10065
    %13507 = vmatprep.subr.bf16.mxu0 %v10090
    %13508 = vmatpush1.bf16.msra.mxu0 %v10089
    %13509 = vmatprep.subr.bf16.mxu0 %v10114
    %13510 = vmatpush1.bf16.msra.mxu0 %v10113
    %13511 = vmatprep.subr.bf16.mxu0 %v10138
    %13512 = vmatpush1.bf16.msra.mxu0 %v10137
    %13513 = vmatprep.subr.bf16.mxu0 %v10162
    %13514 = vmatpush1.bf16.msra.mxu0 %v10161
    %13515 = vmatprep.mubr.bf16.mxu0 %v2744
    %13516 = vmatmul.mubr.bf16.gmra.mrb[0].mxu0 %v2743
    %v13517 = vpop.f32.mrb[0].mxu0
    %v13518 = vadd.f32 %v13477, %v13517
    %v13519 = vpop.f32.mrb[0].mxu0
    %v13520 = vadd.f32 %v13479, %v13519
    %v13521 = vpop.f32.mrb[0].mxu0
    %v13522 = vpop.f32.mrb[0].mxu0
    %13523 = vdwg.mxu0
    %13524 = vmatprep.subr.bf16.mxu0 %v10186
    %13525 = vmatpush1.bf16.msra.mxu0 %v10185
    %13526 = vmatprep.subr.bf16.mxu0 %v10210
    %13527 = vmatpush1.bf16.msra.mxu0 %v10209
    %13528 = vmatprep.subr.bf16.mxu0 %v10234
    %13529 = vmatpush1.bf16.msra.mxu0 %v10233
    %13530 = vmatprep.subr.bf16.mxu0 %v10258
    %13531 = vmatpush1.bf16.msra.mxu0 %v10257
    %13532 = vmatprep.subr.bf16.mxu0 %v10282
    %13533 = vmatpush1.bf16.msra.mxu0 %v10281
    %13534 = vmatprep.subr.bf16.mxu0 %v10306
    %13535 = vmatpush1.bf16.msra.mxu0 %v10305
    %13536 = vmatprep.subr.bf16.mxu0 %v10330
    %13537 = vmatpush1.bf16.msra.mxu0 %v10329
    %13538 = vmatprep.subr.bf16.mxu0 %v10354
    %13539 = vmatpush1.bf16.msra.mxu0 %v10353
    %13540 = vmatprep.subr.bf16.mxu0 %v10378
    %13541 = vmatpush1.bf16.msra.mxu0 %v10377
    %13542 = vmatprep.subr.bf16.mxu0 %v10402
    %13543 = vmatpush1.bf16.msra.mxu0 %v10401
    %13544 = vmatprep.subr.bf16.mxu0 %v10426
    %13545 = vmatpush1.bf16.msra.mxu0 %v10425
    %13546 = vmatprep.subr.bf16.mxu0 %v10450
    %13547 = vmatpush1.bf16.msra.mxu0 %v10449
    %13548 = vmatprep.subr.bf16.mxu0 %v10474
    %13549 = vmatpush1.bf16.msra.mxu0 %v10473
    %13550 = vmatprep.subr.bf16.mxu0 %v10498
    %13551 = vmatpush1.bf16.msra.mxu0 %v10497
    %13552 = vmatprep.subr.bf16.mxu0 %v10522
    %13553 = vmatpush1.bf16.msra.mxu0 %v10521
    %13554 = vmatprep.subr.bf16.mxu0 %v10546
    %13555 = vmatpush1.bf16.msra.mxu0 %v10545
    %13556 = vmatprep.mubr.bf16.mxu0 %v2746
    %13557 = vmatmul.mubr.bf16.gmra.mrb[0].mxu0 %v2745
    %v13558 = vpop.f32.mrb[0].mxu0
    %v13559 = vadd.f32 %v13518, %v13558
    %v13560 = vpop.f32.mrb[0].mxu0
    %v13561 = vadd.f32 %v13520, %v13560
    %v13562 = vpop.f32.mrb[0].mxu0
    %v13563 = vpop.f32.mrb[0].mxu0
    %13564 = vdwg.mxu0
    %13565 = vmatprep.subr.bf16.mxu0 %v9036
    %13566 = vmatpush1.bf16.msra.mxu0 %v9035
    %13567 = vmatprep.subr.bf16.mxu0 %v9060
    %13568 = vmatpush1.bf16.msra.mxu0 %v9059
    %13569 = vmatprep.subr.bf16.mxu0 %v9084
    %13570 = vmatpush1.bf16.msra.mxu0 %v9083
    %13571 = vmatprep.subr.bf16.mxu0 %v9108
    %13572 = vmatpush1.bf16.msra.mxu0 %v9107
    %13573 = vmatprep.subr.bf16.mxu0 %v9132
    %13574 = vmatpush1.bf16.msra.mxu0 %v9131
    %13575 = vmatprep.subr.bf16.mxu0 %v9156
    %13576 = vmatpush1.bf16.msra.mxu0 %v9155
    %13577 = vmatprep.subr.bf16.mxu0 %v9180
    %13578 = vmatpush1.bf16.msra.mxu0 %v9179
    %13579 = vmatprep.subr.bf16.mxu0 %v9204
    %13580 = vmatpush1.bf16.msra.mxu0 %v9203
    %13581 = vmatprep.subr.bf16.mxu0 %v9228
    %13582 = vmatpush1.bf16.msra.mxu0 %v9227
    %13583 = vmatprep.subr.bf16.mxu0 %v9252
    %13584 = vmatpush1.bf16.msra.mxu0 %v9251
    %13585 = vmatprep.subr.bf16.mxu0 %v9276
    %13586 = vmatpush1.bf16.msra.mxu0 %v9275
    %13587 = vmatprep.subr.bf16.mxu0 %v9300
    %13588 = vmatpush1.bf16.msra.mxu0 %v9299
    %13589 = vmatprep.subr.bf16.mxu0 %v9324
    %13590 = vmatpush1.bf16.msra.mxu0 %v9323
    %13591 = vmatprep.subr.bf16.mxu0 %v9348
    %13592 = vmatpush1.bf16.msra.mxu0 %v9347
    %13593 = vmatprep.subr.bf16.mxu0 %v9372
    %13594 = vmatpush1.bf16.msra.mxu0 %v9371
    %13595 = vmatprep.subr.bf16.mxu0 %v9396
    %13596 = vmatpush1.bf16.msra.mxu0 %v9395
    %13597 = vmatprep.mubr.bf16.mxu0 %v2740
    %13598 = vmatmul.mubr.bf16.gmra.mrb[0].mxu0 %v2739
    %v13599 = vpop.f32.mrb[0].mxu0
    %v13600 = vadd.f32 %v4364, %v13599
    %v13601 = vpop.f32.mrb[0].mxu0
    %v13602 = vadd.f32 %v4368, %v13601
    %v13603 = vpop.f32.mrb[0].mxu0
    %v13604 = vpop.f32.mrb[0].mxu0
    %13605 = vdwg.mxu0
    %13606 = vmatprep.subr.bf16.mxu0 %v9420
    %13607 = vmatpush1.bf16.msra.mxu0 %v9419
    %13608 = vmatprep.subr.bf16.mxu0 %v9444
    %13609 = vmatpush1.bf16.msra.mxu0 %v9443
    %13610 = vmatprep.subr.bf16.mxu0 %v9468
    %13611 = vmatpush1.bf16.msra.mxu0 %v9467
    %13612 = vmatprep.subr.bf16.mxu0 %v9492
    %13613 = vmatpush1.bf16.msra.mxu0 %v9491
    %13614 = vmatprep.subr.bf16.mxu0 %v9516
    %13615 = vmatpush1.bf16.msra.mxu0 %v9515
    %13616 = vmatprep.subr.bf16.mxu0 %v9540
    %13617 = vmatpush1.bf16.msra.mxu0 %v9539
    %13618 = vmatprep.subr.bf16.mxu0 %v9564
    %13619 = vmatpush1.bf16.msra.mxu0 %v9563
    %13620 = vmatprep.subr.bf16.mxu0 %v9588
    %13621 = vmatpush1.bf16.msra.mxu0 %v9587
    %13622 = vmatprep.subr.bf16.mxu0 %v9612
    %13623 = vmatpush1.bf16.msra.mxu0 %v9611
    %13624 = vmatprep.subr.bf16.mxu0 %v9636
    %13625 = vmatpush1.bf16.msra.mxu0 %v9635
    %13626 = vmatprep.subr.bf16.mxu0 %v9660
    %13627 = vmatpush1.bf16.msra.mxu0 %v9659
    %13628 = vmatprep.subr.bf16.mxu0 %v9684
    %13629 = vmatpush1.bf16.msra.mxu0 %v9683
    %13630 = vmatprep.subr.bf16.mxu0 %v9708
    %13631 = vmatpush1.bf16.msra.mxu0 %v9707
    %13632 = vmatprep.subr.bf16.mxu0 %v9732
    %13633 = vmatpush1.bf16.msra.mxu0 %v9731
    %13634 = vmatprep.subr.bf16.mxu0 %v9756
    %13635 = vmatpush1.bf16.msra.mxu0 %v9755
    %13636 = vmatprep.subr.bf16.mxu0 %v9780
    %13637 = vmatpush1.bf16.msra.mxu0 %v9779
    %13638 = vmatprep.mubr.bf16.mxu0 %v2742
    %13639 = vmatmul.mubr.bf16.gmra.mrb[0].mxu0 %v2741
    %v13640 = vpop.f32.mrb[0].mxu0
    %v13641 = vadd.f32 %v13600, %v13640
    %v13642 = vpop.f32.mrb[0].mxu0
    %v13643 = vadd.f32 %v13602, %v13642
    %v13644 = vpop.f32.mrb[0].mxu0
    %v13645 = vpop.f32.mrb[0].mxu0
    %13646 = vdwg.mxu0
    %13647 = vmatprep.subr.bf16.mxu0 %v9804
    %13648 = vmatpush1.bf16.msra.mxu0 %v9803
    %13649 = vmatprep.subr.bf16.mxu0 %v9828
    %13650 = vmatpush1.bf16.msra.mxu0 %v9827
    %13651 = vmatprep.subr.bf16.mxu0 %v9852
    %13652 = vmatpush1.bf16.msra.mxu0 %v9851
    %13653 = vmatprep.subr.bf16.mxu0 %v9876
    %13654 = vmatpush1.bf16.msra.mxu0 %v9875
    %13655 = vmatprep.subr.bf16.mxu0 %v9900
    %13656 = vmatpush1.bf16.msra.mxu0 %v9899
    %13657 = vmatprep.subr.bf16.mxu0 %v9924
    %13658 = vmatpush1.bf16.msra.mxu0 %v9923
    %13659 = vmatprep.subr.bf16.mxu0 %v9948
    %13660 = vmatpush1.bf16.msra.mxu0 %v9947
    %13661 = vmatprep.subr.bf16.mxu0 %v9972
    %13662 = vmatpush1.bf16.msra.mxu0 %v9971
    %13663 = vmatprep.subr.bf16.mxu0 %v9996
    %13664 = vmatpush1.bf16.msra.mxu0 %v9995
    %13665 = vmatprep.subr.bf16.mxu0 %v10020
    %13666 = vmatpush1.bf16.msra.mxu0 %v10019
    %13667 = vmatprep.subr.bf16.mxu0 %v10044
    %13668 = vmatpush1.bf16.msra.mxu0 %v10043
    %13669 = vmatprep.subr.bf16.mxu0 %v10068
    %13670 = vmatpush1.bf16.msra.mxu0 %v10067
    %13671 = vmatprep.subr.bf16.mxu0 %v10092
    %13672 = vmatpush1.bf16.msra.mxu0 %v10091
    %13673 = vmatprep.subr.bf16.mxu0 %v10116
    %13674 = vmatpush1.bf16.msra.mxu0 %v10115
    %13675 = vmatprep.subr.bf16.mxu0 %v10140
    %13676 = vmatpush1.bf16.msra.mxu0 %v10139
    %13677 = vmatprep.subr.bf16.mxu0 %v10164
    %13678 = vmatpush1.bf16.msra.mxu0 %v10163
    %13679 = vmatprep.mubr.bf16.mxu0 %v2744
    %13680 = vmatmul.mubr.bf16.gmra.mrb[0].mxu0 %v2743
    %v13681 = vpop.f32.mrb[0].mxu0
    %v13682 = vadd.f32 %v13641, %v13681
    %v13683 = vpop.f32.mrb[0].mxu0
    %v13684 = vadd.f32 %v13643, %v13683
    %v13685 = vpop.f32.mrb[0].mxu0
    %v13686 = vpop.f32.mrb[0].mxu0
    %13687 = vdwg.mxu0
    %13688 = vmatprep.subr.bf16.mxu0 %v10188
    %13689 = vmatpush1.bf16.msra.mxu0 %v10187
    %13690 = vmatprep.subr.bf16.mxu0 %v10212
    %13691 = vmatpush1.bf16.msra.mxu0 %v10211
    %13692 = vmatprep.subr.bf16.mxu0 %v10236
    %13693 = vmatpush1.bf16.msra.mxu0 %v10235
    %13694 = vmatprep.subr.bf16.mxu0 %v10260
    %13695 = vmatpush1.bf16.msra.mxu0 %v10259
    %13696 = vmatprep.subr.bf16.mxu0 %v10284
    %13697 = vmatpush1.bf16.msra.mxu0 %v10283
    %13698 = vmatprep.subr.bf16.mxu0 %v10308
    %13699 = vmatpush1.bf16.msra.mxu0 %v10307
    %13700 = vmatprep.subr.bf16.mxu0 %v10332
    %13701 = vmatpush1.bf16.msra.mxu0 %v10331
    %13702 = vmatprep.subr.bf16.mxu0 %v10356
    %13703 = vmatpush1.bf16.msra.mxu0 %v10355
    %13704 = vmatprep.subr.bf16.mxu0 %v10380
    %13705 = vmatpush1.bf16.msra.mxu0 %v10379
    %13706 = vmatprep.subr.bf16.mxu0 %v10404
    %13707 = vmatpush1.bf16.msra.mxu0 %v10403
    %13708 = vmatprep.subr.bf16.mxu0 %v10428
    %13709 = vmatpush1.bf16.msra.mxu0 %v10427
    %13710 = vmatprep.subr.bf16.mxu0 %v10452
    %13711 = vmatpush1.bf16.msra.mxu0 %v10451
    %13712 = vmatprep.subr.bf16.mxu0 %v10476
    %13713 = vmatpush1.bf16.msra.mxu0 %v10475
    %13714 = vmatprep.subr.bf16.mxu0 %v10500
    %13715 = vmatpush1.bf16.msra.mxu0 %v10499
    %13716 = vmatprep.subr.bf16.mxu0 %v10524
    %13717 = vmatpush1.bf16.msra.mxu0 %v10523
    %13718 = vmatprep.subr.bf16.mxu0 %v10548
    %13719 = vmatpush1.bf16.msra.mxu0 %v10547
    %13720 = vmatprep.mubr.bf16.mxu0 %v2746
    %13721 = vmatmul.mubr.bf16.gmra.mrb[0].mxu0 %v2745
    %v13722 = vpop.f32.mrb[0].mxu0
    %v13723 = vadd.f32 %v13682, %v13722
    %v13724 = vpop.f32.mrb[0].mxu0
    %v13725 = vadd.f32 %v13684, %v13724
    %v13726 = vpop.f32.mrb[0].mxu0
    %v13727 = vpop.f32.mrb[0].mxu0
    %13728 = vdwg.mxu0
    %13729 = vmatprep.subr.bf16.mxu0 %v9038
    %13730 = vmatpush1.bf16.msra.mxu0 %v9037
    %13731 = vmatprep.subr.bf16.mxu0 %v9062
    %13732 = vmatpush1.bf16.msra.mxu0 %v9061
    %13733 = vmatprep.subr.bf16.mxu0 %v9086
    %13734 = vmatpush1.bf16.msra.mxu0 %v9085
    %13735 = vmatprep.subr.bf16.mxu0 %v9110
    %13736 = vmatpush1.bf16.msra.mxu0 %v9109
    %13737 = vmatprep.subr.bf16.mxu0 %v9134
    %13738 = vmatpush1.bf16.msra.mxu0 %v9133
    %13739 = vmatprep.subr.bf16.mxu0 %v9158
    %13740 = vmatpush1.bf16.msra.mxu0 %v9157
    %13741 = vmatprep.subr.bf16.mxu0 %v9182
    %13742 = vmatpush1.bf16.msra.mxu0 %v9181
    %13743 = vmatprep.subr.bf16.mxu0 %v9206
    %13744 = vmatpush1.bf16.msra.mxu0 %v9205
    %13745 = vmatprep.subr.bf16.mxu0 %v9230
    %13746 = vmatpush1.bf16.msra.mxu0 %v9229
    %13747 = vmatprep.subr.bf16.mxu0 %v9254
    %13748 = vmatpush1.bf16.msra.mxu0 %v9253
    %13749 = vmatprep.subr.bf16.mxu0 %v9278
    %13750 = vmatpush1.bf16.msra.mxu0 %v9277
    %13751 = vmatprep.subr.bf16.mxu0 %v9302
    %13752 = vmatpush1.bf16.msra.mxu0 %v9301
    %13753 = vmatprep.subr.bf16.mxu0 %v9326
    %13754 = vmatpush1.bf16.msra.mxu0 %v9325
    %13755 = vmatprep.subr.bf16.mxu0 %v9350
    %13756 = vmatpush1.bf16.msra.mxu0 %v9349
    %13757 = vmatprep.subr.bf16.mxu0 %v9374
    %13758 = vmatpush1.bf16.msra.mxu0 %v9373
    %13759 = vmatprep.subr.bf16.mxu0 %v9398
    %13760 = vmatpush1.bf16.msra.mxu0 %v9397
    %13761 = vmatprep.mubr.bf16.mxu0 %v2740
    %13762 = vmatmul.mubr.bf16.gmra.mrb[0].mxu0 %v2739
    %v13763 = vpop.f32.mrb[0].mxu0
    %v13764 = vadd.f32 %v4372, %v13763
    %v13765 = vpop.f32.mrb[0].mxu0
    %v13766 = vadd.f32 %v4376, %v13765
    %v13767 = vpop.f32.mrb[0].mxu0
    %v13768 = vpop.f32.mrb[0].mxu0
    %13769 = vdwg.mxu0
    %13770 = vmatprep.subr.bf16.mxu0 %v9422
    %13771 = vmatpush1.bf16.msra.mxu0 %v9421
    %13772 = vmatprep.subr.bf16.mxu0 %v9446
    %13773 = vmatpush1.bf16.msra.mxu0 %v9445
    %13774 = vmatprep.subr.bf16.mxu0 %v9470
    %13775 = vmatpush1.bf16.msra.mxu0 %v9469
    %13776 = vmatprep.subr.bf16.mxu0 %v9494
    %13777 = vmatpush1.bf16.msra.mxu0 %v9493
    %13778 = vmatprep.subr.bf16.mxu0 %v9518
    %13779 = vmatpush1.bf16.msra.mxu0 %v9517
    %13780 = vmatprep.subr.bf16.mxu0 %v9542
    %13781 = vmatpush1.bf16.msra.mxu0 %v9541
    %13782 = vmatprep.subr.bf16.mxu0 %v9566
    %13783 = vmatpush1.bf16.msra.mxu0 %v9565
    %13784 = vmatprep.subr.bf16.mxu0 %v9590
    %13785 = vmatpush1.bf16.msra.mxu0 %v9589
    %13786 = vmatprep.subr.bf16.mxu0 %v9614
    %13787 = vmatpush1.bf16.msra.mxu0 %v9613
    %13788 = vmatprep.subr.bf16.mxu0 %v9638
    %13789 = vmatpush1.bf16.msra.mxu0 %v9637
    %13790 = vmatprep.subr.bf16.mxu0 %v9662
    %13791 = vmatpush1.bf16.msra.mxu0 %v9661
    %13792 = vmatprep.subr.bf16.mxu0 %v9686
    %13793 = vmatpush1.bf16.msra.mxu0 %v9685
    %13794 = vmatprep.subr.bf16.mxu0 %v9710
    %13795 = vmatpush1.bf16.msra.mxu0 %v9709
    %13796 = vmatprep.subr.bf16.mxu0 %v9734
    %13797 = vmatpush1.bf16.msra.mxu0 %v9733
    %13798 = vmatprep.subr.bf16.mxu0 %v9758
    %13799 = vmatpush1.bf16.msra.mxu0 %v9757
    %13800 = vmatprep.subr.bf16.mxu0 %v9782
    %13801 = vmatpush1.bf16.msra.mxu0 %v9781
    %13802 = vmatprep.mubr.bf16.mxu0 %v2742
    %13803 = vmatmul.mubr.bf16.gmra.mrb[0].mxu0 %v2741
    %v13804 = vpop.f32.mrb[0].mxu0
    %v13805 = vadd.f32 %v13764, %v13804
    %v13806 = vpop.f32.mrb[0].mxu0
    %v13807 = vadd.f32 %v13766, %v13806
    %v13808 = vpop.f32.mrb[0].mxu0
    %v13809 = vpop.f32.mrb[0].mxu0
    %13810 = vdwg.mxu0
    %13811 = vmatprep.subr.bf16.mxu0 %v9806
    %13812 = vmatpush1.bf16.msra.mxu0 %v9805
    %13813 = vmatprep.subr.bf16.mxu0 %v9830
    %13814 = vmatpush1.bf16.msra.mxu0 %v9829
    %13815 = vmatprep.subr.bf16.mxu0 %v9854
    %13816 = vmatpush1.bf16.msra.mxu0 %v9853
    %13817 = vmatprep.subr.bf16.mxu0 %v9878
    %13818 = vmatpush1.bf16.msra.mxu0 %v9877
    %13819 = vmatprep.subr.bf16.mxu0 %v9902
    %13820 = vmatpush1.bf16.msra.mxu0 %v9901
    %13821 = vmatprep.subr.bf16.mxu0 %v9926
    %13822 = vmatpush1.bf16.msra.mxu0 %v9925
    %13823 = vmatprep.subr.bf16.mxu0 %v9950
    %13824 = vmatpush1.bf16.msra.mxu0 %v9949
    %13825 = vmatprep.subr.bf16.mxu0 %v9974
    %13826 = vmatpush1.bf16.msra.mxu0 %v9973
    %13827 = vmatprep.subr.bf16.mxu0 %v9998
    %13828 = vmatpush1.bf16.msra.mxu0 %v9997
    %13829 = vmatprep.subr.bf16.mxu0 %v10022
    %13830 = vmatpush1.bf16.msra.mxu0 %v10021
    %13831 = vmatprep.subr.bf16.mxu0 %v10046
    %13832 = vmatpush1.bf16.msra.mxu0 %v10045
    %13833 = vmatprep.subr.bf16.mxu0 %v10070
    %13834 = vmatpush1.bf16.msra.mxu0 %v10069
    %13835 = vmatprep.subr.bf16.mxu0 %v10094
    %13836 = vmatpush1.bf16.msra.mxu0 %v10093
    %13837 = vmatprep.subr.bf16.mxu0 %v10118
    %13838 = vmatpush1.bf16.msra.mxu0 %v10117
    %13839 = vmatprep.subr.bf16.mxu0 %v10142
    %13840 = vmatpush1.bf16.msra.mxu0 %v10141
    %13841 = vmatprep.subr.bf16.mxu0 %v10166
    %13842 = vmatpush1.bf16.msra.mxu0 %v10165
    %13843 = vmatprep.mubr.bf16.mxu0 %v2744
    %13844 = vmatmul.mubr.bf16.gmra.mrb[0].mxu0 %v2743
    %v13845 = vpop.f32.mrb[0].mxu0
    %v13846 = vadd.f32 %v13805, %v13845
    %v13847 = vpop.f32.mrb[0].mxu0
    %v13848 = vadd.f32 %v13807, %v13847
    %v13849 = vpop.f32.mrb[0].mxu0
    %v13850 = vpop.f32.mrb[0].mxu0
    %13851 = vdwg.mxu0
    %13852 = vmatprep.subr.bf16.mxu0 %v10190
    %13853 = vmatpush1.bf16.msra.mxu0 %v10189
    %13854 = vmatprep.subr.bf16.mxu0 %v10214
    %13855 = vmatpush1.bf16.msra.mxu0 %v10213
    %13856 = vmatprep.subr.bf16.mxu0 %v10238
    %13857 = vmatpush1.bf16.msra.mxu0 %v10237
    %13858 = vmatprep.subr.bf16.mxu0 %v10262
    %13859 = vmatpush1.bf16.msra.mxu0 %v10261
    %13860 = vmatprep.subr.bf16.mxu0 %v10286
    %13861 = vmatpush1.bf16.msra.mxu0 %v10285
    %13862 = vmatprep.subr.bf16.mxu0 %v10310
    %13863 = vmatpush1.bf16.msra.mxu0 %v10309
    %13864 = vmatprep.subr.bf16.mxu0 %v10334
    %13865 = vmatpush1.bf16.msra.mxu0 %v10333
    %13866 = vmatprep.subr.bf16.mxu0 %v10358
    %13867 = vmatpush1.bf16.msra.mxu0 %v10357
    %13868 = vmatprep.subr.bf16.mxu0 %v10382
    %13869 = vmatpush1.bf16.msra.mxu0 %v10381
    %13870 = vmatprep.subr.bf16.mxu0 %v10406
    %13871 = vmatpush1.bf16.msra.mxu0 %v10405
    %13872 = vmatprep.subr.bf16.mxu0 %v10430
    %13873 = vmatpush1.bf16.msra.mxu0 %v10429
    %13874 = vmatprep.subr.bf16.mxu0 %v10454
    %13875 = vmatpush1.bf16.msra.mxu0 %v10453
    %13876 = vmatprep.subr.bf16.mxu0 %v10478
    %13877 = vmatpush1.bf16.msra.mxu0 %v10477
    %13878 = vmatprep.subr.bf16.mxu0 %v10502
    %13879 = vmatpush1.bf16.msra.mxu0 %v10501
    %13880 = vmatprep.subr.bf16.mxu0 %v10526
    %13881 = vmatpush1.bf16.msra.mxu0 %v10525
    %13882 = vmatprep.subr.bf16.mxu0 %v10550
    %13883 = vmatpush1.bf16.msra.mxu0 %v10549
    %13884 = vmatprep.mubr.bf16.mxu0 %v2746
    %13885 = vmatmul.mubr.bf16.gmra.mrb[0].mxu0 %v2745
    %v13886 = vpop.f32.mrb[0].mxu0
    %v13887 = vadd.f32 %v13846, %v13886
    %v13888 = vpop.f32.mrb[0].mxu0
    %v13889 = vadd.f32 %v13848, %v13888
    %v13890 = vpop.f32.mrb[0].mxu0
    %v13891 = vpop.f32.mrb[0].mxu0
    %13892 = vdwg.mxu0
    %13893 = vmatprep.subr.bf16.mxu0 %v9040
    %13894 = vmatpush1.bf16.msra.mxu0 %v9039
    %13895 = vmatprep.subr.bf16.mxu0 %v9064
    %13896 = vmatpush1.bf16.msra.mxu0 %v9063
    %13897 = vmatprep.subr.bf16.mxu0 %v9088
    %13898 = vmatpush1.bf16.msra.mxu0 %v9087
    %13899 = vmatprep.subr.bf16.mxu0 %v9112
    %13900 = vmatpush1.bf16.msra.mxu0 %v9111
    %13901 = vmatprep.subr.bf16.mxu0 %v9136
    %13902 = vmatpush1.bf16.msra.mxu0 %v9135
    %13903 = vmatprep.subr.bf16.mxu0 %v9160
    %13904 = vmatpush1.bf16.msra.mxu0 %v9159
    %13905 = vmatprep.subr.bf16.mxu0 %v9184
    %13906 = vmatpush1.bf16.msra.mxu0 %v9183
    %13907 = vmatprep.subr.bf16.mxu0 %v9208
    %13908 = vmatpush1.bf16.msra.mxu0 %v9207
    %13909 = vmatprep.subr.bf16.mxu0 %v9232
    %13910 = vmatpush1.bf16.msra.mxu0 %v9231
    %13911 = vmatprep.subr.bf16.mxu0 %v9256
    %13912 = vmatpush1.bf16.msra.mxu0 %v9255
    %13913 = vmatprep.subr.bf16.mxu0 %v9280
    %13914 = vmatpush1.bf16.msra.mxu0 %v9279
    %13915 = vmatprep.subr.bf16.mxu0 %v9304
    %13916 = vmatpush1.bf16.msra.mxu0 %v9303
    %13917 = vmatprep.subr.bf16.mxu0 %v9328
    %13918 = vmatpush1.bf16.msra.mxu0 %v9327
    %13919 = vmatprep.subr.bf16.mxu0 %v9352
    %13920 = vmatpush1.bf16.msra.mxu0 %v9351
    %13921 = vmatprep.subr.bf16.mxu0 %v9376
    %13922 = vmatpush1.bf16.msra.mxu0 %v9375
    %13923 = vmatprep.subr.bf16.mxu0 %v9400
    %13924 = vmatpush1.bf16.msra.mxu0 %v9399
    %13925 = vmatprep.mubr.bf16.mxu0 %v2740
    %13926 = vmatmul.mubr.bf16.gmra.mrb[0].mxu0 %v2739
    %v13927 = vpop.f32.mrb[0].mxu0
    %v13928 = vadd.f32 %v4380, %v13927
    %v13929 = vpop.f32.mrb[0].mxu0
    %v13930 = vadd.f32 %v4384, %v13929
    %v13931 = vpop.f32.mrb[0].mxu0
    %v13932 = vpop.f32.mrb[0].mxu0
    %13933 = vdwg.mxu0
    %13934 = vmatprep.subr.bf16.mxu0 %v9424
    %13935 = vmatpush1.bf16.msra.mxu0 %v9423
    %13936 = vmatprep.subr.bf16.mxu0 %v9448
    %13937 = vmatpush1.bf16.msra.mxu0 %v9447
    %13938 = vmatprep.subr.bf16.mxu0 %v9472
    %13939 = vmatpush1.bf16.msra.mxu0 %v9471
    %13940 = vmatprep.subr.bf16.mxu0 %v9496
    %13941 = vmatpush1.bf16.msra.mxu0 %v9495
    %13942 = vmatprep.subr.bf16.mxu0 %v9520
    %13943 = vmatpush1.bf16.msra.mxu0 %v9519
    %13944 = vmatprep.subr.bf16.mxu0 %v9544
    %13945 = vmatpush1.bf16.msra.mxu0 %v9543
    %13946 = vmatprep.subr.bf16.mxu0 %v9568
    %13947 = vmatpush1.bf16.msra.mxu0 %v9567
    %13948 = vmatprep.subr.bf16.mxu0 %v9592
    %13949 = vmatpush1.bf16.msra.mxu0 %v9591
    %13950 = vmatprep.subr.bf16.mxu0 %v9616
    %13951 = vmatpush1.bf16.msra.mxu0 %v9615
    %13952 = vmatprep.subr.bf16.mxu0 %v9640
    %13953 = vmatpush1.bf16.msra.mxu0 %v9639
    %13954 = vmatprep.subr.bf16.mxu0 %v9664
    %13955 = vmatpush1.bf16.msra.mxu0 %v9663
    %13956 = vmatprep.subr.bf16.mxu0 %v9688
    %13957 = vmatpush1.bf16.msra.mxu0 %v9687
    %13958 = vmatprep.subr.bf16.mxu0 %v9712
    %13959 = vmatpush1.bf16.msra.mxu0 %v9711
    %13960 = vmatprep.subr.bf16.mxu0 %v9736
    %13961 = vmatpush1.bf16.msra.mxu0 %v9735
    %13962 = vmatprep.subr.bf16.mxu0 %v9760
    %13963 = vmatpush1.bf16.msra.mxu0 %v9759
    %13964 = vmatprep.subr.bf16.mxu0 %v9784
    %13965 = vmatpush1.bf16.msra.mxu0 %v9783
    %13966 = vmatprep.mubr.bf16.mxu0 %v2742
    %13967 = vmatmul.mubr.bf16.gmra.mrb[0].mxu0 %v2741
    %v13968 = vpop.f32.mrb[0].mxu0
    %v13969 = vadd.f32 %v13928, %v13968
    %v13970 = vpop.f32.mrb[0].mxu0
    %v13971 = vadd.f32 %v13930, %v13970
    %v13972 = vpop.f32.mrb[0].mxu0
    %v13973 = vpop.f32.mrb[0].mxu0
    %13974 = vdwg.mxu0
    %13975 = vmatprep.subr.bf16.mxu0 %v9808
    %13976 = vmatpush1.bf16.msra.mxu0 %v9807
    %13977 = vmatprep.subr.bf16.mxu0 %v9832
    %13978 = vmatpush1.bf16.msra.mxu0 %v9831
    %13979 = vmatprep.subr.bf16.mxu0 %v9856
    %13980 = vmatpush1.bf16.msra.mxu0 %v9855
    %13981 = vmatprep.subr.bf16.mxu0 %v9880
    %13982 = vmatpush1.bf16.msra.mxu0 %v9879
    %13983 = vmatprep.subr.bf16.mxu0 %v9904
    %13984 = vmatpush1.bf16.msra.mxu0 %v9903
    %13985 = vmatprep.subr.bf16.mxu0 %v9928
    %13986 = vmatpush1.bf16.msra.mxu0 %v9927
    %13987 = vmatprep.subr.bf16.mxu0 %v9952
    %13988 = vmatpush1.bf16.msra.mxu0 %v9951
    %13989 = vmatprep.subr.bf16.mxu0 %v9976
    %13990 = vmatpush1.bf16.msra.mxu0 %v9975
    %13991 = vmatprep.subr.bf16.mxu0 %v10000
    %13992 = vmatpush1.bf16.msra.mxu0 %v9999
    %13993 = vmatprep.subr.bf16.mxu0 %v10024
    %13994 = vmatpush1.bf16.msra.mxu0 %v10023
    %13995 = vmatprep.subr.bf16.mxu0 %v10048
    %13996 = vmatpush1.bf16.msra.mxu0 %v10047
    %13997 = vmatprep.subr.bf16.mxu0 %v10072
    %13998 = vmatpush1.bf16.msra.mxu0 %v10071
    %13999 = vmatprep.subr.bf16.mxu0 %v10096
    %14000 = vmatpush1.bf16.msra.mxu0 %v10095
    %14001 = vmatprep.subr.bf16.mxu0 %v10120
    %14002 = vmatpush1.bf16.msra.mxu0 %v10119
    %14003 = vmatprep.subr.bf16.mxu0 %v10144
    %14004 = vmatpush1.bf16.msra.mxu0 %v10143
    %14005 = vmatprep.subr.bf16.mxu0 %v10168
    %14006 = vmatpush1.bf16.msra.mxu0 %v10167
    %14007 = vmatprep.mubr.bf16.mxu0 %v2744
    %14008 = vmatmul.mubr.bf16.gmra.mrb[0].mxu0 %v2743
    %v14009 = vpop.f32.mrb[0].mxu0
    %v14010 = vadd.f32 %v13969, %v14009
    %v14011 = vpop.f32.mrb[0].mxu0
    %v14012 = vadd.f32 %v13971, %v14011
    %v14013 = vpop.f32.mrb[0].mxu0
    %v14014 = vpop.f32.mrb[0].mxu0
    %14015 = vdwg.mxu0
    %14016 = vmatprep.subr.bf16.mxu0 %v10192
    %14017 = vmatpush1.bf16.msra.mxu0 %v10191
    %14018 = vmatprep.subr.bf16.mxu0 %v10216
    %14019 = vmatpush1.bf16.msra.mxu0 %v10215
    %14020 = vmatprep.subr.bf16.mxu0 %v10240
    %14021 = vmatpush1.bf16.msra.mxu0 %v10239
    %14022 = vmatprep.subr.bf16.mxu0 %v10264
    %14023 = vmatpush1.bf16.msra.mxu0 %v10263
    %14024 = vmatprep.subr.bf16.mxu0 %v10288
    %14025 = vmatpush1.bf16.msra.mxu0 %v10287
    %14026 = vmatprep.subr.bf16.mxu0 %v10312
    %14027 = vmatpush1.bf16.msra.mxu0 %v10311
    %14028 = vmatprep.subr.bf16.mxu0 %v10336
    %14029 = vmatpush1.bf16.msra.mxu0 %v10335
    %14030 = vmatprep.subr.bf16.mxu0 %v10360
    %14031 = vmatpush1.bf16.msra.mxu0 %v10359
    %14032 = vmatprep.subr.bf16.mxu0 %v10384
    %14033 = vmatpush1.bf16.msra.mxu0 %v10383
    %14034 = vmatprep.subr.bf16.mxu0 %v10408
    %14035 = vmatpush1.bf16.msra.mxu0 %v10407
    %14036 = vmatprep.subr.bf16.mxu0 %v10432
    %14037 = vmatpush1.bf16.msra.mxu0 %v10431
    %14038 = vmatprep.subr.bf16.mxu0 %v10456
    %14039 = vmatpush1.bf16.msra.mxu0 %v10455
    %14040 = vmatprep.subr.bf16.mxu0 %v10480
    %14041 = vmatpush1.bf16.msra.mxu0 %v10479
    %14042 = vmatprep.subr.bf16.mxu0 %v10504
    %14043 = vmatpush1.bf16.msra.mxu0 %v10503
    %14044 = vmatprep.subr.bf16.mxu0 %v10528
    %14045 = vmatpush1.bf16.msra.mxu0 %v10527
    %14046 = vmatprep.subr.bf16.mxu0 %v10552
    %14047 = vmatpush1.bf16.msra.mxu0 %v10551
    %14048 = vmatprep.mubr.bf16.mxu0 %v2746
    %14049 = vmatmul.mubr.bf16.gmra.mrb[0].mxu0 %v2745
    %v14050 = vpop.f32.mrb[0].mxu0
    %v14051 = vadd.f32 %v14010, %v14050
    %v14052 = vpop.f32.mrb[0].mxu0
    %v14053 = vadd.f32 %v14012, %v14052
    %v14054 = vpop.f32.mrb[0].mxu0
    %v14055 = vpop.f32.mrb[0].mxu0
    %14056 = vdwg.mxu0
    %14057 = vst [vmem:[#allocation17] sm:$0xff] %v12247
    %14058 = vst [vmem:[#allocation17 + $0x8] sm:$0xff] %v12249
    %14059 = vst [vmem:[#allocation17 + $0x10] sm:$0xff] %v12411
    %14060 = vst [vmem:[#allocation17 + $0x18] sm:$0xff] %v12413
    %14061 = vst [vmem:[#allocation17 + $0x20] sm:$0xff] %v12575
    %14062 = vst [vmem:[#allocation17 + $0x28] sm:$0xff] %v12577
    %14063 = vst [vmem:[#allocation17 + $0x30] sm:$0xff] %v12739
    %14064 = vst [vmem:[#allocation17 + $0x38] sm:$0xff] %v12741
    %14065 = vst [vmem:[#allocation17 + $0x40] sm:$0xff] %v12903
    %14066 = vst [vmem:[#allocation17 + $0x48] sm:$0xff] %v12905
    %14067 = vst [vmem:[#allocation17 + $0x50] sm:$0xff] %v13067
    %14068 = vst [vmem:[#allocation17 + $0x58] sm:$0xff] %v13069
    %14069 = vst [vmem:[#allocation17 + $0x60] sm:$0xff] %v13231
    %14070 = vst [vmem:[#allocation17 + $0x68] sm:$0xff] %v13233
    %14071 = vst [vmem:[#allocation17 + $0x70] sm:$0xff] %v13395
    %14072 = vst [vmem:[#allocation17 + $0x78] sm:$0xff] %v13397
    %14073 = vst [vmem:[#allocation17 + $0x80] sm:$0xff] %v13559
    %14074 = vst [vmem:[#allocation17 + $0x88] sm:$0xff] %v13561
    %14075 = vst [vmem:[#allocation17 + $0x90] sm:$0xff] %v13723
    %14076 = vst [vmem:[#allocation17 + $0x98] sm:$0xff] %v13725
    %14077 = vst [vmem:[#allocation17 + $0xa0] sm:$0xff] %v13887
    %14078 = vst [vmem:[#allocation17 + $0xa8] sm:$0xff] %v13889
    %14079 = vst [vmem:[#allocation17 + $0xb0] sm:$0xff] %v14051
    %14080 = vst [vmem:[#allocation17 + $0xb8] sm:$0xff] %v14053
    // Predicated region
    $region74: #{tpu_custom_call.1} parent=1 // pred_check
      _
    $region75: #{tpu_custom_call.1} parent=1 // pred_check_branch
      %14082 = sbr.rel (0) target = $region77
    $region76: #{tpu_custom_call.1} parent=1 // pred_region
      %s14084 = ssub.s32 3072, 3072
      %14085 = vsyncadd [#allocation4], %s14084
      %s14087 = sshll.u32 [#allocation17], 4
      %s14088 = int_to_ptr.vmem [resolvable:$true] %s14087
      %14090 = dma.vmem_to_hbm [thread:$0]  %s14088, 3072, %s9, [#allocation4]
    $region77: #{tpu_custom_call.1} parent=1 // pred_fallthru
      _
    // Predicated region
    $region78: #{tpu_custom_call.1} parent=1 // pred_check
      _
    $region79: #{tpu_custom_call.1} parent=1 // pred_check_branch
      %14092 = sbr.rel (0) target = $region81
    $region80: #{tpu_custom_call.1} parent=1 // pred_region
      %14093 = dma.done [#allocation4], 3072
    $region81: #{tpu_custom_call.1} parent=1 // pred_fallthru
      _
    %14094 = vsyncpa [#allocation3], 1
    %14095 = vsyncpa [#allocation6], 1
    %14096 = vsyncpa [#allocation9], 1
    %14097 = vsyncpa [#allocation12], 1
    %14098 = vsyncpa [#allocation15], 1
    %14099 = vsyncpa [#allocation4], 1

</llo_original>
